<compile_context>
chip_gen: v7x
topology: tpu7x:2x2x1
jax: 0.10.0
libtpu: 0.0.40
codegen_flags: <defaults>
</compile_context>

<pallas_src>
import functools

import jax
import jax.numpy as jnp
import numpy as np
from jax import lax
from jax.experimental import pallas as pl
from jax.experimental.pallas import tpu as pltpu

BN_EPS = 1e-5


def _first_layer_kernel(l_ref, r_ref, gamma_ref, beta_ref, o_ref, *, count):
    """Fused Conv3x3 -> BatchNorm(batch stats) -> ReLU -> MaxPool2x2 (single merged slab).

    l_ref:      (2*N*Ho, KP)       H-im2col rows; top half = even output rows, bottom = odd
    r_ref:      (KP, 2*Wo*C)       banded conv weights; left half = even output cols, right = odd
    gamma_ref:  (1, C)             BN scale
    beta_ref:   (1, C)             BN shift
    o_ref:      (N*Ho, Wo*C)       pooled output, lane-dense
    count:      static N*H*W       BN reduction count
    """
    f32 = jnp.float32
    hp = lax.Precision.HIGHEST

    rows = l_ref.shape[0]          # 2*N*Ho
    lanes = r_ref.shape[1]         # 2*Wo*C
    c = gamma_ref.shape[1]         # C
    half_r = rows // 2             # N*Ho   (multiple of 8  -> tile-aligned slice)
    half_l = lanes // 2            # Wo*C   (multiple of 128 -> tile-aligned slice)

    # ---- one merged conv matmul on the MXU:  conv[(a,n,h2), (b,w2,c)] ----
    conv = jnp.dot(l_ref[...], r_ref[...], preferred_element_type=f32, precision=hp)

    # ---- BN batch statistics, single pass: sum and sum-of-squares over (N, H, W) ----
    s1 = jnp.sum(conv, axis=0, keepdims=True)          # (1, 2*Wo*C)
    s2 = jnp.sum(conv * conv, axis=0, keepdims=True)   # (1, 2*Wo*C)

    # Fold the (w-parity, w2, c)-interleaved lane layout down to per-channel with an
    # exact 0/1 matmul; the fold matrix is generated in-kernel (no DMA) from iota.
    g = (lax.broadcasted_iota(jnp.int32, (lanes, c), 0) % c
         == lax.broadcasted_iota(jnp.int32, (lanes, c), 1)).astype(f32)
    s1c = jnp.dot(s1, g, preferred_element_type=f32, precision=hp)   # (1, C)
    s2c = jnp.dot(s2, g, preferred_element_type=f32, precision=hp)   # (1, C)

    inv_cnt = 1.0 / count
    mean = s1c * inv_cnt
    var = s2c * inv_cnt - mean * mean            # biased variance (train-mode BN), f32
    scale_c = gamma_ref[...] * lax.rsqrt(var + BN_EPS)
    # Conv bias dropped on purpose: it cancels exactly in (conv - batch_mean).
    shift_c = beta_ref[...] - mean * scale_c

    # Tile per-channel scale/shift back onto the interleaved lane layout (exact 0/1 matmul).
    gt = (lax.broadcasted_iota(jnp.int32, (c, lanes), 0)
          == lax.broadcasted_iota(jnp.int32, (c, lanes), 1) % c).astype(f32)
    scale_t = jnp.dot(scale_c, gt, preferred_element_type=f32, precision=hp)  # (1, 2*Wo*C)
    shift_t = jnp.dot(shift_c, gt, preferred_element_type=f32, precision=hp)  # (1, 2*Wo*C)

    # ---- fused BN affine + ReLU once on the merged slab ----
    y = jnp.maximum(conv * scale_t + shift_t, 0.0)     # (2*N*Ho, 2*Wo*C)

    # ---- 2x2 max-pool = elementwise max over the four tile-aligned quadrant views ----
    o_ref[...] = jnp.maximum(
        jnp.maximum(y[:half_r, :half_l], y[:half_r, half_l:]),
        jnp.maximum(y[half_r:, :half_l], y[half_r:, half_l:]))


def first_layer_forward(x_nchw, w_conv, b_conv, gamma, beta):
    """PyTorch-NCHW FirstLayer forward.  x: (N,1,H,W) f32 -> (N,C,H/2,W/2) f32.

    NOTE: b_conv is accepted for interface parity but intentionally unused — under
    training-mode BatchNorm the conv bias cancels exactly in (conv - batch_mean).
    """
    del b_conv  # cancels under train-mode BN (see note above)
    N, Cin, H, W = x_nchw.shape
    assert Cin == 1 and H % 2 == 0 and W % 2 == 0
    C = w_conv.shape[0]
    Ho, Wo = H // 2, W // 2
    K = 3 * (W + 2)                       # contraction dim: 3 stacked padded rows
    KP = ((K + 63) // 64) * 64            # small pad only (review: 64, not 128)

    f32 = jnp.float32
    x = x_nchw.astype(f32)

    # ---- glue: H-only im2col of the zero-padded input, rows split by output-h parity ----
    xp = jnp.pad(x[:, 0, :, :], ((0, 0), (1, 1), (1, 1)))                # (N, H+2, W+2)
    win = jnp.stack([xp[:, dy:dy + H, :] for dy in range(3)], axis=2)    # (N, H, 3, W+2)
    lfull = win.reshape(N, H, K)                                         # (N, H, K)
    l0 = lfull[:, 0::2, :].reshape(N * Ho, K)        # even output rows, (n, h2) order
    l1 = lfull[:, 1::2, :].reshape(N * Ho, K)        # odd output rows
    lmat = jnp.pad(jnp.concatenate([l0, l1], axis=0), ((0, 0), (0, KP - K)))

    # ---- glue: banded/Toeplitz weight matrix via ONE einsum with a numpy 0/1 constant ----
    # sel[k, row, b*Wo + w2] = 1  where row = dy*(W+2) + 2*w2 + b + dx and k = dy*3 + dx.
    sel = np.zeros((9, KP, 2 * Wo), np.float32)
    for dy in range(3):
        for dx in range(3):
            k = dy * 3 + dx
            for b in range(2):
                for w2 in range(Wo):
                    sel[k, dy * (W + 2) + 2 * w2 + b + dx, b * Wo + w2] = 1.0
    w9 = w_conv.reshape(C, 9).T.astype(f32)                               # (9, C)
    rmat = jnp.einsum("krq,kc->rqc", jnp.asarray(sel), w9).reshape(KP, 2 * Wo * C)

    gamma2 = gamma.reshape(1, C).astype(f32)
    beta2 = beta.reshape(1, C).astype(f32)

    vmem = pl.BlockSpec(memory_space=pltpu.MemorySpace.VMEM)
    kernel = functools.partial(_first_layer_kernel, count=N * H * W)
    out2d = pl.pallas_call(
        kernel,
        out_shape=jax.ShapeDtypeStruct((N * Ho, Wo * C), f32),
        in_specs=[vmem] * 4,
        out_specs=vmem,
    )(lmat, rmat, gamma2, beta2)

    # Back to NCHW: rows are (n, h2) n-major, cols are (w2, c) w2-major.
    return out2d.reshape(N, Ho, Wo, C).transpose(0, 3, 1, 2)


def reference_forward(x, w, b, gamma, beta):
    """Pure-JAX reference with identical semantics (numerical sanity check)."""
    conv = jax.lax.conv_general_dilated(
        x, w, window_strides=(1, 1), padding=((1, 1), (1, 1)),
        dimension_numbers=("NCHW", "OIHW", "NCHW"))
    conv = conv + b[None, :, None, None]
    mean = conv.mean(axis=(0, 2, 3), keepdims=True)
    var = ((conv - mean) ** 2).mean(axis=(0, 2, 3), keepdims=True)
    y = (conv - mean) * jax.lax.rsqrt(var + BN_EPS)
    y = y * gamma[None, :, None, None] + beta[None, :, None, None]
    r = jnp.maximum(y, 0.0)
    return jax.lax.reduce_window(r, -jnp.inf, jax.lax.max,
                                 (1, 1, 2, 2), (1, 1, 2, 2), "VALID")


if __name__ == "__main__":
    num_channels = 32
    N, Cin, H, W = 2, 1, 16, 16

    key = jax.random.PRNGKey(0)
    k_x, k_w, k_b, k_g, k_be = jax.random.split(key, 5)

    x = jax.random.normal(k_x, (N, Cin, H, W), dtype=jnp.float32)
    w_conv = 0.2 * jax.random.normal(k_w, (num_channels, 1, 3, 3), dtype=jnp.float32)
    b_conv = 0.1 * jax.random.normal(k_b, (num_channels,), dtype=jnp.float32)
    gamma = 1.0 + 0.1 * jax.random.normal(k_g, (num_channels,), dtype=jnp.float32)
    beta = 0.1 * jax.random.normal(k_be, (num_channels,), dtype=jnp.float32)

    out = jax.jit(first_layer_forward)(x, w_conv, b_conv, gamma, beta)
    out = jax.block_until_ready(out)

    ref = jax.block_until_ready(reference_forward(x, w_conv, b_conv, gamma, beta))

    assert out.shape == (N, num_channels, H // 2, W // 2), out.shape
    assert np.allclose(np.asarray(out), np.asarray(ref), atol=2e-3, rtol=2e-3), \
        "Pallas kernel output does not match reference"

    print("KERNEL_OK")
</pallas_src>

<mosaic_0001>
module attributes {stable_mosaic.version = 11 : i64} {
  func.func @_first_layer_kernel(%arg0: memref<32x64xf32, #tpu.memory_space<vmem>>, %arg1: memref<64x512xf32, #tpu.memory_space<vmem>>, %arg2: memref<1x32xf32, #tpu.memory_space<vmem>>, %arg3: memref<1x32xf32, #tpu.memory_space<vmem>>, %arg4: memref<16x256xf32, #tpu.memory_space<vmem>>) attributes {dimension_semantics = [], scalar_prefetch = 0 : i64, scratch_operands = 0 : i64, tpu.core_type = #tpu.core_type<tc>} {
    %c0 = arith.constant 0 : index
    %c0_0 = arith.constant 0 : index
    %0 = vector.load %arg0[%c0, %c0_0] : memref<32x64xf32, #tpu.memory_space<vmem>>, vector<32x64xf32>
    %c0_1 = arith.constant 0 : index
    %c0_2 = arith.constant 0 : index
    %1 = vector.load %arg1[%c0_1, %c0_2] : memref<64x512xf32, #tpu.memory_space<vmem>>, vector<64x512xf32>
    %cst = arith.constant dense<0.000000e+00> : vector<32x512xf32>
    %2 = tpu.matmul %0, %1, %cst {dimension_numbers = #tpu.dot_dimension_numbers<[1], [0], [0], [1], [0, 0, 1, 1], [], []>, precision = #tpu.contract_precision<fp32>} : vector<32x64xf32>, vector<64x512xf32>, vector<32x512xf32> -> vector<32x512xf32>
    %cst_3 = arith.constant dense<0.000000e+00> : vector<512xf32>
    %3 = vector.multi_reduction <add>, %2, %cst_3 [0] : vector<32x512xf32> to vector<512xf32>
    %4 = vector.shape_cast %3 : vector<512xf32> to vector<1x512xf32>
    %5 = arith.mulf %2, %2 : vector<32x512xf32>
    %cst_4 = arith.constant dense<0.000000e+00> : vector<512xf32>
    %6 = vector.multi_reduction <add>, %5, %cst_4 [0] : vector<32x512xf32> to vector<512xf32>
    %7 = vector.shape_cast %6 : vector<512xf32> to vector<1x512xf32>
    %8 = tpu.iota {dimensions = array<i32: 0>} : vector<512x32xi32>
    %c32_i32 = arith.constant 32 : i32
    %c0_i32 = arith.constant 0 : i32
    %9 = arith.cmpi eq, %c32_i32, %c0_i32 : i32
    %c1_i32 = arith.constant 1 : i32
    %10 = arith.select %9, %c1_i32, %c32_i32 : i32
    %11 = vector.broadcast %10 : i32 to vector<512x32xi32>
    %12 = arith.remsi %8, %11 : vector<512x32xi32>
    %c0_i32_5 = arith.constant 0 : i32
    %13 = vector.broadcast %c0_i32_5 : i32 to vector<512x32xi32>
    %14 = arith.cmpi ne, %12, %13 : vector<512x32xi32>
    %c0_i32_6 = arith.constant 0 : i32
    %15 = vector.broadcast %c0_i32_6 : i32 to vector<512x32xi32>
    %16 = arith.cmpi slt, %12, %15 : vector<512x32xi32>
    %c0_i32_7 = arith.constant 0 : i32
    %17 = arith.cmpi slt, %10, %c0_i32_7 : i32
    %18 = vector.broadcast %17 : i1 to vector<512x32xi1>
    %19 = vector.broadcast %18 : vector<512x32xi1> to vector<512x32xi1>
    %20 = arith.xori %16, %19 : vector<512x32xi1>
    %21 = arith.andi %20, %14 : vector<512x32xi1>
    %22 = vector.broadcast %10 : i32 to vector<512x32xi32>
    %23 = arith.addi %12, %22 : vector<512x32xi32>
    %24 = arith.select %21, %23, %12 : vector<512x32xi1>, vector<512x32xi32>
    %25 = tpu.iota {dimensions = array<i32: 1>} : vector<512x32xi32>
    %26 = arith.cmpi eq, %24, %25 : vector<512x32xi32>
    %27 = arith.extui %26 : vector<512x32xi1> to vector<512x32xi32>
    %28 = arith.sitofp %27 : vector<512x32xi32> to vector<512x32xf32>
    %cst_8 = arith.constant dense<0.000000e+00> : vector<1x32xf32>
    %29 = tpu.matmul %4, %28, %cst_8 {dimension_numbers = #tpu.dot_dimension_numbers<[1], [0], [0], [1], [0, 0, 1, 1], [], []>, precision = #tpu.contract_precision<fp32>} : vector<1x512xf32>, vector<512x32xf32>, vector<1x32xf32> -> vector<1x32xf32>
    %cst_9 = arith.constant dense<0.000000e+00> : vector<1x32xf32>
    %30 = tpu.matmul %7, %28, %cst_9 {dimension_numbers = #tpu.dot_dimension_numbers<[1], [0], [0], [1], [0, 0, 1, 1], [], []>, precision = #tpu.contract_precision<fp32>} : vector<1x512xf32>, vector<512x32xf32>, vector<1x32xf32> -> vector<1x32xf32>
    %cst_10 = arith.constant 0.001953125 : f32
    %31 = vector.broadcast %cst_10 : f32 to vector<1x32xf32>
    %32 = arith.mulf %29, %31 : vector<1x32xf32>
    %cst_11 = arith.constant 0.001953125 : f32
    %33 = vector.broadcast %cst_11 : f32 to vector<1x32xf32>
    %34 = arith.mulf %30, %33 : vector<1x32xf32>
    %35 = arith.mulf %32, %32 : vector<1x32xf32>
    %36 = arith.subf %34, %35 : vector<1x32xf32>
    %c0_12 = arith.constant 0 : index
    %c0_13 = arith.constant 0 : index
    %37 = vector.load %arg2[%c0_12, %c0_13] : memref<1x32xf32, #tpu.memory_space<vmem>>, vector<1x32xf32>
    %cst_14 = arith.constant 9.99999974E-6 : f32
    %38 = vector.broadcast %cst_14 : f32 to vector<1x32xf32>
    %39 = arith.addf %36, %38 : vector<1x32xf32>
    %40 = math.rsqrt %39 : vector<1x32xf32>
    %41 = arith.mulf %37, %40 : vector<1x32xf32>
    %c0_15 = arith.constant 0 : index
    %c0_16 = arith.constant 0 : index
    %42 = vector.load %arg3[%c0_15, %c0_16] : memref<1x32xf32, #tpu.memory_space<vmem>>, vector<1x32xf32>
    %43 = arith.mulf %32, %41 : vector<1x32xf32>
    %44 = arith.subf %42, %43 : vector<1x32xf32>
    %45 = tpu.iota {dimensions = array<i32: 0>} : vector<32x512xi32>
    %46 = tpu.iota {dimensions = array<i32: 1>} : vector<32x512xi32>
    %c32_i32_17 = arith.constant 32 : i32
    %c0_i32_18 = arith.constant 0 : i32
    %47 = arith.cmpi eq, %c32_i32_17, %c0_i32_18 : i32
    %c1_i32_19 = arith.constant 1 : i32
    %48 = arith.select %47, %c1_i32_19, %c32_i32_17 : i32
    %49 = vector.broadcast %48 : i32 to vector<32x512xi32>
    %50 = arith.remsi %46, %49 : vector<32x512xi32>
    %c0_i32_20 = arith.constant 0 : i32
    %51 = vector.broadcast %c0_i32_20 : i32 to vector<32x512xi32>
    %52 = arith.cmpi ne, %50, %51 : vector<32x512xi32>
    %c0_i32_21 = arith.constant 0 : i32
    %53 = vector.broadcast %c0_i32_21 : i32 to vector<32x512xi32>
    %54 = arith.cmpi slt, %50, %53 : vector<32x512xi32>
    %c0_i32_22 = arith.constant 0 : i32
    %55 = arith.cmpi slt, %48, %c0_i32_22 : i32
    %56 = vector.broadcast %55 : i1 to vector<32x512xi1>
    %57 = vector.broadcast %56 : vector<32x512xi1> to vector<32x512xi1>
    %58 = arith.xori %54, %57 : vector<32x512xi1>
    %59 = arith.andi %58, %52 : vector<32x512xi1>
    %60 = vector.broadcast %48 : i32 to vector<32x512xi32>
    %61 = arith.addi %50, %60 : vector<32x512xi32>
    %62 = arith.select %59, %61, %50 : vector<32x512xi1>, vector<32x512xi32>
    %63 = arith.cmpi eq, %45, %62 : vector<32x512xi32>
    %64 = arith.extui %63 : vector<32x512xi1> to vector<32x512xi32>
    %65 = arith.sitofp %64 : vector<32x512xi32> to vector<32x512xf32>
    %cst_23 = arith.constant dense<0.000000e+00> : vector<1x512xf32>
    %66 = tpu.matmul %41, %65, %cst_23 {dimension_numbers = #tpu.dot_dimension_numbers<[1], [0], [0], [1], [0, 0, 1, 1], [], []>, precision = #tpu.contract_precision<fp32>} : vector<1x32xf32>, vector<32x512xf32>, vector<1x512xf32> -> vector<1x512xf32>
    %cst_24 = arith.constant dense<0.000000e+00> : vector<1x512xf32>
    %67 = tpu.matmul %44, %65, %cst_24 {dimension_numbers = #tpu.dot_dimension_numbers<[1], [0], [0], [1], [0, 0, 1, 1], [], []>, precision = #tpu.contract_precision<fp32>} : vector<1x32xf32>, vector<32x512xf32>, vector<1x512xf32> -> vector<1x512xf32>
    %68 = vector.broadcast %66 : vector<1x512xf32> to vector<32x512xf32>
    %69 = arith.mulf %2, %68 : vector<32x512xf32>
    %70 = vector.broadcast %67 : vector<1x512xf32> to vector<32x512xf32>
    %71 = arith.addf %69, %70 : vector<32x512xf32>
    %cst_25 = arith.constant 0.000000e+00 : f32
    %72 = vector.broadcast %cst_25 : f32 to vector<32x512xf32>
    %73 = arith.maximumf %71, %72 : vector<32x512xf32>
    %74 = vector.extract_strided_slice %73 {offsets = [0, 0], sizes = [16, 256], strides = [1, 1]} : vector<32x512xf32> to vector<16x256xf32>
    %75 = vector.extract_strided_slice %73 {offsets = [0, 256], sizes = [16, 256], strides = [1, 1]} : vector<32x512xf32> to vector<16x256xf32>
    %76 = arith.maximumf %74, %75 : vector<16x256xf32>
    %77 = vector.extract_strided_slice %73 {offsets = [16, 0], sizes = [16, 256], strides = [1, 1]} : vector<32x512xf32> to vector<16x256xf32>
    %78 = vector.extract_strided_slice %73 {offsets = [16, 256], sizes = [16, 256], strides = [1, 1]} : vector<32x512xf32> to vector<16x256xf32>
    %79 = arith.maximumf %77, %78 : vector<16x256xf32>
    %80 = arith.maximumf %76, %79 : vector<16x256xf32>
    %c0_26 = arith.constant 0 : index
    %c0_27 = arith.constant 0 : index
    %81 = vector.load %arg4[%c0_26, %c0_27] : memref<16x256xf32, #tpu.memory_space<vmem>>, vector<16x256xf32>
    tpu.vector_store %arg4[%c0_26, %c0_27], %80 {strides = array<i32>} : memref<16x256xf32, #tpu.memory_space<vmem>>, vector<16x256xf32>,
    return
  }
}

</mosaic_0001>

<llo_original>
// kernel: first_layer_forward.1
$region0: #{first_layer_forward.1}
  #allocation0 [shape = 'u32[]', space=smem, size = 0x4, offset = 0x4, fixed_abs, tag = 'smem constant byte address 0x4 - core index']
  #allocation1 [shape = 'u32[144,128]{1,0:T(1,128)}', space=vmem, size = 0x12000, scoped, tag = 'internal scratch']
  %s0 = inlined_call_operand.vmem [shape: f32[32,64], index: 0, kind: input, shape index: {}]
  %s1 = inlined_call_operand.vmem [shape: f32[64,512], index: 1, kind: input, shape index: {}]
  %s2 = inlined_call_operand.vmem [shape: f32[1,32], index: 2, kind: input, shape index: {}]
  %s3 = inlined_call_operand.vmem [shape: f32[1,32], index: 3, kind: input, shape index: {}]
  %s4 = inlined_call_operand.vmem [shape: f32[16,256], index: 4, kind: output, shape index: {}]
  %s5 = sld [smem:[#allocation0]]
  $region26: #{first_layer_forward.1} parent=0
    _
  %s7 = ssub.s32 1, %s5
  %s8 = scalar_select 0, %s7, %s5
  // Predicated region
  $region2: #{first_layer_forward.1} parent=0 // pred_check
    _
  $region3: #{first_layer_forward.1} parent=0 // pred_check_branch
    %10 = sbr.rel (0) target = $region5
  $region4: #{first_layer_forward.1} parent=0 // pred_region
    _
  $region5: #{first_layer_forward.1} parent=0 // pred_fallthru
    _
  // Predicated region
  $region6: #{first_layer_forward.1} parent=0 // pred_check
    _
  $region7: #{first_layer_forward.1} parent=0 // pred_check_branch
    %12 = sbr.rel (0) target = $region9
  $region8: #{first_layer_forward.1} parent=0 // pred_region
    _
  $region9: #{first_layer_forward.1} parent=0 // pred_fallthru
    _
  // Predicated region
  $region10: #{first_layer_forward.1} parent=0 // pred_check
    _
  $region11: #{first_layer_forward.1} parent=0 // pred_check_branch
    %14 = sbr.rel (0) target = $region13
  $region12: #{first_layer_forward.1} parent=0 // pred_region
    _
  $region13: #{first_layer_forward.1} parent=0 // pred_fallthru
    _
  // Predicated region
  $region14: #{first_layer_forward.1} parent=0 // pred_check
    _
  $region15: #{first_layer_forward.1} parent=0 // pred_check_branch
    %16 = sbr.rel (0) target = $region17
  $region16: #{first_layer_forward.1} parent=0 // pred_region
    _
  $region17: #{first_layer_forward.1} parent=0 // pred_fallthru
    _
  %v17 = vld [vmem:[%s0] sm:$0xff]
  %v18 = vld [vmem:[%s0 + $0x8] sm:$0xff]
  %v19 = vld [vmem:[%s0 + $0x10] sm:$0xff]
  %v20 = vld [vmem:[%s0 + $0x18] sm:$0xff]
  %v21 = vld [vmem:[%s1] sm:$0xff]
  %v22 = vld [vmem:[%s1 + $0x8] sm:$0xff]
  %v23 = vld [vmem:[%s1 + $0x10] sm:$0xff]
  %v24 = vld [vmem:[%s1 + $0x18] sm:$0xff]
  %v25 = vld [vmem:[%s1 + $0x20] sm:$0xff]
  %v26 = vld [vmem:[%s1 + $0x28] sm:$0xff]
  %v27 = vld [vmem:[%s1 + $0x30] sm:$0xff]
  %v28 = vld [vmem:[%s1 + $0x38] sm:$0xff]
  %v29 = vld [vmem:[%s1 + $0x40] sm:$0xff]
  %v30 = vld [vmem:[%s1 + $0x48] sm:$0xff]
  %v31 = vld [vmem:[%s1 + $0x50] sm:$0xff]
  %v32 = vld [vmem:[%s1 + $0x58] sm:$0xff]
  %v33 = vld [vmem:[%s1 + $0x60] sm:$0xff]
  %v34 = vld [vmem:[%s1 + $0x68] sm:$0xff]
  %v35 = vld [vmem:[%s1 + $0x70] sm:$0xff]
  %v36 = vld [vmem:[%s1 + $0x78] sm:$0xff]
  %v37 = vld [vmem:[%s1 + $0x80] sm:$0xff]
  %v38 = vld [vmem:[%s1 + $0x88] sm:$0xff]
  %v39 = vld [vmem:[%s1 + $0x90] sm:$0xff]
  %v40 = vld [vmem:[%s1 + $0x98] sm:$0xff]
  %v41 = vld [vmem:[%s1 + $0xa0] sm:$0xff]
  %v42 = vld [vmem:[%s1 + $0xa8] sm:$0xff]
  %v43 = vld [vmem:[%s1 + $0xb0] sm:$0xff]
  %v44 = vld [vmem:[%s1 + $0xb8] sm:$0xff]
  %v45 = vld [vmem:[%s1 + $0xc0] sm:$0xff]
  %v46 = vld [vmem:[%s1 + $0xc8] sm:$0xff]
  %v47 = vld [vmem:[%s1 + $0xd0] sm:$0xff]
  %v48 = vld [vmem:[%s1 + $0xd8] sm:$0xff]
  %v49 = vld [vmem:[%s1 + $0xe0] sm:$0xff]
  %v50 = vld [vmem:[%s1 + $0xe8] sm:$0xff]
  %v51 = vld [vmem:[%s1 + $0xf0] sm:$0xff]
  %v52 = vld [vmem:[%s1 + $0xf8] sm:$0xff]
  %vm53 = vcmask 523264
  %v55 = vsel %vm53, %v17, 0
  %v58 = vsel %vm53, %v18, 0
  %v61 = vsel %vm53, %v19, 0
  %v64 = vsel %vm53, %v20, 0
  %v66 = vand.u32 %v22, 4294901760
  %67 = vmatprep.subr.mxu0 %v66
  %v68 = vand.u32 %v21, 4294901760
  %69 = vmatpush1.msra.mxu0 %v68
  %v70 = vand.u32 %v26, 4294901760
  %71 = vmatprep.subr.mxu0 %v70
  %v72 = vand.u32 %v25, 4294901760
  %73 = vmatpush1.msra.mxu0 %v72
  %v74 = vand.u32 %v30, 4294901760
  %75 = vmatprep.subr.mxu0 %v74
  %v76 = vand.u32 %v29, 4294901760
  %77 = vmatpush1.msra.mxu0 %v76
  %v78 = vand.u32 %v34, 4294901760
  %79 = vmatprep.subr.mxu0 %v78
  %v80 = vand.u32 %v33, 4294901760
  %81 = vmatpush1.msra.mxu0 %v80
  %v82 = vand.u32 %v38, 4294901760
  %83 = vmatprep.subr.mxu0 %v82
  %v84 = vand.u32 %v37, 4294901760
  %85 = vmatpush1.msra.mxu0 %v84
  %v86 = vand.u32 %v42, 4294901760
  %87 = vmatprep.subr.mxu0 %v86
  %v88 = vand.u32 %v41, 4294901760
  %89 = vmatpush1.msra.mxu0 %v88
  %v90 = vand.u32 %v46, 4294901760
  %91 = vmatprep.subr.mxu0 %v90
  %v92 = vand.u32 %v45, 4294901760
  %93 = vmatpush1.msra.mxu0 %v92
  %v94 = vand.u32 %v50, 4294901760
  %95 = vmatprep.subr.mxu0 %v94
  %v96 = vand.u32 %v49, 4294901760
  %97 = vmatpush1.msra.mxu0 %v96
  %98 = vmatprep.subr.mxu0 0.0
  %99 = vmatpush1.msra.mxu0 0.0
  %100 = vmatprep.subr.mxu0 0.0
  %101 = vmatpush1.msra.mxu0 0.0
  %102 = vmatprep.subr.mxu0 0.0
  %103 = vmatpush1.msra.mxu0 0.0
  %104 = vmatprep.subr.mxu0 0.0
  %105 = vmatpush1.msra.mxu0 0.0
  %106 = vmatprep.subr.mxu0 0.0
  %107 = vmatpush1.msra.mxu0 0.0
  %108 = vmatprep.subr.mxu0 0.0
  %109 = vmatpush1.msra.mxu0 0.0
  %110 = vmatprep.subr.mxu0 0.0
  %111 = vmatpush1.msra.mxu0 0.0
  %112 = vmatprep.subr.mxu0 0.0
  %113 = vmatpush1.msra.mxu0 0.0
  %114 = vmatprep.subr.mxu0 0.0
  %115 = vmatpush1.msra.mxu0 0.0
  %116 = vmatprep.subr.mxu0 0.0
  %117 = vmatpush1.msra.mxu0 0.0
  %118 = vmatprep.subr.mxu0 0.0
  %119 = vmatpush1.msra.mxu0 0.0
  %120 = vmatprep.subr.mxu0 0.0
  %121 = vmatpush1.msra.mxu0 0.0
  %122 = vmatprep.subr.mxu0 0.0
  %123 = vmatpush1.msra.mxu0 0.0
  %124 = vmatprep.subr.mxu0 0.0
  %125 = vmatpush1.msra.mxu0 0.0
  %126 = vmatprep.subr.mxu0 0.0
  %127 = vmatpush1.msra.mxu0 0.0
  %128 = vmatprep.subr.mxu0 0.0
  %129 = vmatpush1.msra.mxu0 0.0
  %130 = vmatprep.subr.mxu0 0.0
  %131 = vmatpush1.msra.mxu0 0.0
  %132 = vmatprep.subr.mxu0 0.0
  %133 = vmatpush1.msra.mxu0 0.0
  %134 = vmatprep.subr.mxu0 0.0
  %135 = vmatpush1.msra.mxu0 0.0
  %136 = vmatprep.subr.mxu0 0.0
  %137 = vmatpush1.msra.mxu0 0.0
  %138 = vmatprep.subr.mxu0 0.0
  %139 = vmatpush1.msra.mxu0 0.0
  %140 = vmatprep.subr.mxu0 0.0
  %141 = vmatpush1.msra.mxu0 0.0
  %142 = vmatprep.subr.mxu0 0.0
  %143 = vmatpush1.msra.mxu0 0.0
  %144 = vmatprep.subr.mxu0 0.0
  %145 = vmatpush1.msra.mxu0 0.0
  %146 = vmatprep.mubr.f32.mxu0 0.0
  %v147 = vand.u32 %v55, 4294901760
  %v148 = vsub.f32 %v55, %v147
  %v149 = vand.u32 %v148, 4294901760
  %v150 = vsub.f32 %v148, %v149
  %v151 = vand.u32 %v150, 4294901760
  %152 = vmatmul.mubr.f32.gmra.mrb[0].mxu0 %v151
  %v153 = vpop.f32.mrb[0].mxu0
  %v154 = vadd.f32 0.0, %v153
  %v155 = vpop.f32.mrb[0].mxu0
  %v156 = vadd.f32 0.0, %v155
  %157 = vmatprep.mubr.f32.mxu0 0.0
  %v158 = vand.u32 %v58, 4294901760
  %v159 = vsub.f32 %v58, %v158
  %v160 = vand.u32 %v159, 4294901760
  %v161 = vsub.f32 %v159, %v160
  %v162 = vand.u32 %v161, 4294901760
  %163 = vmatmul.mubr.f32.gmra.mrb[0].mxu0 %v162
  %v164 = vpop.f32.mrb[0].mxu0
  %v165 = vadd.f32 0.0, %v164
  %v166 = vpop.f32.mrb[0].mxu0
  %v167 = vadd.f32 0.0, %v166
  %168 = vmatprep.mubr.f32.mxu0 0.0
  %v169 = vand.u32 %v61, 4294901760
  %v170 = vsub.f32 %v61, %v169
  %v171 = vand.u32 %v170, 4294901760
  %v172 = vsub.f32 %v170, %v171
  %v173 = vand.u32 %v172, 4294901760
  %174 = vmatmul.mubr.f32.gmra.mrb[0].mxu0 %v173
  %v175 = vpop.f32.mrb[0].mxu0
  %v176 = vadd.f32 0.0, %v175
  %v177 = vpop.f32.mrb[0].mxu0
  %v178 = vadd.f32 0.0, %v177
  %179 = vmatprep.mubr.f32.mxu0 0.0
  %v180 = vand.u32 %v64, 4294901760
  %v181 = vsub.f32 %v64, %v180
  %v182 = vand.u32 %v181, 4294901760
  %v183 = vsub.f32 %v181, %v182
  %v184 = vand.u32 %v183, 4294901760
  %185 = vmatmul.mubr.f32.gmra.mrb[0].mxu0 %v184
  %v186 = vpop.f32.mrb[0].mxu0
  %v187 = vadd.f32 0.0, %v186
  %v188 = vpop.f32.mrb[0].mxu0
  %v189 = vadd.f32 0.0, %v188
  %190 = vdwg.mxu0
  %v191 = vand.u32 %v22, 4294901760
  %v192 = vsub.f32 %v22, %v191
  %v193 = vand.u32 %v192, 4294901760
  %v194 = vsub.f32 %v192, %v193
  %v195 = vand.u32 %v194, 4294901760
  %196 = vmatprep.subr.mxu0 %v195
  %v197 = vand.u32 %v21, 4294901760
  %v198 = vsub.f32 %v21, %v197
  %v199 = vand.u32 %v198, 4294901760
  %v200 = vsub.f32 %v198, %v199
  %v201 = vand.u32 %v200, 4294901760
  %202 = vmatpush1.msra.mxu0 %v201
  %v203 = vand.u32 %v26, 4294901760
  %v204 = vsub.f32 %v26, %v203
  %v205 = vand.u32 %v204, 4294901760
  %v206 = vsub.f32 %v204, %v205
  %v207 = vand.u32 %v206, 4294901760
  %208 = vmatprep.subr.mxu0 %v207
  %v209 = vand.u32 %v25, 4294901760
  %v210 = vsub.f32 %v25, %v209
  %v211 = vand.u32 %v210, 4294901760
  %v212 = vsub.f32 %v210, %v211
  %v213 = vand.u32 %v212, 4294901760
  %214 = vmatpush1.msra.mxu0 %v213
  %v215 = vand.u32 %v30, 4294901760
  %v216 = vsub.f32 %v30, %v215
  %v217 = vand.u32 %v216, 4294901760
  %v218 = vsub.f32 %v216, %v217
  %v219 = vand.u32 %v218, 4294901760
  %220 = vmatprep.subr.mxu0 %v219
  %v221 = vand.u32 %v29, 4294901760
  %v222 = vsub.f32 %v29, %v221
  %v223 = vand.u32 %v222, 4294901760
  %v224 = vsub.f32 %v222, %v223
  %v225 = vand.u32 %v224, 4294901760
  %226 = vmatpush1.msra.mxu0 %v225
  %v227 = vand.u32 %v34, 4294901760
  %v228 = vsub.f32 %v34, %v227
  %v229 = vand.u32 %v228, 4294901760
  %v230 = vsub.f32 %v228, %v229
  %v231 = vand.u32 %v230, 4294901760
  %232 = vmatprep.subr.mxu0 %v231
  %v233 = vand.u32 %v33, 4294901760
  %v234 = vsub.f32 %v33, %v233
  %v235 = vand.u32 %v234, 4294901760
  %v236 = vsub.f32 %v234, %v235
  %v237 = vand.u32 %v236, 4294901760
  %238 = vmatpush1.msra.mxu0 %v237
  %v239 = vand.u32 %v38, 4294901760
  %v240 = vsub.f32 %v38, %v239
  %v241 = vand.u32 %v240, 4294901760
  %v242 = vsub.f32 %v240, %v241
  %v243 = vand.u32 %v242, 4294901760
  %244 = vmatprep.subr.mxu0 %v243
  %v245 = vand.u32 %v37, 4294901760
  %v246 = vsub.f32 %v37, %v245
  %v247 = vand.u32 %v246, 4294901760
  %v248 = vsub.f32 %v246, %v247
  %v249 = vand.u32 %v248, 4294901760
  %250 = vmatpush1.msra.mxu0 %v249
  %v251 = vand.u32 %v42, 4294901760
  %v252 = vsub.f32 %v42, %v251
  %v253 = vand.u32 %v252, 4294901760
  %v254 = vsub.f32 %v252, %v253
  %v255 = vand.u32 %v254, 4294901760
  %256 = vmatprep.subr.mxu0 %v255
  %v257 = vand.u32 %v41, 4294901760
  %v258 = vsub.f32 %v41, %v257
  %v259 = vand.u32 %v258, 4294901760
  %v260 = vsub.f32 %v258, %v259
  %v261 = vand.u32 %v260, 4294901760
  %262 = vmatpush1.msra.mxu0 %v261
  %v263 = vand.u32 %v46, 4294901760
  %v264 = vsub.f32 %v46, %v263
  %v265 = vand.u32 %v264, 4294901760
  %v266 = vsub.f32 %v264, %v265
  %v267 = vand.u32 %v266, 4294901760
  %268 = vmatprep.subr.mxu0 %v267
  %v269 = vand.u32 %v45, 4294901760
  %v270 = vsub.f32 %v45, %v269
  %v271 = vand.u32 %v270, 4294901760
  %v272 = vsub.f32 %v270, %v271
  %v273 = vand.u32 %v272, 4294901760
  %274 = vmatpush1.msra.mxu0 %v273
  %v275 = vand.u32 %v50, 4294901760
  %v276 = vsub.f32 %v50, %v275
  %v277 = vand.u32 %v276, 4294901760
  %v278 = vsub.f32 %v276, %v277
  %v279 = vand.u32 %v278, 4294901760
  %280 = vmatprep.subr.mxu0 %v279
  %v281 = vand.u32 %v49, 4294901760
  %v282 = vsub.f32 %v49, %v281
  %v283 = vand.u32 %v282, 4294901760
  %v284 = vsub.f32 %v282, %v283
  %v285 = vand.u32 %v284, 4294901760
  %286 = vmatpush1.msra.mxu0 %v285
  %287 = vmatprep.subr.mxu0 0.0
  %288 = vmatpush1.msra.mxu0 0.0
  %289 = vmatprep.subr.mxu0 0.0
  %290 = vmatpush1.msra.mxu0 0.0
  %291 = vmatprep.subr.mxu0 0.0
  %292 = vmatpush1.msra.mxu0 0.0
  %293 = vmatprep.subr.mxu0 0.0
  %294 = vmatpush1.msra.mxu0 0.0
  %295 = vmatprep.subr.mxu0 0.0
  %296 = vmatpush1.msra.mxu0 0.0
  %297 = vmatprep.subr.mxu0 0.0
  %298 = vmatpush1.msra.mxu0 0.0
  %299 = vmatprep.subr.mxu0 0.0
  %300 = vmatpush1.msra.mxu0 0.0
  %301 = vmatprep.subr.mxu0 0.0
  %302 = vmatpush1.msra.mxu0 0.0
  %303 = vmatprep.subr.mxu0 0.0
  %304 = vmatpush1.msra.mxu0 0.0
  %305 = vmatprep.subr.mxu0 0.0
  %306 = vmatpush1.msra.mxu0 0.0
  %307 = vmatprep.subr.mxu0 0.0
  %308 = vmatpush1.msra.mxu0 0.0
  %309 = vmatprep.subr.mxu0 0.0
  %310 = vmatpush1.msra.mxu0 0.0
  %311 = vmatprep.subr.mxu0 0.0
  %312 = vmatpush1.msra.mxu0 0.0
  %313 = vmatprep.subr.mxu0 0.0
  %314 = vmatpush1.msra.mxu0 0.0
  %315 = vmatprep.subr.mxu0 0.0
  %316 = vmatpush1.msra.mxu0 0.0
  %317 = vmatprep.subr.mxu0 0.0
  %318 = vmatpush1.msra.mxu0 0.0
  %319 = vmatprep.subr.mxu0 0.0
  %320 = vmatpush1.msra.mxu0 0.0
  %321 = vmatprep.subr.mxu0 0.0
  %322 = vmatpush1.msra.mxu0 0.0
  %323 = vmatprep.subr.mxu0 0.0
  %324 = vmatpush1.msra.mxu0 0.0
  %325 = vmatprep.subr.mxu0 0.0
  %326 = vmatpush1.msra.mxu0 0.0
  %327 = vmatprep.subr.mxu0 0.0
  %328 = vmatpush1.msra.mxu0 0.0
  %329 = vmatprep.subr.mxu0 0.0
  %330 = vmatpush1.msra.mxu0 0.0
  %331 = vmatprep.subr.mxu0 0.0
  %332 = vmatpush1.msra.mxu0 0.0
  %333 = vmatprep.subr.mxu0 0.0
  %334 = vmatpush1.msra.mxu0 0.0
  %335 = vmatprep.mubr.f32.mxu0 0.0
  %v336 = vand.u32 %v55, 4294901760
  %337 = vmatmul.mubr.f32.gmra.mrb[0].mxu0 %v336
  %v338 = vpop.f32.mrb[0].mxu0
  %v339 = vadd.f32 %v154, %v338
  %v340 = vpop.f32.mrb[0].mxu0
  %v341 = vadd.f32 %v156, %v340
  %342 = vmatprep.mubr.f32.mxu0 0.0
  %v343 = vand.u32 %v58, 4294901760
  %344 = vmatmul.mubr.f32.gmra.mrb[0].mxu0 %v343
  %v345 = vpop.f32.mrb[0].mxu0
  %v346 = vadd.f32 %v165, %v345
  %v347 = vpop.f32.mrb[0].mxu0
  %v348 = vadd.f32 %v167, %v347
  %349 = vmatprep.mubr.f32.mxu0 0.0
  %v350 = vand.u32 %v61, 4294901760
  %351 = vmatmul.mubr.f32.gmra.mrb[0].mxu0 %v350
  %v352 = vpop.f32.mrb[0].mxu0
  %v353 = vadd.f32 %v176, %v352
  %v354 = vpop.f32.mrb[0].mxu0
  %v355 = vadd.f32 %v178, %v354
  %356 = vmatprep.mubr.f32.mxu0 0.0
  %v357 = vand.u32 %v64, 4294901760
  %358 = vmatmul.mubr.f32.gmra.mrb[0].mxu0 %v357
  %v359 = vpop.f32.mrb[0].mxu0
  %v360 = vadd.f32 %v187, %v359
  %v361 = vpop.f32.mrb[0].mxu0
  %v362 = vadd.f32 %v189, %v361
  %363 = vdwg.mxu0
  %v364 = vand.u32 %v22, 4294901760
  %v365 = vsub.f32 %v22, %v364
  %366 = vmatprep.subr.mxu0 %v365
  %v367 = vand.u32 %v21, 4294901760
  %v368 = vsub.f32 %v21, %v367
  %369 = vmatpush1.msra.mxu0 %v368
  %v370 = vand.u32 %v26, 4294901760
  %v371 = vsub.f32 %v26, %v370
  %372 = vmatprep.subr.mxu0 %v371
  %v373 = vand.u32 %v25, 4294901760
  %v374 = vsub.f32 %v25, %v373
  %375 = vmatpush1.msra.mxu0 %v374
  %v376 = vand.u32 %v30, 4294901760
  %v377 = vsub.f32 %v30, %v376
  %378 = vmatprep.subr.mxu0 %v377
  %v379 = vand.u32 %v29, 4294901760
  %v380 = vsub.f32 %v29, %v379
  %381 = vmatpush1.msra.mxu0 %v380
  %v382 = vand.u32 %v34, 4294901760
  %v383 = vsub.f32 %v34, %v382
  %384 = vmatprep.subr.mxu0 %v383
  %v385 = vand.u32 %v33, 4294901760
  %v386 = vsub.f32 %v33, %v385
  %387 = vmatpush1.msra.mxu0 %v386
  %v388 = vand.u32 %v38, 4294901760
  %v389 = vsub.f32 %v38, %v388
  %390 = vmatprep.subr.mxu0 %v389
  %v391 = vand.u32 %v37, 4294901760
  %v392 = vsub.f32 %v37, %v391
  %393 = vmatpush1.msra.mxu0 %v392
  %v394 = vand.u32 %v42, 4294901760
  %v395 = vsub.f32 %v42, %v394
  %396 = vmatprep.subr.mxu0 %v395
  %v397 = vand.u32 %v41, 4294901760
  %v398 = vsub.f32 %v41, %v397
  %399 = vmatpush1.msra.mxu0 %v398
  %v400 = vand.u32 %v46, 4294901760
  %v401 = vsub.f32 %v46, %v400
  %402 = vmatprep.subr.mxu0 %v401
  %v403 = vand.u32 %v45, 4294901760
  %v404 = vsub.f32 %v45, %v403
  %405 = vmatpush1.msra.mxu0 %v404
  %v406 = vand.u32 %v50, 4294901760
  %v407 = vsub.f32 %v50, %v406
  %408 = vmatprep.subr.mxu0 %v407
  %v409 = vand.u32 %v49, 4294901760
  %v410 = vsub.f32 %v49, %v409
  %411 = vmatpush1.msra.mxu0 %v410
  %412 = vmatprep.subr.mxu0 0.0
  %413 = vmatpush1.msra.mxu0 0.0
  %414 = vmatprep.subr.mxu0 0.0
  %415 = vmatpush1.msra.mxu0 0.0
  %416 = vmatprep.subr.mxu0 0.0
  %417 = vmatpush1.msra.mxu0 0.0
  %418 = vmatprep.subr.mxu0 0.0
  %419 = vmatpush1.msra.mxu0 0.0
  %420 = vmatprep.subr.mxu0 0.0
  %421 = vmatpush1.msra.mxu0 0.0
  %422 = vmatprep.subr.mxu0 0.0
  %423 = vmatpush1.msra.mxu0 0.0
  %424 = vmatprep.subr.mxu0 0.0
  %425 = vmatpush1.msra.mxu0 0.0
  %426 = vmatprep.subr.mxu0 0.0
  %427 = vmatpush1.msra.mxu0 0.0
  %428 = vmatprep.subr.mxu0 0.0
  %429 = vmatpush1.msra.mxu0 0.0
  %430 = vmatprep.subr.mxu0 0.0
  %431 = vmatpush1.msra.mxu0 0.0
  %432 = vmatprep.subr.mxu0 0.0
  %433 = vmatpush1.msra.mxu0 0.0
  %434 = vmatprep.subr.mxu0 0.0
  %435 = vmatpush1.msra.mxu0 0.0
  %436 = vmatprep.subr.mxu0 0.0
  %437 = vmatpush1.msra.mxu0 0.0
  %438 = vmatprep.subr.mxu0 0.0
  %439 = vmatpush1.msra.mxu0 0.0
  %440 = vmatprep.subr.mxu0 0.0
  %441 = vmatpush1.msra.mxu0 0.0
  %442 = vmatprep.subr.mxu0 0.0
  %443 = vmatpush1.msra.mxu0 0.0
  %444 = vmatprep.subr.mxu0 0.0
  %445 = vmatpush1.msra.mxu0 0.0
  %446 = vmatprep.subr.mxu0 0.0
  %447 = vmatpush1.msra.mxu0 0.0
  %448 = vmatprep.subr.mxu0 0.0
  %449 = vmatpush1.msra.mxu0 0.0
  %450 = vmatprep.subr.mxu0 0.0
  %451 = vmatpush1.msra.mxu0 0.0
  %452 = vmatprep.subr.mxu0 0.0
  %453 = vmatpush1.msra.mxu0 0.0
  %454 = vmatprep.subr.mxu0 0.0
  %455 = vmatpush1.msra.mxu0 0.0
  %456 = vmatprep.subr.mxu0 0.0
  %457 = vmatpush1.msra.mxu0 0.0
  %458 = vmatprep.subr.mxu0 0.0
  %459 = vmatpush1.msra.mxu0 0.0
  %460 = vmatprep.mubr.f32.mxu0 0.0
  %v461 = vand.u32 %v55, 4294901760
  %v462 = vsub.f32 %v55, %v461
  %463 = vmatmul.mubr.f32.gmra.mrb[0].mxu0 %v462
  %v464 = vpop.f32.mrb[0].mxu0
  %v465 = vadd.f32 %v339, %v464
  %v466 = vpop.f32.mrb[0].mxu0
  %v467 = vadd.f32 %v341, %v466
  %468 = vmatprep.mubr.f32.mxu0 0.0
  %v469 = vand.u32 %v58, 4294901760
  %v470 = vsub.f32 %v58, %v469
  %471 = vmatmul.mubr.f32.gmra.mrb[0].mxu0 %v470
  %v472 = vpop.f32.mrb[0].mxu0
  %v473 = vadd.f32 %v346, %v472
  %v474 = vpop.f32.mrb[0].mxu0
  %v475 = vadd.f32 %v348, %v474
  %476 = vmatprep.mubr.f32.mxu0 0.0
  %v477 = vand.u32 %v61, 4294901760
  %v478 = vsub.f32 %v61, %v477
  %479 = vmatmul.mubr.f32.gmra.mrb[0].mxu0 %v478
  %v480 = vpop.f32.mrb[0].mxu0
  %v481 = vadd.f32 %v353, %v480
  %v482 = vpop.f32.mrb[0].mxu0
  %v483 = vadd.f32 %v355, %v482
  %484 = vmatprep.mubr.f32.mxu0 0.0
  %v485 = vand.u32 %v64, 4294901760
  %v486 = vsub.f32 %v64, %v485
  %487 = vmatmul.mubr.f32.gmra.mrb[0].mxu0 %v486
  %v488 = vpop.f32.mrb[0].mxu0
  %v489 = vadd.f32 %v360, %v488
  %v490 = vpop.f32.mrb[0].mxu0
  %v491 = vadd.f32 %v362, %v490
  %492 = vdwg.mxu0
  %v493 = vand.u32 %v22, 4294901760
  %494 = vmatprep.subr.mxu0 %v493
  %v495 = vand.u32 %v21, 4294901760
  %496 = vmatpush1.msra.mxu0 %v495
  %v497 = vand.u32 %v26, 4294901760
  %498 = vmatprep.subr.mxu0 %v497
  %v499 = vand.u32 %v25, 4294901760
  %500 = vmatpush1.msra.mxu0 %v499
  %v501 = vand.u32 %v30, 4294901760
  %502 = vmatprep.subr.mxu0 %v501
  %v503 = vand.u32 %v29, 4294901760
  %504 = vmatpush1.msra.mxu0 %v503
  %v505 = vand.u32 %v34, 4294901760
  %506 = vmatprep.subr.mxu0 %v505
  %v507 = vand.u32 %v33, 4294901760
  %508 = vmatpush1.msra.mxu0 %v507
  %v509 = vand.u32 %v38, 4294901760
  %510 = vmatprep.subr.mxu0 %v509
  %v511 = vand.u32 %v37, 4294901760
  %512 = vmatpush1.msra.mxu0 %v511
  %v513 = vand.u32 %v42, 4294901760
  %514 = vmatprep.subr.mxu0 %v513
  %v515 = vand.u32 %v41, 4294901760
  %516 = vmatpush1.msra.mxu0 %v515
  %v517 = vand.u32 %v46, 4294901760
  %518 = vmatprep.subr.mxu0 %v517
  %v519 = vand.u32 %v45, 4294901760
  %520 = vmatpush1.msra.mxu0 %v519
  %v521 = vand.u32 %v50, 4294901760
  %522 = vmatprep.subr.mxu0 %v521
  %v523 = vand.u32 %v49, 4294901760
  %524 = vmatpush1.msra.mxu0 %v523
  %525 = vmatprep.subr.mxu0 0.0
  %526 = vmatpush1.msra.mxu0 0.0
  %527 = vmatprep.subr.mxu0 0.0
  %528 = vmatpush1.msra.mxu0 0.0
  %529 = vmatprep.subr.mxu0 0.0
  %530 = vmatpush1.msra.mxu0 0.0
  %531 = vmatprep.subr.mxu0 0.0
  %532 = vmatpush1.msra.mxu0 0.0
  %533 = vmatprep.subr.mxu0 0.0
  %534 = vmatpush1.msra.mxu0 0.0
  %535 = vmatprep.subr.mxu0 0.0
  %536 = vmatpush1.msra.mxu0 0.0
  %537 = vmatprep.subr.mxu0 0.0
  %538 = vmatpush1.msra.mxu0 0.0
  %539 = vmatprep.subr.mxu0 0.0
  %540 = vmatpush1.msra.mxu0 0.0
  %541 = vmatprep.subr.mxu0 0.0
  %542 = vmatpush1.msra.mxu0 0.0
  %543 = vmatprep.subr.mxu0 0.0
  %544 = vmatpush1.msra.mxu0 0.0
  %545 = vmatprep.subr.mxu0 0.0
  %546 = vmatpush1.msra.mxu0 0.0
  %547 = vmatprep.subr.mxu0 0.0
  %548 = vmatpush1.msra.mxu0 0.0
  %549 = vmatprep.subr.mxu0 0.0
  %550 = vmatpush1.msra.mxu0 0.0
  %551 = vmatprep.subr.mxu0 0.0
  %552 = vmatpush1.msra.mxu0 0.0
  %553 = vmatprep.subr.mxu0 0.0
  %554 = vmatpush1.msra.mxu0 0.0
  %555 = vmatprep.subr.mxu0 0.0
  %556 = vmatpush1.msra.mxu0 0.0
  %557 = vmatprep.subr.mxu0 0.0
  %558 = vmatpush1.msra.mxu0 0.0
  %559 = vmatprep.subr.mxu0 0.0
  %560 = vmatpush1.msra.mxu0 0.0
  %561 = vmatprep.subr.mxu0 0.0
  %562 = vmatpush1.msra.mxu0 0.0
  %563 = vmatprep.subr.mxu0 0.0
  %564 = vmatpush1.msra.mxu0 0.0
  %565 = vmatprep.subr.mxu0 0.0
  %566 = vmatpush1.msra.mxu0 0.0
  %567 = vmatprep.subr.mxu0 0.0
  %568 = vmatpush1.msra.mxu0 0.0
  %569 = vmatprep.subr.mxu0 0.0
  %570 = vmatpush1.msra.mxu0 0.0
  %571 = vmatprep.subr.mxu0 0.0
  %572 = vmatpush1.msra.mxu0 0.0
  %573 = vmatprep.mubr.f32.mxu0 0.0
  %v574 = vand.u32 %v55, 4294901760
  %v575 = vsub.f32 %v55, %v574
  %v576 = vand.u32 %v575, 4294901760
  %577 = vmatmul.mubr.f32.gmra.mrb[0].mxu0 %v576
  %v578 = vpop.f32.mrb[0].mxu0
  %v579 = vadd.f32 %v465, %v578
  %v580 = vpop.f32.mrb[0].mxu0
  %v581 = vadd.f32 %v467, %v580
  %582 = vmatprep.mubr.f32.mxu0 0.0
  %v583 = vand.u32 %v58, 4294901760
  %v584 = vsub.f32 %v58, %v583
  %v585 = vand.u32 %v584, 4294901760
  %586 = vmatmul.mubr.f32.gmra.mrb[0].mxu0 %v585
  %v587 = vpop.f32.mrb[0].mxu0
  %v588 = vadd.f32 %v473, %v587
  %v589 = vpop.f32.mrb[0].mxu0
  %v590 = vadd.f32 %v475, %v589
  %591 = vmatprep.mubr.f32.mxu0 0.0
  %v592 = vand.u32 %v61, 4294901760
  %v593 = vsub.f32 %v61, %v592
  %v594 = vand.u32 %v593, 4294901760
  %595 = vmatmul.mubr.f32.gmra.mrb[0].mxu0 %v594
  %v596 = vpop.f32.mrb[0].mxu0
  %v597 = vadd.f32 %v481, %v596
  %v598 = vpop.f32.mrb[0].mxu0
  %v599 = vadd.f32 %v483, %v598
  %600 = vmatprep.mubr.f32.mxu0 0.0
  %v601 = vand.u32 %v64, 4294901760
  %v602 = vsub.f32 %v64, %v601
  %v603 = vand.u32 %v602, 4294901760
  %604 = vmatmul.mubr.f32.gmra.mrb[0].mxu0 %v603
  %v605 = vpop.f32.mrb[0].mxu0
  %v606 = vadd.f32 %v489, %v605
  %v607 = vpop.f32.mrb[0].mxu0
  %v608 = vadd.f32 %v491, %v607
  %609 = vdwg.mxu0
  %v610 = vand.u32 %v22, 4294901760
  %v611 = vsub.f32 %v22, %v610
  %v612 = vand.u32 %v611, 4294901760
  %613 = vmatprep.subr.mxu0 %v612
  %v614 = vand.u32 %v21, 4294901760
  %v615 = vsub.f32 %v21, %v614
  %v616 = vand.u32 %v615, 4294901760
  %617 = vmatpush1.msra.mxu0 %v616
  %v618 = vand.u32 %v26, 4294901760
  %v619 = vsub.f32 %v26, %v618
  %v620 = vand.u32 %v619, 4294901760
  %621 = vmatprep.subr.mxu0 %v620
  %v622 = vand.u32 %v25, 4294901760
  %v623 = vsub.f32 %v25, %v622
  %v624 = vand.u32 %v623, 4294901760
  %625 = vmatpush1.msra.mxu0 %v624
  %v626 = vand.u32 %v30, 4294901760
  %v627 = vsub.f32 %v30, %v626
  %v628 = vand.u32 %v627, 4294901760
  %629 = vmatprep.subr.mxu0 %v628
  %v630 = vand.u32 %v29, 4294901760
  %v631 = vsub.f32 %v29, %v630
  %v632 = vand.u32 %v631, 4294901760
  %633 = vmatpush1.msra.mxu0 %v632
  %v634 = vand.u32 %v34, 4294901760
  %v635 = vsub.f32 %v34, %v634
  %v636 = vand.u32 %v635, 4294901760
  %637 = vmatprep.subr.mxu0 %v636
  %v638 = vand.u32 %v33, 4294901760
  %v639 = vsub.f32 %v33, %v638
  %v640 = vand.u32 %v639, 4294901760
  %641 = vmatpush1.msra.mxu0 %v640
  %v642 = vand.u32 %v38, 4294901760
  %v643 = vsub.f32 %v38, %v642
  %v644 = vand.u32 %v643, 4294901760
  %645 = vmatprep.subr.mxu0 %v644
  %v646 = vand.u32 %v37, 4294901760
  %v647 = vsub.f32 %v37, %v646
  %v648 = vand.u32 %v647, 4294901760
  %649 = vmatpush1.msra.mxu0 %v648
  %v650 = vand.u32 %v42, 4294901760
  %v651 = vsub.f32 %v42, %v650
  %v652 = vand.u32 %v651, 4294901760
  %653 = vmatprep.subr.mxu0 %v652
  %v654 = vand.u32 %v41, 4294901760
  %v655 = vsub.f32 %v41, %v654
  %v656 = vand.u32 %v655, 4294901760
  %657 = vmatpush1.msra.mxu0 %v656
  %v658 = vand.u32 %v46, 4294901760
  %v659 = vsub.f32 %v46, %v658
  %v660 = vand.u32 %v659, 4294901760
  %661 = vmatprep.subr.mxu0 %v660
  %v662 = vand.u32 %v45, 4294901760
  %v663 = vsub.f32 %v45, %v662
  %v664 = vand.u32 %v663, 4294901760
  %665 = vmatpush1.msra.mxu0 %v664
  %v666 = vand.u32 %v50, 4294901760
  %v667 = vsub.f32 %v50, %v666
  %v668 = vand.u32 %v667, 4294901760
  %669 = vmatprep.subr.mxu0 %v668
  %v670 = vand.u32 %v49, 4294901760
  %v671 = vsub.f32 %v49, %v670
  %v672 = vand.u32 %v671, 4294901760
  %673 = vmatpush1.msra.mxu0 %v672
  %674 = vmatprep.subr.mxu0 0.0
  %675 = vmatpush1.msra.mxu0 0.0
  %676 = vmatprep.subr.mxu0 0.0
  %677 = vmatpush1.msra.mxu0 0.0
  %678 = vmatprep.subr.mxu0 0.0
  %679 = vmatpush1.msra.mxu0 0.0
  %680 = vmatprep.subr.mxu0 0.0
  %681 = vmatpush1.msra.mxu0 0.0
  %682 = vmatprep.subr.mxu0 0.0
  %683 = vmatpush1.msra.mxu0 0.0
  %684 = vmatprep.subr.mxu0 0.0
  %685 = vmatpush1.msra.mxu0 0.0
  %686 = vmatprep.subr.mxu0 0.0
  %687 = vmatpush1.msra.mxu0 0.0
  %688 = vmatprep.subr.mxu0 0.0
  %689 = vmatpush1.msra.mxu0 0.0
  %690 = vmatprep.subr.mxu0 0.0
  %691 = vmatpush1.msra.mxu0 0.0
  %692 = vmatprep.subr.mxu0 0.0
  %693 = vmatpush1.msra.mxu0 0.0
  %694 = vmatprep.subr.mxu0 0.0
  %695 = vmatpush1.msra.mxu0 0.0
  %696 = vmatprep.subr.mxu0 0.0
  %697 = vmatpush1.msra.mxu0 0.0
  %698 = vmatprep.subr.mxu0 0.0
  %699 = vmatpush1.msra.mxu0 0.0
  %700 = vmatprep.subr.mxu0 0.0
  %701 = vmatpush1.msra.mxu0 0.0
  %702 = vmatprep.subr.mxu0 0.0
  %703 = vmatpush1.msra.mxu0 0.0
  %704 = vmatprep.subr.mxu0 0.0
  %705 = vmatpush1.msra.mxu0 0.0
  %706 = vmatprep.subr.mxu0 0.0
  %707 = vmatpush1.msra.mxu0 0.0
  %708 = vmatprep.subr.mxu0 0.0
  %709 = vmatpush1.msra.mxu0 0.0
  %710 = vmatprep.subr.mxu0 0.0
  %711 = vmatpush1.msra.mxu0 0.0
  %712 = vmatprep.subr.mxu0 0.0
  %713 = vmatpush1.msra.mxu0 0.0
  %714 = vmatprep.subr.mxu0 0.0
  %715 = vmatpush1.msra.mxu0 0.0
  %716 = vmatprep.subr.mxu0 0.0
  %717 = vmatpush1.msra.mxu0 0.0
  %718 = vmatprep.subr.mxu0 0.0
  %719 = vmatpush1.msra.mxu0 0.0
  %720 = vmatprep.subr.mxu0 0.0
  %721 = vmatpush1.msra.mxu0 0.0
  %722 = vmatprep.mubr.f32.mxu0 0.0
  %v723 = vand.u32 %v55, 4294901760
  %724 = vmatmul.mubr.f32.gmra.mrb[0].mxu0 %v723
  %v725 = vpop.f32.mrb[0].mxu0
  %v726 = vadd.f32 %v579, %v725
  %v727 = vpop.f32.mrb[0].mxu0
  %v728 = vadd.f32 %v581, %v727
  %729 = vmatprep.mubr.f32.mxu0 0.0
  %v730 = vand.u32 %v58, 4294901760
  %731 = vmatmul.mubr.f32.gmra.mrb[0].mxu0 %v730
  %v732 = vpop.f32.mrb[0].mxu0
  %v733 = vadd.f32 %v588, %v732
  %v734 = vpop.f32.mrb[0].mxu0
  %v735 = vadd.f32 %v590, %v734
  %736 = vmatprep.mubr.f32.mxu0 0.0
  %v737 = vand.u32 %v61, 4294901760
  %738 = vmatmul.mubr.f32.gmra.mrb[0].mxu0 %v737
  %v739 = vpop.f32.mrb[0].mxu0
  %v740 = vadd.f32 %v597, %v739
  %v741 = vpop.f32.mrb[0].mxu0
  %v742 = vadd.f32 %v599, %v741
  %743 = vmatprep.mubr.f32.mxu0 0.0
  %v744 = vand.u32 %v64, 4294901760
  %745 = vmatmul.mubr.f32.gmra.mrb[0].mxu0 %v744
  %v746 = vpop.f32.mrb[0].mxu0
  %v747 = vadd.f32 %v606, %v746
  %v748 = vpop.f32.mrb[0].mxu0
  %v749 = vadd.f32 %v608, %v748
  %750 = vdwg.mxu0
  %v751 = vand.u32 %v22, 4294901760
  %752 = vmatprep.subr.mxu0 %v751
  %v753 = vand.u32 %v21, 4294901760
  %754 = vmatpush1.msra.mxu0 %v753
  %v755 = vand.u32 %v26, 4294901760
  %756 = vmatprep.subr.mxu0 %v755
  %v757 = vand.u32 %v25, 4294901760
  %758 = vmatpush1.msra.mxu0 %v757
  %v759 = vand.u32 %v30, 4294901760
  %760 = vmatprep.subr.mxu0 %v759
  %v761 = vand.u32 %v29, 4294901760
  %762 = vmatpush1.msra.mxu0 %v761
  %v763 = vand.u32 %v34, 4294901760
  %764 = vmatprep.subr.mxu0 %v763
  %v765 = vand.u32 %v33, 4294901760
  %766 = vmatpush1.msra.mxu0 %v765
  %v767 = vand.u32 %v38, 4294901760
  %768 = vmatprep.subr.mxu0 %v767
  %v769 = vand.u32 %v37, 4294901760
  %770 = vmatpush1.msra.mxu0 %v769
  %v771 = vand.u32 %v42, 4294901760
  %772 = vmatprep.subr.mxu0 %v771
  %v773 = vand.u32 %v41, 4294901760
  %774 = vmatpush1.msra.mxu0 %v773
  %v775 = vand.u32 %v46, 4294901760
  %776 = vmatprep.subr.mxu0 %v775
  %v777 = vand.u32 %v45, 4294901760
  %778 = vmatpush1.msra.mxu0 %v777
  %v779 = vand.u32 %v50, 4294901760
  %780 = vmatprep.subr.mxu0 %v779
  %v781 = vand.u32 %v49, 4294901760
  %782 = vmatpush1.msra.mxu0 %v781
  %783 = vmatprep.subr.mxu0 0.0
  %784 = vmatpush1.msra.mxu0 0.0
  %785 = vmatprep.subr.mxu0 0.0
  %786 = vmatpush1.msra.mxu0 0.0
  %787 = vmatprep.subr.mxu0 0.0
  %788 = vmatpush1.msra.mxu0 0.0
  %789 = vmatprep.subr.mxu0 0.0
  %790 = vmatpush1.msra.mxu0 0.0
  %791 = vmatprep.subr.mxu0 0.0
  %792 = vmatpush1.msra.mxu0 0.0
  %793 = vmatprep.subr.mxu0 0.0
  %794 = vmatpush1.msra.mxu0 0.0
  %795 = vmatprep.subr.mxu0 0.0
  %796 = vmatpush1.msra.mxu0 0.0
  %797 = vmatprep.subr.mxu0 0.0
  %798 = vmatpush1.msra.mxu0 0.0
  %799 = vmatprep.subr.mxu0 0.0
  %800 = vmatpush1.msra.mxu0 0.0
  %801 = vmatprep.subr.mxu0 0.0
  %802 = vmatpush1.msra.mxu0 0.0
  %803 = vmatprep.subr.mxu0 0.0
  %804 = vmatpush1.msra.mxu0 0.0
  %805 = vmatprep.subr.mxu0 0.0
  %806 = vmatpush1.msra.mxu0 0.0
  %807 = vmatprep.subr.mxu0 0.0
  %808 = vmatpush1.msra.mxu0 0.0
  %809 = vmatprep.subr.mxu0 0.0
  %810 = vmatpush1.msra.mxu0 0.0
  %811 = vmatprep.subr.mxu0 0.0
  %812 = vmatpush1.msra.mxu0 0.0
  %813 = vmatprep.subr.mxu0 0.0
  %814 = vmatpush1.msra.mxu0 0.0
  %815 = vmatprep.subr.mxu0 0.0
  %816 = vmatpush1.msra.mxu0 0.0
  %817 = vmatprep.subr.mxu0 0.0
  %818 = vmatpush1.msra.mxu0 0.0
  %819 = vmatprep.subr.mxu0 0.0
  %820 = vmatpush1.msra.mxu0 0.0
  %821 = vmatprep.subr.mxu0 0.0
  %822 = vmatpush1.msra.mxu0 0.0
  %823 = vmatprep.subr.mxu0 0.0
  %824 = vmatpush1.msra.mxu0 0.0
  %825 = vmatprep.subr.mxu0 0.0
  %826 = vmatpush1.msra.mxu0 0.0
  %827 = vmatprep.subr.mxu0 0.0
  %828 = vmatpush1.msra.mxu0 0.0
  %829 = vmatprep.subr.mxu0 0.0
  %830 = vmatpush1.msra.mxu0 0.0
  %831 = vmatprep.mubr.f32.mxu0 0.0
  %v832 = vand.u32 %v55, 4294901760
  %833 = vmatmul.mubr.f32.gmra.mrb[0].mxu0 %v832
  %v834 = vpop.f32.mrb[0].mxu0
  %v835 = vadd.f32 %v726, %v834
  %v836 = vpop.f32.mrb[0].mxu0
  %v837 = vadd.f32 %v728, %v836
  %838 = vmatprep.mubr.f32.mxu0 0.0
  %v839 = vand.u32 %v58, 4294901760
  %840 = vmatmul.mubr.f32.gmra.mrb[0].mxu0 %v839
  %v841 = vpop.f32.mrb[0].mxu0
  %v842 = vadd.f32 %v733, %v841
  %v843 = vpop.f32.mrb[0].mxu0
  %v844 = vadd.f32 %v735, %v843
  %845 = vmatprep.mubr.f32.mxu0 0.0
  %v846 = vand.u32 %v61, 4294901760
  %847 = vmatmul.mubr.f32.gmra.mrb[0].mxu0 %v846
  %v848 = vpop.f32.mrb[0].mxu0
  %v849 = vadd.f32 %v740, %v848
  %v850 = vpop.f32.mrb[0].mxu0
  %v851 = vadd.f32 %v742, %v850
  %852 = vmatprep.mubr.f32.mxu0 0.0
  %v853 = vand.u32 %v64, 4294901760
  %854 = vmatmul.mubr.f32.gmra.mrb[0].mxu0 %v853
  %v855 = vpop.f32.mrb[0].mxu0
  %v856 = vadd.f32 %v747, %v855
  %v857 = vpop.f32.mrb[0].mxu0
  %v858 = vadd.f32 %v749, %v857
  %859 = vdwg.mxu0
  %v860 = vand.u32 %v24, 4294901760
  %861 = vmatprep.subr.mxu0 %v860
  %v862 = vand.u32 %v23, 4294901760
  %863 = vmatpush1.msra.mxu0 %v862
  %v864 = vand.u32 %v28, 4294901760
  %865 = vmatprep.subr.mxu0 %v864
  %v866 = vand.u32 %v27, 4294901760
  %867 = vmatpush1.msra.mxu0 %v866
  %v868 = vand.u32 %v32, 4294901760
  %869 = vmatprep.subr.mxu0 %v868
  %v870 = vand.u32 %v31, 4294901760
  %871 = vmatpush1.msra.mxu0 %v870
  %v872 = vand.u32 %v36, 4294901760
  %873 = vmatprep.subr.mxu0 %v872
  %v874 = vand.u32 %v35, 4294901760
  %875 = vmatpush1.msra.mxu0 %v874
  %v876 = vand.u32 %v40, 4294901760
  %877 = vmatprep.subr.mxu0 %v876
  %v878 = vand.u32 %v39, 4294901760
  %879 = vmatpush1.msra.mxu0 %v878
  %v880 = vand.u32 %v44, 4294901760
  %881 = vmatprep.subr.mxu0 %v880
  %v882 = vand.u32 %v43, 4294901760
  %883 = vmatpush1.msra.mxu0 %v882
  %v884 = vand.u32 %v48, 4294901760
  %885 = vmatprep.subr.mxu0 %v884
  %v886 = vand.u32 %v47, 4294901760
  %887 = vmatpush1.msra.mxu0 %v886
  %v888 = vand.u32 %v52, 4294901760
  %889 = vmatprep.subr.mxu0 %v888
  %v890 = vand.u32 %v51, 4294901760
  %891 = vmatpush1.msra.mxu0 %v890
  %892 = vmatprep.subr.mxu0 0.0
  %893 = vmatpush1.msra.mxu0 0.0
  %894 = vmatprep.subr.mxu0 0.0
  %895 = vmatpush1.msra.mxu0 0.0
  %896 = vmatprep.subr.mxu0 0.0
  %897 = vmatpush1.msra.mxu0 0.0
  %898 = vmatprep.subr.mxu0 0.0
  %899 = vmatpush1.msra.mxu0 0.0
  %900 = vmatprep.subr.mxu0 0.0
  %901 = vmatpush1.msra.mxu0 0.0
  %902 = vmatprep.subr.mxu0 0.0
  %903 = vmatpush1.msra.mxu0 0.0
  %904 = vmatprep.subr.mxu0 0.0
  %905 = vmatpush1.msra.mxu0 0.0
  %906 = vmatprep.subr.mxu0 0.0
  %907 = vmatpush1.msra.mxu0 0.0
  %908 = vmatprep.subr.mxu0 0.0
  %909 = vmatpush1.msra.mxu0 0.0
  %910 = vmatprep.subr.mxu0 0.0
  %911 = vmatpush1.msra.mxu0 0.0
  %912 = vmatprep.subr.mxu0 0.0
  %913 = vmatpush1.msra.mxu0 0.0
  %914 = vmatprep.subr.mxu0 0.0
  %915 = vmatpush1.msra.mxu0 0.0
  %916 = vmatprep.subr.mxu0 0.0
  %917 = vmatpush1.msra.mxu0 0.0
  %918 = vmatprep.subr.mxu0 0.0
  %919 = vmatpush1.msra.mxu0 0.0
  %920 = vmatprep.subr.mxu0 0.0
  %921 = vmatpush1.msra.mxu0 0.0
  %922 = vmatprep.subr.mxu0 0.0
  %923 = vmatpush1.msra.mxu0 0.0
  %924 = vmatprep.subr.mxu0 0.0
  %925 = vmatpush1.msra.mxu0 0.0
  %926 = vmatprep.subr.mxu0 0.0
  %927 = vmatpush1.msra.mxu0 0.0
  %928 = vmatprep.subr.mxu0 0.0
  %929 = vmatpush1.msra.mxu0 0.0
  %930 = vmatprep.subr.mxu0 0.0
  %931 = vmatpush1.msra.mxu0 0.0
  %932 = vmatprep.subr.mxu0 0.0
  %933 = vmatpush1.msra.mxu0 0.0
  %934 = vmatprep.subr.mxu0 0.0
  %935 = vmatpush1.msra.mxu0 0.0
  %936 = vmatprep.subr.mxu0 0.0
  %937 = vmatpush1.msra.mxu0 0.0
  %938 = vmatprep.subr.mxu0 0.0
  %939 = vmatpush1.msra.mxu0 0.0
  %940 = vmatprep.mubr.f32.mxu0 0.0
  %v941 = vand.u32 %v55, 4294901760
  %v942 = vsub.f32 %v55, %v941
  %v943 = vand.u32 %v942, 4294901760
  %v944 = vsub.f32 %v942, %v943
  %v945 = vand.u32 %v944, 4294901760
  %946 = vmatmul.mubr.f32.gmra.mrb[0].mxu0 %v945
  %v947 = vpop.f32.mrb[0].mxu0
  %v948 = vadd.f32 0.0, %v947
  %v949 = vpop.f32.mrb[0].mxu0
  %v950 = vadd.f32 0.0, %v949
  %951 = vmatprep.mubr.f32.mxu0 0.0
  %v952 = vand.u32 %v58, 4294901760
  %v953 = vsub.f32 %v58, %v952
  %v954 = vand.u32 %v953, 4294901760
  %v955 = vsub.f32 %v953, %v954
  %v956 = vand.u32 %v955, 4294901760
  %957 = vmatmul.mubr.f32.gmra.mrb[0].mxu0 %v956
  %v958 = vpop.f32.mrb[0].mxu0
  %v959 = vadd.f32 0.0, %v958
  %v960 = vpop.f32.mrb[0].mxu0
  %v961 = vadd.f32 0.0, %v960
  %962 = vmatprep.mubr.f32.mxu0 0.0
  %v963 = vand.u32 %v61, 4294901760
  %v964 = vsub.f32 %v61, %v963
  %v965 = vand.u32 %v964, 4294901760
  %v966 = vsub.f32 %v964, %v965
  %v967 = vand.u32 %v966, 4294901760
  %968 = vmatmul.mubr.f32.gmra.mrb[0].mxu0 %v967
  %v969 = vpop.f32.mrb[0].mxu0
  %v970 = vadd.f32 0.0, %v969
  %v971 = vpop.f32.mrb[0].mxu0
  %v972 = vadd.f32 0.0, %v971
  %973 = vmatprep.mubr.f32.mxu0 0.0
  %v974 = vand.u32 %v64, 4294901760
  %v975 = vsub.f32 %v64, %v974
  %v976 = vand.u32 %v975, 4294901760
  %v977 = vsub.f32 %v975, %v976
  %v978 = vand.u32 %v977, 4294901760
  %979 = vmatmul.mubr.f32.gmra.mrb[0].mxu0 %v978
  %v980 = vpop.f32.mrb[0].mxu0
  %v981 = vadd.f32 0.0, %v980
  %v982 = vpop.f32.mrb[0].mxu0
  %v983 = vadd.f32 0.0, %v982
  %984 = vdwg.mxu0
  %v985 = vand.u32 %v24, 4294901760
  %v986 = vsub.f32 %v24, %v985
  %v987 = vand.u32 %v986, 4294901760
  %v988 = vsub.f32 %v986, %v987
  %v989 = vand.u32 %v988, 4294901760
  %990 = vmatprep.subr.mxu0 %v989
  %v991 = vand.u32 %v23, 4294901760
  %v992 = vsub.f32 %v23, %v991
  %v993 = vand.u32 %v992, 4294901760
  %v994 = vsub.f32 %v992, %v993
  %v995 = vand.u32 %v994, 4294901760
  %996 = vmatpush1.msra.mxu0 %v995
  %v997 = vand.u32 %v28, 4294901760
  %v998 = vsub.f32 %v28, %v997
  %v999 = vand.u32 %v998, 4294901760
  %v1000 = vsub.f32 %v998, %v999
  %v1001 = vand.u32 %v1000, 4294901760
  %1002 = vmatprep.subr.mxu0 %v1001
  %v1003 = vand.u32 %v27, 4294901760
  %v1004 = vsub.f32 %v27, %v1003
  %v1005 = vand.u32 %v1004, 4294901760
  %v1006 = vsub.f32 %v1004, %v1005
  %v1007 = vand.u32 %v1006, 4294901760
  %1008 = vmatpush1.msra.mxu0 %v1007
  %v1009 = vand.u32 %v32, 4294901760
  %v1010 = vsub.f32 %v32, %v1009
  %v1011 = vand.u32 %v1010, 4294901760
  %v1012 = vsub.f32 %v1010, %v1011
  %v1013 = vand.u32 %v1012, 4294901760
  %1014 = vmatprep.subr.mxu0 %v1013
  %v1015 = vand.u32 %v31, 4294901760
  %v1016 = vsub.f32 %v31, %v1015
  %v1017 = vand.u32 %v1016, 4294901760
  %v1018 = vsub.f32 %v1016, %v1017
  %v1019 = vand.u32 %v1018, 4294901760
  %1020 = vmatpush1.msra.mxu0 %v1019
  %v1021 = vand.u32 %v36, 4294901760
  %v1022 = vsub.f32 %v36, %v1021
  %v1023 = vand.u32 %v1022, 4294901760
  %v1024 = vsub.f32 %v1022, %v1023
  %v1025 = vand.u32 %v1024, 4294901760
  %1026 = vmatprep.subr.mxu0 %v1025
  %v1027 = vand.u32 %v35, 4294901760
  %v1028 = vsub.f32 %v35, %v1027
  %v1029 = vand.u32 %v1028, 4294901760
  %v1030 = vsub.f32 %v1028, %v1029
  %v1031 = vand.u32 %v1030, 4294901760
  %1032 = vmatpush1.msra.mxu0 %v1031
  %v1033 = vand.u32 %v40, 4294901760
  %v1034 = vsub.f32 %v40, %v1033
  %v1035 = vand.u32 %v1034, 4294901760
  %v1036 = vsub.f32 %v1034, %v1035
  %v1037 = vand.u32 %v1036, 4294901760
  %1038 = vmatprep.subr.mxu0 %v1037
  %v1039 = vand.u32 %v39, 4294901760
  %v1040 = vsub.f32 %v39, %v1039
  %v1041 = vand.u32 %v1040, 4294901760
  %v1042 = vsub.f32 %v1040, %v1041
  %v1043 = vand.u32 %v1042, 4294901760
  %1044 = vmatpush1.msra.mxu0 %v1043
  %v1045 = vand.u32 %v44, 4294901760
  %v1046 = vsub.f32 %v44, %v1045
  %v1047 = vand.u32 %v1046, 4294901760
  %v1048 = vsub.f32 %v1046, %v1047
  %v1049 = vand.u32 %v1048, 4294901760
  %1050 = vmatprep.subr.mxu0 %v1049
  %v1051 = vand.u32 %v43, 4294901760
  %v1052 = vsub.f32 %v43, %v1051
  %v1053 = vand.u32 %v1052, 4294901760
  %v1054 = vsub.f32 %v1052, %v1053
  %v1055 = vand.u32 %v1054, 4294901760
  %1056 = vmatpush1.msra.mxu0 %v1055
  %v1057 = vand.u32 %v48, 4294901760
  %v1058 = vsub.f32 %v48, %v1057
  %v1059 = vand.u32 %v1058, 4294901760
  %v1060 = vsub.f32 %v1058, %v1059
  %v1061 = vand.u32 %v1060, 4294901760
  %1062 = vmatprep.subr.mxu0 %v1061
  %v1063 = vand.u32 %v47, 4294901760
  %v1064 = vsub.f32 %v47, %v1063
  %v1065 = vand.u32 %v1064, 4294901760
  %v1066 = vsub.f32 %v1064, %v1065
  %v1067 = vand.u32 %v1066, 4294901760
  %1068 = vmatpush1.msra.mxu0 %v1067
  %v1069 = vand.u32 %v52, 4294901760
  %v1070 = vsub.f32 %v52, %v1069
  %v1071 = vand.u32 %v1070, 4294901760
  %v1072 = vsub.f32 %v1070, %v1071
  %v1073 = vand.u32 %v1072, 4294901760
  %1074 = vmatprep.subr.mxu0 %v1073
  %v1075 = vand.u32 %v51, 4294901760
  %v1076 = vsub.f32 %v51, %v1075
  %v1077 = vand.u32 %v1076, 4294901760
  %v1078 = vsub.f32 %v1076, %v1077
  %v1079 = vand.u32 %v1078, 4294901760
  %1080 = vmatpush1.msra.mxu0 %v1079
  %1081 = vmatprep.subr.mxu0 0.0
  %1082 = vmatpush1.msra.mxu0 0.0
  %1083 = vmatprep.subr.mxu0 0.0
  %1084 = vmatpush1.msra.mxu0 0.0
  %1085 = vmatprep.subr.mxu0 0.0
  %1086 = vmatpush1.msra.mxu0 0.0
  %1087 = vmatprep.subr.mxu0 0.0
  %1088 = vmatpush1.msra.mxu0 0.0
  %1089 = vmatprep.subr.mxu0 0.0
  %1090 = vmatpush1.msra.mxu0 0.0
  %1091 = vmatprep.subr.mxu0 0.0
  %1092 = vmatpush1.msra.mxu0 0.0
  %1093 = vmatprep.subr.mxu0 0.0
  %1094 = vmatpush1.msra.mxu0 0.0
  %1095 = vmatprep.subr.mxu0 0.0
  %1096 = vmatpush1.msra.mxu0 0.0
  %1097 = vmatprep.subr.mxu0 0.0
  %1098 = vmatpush1.msra.mxu0 0.0
  %1099 = vmatprep.subr.mxu0 0.0
  %1100 = vmatpush1.msra.mxu0 0.0
  %1101 = vmatprep.subr.mxu0 0.0
  %1102 = vmatpush1.msra.mxu0 0.0
  %1103 = vmatprep.subr.mxu0 0.0
  %1104 = vmatpush1.msra.mxu0 0.0
  %1105 = vmatprep.subr.mxu0 0.0
  %1106 = vmatpush1.msra.mxu0 0.0
  %1107 = vmatprep.subr.mxu0 0.0
  %1108 = vmatpush1.msra.mxu0 0.0
  %1109 = vmatprep.subr.mxu0 0.0
  %1110 = vmatpush1.msra.mxu0 0.0
  %1111 = vmatprep.subr.mxu0 0.0
  %1112 = vmatpush1.msra.mxu0 0.0
  %1113 = vmatprep.subr.mxu0 0.0
  %1114 = vmatpush1.msra.mxu0 0.0
  %1115 = vmatprep.subr.mxu0 0.0
  %1116 = vmatpush1.msra.mxu0 0.0
  %1117 = vmatprep.subr.mxu0 0.0
  %1118 = vmatpush1.msra.mxu0 0.0
  %1119 = vmatprep.subr.mxu0 0.0
  %1120 = vmatpush1.msra.mxu0 0.0
  %1121 = vmatprep.subr.mxu0 0.0
  %1122 = vmatpush1.msra.mxu0 0.0
  %1123 = vmatprep.subr.mxu0 0.0
  %1124 = vmatpush1.msra.mxu0 0.0
  %1125 = vmatprep.subr.mxu0 0.0
  %1126 = vmatpush1.msra.mxu0 0.0
  %1127 = vmatprep.subr.mxu0 0.0
  %1128 = vmatpush1.msra.mxu0 0.0
  %1129 = vmatprep.mubr.f32.mxu0 0.0
  %v1130 = vand.u32 %v55, 4294901760
  %1131 = vmatmul.mubr.f32.gmra.mrb[0].mxu0 %v1130
  %v1132 = vpop.f32.mrb[0].mxu0
  %v1133 = vadd.f32 %v948, %v1132
  %v1134 = vpop.f32.mrb[0].mxu0
  %v1135 = vadd.f32 %v950, %v1134
  %1136 = vmatprep.mubr.f32.mxu0 0.0
  %v1137 = vand.u32 %v58, 4294901760
  %1138 = vmatmul.mubr.f32.gmra.mrb[0].mxu0 %v1137
  %v1139 = vpop.f32.mrb[0].mxu0
  %v1140 = vadd.f32 %v959, %v1139
  %v1141 = vpop.f32.mrb[0].mxu0
  %v1142 = vadd.f32 %v961, %v1141
  %1143 = vmatprep.mubr.f32.mxu0 0.0
  %v1144 = vand.u32 %v61, 4294901760
  %1145 = vmatmul.mubr.f32.gmra.mrb[0].mxu0 %v1144
  %v1146 = vpop.f32.mrb[0].mxu0
  %v1147 = vadd.f32 %v970, %v1146
  %v1148 = vpop.f32.mrb[0].mxu0
  %v1149 = vadd.f32 %v972, %v1148
  %1150 = vmatprep.mubr.f32.mxu0 0.0
  %v1151 = vand.u32 %v64, 4294901760
  %1152 = vmatmul.mubr.f32.gmra.mrb[0].mxu0 %v1151
  %v1153 = vpop.f32.mrb[0].mxu0
  %v1154 = vadd.f32 %v981, %v1153
  %v1155 = vpop.f32.mrb[0].mxu0
  %v1156 = vadd.f32 %v983, %v1155
  %1157 = vdwg.mxu0
  %v1158 = vand.u32 %v24, 4294901760
  %v1159 = vsub.f32 %v24, %v1158
  %1160 = vmatprep.subr.mxu0 %v1159
  %v1161 = vand.u32 %v23, 4294901760
  %v1162 = vsub.f32 %v23, %v1161
  %1163 = vmatpush1.msra.mxu0 %v1162
  %v1164 = vand.u32 %v28, 4294901760
  %v1165 = vsub.f32 %v28, %v1164
  %1166 = vmatprep.subr.mxu0 %v1165
  %v1167 = vand.u32 %v27, 4294901760
  %v1168 = vsub.f32 %v27, %v1167
  %1169 = vmatpush1.msra.mxu0 %v1168
  %v1170 = vand.u32 %v32, 4294901760
  %v1171 = vsub.f32 %v32, %v1170
  %1172 = vmatprep.subr.mxu0 %v1171
  %v1173 = vand.u32 %v31, 4294901760
  %v1174 = vsub.f32 %v31, %v1173
  %1175 = vmatpush1.msra.mxu0 %v1174
  %v1176 = vand.u32 %v36, 4294901760
  %v1177 = vsub.f32 %v36, %v1176
  %1178 = vmatprep.subr.mxu0 %v1177
  %v1179 = vand.u32 %v35, 4294901760
  %v1180 = vsub.f32 %v35, %v1179
  %1181 = vmatpush1.msra.mxu0 %v1180
  %v1182 = vand.u32 %v40, 4294901760
  %v1183 = vsub.f32 %v40, %v1182
  %1184 = vmatprep.subr.mxu0 %v1183
  %v1185 = vand.u32 %v39, 4294901760
  %v1186 = vsub.f32 %v39, %v1185
  %1187 = vmatpush1.msra.mxu0 %v1186
  %v1188 = vand.u32 %v44, 4294901760
  %v1189 = vsub.f32 %v44, %v1188
  %1190 = vmatprep.subr.mxu0 %v1189
  %v1191 = vand.u32 %v43, 4294901760
  %v1192 = vsub.f32 %v43, %v1191
  %1193 = vmatpush1.msra.mxu0 %v1192
  %v1194 = vand.u32 %v48, 4294901760
  %v1195 = vsub.f32 %v48, %v1194
  %1196 = vmatprep.subr.mxu0 %v1195
  %v1197 = vand.u32 %v47, 4294901760
  %v1198 = vsub.f32 %v47, %v1197
  %1199 = vmatpush1.msra.mxu0 %v1198
  %v1200 = vand.u32 %v52, 4294901760
  %v1201 = vsub.f32 %v52, %v1200
  %1202 = vmatprep.subr.mxu0 %v1201
  %v1203 = vand.u32 %v51, 4294901760
  %v1204 = vsub.f32 %v51, %v1203
  %1205 = vmatpush1.msra.mxu0 %v1204
  %1206 = vmatprep.subr.mxu0 0.0
  %1207 = vmatpush1.msra.mxu0 0.0
  %1208 = vmatprep.subr.mxu0 0.0
  %1209 = vmatpush1.msra.mxu0 0.0
  %1210 = vmatprep.subr.mxu0 0.0
  %1211 = vmatpush1.msra.mxu0 0.0
  %1212 = vmatprep.subr.mxu0 0.0
  %1213 = vmatpush1.msra.mxu0 0.0
  %1214 = vmatprep.subr.mxu0 0.0
  %1215 = vmatpush1.msra.mxu0 0.0
  %1216 = vmatprep.subr.mxu0 0.0
  %1217 = vmatpush1.msra.mxu0 0.0
  %1218 = vmatprep.subr.mxu0 0.0
  %1219 = vmatpush1.msra.mxu0 0.0
  %1220 = vmatprep.subr.mxu0 0.0
  %1221 = vmatpush1.msra.mxu0 0.0
  %1222 = vmatprep.subr.mxu0 0.0
  %1223 = vmatpush1.msra.mxu0 0.0
  %1224 = vmatprep.subr.mxu0 0.0
  %1225 = vmatpush1.msra.mxu0 0.0
  %1226 = vmatprep.subr.mxu0 0.0
  %1227 = vmatpush1.msra.mxu0 0.0
  %1228 = vmatprep.subr.mxu0 0.0
  %1229 = vmatpush1.msra.mxu0 0.0
  %1230 = vmatprep.subr.mxu0 0.0
  %1231 = vmatpush1.msra.mxu0 0.0
  %1232 = vmatprep.subr.mxu0 0.0
  %1233 = vmatpush1.msra.mxu0 0.0
  %1234 = vmatprep.subr.mxu0 0.0
  %1235 = vmatpush1.msra.mxu0 0.0
  %1236 = vmatprep.subr.mxu0 0.0
  %1237 = vmatpush1.msra.mxu0 0.0
  %1238 = vmatprep.subr.mxu0 0.0
  %1239 = vmatpush1.msra.mxu0 0.0
  %1240 = vmatprep.subr.mxu0 0.0
  %1241 = vmatpush1.msra.mxu0 0.0
  %1242 = vmatprep.subr.mxu0 0.0
  %1243 = vmatpush1.msra.mxu0 0.0
  %1244 = vmatprep.subr.mxu0 0.0
  %1245 = vmatpush1.msra.mxu0 0.0
  %1246 = vmatprep.subr.mxu0 0.0
  %1247 = vmatpush1.msra.mxu0 0.0
  %1248 = vmatprep.subr.mxu0 0.0
  %1249 = vmatpush1.msra.mxu0 0.0
  %1250 = vmatprep.subr.mxu0 0.0
  %1251 = vmatpush1.msra.mxu0 0.0
  %1252 = vmatprep.subr.mxu0 0.0
  %1253 = vmatpush1.msra.mxu0 0.0
  %1254 = vmatprep.mubr.f32.mxu0 0.0
  %v1255 = vand.u32 %v55, 4294901760
  %v1256 = vsub.f32 %v55, %v1255
  %1257 = vmatmul.mubr.f32.gmra.mrb[0].mxu0 %v1256
  %v1258 = vpop.f32.mrb[0].mxu0
  %v1259 = vadd.f32 %v1133, %v1258
  %v1260 = vpop.f32.mrb[0].mxu0
  %v1261 = vadd.f32 %v1135, %v1260
  %1262 = vmatprep.mubr.f32.mxu0 0.0
  %v1263 = vand.u32 %v58, 4294901760
  %v1264 = vsub.f32 %v58, %v1263
  %1265 = vmatmul.mubr.f32.gmra.mrb[0].mxu0 %v1264
  %v1266 = vpop.f32.mrb[0].mxu0
  %v1267 = vadd.f32 %v1140, %v1266
  %v1268 = vpop.f32.mrb[0].mxu0
  %v1269 = vadd.f32 %v1142, %v1268
  %1270 = vmatprep.mubr.f32.mxu0 0.0
  %v1271 = vand.u32 %v61, 4294901760
  %v1272 = vsub.f32 %v61, %v1271
  %1273 = vmatmul.mubr.f32.gmra.mrb[0].mxu0 %v1272
  %v1274 = vpop.f32.mrb[0].mxu0
  %v1275 = vadd.f32 %v1147, %v1274
  %v1276 = vpop.f32.mrb[0].mxu0
  %v1277 = vadd.f32 %v1149, %v1276
  %1278 = vmatprep.mubr.f32.mxu0 0.0
  %v1279 = vand.u32 %v64, 4294901760
  %v1280 = vsub.f32 %v64, %v1279
  %1281 = vmatmul.mubr.f32.gmra.mrb[0].mxu0 %v1280
  %v1282 = vpop.f32.mrb[0].mxu0
  %v1283 = vadd.f32 %v1154, %v1282
  %v1284 = vpop.f32.mrb[0].mxu0
  %v1285 = vadd.f32 %v1156, %v1284
  %1286 = vdwg.mxu0
  %v1287 = vand.u32 %v24, 4294901760
  %1288 = vmatprep.subr.mxu0 %v1287
  %v1289 = vand.u32 %v23, 4294901760
  %1290 = vmatpush1.msra.mxu0 %v1289
  %v1291 = vand.u32 %v28, 4294901760
  %1292 = vmatprep.subr.mxu0 %v1291
  %v1293 = vand.u32 %v27, 4294901760
  %1294 = vmatpush1.msra.mxu0 %v1293
  %v1295 = vand.u32 %v32, 4294901760
  %1296 = vmatprep.subr.mxu0 %v1295
  %v1297 = vand.u32 %v31, 4294901760
  %1298 = vmatpush1.msra.mxu0 %v1297
  %v1299 = vand.u32 %v36, 4294901760
  %1300 = vmatprep.subr.mxu0 %v1299
  %v1301 = vand.u32 %v35, 4294901760
  %1302 = vmatpush1.msra.mxu0 %v1301
  %v1303 = vand.u32 %v40, 4294901760
  %1304 = vmatprep.subr.mxu0 %v1303
  %v1305 = vand.u32 %v39, 4294901760
  %1306 = vmatpush1.msra.mxu0 %v1305
  %v1307 = vand.u32 %v44, 4294901760
  %1308 = vmatprep.subr.mxu0 %v1307
  %v1309 = vand.u32 %v43, 4294901760
  %1310 = vmatpush1.msra.mxu0 %v1309
  %v1311 = vand.u32 %v48, 4294901760
  %1312 = vmatprep.subr.mxu0 %v1311
  %v1313 = vand.u32 %v47, 4294901760
  %1314 = vmatpush1.msra.mxu0 %v1313
  %v1315 = vand.u32 %v52, 4294901760
  %1316 = vmatprep.subr.mxu0 %v1315
  %v1317 = vand.u32 %v51, 4294901760
  %1318 = vmatpush1.msra.mxu0 %v1317
  %1319 = vmatprep.subr.mxu0 0.0
  %1320 = vmatpush1.msra.mxu0 0.0
  %1321 = vmatprep.subr.mxu0 0.0
  %1322 = vmatpush1.msra.mxu0 0.0
  %1323 = vmatprep.subr.mxu0 0.0
  %1324 = vmatpush1.msra.mxu0 0.0
  %1325 = vmatprep.subr.mxu0 0.0
  %1326 = vmatpush1.msra.mxu0 0.0
  %1327 = vmatprep.subr.mxu0 0.0
  %1328 = vmatpush1.msra.mxu0 0.0
  %1329 = vmatprep.subr.mxu0 0.0
  %1330 = vmatpush1.msra.mxu0 0.0
  %1331 = vmatprep.subr.mxu0 0.0
  %1332 = vmatpush1.msra.mxu0 0.0
  %1333 = vmatprep.subr.mxu0 0.0
  %1334 = vmatpush1.msra.mxu0 0.0
  %1335 = vmatprep.subr.mxu0 0.0
  %1336 = vmatpush1.msra.mxu0 0.0
  %1337 = vmatprep.subr.mxu0 0.0
  %1338 = vmatpush1.msra.mxu0 0.0
  %1339 = vmatprep.subr.mxu0 0.0
  %1340 = vmatpush1.msra.mxu0 0.0
  %1341 = vmatprep.subr.mxu0 0.0
  %1342 = vmatpush1.msra.mxu0 0.0
  %1343 = vmatprep.subr.mxu0 0.0
  %1344 = vmatpush1.msra.mxu0 0.0
  %1345 = vmatprep.subr.mxu0 0.0
  %1346 = vmatpush1.msra.mxu0 0.0
  %1347 = vmatprep.subr.mxu0 0.0
  %1348 = vmatpush1.msra.mxu0 0.0
  %1349 = vmatprep.subr.mxu0 0.0
  %1350 = vmatpush1.msra.mxu0 0.0
  %1351 = vmatprep.subr.mxu0 0.0
  %1352 = vmatpush1.msra.mxu0 0.0
  %1353 = vmatprep.subr.mxu0 0.0
  %1354 = vmatpush1.msra.mxu0 0.0
  %1355 = vmatprep.subr.mxu0 0.0
  %1356 = vmatpush1.msra.mxu0 0.0
  %1357 = vmatprep.subr.mxu0 0.0
  %1358 = vmatpush1.msra.mxu0 0.0
  %1359 = vmatprep.subr.mxu0 0.0
  %1360 = vmatpush1.msra.mxu0 0.0
  %1361 = vmatprep.subr.mxu0 0.0
  %1362 = vmatpush1.msra.mxu0 0.0
  %1363 = vmatprep.subr.mxu0 0.0
  %1364 = vmatpush1.msra.mxu0 0.0
  %1365 = vmatprep.subr.mxu0 0.0
  %1366 = vmatpush1.msra.mxu0 0.0
  %1367 = vmatprep.mubr.f32.mxu0 0.0
  %v1368 = vand.u32 %v55, 4294901760
  %v1369 = vsub.f32 %v55, %v1368
  %v1370 = vand.u32 %v1369, 4294901760
  %1371 = vmatmul.mubr.f32.gmra.mrb[0].mxu0 %v1370
  %v1372 = vpop.f32.mrb[0].mxu0
  %v1373 = vadd.f32 %v1259, %v1372
  %v1374 = vpop.f32.mrb[0].mxu0
  %v1375 = vadd.f32 %v1261, %v1374
  %1376 = vmatprep.mubr.f32.mxu0 0.0
  %v1377 = vand.u32 %v58, 4294901760
  %v1378 = vsub.f32 %v58, %v1377
  %v1379 = vand.u32 %v1378, 4294901760
  %1380 = vmatmul.mubr.f32.gmra.mrb[0].mxu0 %v1379
  %v1381 = vpop.f32.mrb[0].mxu0
  %v1382 = vadd.f32 %v1267, %v1381
  %v1383 = vpop.f32.mrb[0].mxu0
  %v1384 = vadd.f32 %v1269, %v1383
  %1385 = vmatprep.mubr.f32.mxu0 0.0
  %v1386 = vand.u32 %v61, 4294901760
  %v1387 = vsub.f32 %v61, %v1386
  %v1388 = vand.u32 %v1387, 4294901760
  %1389 = vmatmul.mubr.f32.gmra.mrb[0].mxu0 %v1388
  %v1390 = vpop.f32.mrb[0].mxu0
  %v1391 = vadd.f32 %v1275, %v1390
  %v1392 = vpop.f32.mrb[0].mxu0
  %v1393 = vadd.f32 %v1277, %v1392
  %1394 = vmatprep.mubr.f32.mxu0 0.0
  %v1395 = vand.u32 %v64, 4294901760
  %v1396 = vsub.f32 %v64, %v1395
  %v1397 = vand.u32 %v1396, 4294901760
  %1398 = vmatmul.mubr.f32.gmra.mrb[0].mxu0 %v1397
  %v1399 = vpop.f32.mrb[0].mxu0
  %v1400 = vadd.f32 %v1283, %v1399
  %v1401 = vpop.f32.mrb[0].mxu0
  %v1402 = vadd.f32 %v1285, %v1401
  %1403 = vdwg.mxu0
  %v1404 = vand.u32 %v24, 4294901760
  %v1405 = vsub.f32 %v24, %v1404
  %v1406 = vand.u32 %v1405, 4294901760
  %1407 = vmatprep.subr.mxu0 %v1406
  %v1408 = vand.u32 %v23, 4294901760
  %v1409 = vsub.f32 %v23, %v1408
  %v1410 = vand.u32 %v1409, 4294901760
  %1411 = vmatpush1.msra.mxu0 %v1410
  %v1412 = vand.u32 %v28, 4294901760
  %v1413 = vsub.f32 %v28, %v1412
  %v1414 = vand.u32 %v1413, 4294901760
  %1415 = vmatprep.subr.mxu0 %v1414
  %v1416 = vand.u32 %v27, 4294901760
  %v1417 = vsub.f32 %v27, %v1416
  %v1418 = vand.u32 %v1417, 4294901760
  %1419 = vmatpush1.msra.mxu0 %v1418
  %v1420 = vand.u32 %v32, 4294901760
  %v1421 = vsub.f32 %v32, %v1420
  %v1422 = vand.u32 %v1421, 4294901760
  %1423 = vmatprep.subr.mxu0 %v1422
  %v1424 = vand.u32 %v31, 4294901760
  %v1425 = vsub.f32 %v31, %v1424
  %v1426 = vand.u32 %v1425, 4294901760
  %1427 = vmatpush1.msra.mxu0 %v1426
  %v1428 = vand.u32 %v36, 4294901760
  %v1429 = vsub.f32 %v36, %v1428
  %v1430 = vand.u32 %v1429, 4294901760
  %1431 = vmatprep.subr.mxu0 %v1430
  %v1432 = vand.u32 %v35, 4294901760
  %v1433 = vsub.f32 %v35, %v1432
  %v1434 = vand.u32 %v1433, 4294901760
  %1435 = vmatpush1.msra.mxu0 %v1434
  %v1436 = vand.u32 %v40, 4294901760
  %v1437 = vsub.f32 %v40, %v1436
  %v1438 = vand.u32 %v1437, 4294901760
  %1439 = vmatprep.subr.mxu0 %v1438
  %v1440 = vand.u32 %v39, 4294901760
  %v1441 = vsub.f32 %v39, %v1440
  %v1442 = vand.u32 %v1441, 4294901760
  %1443 = vmatpush1.msra.mxu0 %v1442
  %v1444 = vand.u32 %v44, 4294901760
  %v1445 = vsub.f32 %v44, %v1444
  %v1446 = vand.u32 %v1445, 4294901760
  %1447 = vmatprep.subr.mxu0 %v1446
  %v1448 = vand.u32 %v43, 4294901760
  %v1449 = vsub.f32 %v43, %v1448
  %v1450 = vand.u32 %v1449, 4294901760
  %1451 = vmatpush1.msra.mxu0 %v1450
  %v1452 = vand.u32 %v48, 4294901760
  %v1453 = vsub.f32 %v48, %v1452
  %v1454 = vand.u32 %v1453, 4294901760
  %1455 = vmatprep.subr.mxu0 %v1454
  %v1456 = vand.u32 %v47, 4294901760
  %v1457 = vsub.f32 %v47, %v1456
  %v1458 = vand.u32 %v1457, 4294901760
  %1459 = vmatpush1.msra.mxu0 %v1458
  %v1460 = vand.u32 %v52, 4294901760
  %v1461 = vsub.f32 %v52, %v1460
  %v1462 = vand.u32 %v1461, 4294901760
  %1463 = vmatprep.subr.mxu0 %v1462
  %v1464 = vand.u32 %v51, 4294901760
  %v1465 = vsub.f32 %v51, %v1464
  %v1466 = vand.u32 %v1465, 4294901760
  %1467 = vmatpush1.msra.mxu0 %v1466
  %1468 = vmatprep.subr.mxu0 0.0
  %1469 = vmatpush1.msra.mxu0 0.0
  %1470 = vmatprep.subr.mxu0 0.0
  %1471 = vmatpush1.msra.mxu0 0.0
  %1472 = vmatprep.subr.mxu0 0.0
  %1473 = vmatpush1.msra.mxu0 0.0
  %1474 = vmatprep.subr.mxu0 0.0
  %1475 = vmatpush1.msra.mxu0 0.0
  %1476 = vmatprep.subr.mxu0 0.0
  %1477 = vmatpush1.msra.mxu0 0.0
  %1478 = vmatprep.subr.mxu0 0.0
  %1479 = vmatpush1.msra.mxu0 0.0
  %1480 = vmatprep.subr.mxu0 0.0
  %1481 = vmatpush1.msra.mxu0 0.0
  %1482 = vmatprep.subr.mxu0 0.0
  %1483 = vmatpush1.msra.mxu0 0.0
  %1484 = vmatprep.subr.mxu0 0.0
  %1485 = vmatpush1.msra.mxu0 0.0
  %1486 = vmatprep.subr.mxu0 0.0
  %1487 = vmatpush1.msra.mxu0 0.0
  %1488 = vmatprep.subr.mxu0 0.0
  %1489 = vmatpush1.msra.mxu0 0.0
  %1490 = vmatprep.subr.mxu0 0.0
  %1491 = vmatpush1.msra.mxu0 0.0
  %1492 = vmatprep.subr.mxu0 0.0
  %1493 = vmatpush1.msra.mxu0 0.0
  %1494 = vmatprep.subr.mxu0 0.0
  %1495 = vmatpush1.msra.mxu0 0.0
  %1496 = vmatprep.subr.mxu0 0.0
  %1497 = vmatpush1.msra.mxu0 0.0
  %1498 = vmatprep.subr.mxu0 0.0
  %1499 = vmatpush1.msra.mxu0 0.0
  %1500 = vmatprep.subr.mxu0 0.0
  %1501 = vmatpush1.msra.mxu0 0.0
  %1502 = vmatprep.subr.mxu0 0.0
  %1503 = vmatpush1.msra.mxu0 0.0
  %1504 = vmatprep.subr.mxu0 0.0
  %1505 = vmatpush1.msra.mxu0 0.0
  %1506 = vmatprep.subr.mxu0 0.0
  %1507 = vmatpush1.msra.mxu0 0.0
  %1508 = vmatprep.subr.mxu0 0.0
  %1509 = vmatpush1.msra.mxu0 0.0
  %1510 = vmatprep.subr.mxu0 0.0
  %1511 = vmatpush1.msra.mxu0 0.0
  %1512 = vmatprep.subr.mxu0 0.0
  %1513 = vmatpush1.msra.mxu0 0.0
  %1514 = vmatprep.subr.mxu0 0.0
  %1515 = vmatpush1.msra.mxu0 0.0
  %1516 = vmatprep.mubr.f32.mxu0 0.0
  %v1517 = vand.u32 %v55, 4294901760
  %1518 = vmatmul.mubr.f32.gmra.mrb[0].mxu0 %v1517
  %v1519 = vpop.f32.mrb[0].mxu0
  %v1520 = vadd.f32 %v1373, %v1519
  %v1521 = vpop.f32.mrb[0].mxu0
  %v1522 = vadd.f32 %v1375, %v1521
  %1523 = vmatprep.mubr.f32.mxu0 0.0
  %v1524 = vand.u32 %v58, 4294901760
  %1525 = vmatmul.mubr.f32.gmra.mrb[0].mxu0 %v1524
  %v1526 = vpop.f32.mrb[0].mxu0
  %v1527 = vadd.f32 %v1382, %v1526
  %v1528 = vpop.f32.mrb[0].mxu0
  %v1529 = vadd.f32 %v1384, %v1528
  %1530 = vmatprep.mubr.f32.mxu0 0.0
  %v1531 = vand.u32 %v61, 4294901760
  %1532 = vmatmul.mubr.f32.gmra.mrb[0].mxu0 %v1531
  %v1533 = vpop.f32.mrb[0].mxu0
  %v1534 = vadd.f32 %v1391, %v1533
  %v1535 = vpop.f32.mrb[0].mxu0
  %v1536 = vadd.f32 %v1393, %v1535
  %1537 = vmatprep.mubr.f32.mxu0 0.0
  %v1538 = vand.u32 %v64, 4294901760
  %1539 = vmatmul.mubr.f32.gmra.mrb[0].mxu0 %v1538
  %v1540 = vpop.f32.mrb[0].mxu0
  %v1541 = vadd.f32 %v1400, %v1540
  %v1542 = vpop.f32.mrb[0].mxu0
  %v1543 = vadd.f32 %v1402, %v1542
  %1544 = vdwg.mxu0
  %v1545 = vand.u32 %v24, 4294901760
  %1546 = vmatprep.subr.mxu0 %v1545
  %v1547 = vand.u32 %v23, 4294901760
  %1548 = vmatpush1.msra.mxu0 %v1547
  %v1549 = vand.u32 %v28, 4294901760
  %1550 = vmatprep.subr.mxu0 %v1549
  %v1551 = vand.u32 %v27, 4294901760
  %1552 = vmatpush1.msra.mxu0 %v1551
  %v1553 = vand.u32 %v32, 4294901760
  %1554 = vmatprep.subr.mxu0 %v1553
  %v1555 = vand.u32 %v31, 4294901760
  %1556 = vmatpush1.msra.mxu0 %v1555
  %v1557 = vand.u32 %v36, 4294901760
  %1558 = vmatprep.subr.mxu0 %v1557
  %v1559 = vand.u32 %v35, 4294901760
  %1560 = vmatpush1.msra.mxu0 %v1559
  %v1561 = vand.u32 %v40, 4294901760
  %1562 = vmatprep.subr.mxu0 %v1561
  %v1563 = vand.u32 %v39, 4294901760
  %1564 = vmatpush1.msra.mxu0 %v1563
  %v1565 = vand.u32 %v44, 4294901760
  %1566 = vmatprep.subr.mxu0 %v1565
  %v1567 = vand.u32 %v43, 4294901760
  %1568 = vmatpush1.msra.mxu0 %v1567
  %v1569 = vand.u32 %v48, 4294901760
  %1570 = vmatprep.subr.mxu0 %v1569
  %v1571 = vand.u32 %v47, 4294901760
  %1572 = vmatpush1.msra.mxu0 %v1571
  %v1573 = vand.u32 %v52, 4294901760
  %1574 = vmatprep.subr.mxu0 %v1573
  %v1575 = vand.u32 %v51, 4294901760
  %1576 = vmatpush1.msra.mxu0 %v1575
  %1577 = vmatprep.subr.mxu0 0.0
  %1578 = vmatpush1.msra.mxu0 0.0
  %1579 = vmatprep.subr.mxu0 0.0
  %1580 = vmatpush1.msra.mxu0 0.0
  %1581 = vmatprep.subr.mxu0 0.0
  %1582 = vmatpush1.msra.mxu0 0.0
  %1583 = vmatprep.subr.mxu0 0.0
  %1584 = vmatpush1.msra.mxu0 0.0
  %1585 = vmatprep.subr.mxu0 0.0
  %1586 = vmatpush1.msra.mxu0 0.0
  %1587 = vmatprep.subr.mxu0 0.0
  %1588 = vmatpush1.msra.mxu0 0.0
  %1589 = vmatprep.subr.mxu0 0.0
  %1590 = vmatpush1.msra.mxu0 0.0
  %1591 = vmatprep.subr.mxu0 0.0
  %1592 = vmatpush1.msra.mxu0 0.0
  %1593 = vmatprep.subr.mxu0 0.0
  %1594 = vmatpush1.msra.mxu0 0.0
  %1595 = vmatprep.subr.mxu0 0.0
  %1596 = vmatpush1.msra.mxu0 0.0
  %1597 = vmatprep.subr.mxu0 0.0
  %1598 = vmatpush1.msra.mxu0 0.0
  %1599 = vmatprep.subr.mxu0 0.0
  %1600 = vmatpush1.msra.mxu0 0.0
  %1601 = vmatprep.subr.mxu0 0.0
  %1602 = vmatpush1.msra.mxu0 0.0
  %1603 = vmatprep.subr.mxu0 0.0
  %1604 = vmatpush1.msra.mxu0 0.0
  %1605 = vmatprep.subr.mxu0 0.0
  %1606 = vmatpush1.msra.mxu0 0.0
  %1607 = vmatprep.subr.mxu0 0.0
  %1608 = vmatpush1.msra.mxu0 0.0
  %1609 = vmatprep.subr.mxu0 0.0
  %1610 = vmatpush1.msra.mxu0 0.0
  %1611 = vmatprep.subr.mxu0 0.0
  %1612 = vmatpush1.msra.mxu0 0.0
  %1613 = vmatprep.subr.mxu0 0.0
  %1614 = vmatpush1.msra.mxu0 0.0
  %1615 = vmatprep.subr.mxu0 0.0
  %1616 = vmatpush1.msra.mxu0 0.0
  %1617 = vmatprep.subr.mxu0 0.0
  %1618 = vmatpush1.msra.mxu0 0.0
  %1619 = vmatprep.subr.mxu0 0.0
  %1620 = vmatpush1.msra.mxu0 0.0
  %1621 = vmatprep.subr.mxu0 0.0
  %1622 = vmatpush1.msra.mxu0 0.0
  %1623 = vmatprep.subr.mxu0 0.0
  %1624 = vmatpush1.msra.mxu0 0.0
  %1625 = vmatprep.mubr.f32.mxu0 0.0
  %v1626 = vand.u32 %v55, 4294901760
  %1627 = vmatmul.mubr.f32.gmra.mrb[0].mxu0 %v1626
  %v1628 = vpop.f32.mrb[0].mxu0
  %v1629 = vadd.f32 %v1520, %v1628
  %v1630 = vpop.f32.mrb[0].mxu0
  %v1631 = vadd.f32 %v1522, %v1630
  %1632 = vmatprep.mubr.f32.mxu0 0.0
  %v1633 = vand.u32 %v58, 4294901760
  %1634 = vmatmul.mubr.f32.gmra.mrb[0].mxu0 %v1633
  %v1635 = vpop.f32.mrb[0].mxu0
  %v1636 = vadd.f32 %v1527, %v1635
  %v1637 = vpop.f32.mrb[0].mxu0
  %v1638 = vadd.f32 %v1529, %v1637
  %1639 = vmatprep.mubr.f32.mxu0 0.0
  %v1640 = vand.u32 %v61, 4294901760
  %1641 = vmatmul.mubr.f32.gmra.mrb[0].mxu0 %v1640
  %v1642 = vpop.f32.mrb[0].mxu0
  %v1643 = vadd.f32 %v1534, %v1642
  %v1644 = vpop.f32.mrb[0].mxu0
  %v1645 = vadd.f32 %v1536, %v1644
  %1646 = vmatprep.mubr.f32.mxu0 0.0
  %v1647 = vand.u32 %v64, 4294901760
  %1648 = vmatmul.mubr.f32.gmra.mrb[0].mxu0 %v1647
  %v1649 = vpop.f32.mrb[0].mxu0
  %v1650 = vadd.f32 %v1541, %v1649
  %v1651 = vpop.f32.mrb[0].mxu0
  %v1652 = vadd.f32 %v1543, %v1651
  %1653 = vdwg.mxu0
  %v1654 = vadd.f32 %v835, %v842
  %v1655 = vadd.f32 %v1654, %v849
  %v1656 = vadd.f32 %v1655, %v856
  %v1657 = vrot.slane %v1656, 4
  %v1658 = vadd.f32 %v1656, %v1657
  %v1659 = vrot.slane %v1658, 2
  %v1660 = vadd.f32 %v1658, %v1659
  %v1661 = vrot.slane %v1660, 1
  %v1662 = vadd.f32 %v1660, %v1661
  %v1663 = vadd.f32 %v837, %v844
  %v1664 = vadd.f32 %v1663, %v851
  %v1665 = vadd.f32 %v1664, %v858
  %v1666 = vrot.slane %v1665, 4
  %v1667 = vadd.f32 %v1665, %v1666
  %v1668 = vrot.slane %v1667, 2
  %v1669 = vadd.f32 %v1667, %v1668
  %v1670 = vrot.slane %v1669, 1
  %v1671 = vadd.f32 %v1669, %v1670
  %v1672 = vadd.f32 %v1629, %v1636
  %v1673 = vadd.f32 %v1672, %v1643
  %v1674 = vadd.f32 %v1673, %v1650
  %v1675 = vrot.slane %v1674, 4
  %v1676 = vadd.f32 %v1674, %v1675
  %v1677 = vrot.slane %v1676, 2
  %v1678 = vadd.f32 %v1676, %v1677
  %v1679 = vrot.slane %v1678, 1
  %v1680 = vadd.f32 %v1678, %v1679
  %v1681 = vadd.f32 %v1631, %v1638
  %v1682 = vadd.f32 %v1681, %v1645
  %v1683 = vadd.f32 %v1682, %v1652
  %v1684 = vrot.slane %v1683, 4
  %v1685 = vadd.f32 %v1683, %v1684
  %v1686 = vrot.slane %v1685, 2
  %v1687 = vadd.f32 %v1685, %v1686
  %v1688 = vrot.slane %v1687, 1
  %v1689 = vadd.f32 %v1687, %v1688
  %v1690 = vmul.f32 %v835, %v835
  %v1691 = vmul.f32 %v837, %v837
  %v1692 = vmul.f32 %v1629, %v1629
  %v1693 = vmul.f32 %v1631, %v1631
  %v1694 = vmul.f32 %v842, %v842
  %v1695 = vmul.f32 %v844, %v844
  %v1696 = vmul.f32 %v1636, %v1636
  %v1697 = vmul.f32 %v1638, %v1638
  %v1698 = vmul.f32 %v849, %v849
  %v1699 = vmul.f32 %v851, %v851
  %v1700 = vmul.f32 %v1643, %v1643
  %v1701 = vmul.f32 %v1645, %v1645
  %v1702 = vmul.f32 %v856, %v856
  %v1703 = vmul.f32 %v858, %v858
  %v1704 = vmul.f32 %v1650, %v1650
  %v1705 = vmul.f32 %v1652, %v1652
  %v1706 = vadd.f32 %v1690, %v1694
  %v1707 = vadd.f32 %v1706, %v1698
  %v1708 = vadd.f32 %v1707, %v1702
  %v1709 = vrot.slane %v1708, 4
  %v1710 = vadd.f32 %v1708, %v1709
  %v1711 = vrot.slane %v1710, 2
  %v1712 = vadd.f32 %v1710, %v1711
  %v1713 = vrot.slane %v1712, 1
  %v1714 = vadd.f32 %v1712, %v1713
  %v1715 = vadd.f32 %v1691, %v1695
  %v1716 = vadd.f32 %v1715, %v1699
  %v1717 = vadd.f32 %v1716, %v1703
  %v1718 = vrot.slane %v1717, 4
  %v1719 = vadd.f32 %v1717, %v1718
  %v1720 = vrot.slane %v1719, 2
  %v1721 = vadd.f32 %v1719, %v1720
  %v1722 = vrot.slane %v1721, 1
  %v1723 = vadd.f32 %v1721, %v1722
  %v1724 = vadd.f32 %v1692, %v1696
  %v1725 = vadd.f32 %v1724, %v1700
  %v1726 = vadd.f32 %v1725, %v1704
  %v1727 = vrot.slane %v1726, 4
  %v1728 = vadd.f32 %v1726, %v1727
  %v1729 = vrot.slane %v1728, 2
  %v1730 = vadd.f32 %v1728, %v1729
  %v1731 = vrot.slane %v1730, 1
  %v1732 = vadd.f32 %v1730, %v1731
  %v1733 = vadd.f32 %v1693, %v1697
  %v1734 = vadd.f32 %v1733, %v1701
  %v1735 = vadd.f32 %v1734, %v1705
  %v1736 = vrot.slane %v1735, 4
  %v1737 = vadd.f32 %v1735, %v1736
  %v1738 = vrot.slane %v1737, 2
  %v1739 = vadd.f32 %v1737, %v1738
  %v1740 = vrot.slane %v1739, 1
  %v1741 = vadd.f32 %v1739, %v1740
  %v1742 = vlaneseq
  %v1743 = vshrl.u32 %v1742, 7
  %v1744 = vadd.s32 %v1743, 8
  %v1745 = vadd.s32 %v1743, 16
  %v1746 = vadd.s32 %v1743, 24
  %v1747 = vadd.s32 %v1743, 32
  %v1748 = vadd.s32 %v1743, 40
  %v1749 = vadd.s32 %v1743, 48
  %v1750 = vadd.s32 %v1743, 56
  %v1751 = vadd.s32 %v1743, 64
  %v1752 = vadd.s32 %v1743, 72
  %v1753 = vadd.s32 %v1743, 80
  %v1754 = vadd.s32 %v1743, 88
  %v1755 = vadd.s32 %v1743, 96
  %v1756 = vadd.s32 %v1743, 104
  %v1757 = vadd.s32 %v1743, 112
  %v1758 = vadd.s32 %v1743, 120
  %v1759 = vadd.s32 %v1743, 128
  %v1760 = vadd.s32 %v1743, 136
  %v1761 = vadd.s32 %v1743, 144
  %v1762 = vadd.s32 %v1743, 152
  %v1763 = vadd.s32 %v1743, 160
  %v1764 = vadd.s32 %v1743, 168
  %v1765 = vadd.s32 %v1743, 176
  %v1766 = vadd.s32 %v1743, 184
  %v1767 = vadd.s32 %v1743, 192
  %v1768 = vadd.s32 %v1743, 200
  %v1769 = vadd.s32 %v1743, 208
  %v1770 = vadd.s32 %v1743, 216
  %v1771 = vadd.s32 %v1743, 224
  %v1772 = vadd.s32 %v1743, 232
  %v1773 = vadd.s32 %v1743, 240
  %v1774 = vadd.s32 %v1743, 248
  %v1775 = vadd.s32 %v1743, 256
  %v1776 = vadd.s32 %v1743, 264
  %v1777 = vadd.s32 %v1743, 272
  %v1778 = vadd.s32 %v1743, 280
  %v1779 = vadd.s32 %v1743, 288
  %v1780 = vadd.s32 %v1743, 296
  %v1781 = vadd.s32 %v1743, 304
  %v1782 = vadd.s32 %v1743, 312
  %v1783 = vadd.s32 %v1743, 320
  %v1784 = vadd.s32 %v1743, 328
  %v1785 = vadd.s32 %v1743, 336
  %v1786 = vadd.s32 %v1743, 344
  %v1787 = vadd.s32 %v1743, 352
  %v1788 = vadd.s32 %v1743, 360
  %v1789 = vadd.s32 %v1743, 368
  %v1790 = vadd.s32 %v1743, 376
  %v1791 = vadd.s32 %v1743, 384
  %v1792 = vadd.s32 %v1743, 392
  %v1793 = vadd.s32 %v1743, 400
  %v1794 = vadd.s32 %v1743, 408
  %v1795 = vadd.s32 %v1743, 416
  %v1796 = vadd.s32 %v1743, 424
  %v1797 = vadd.s32 %v1743, 432
  %v1798 = vadd.s32 %v1743, 440
  %v1799 = vadd.s32 %v1743, 448
  %v1800 = vadd.s32 %v1743, 456
  %v1801 = vadd.s32 %v1743, 464
  %v1802 = vadd.s32 %v1743, 472
  %v1803 = vadd.s32 %v1743, 480
  %v1804 = vadd.s32 %v1743, 488
  %v1805 = vadd.s32 %v1743, 496
  %v1806 = vadd.s32 %v1743, 504
  %vm1807 = vcmp.lt.s32.totalorder %v1743, 0
  %v1808 = vsub.s32 0, %v1743
  %v1809 = vsel %vm1807, %v1808, %v1743
  %v1810 = vshrl.u32 %v1809, 5
  %v1811 = vand.u32 %v1809, 31
  %v1812 = vsub.s32 0, %v1811
  %v1813 = vsel %vm1807, %v1812, %v1811
  %vm1814 = vcmp.lt.s32.totalorder %v1744, 0
  %v1815 = vsub.s32 0, %v1744
  %v1816 = vsel %vm1814, %v1815, %v1744
  %v1817 = vshrl.u32 %v1816, 5
  %v1818 = vand.u32 %v1816, 31
  %v1819 = vsub.s32 0, %v1818
  %v1820 = vsel %vm1814, %v1819, %v1818
  %vm1821 = vcmp.lt.s32.totalorder %v1745, 0
  %v1822 = vsub.s32 0, %v1745
  %v1823 = vsel %vm1821, %v1822, %v1745
  %v1824 = vshrl.u32 %v1823, 5
  %v1825 = vand.u32 %v1823, 31
  %v1826 = vsub.s32 0, %v1825
  %v1827 = vsel %vm1821, %v1826, %v1825
  %vm1828 = vcmp.lt.s32.totalorder %v1746, 0
  %v1829 = vsub.s32 0, %v1746
  %v1830 = vsel %vm1828, %v1829, %v1746
  %v1831 = vshrl.u32 %v1830, 5
  %v1832 = vand.u32 %v1830, 31
  %v1833 = vsub.s32 0, %v1832
  %v1834 = vsel %vm1828, %v1833, %v1832
  %vm1835 = vcmp.lt.s32.totalorder %v1747, 0
  %v1836 = vsub.s32 0, %v1747
  %v1837 = vsel %vm1835, %v1836, %v1747
  %v1838 = vshrl.u32 %v1837, 5
  %v1839 = vand.u32 %v1837, 31
  %v1840 = vsub.s32 0, %v1839
  %v1841 = vsel %vm1835, %v1840, %v1839
  %vm1842 = vcmp.lt.s32.totalorder %v1748, 0
  %v1843 = vsub.s32 0, %v1748
  %v1844 = vsel %vm1842, %v1843, %v1748
  %v1845 = vshrl.u32 %v1844, 5
  %v1846 = vand.u32 %v1844, 31
  %v1847 = vsub.s32 0, %v1846
  %v1848 = vsel %vm1842, %v1847, %v1846
  %vm1849 = vcmp.lt.s32.totalorder %v1749, 0
  %v1850 = vsub.s32 0, %v1749
  %v1851 = vsel %vm1849, %v1850, %v1749
  %v1852 = vshrl.u32 %v1851, 5
  %v1853 = vand.u32 %v1851, 31
  %v1854 = vsub.s32 0, %v1853
  %v1855 = vsel %vm1849, %v1854, %v1853
  %vm1856 = vcmp.lt.s32.totalorder %v1750, 0
  %v1857 = vsub.s32 0, %v1750
  %v1858 = vsel %vm1856, %v1857, %v1750
  %v1859 = vshrl.u32 %v1858, 5
  %v1860 = vand.u32 %v1858, 31
  %v1861 = vsub.s32 0, %v1860
  %v1862 = vsel %vm1856, %v1861, %v1860
  %vm1863 = vcmp.lt.s32.totalorder %v1751, 0
  %v1864 = vsub.s32 0, %v1751
  %v1865 = vsel %vm1863, %v1864, %v1751
  %v1866 = vshrl.u32 %v1865, 5
  %v1867 = vand.u32 %v1865, 31
  %v1868 = vsub.s32 0, %v1867
  %v1869 = vsel %vm1863, %v1868, %v1867
  %vm1870 = vcmp.lt.s32.totalorder %v1752, 0
  %v1871 = vsub.s32 0, %v1752
  %v1872 = vsel %vm1870, %v1871, %v1752
  %v1873 = vshrl.u32 %v1872, 5
  %v1874 = vand.u32 %v1872, 31
  %v1875 = vsub.s32 0, %v1874
  %v1876 = vsel %vm1870, %v1875, %v1874
  %vm1877 = vcmp.lt.s32.totalorder %v1753, 0
  %v1878 = vsub.s32 0, %v1753
  %v1879 = vsel %vm1877, %v1878, %v1753
  %v1880 = vshrl.u32 %v1879, 5
  %v1881 = vand.u32 %v1879, 31
  %v1882 = vsub.s32 0, %v1881
  %v1883 = vsel %vm1877, %v1882, %v1881
  %vm1884 = vcmp.lt.s32.totalorder %v1754, 0
  %v1885 = vsub.s32 0, %v1754
  %v1886 = vsel %vm1884, %v1885, %v1754
  %v1887 = vshrl.u32 %v1886, 5
  %v1888 = vand.u32 %v1886, 31
  %v1889 = vsub.s32 0, %v1888
  %v1890 = vsel %vm1884, %v1889, %v1888
  %vm1891 = vcmp.lt.s32.totalorder %v1755, 0
  %v1892 = vsub.s32 0, %v1755
  %v1893 = vsel %vm1891, %v1892, %v1755
  %v1894 = vshrl.u32 %v1893, 5
  %v1895 = vand.u32 %v1893, 31
  %v1896 = vsub.s32 0, %v1895
  %v1897 = vsel %vm1891, %v1896, %v1895
  %vm1898 = vcmp.lt.s32.totalorder %v1756, 0
  %v1899 = vsub.s32 0, %v1756
  %v1900 = vsel %vm1898, %v1899, %v1756
  %v1901 = vshrl.u32 %v1900, 5
  %v1902 = vand.u32 %v1900, 31
  %v1903 = vsub.s32 0, %v1902
  %v1904 = vsel %vm1898, %v1903, %v1902
  %vm1905 = vcmp.lt.s32.totalorder %v1757, 0
  %v1906 = vsub.s32 0, %v1757
  %v1907 = vsel %vm1905, %v1906, %v1757
  %v1908 = vshrl.u32 %v1907, 5
  %v1909 = vand.u32 %v1907, 31
  %v1910 = vsub.s32 0, %v1909
  %v1911 = vsel %vm1905, %v1910, %v1909
  %vm1912 = vcmp.lt.s32.totalorder %v1758, 0
  %v1913 = vsub.s32 0, %v1758
  %v1914 = vsel %vm1912, %v1913, %v1758
  %v1915 = vshrl.u32 %v1914, 5
  %v1916 = vand.u32 %v1914, 31
  %v1917 = vsub.s32 0, %v1916
  %v1918 = vsel %vm1912, %v1917, %v1916
  %vm1919 = vcmp.lt.s32.totalorder %v1759, 0
  %v1920 = vsub.s32 0, %v1759
  %v1921 = vsel %vm1919, %v1920, %v1759
  %v1922 = vshrl.u32 %v1921, 5
  %v1923 = vand.u32 %v1921, 31
  %v1924 = vsub.s32 0, %v1923
  %v1925 = vsel %vm1919, %v1924, %v1923
  %vm1926 = vcmp.lt.s32.totalorder %v1760, 0
  %v1927 = vsub.s32 0, %v1760
  %v1928 = vsel %vm1926, %v1927, %v1760
  %v1929 = vshrl.u32 %v1928, 5
  %v1930 = vand.u32 %v1928, 31
  %v1931 = vsub.s32 0, %v1930
  %v1932 = vsel %vm1926, %v1931, %v1930
  %vm1933 = vcmp.lt.s32.totalorder %v1761, 0
  %v1934 = vsub.s32 0, %v1761
  %v1935 = vsel %vm1933, %v1934, %v1761
  %v1936 = vshrl.u32 %v1935, 5
  %v1937 = vand.u32 %v1935, 31
  %v1938 = vsub.s32 0, %v1937
  %v1939 = vsel %vm1933, %v1938, %v1937
  %vm1940 = vcmp.lt.s32.totalorder %v1762, 0
  %v1941 = vsub.s32 0, %v1762
  %v1942 = vsel %vm1940, %v1941, %v1762
  %v1943 = vshrl.u32 %v1942, 5
  %v1944 = vand.u32 %v1942, 31
  %v1945 = vsub.s32 0, %v1944
  %v1946 = vsel %vm1940, %v1945, %v1944
  %vm1947 = vcmp.lt.s32.totalorder %v1763, 0
  %v1948 = vsub.s32 0, %v1763
  %v1949 = vsel %vm1947, %v1948, %v1763
  %v1950 = vshrl.u32 %v1949, 5
  %v1951 = vand.u32 %v1949, 31
  %v1952 = vsub.s32 0, %v1951
  %v1953 = vsel %vm1947, %v1952, %v1951
  %vm1954 = vcmp.lt.s32.totalorder %v1764, 0
  %v1955 = vsub.s32 0, %v1764
  %v1956 = vsel %vm1954, %v1955, %v1764
  %v1957 = vshrl.u32 %v1956, 5
  %v1958 = vand.u32 %v1956, 31
  %v1959 = vsub.s32 0, %v1958
  %v1960 = vsel %vm1954, %v1959, %v1958
  %vm1961 = vcmp.lt.s32.totalorder %v1765, 0
  %v1962 = vsub.s32 0, %v1765
  %v1963 = vsel %vm1961, %v1962, %v1765
  %v1964 = vshrl.u32 %v1963, 5
  %v1965 = vand.u32 %v1963, 31
  %v1966 = vsub.s32 0, %v1965
  %v1967 = vsel %vm1961, %v1966, %v1965
  %vm1968 = vcmp.lt.s32.totalorder %v1766, 0
  %v1969 = vsub.s32 0, %v1766
  %v1970 = vsel %vm1968, %v1969, %v1766
  %v1971 = vshrl.u32 %v1970, 5
  %v1972 = vand.u32 %v1970, 31
  %v1973 = vsub.s32 0, %v1972
  %v1974 = vsel %vm1968, %v1973, %v1972
  %vm1975 = vcmp.lt.s32.totalorder %v1767, 0
  %v1976 = vsub.s32 0, %v1767
  %v1977 = vsel %vm1975, %v1976, %v1767
  %v1978 = vshrl.u32 %v1977, 5
  %v1979 = vand.u32 %v1977, 31
  %v1980 = vsub.s32 0, %v1979
  %v1981 = vsel %vm1975, %v1980, %v1979
  %vm1982 = vcmp.lt.s32.totalorder %v1768, 0
  %v1983 = vsub.s32 0, %v1768
  %v1984 = vsel %vm1982, %v1983, %v1768
  %v1985 = vshrl.u32 %v1984, 5
  %v1986 = vand.u32 %v1984, 31
  %v1987 = vsub.s32 0, %v1986
  %v1988 = vsel %vm1982, %v1987, %v1986
  %vm1989 = vcmp.lt.s32.totalorder %v1769, 0
  %v1990 = vsub.s32 0, %v1769
  %v1991 = vsel %vm1989, %v1990, %v1769
  %v1992 = vshrl.u32 %v1991, 5
  %v1993 = vand.u32 %v1991, 31
  %v1994 = vsub.s32 0, %v1993
  %v1995 = vsel %vm1989, %v1994, %v1993
  %vm1996 = vcmp.lt.s32.totalorder %v1770, 0
  %v1997 = vsub.s32 0, %v1770
  %v1998 = vsel %vm1996, %v1997, %v1770
  %v1999 = vshrl.u32 %v1998, 5
  %v2000 = vand.u32 %v1998, 31
  %v2001 = vsub.s32 0, %v2000
  %v2002 = vsel %vm1996, %v2001, %v2000
  %vm2003 = vcmp.lt.s32.totalorder %v1771, 0
  %v2004 = vsub.s32 0, %v1771
  %v2005 = vsel %vm2003, %v2004, %v1771
  %v2006 = vshrl.u32 %v2005, 5
  %v2007 = vand.u32 %v2005, 31
  %v2008 = vsub.s32 0, %v2007
  %v2009 = vsel %vm2003, %v2008, %v2007
  %vm2010 = vcmp.lt.s32.totalorder %v1772, 0
  %v2011 = vsub.s32 0, %v1772
  %v2012 = vsel %vm2010, %v2011, %v1772
  %v2013 = vshrl.u32 %v2012, 5
  %v2014 = vand.u32 %v2012, 31
  %v2015 = vsub.s32 0, %v2014
  %v2016 = vsel %vm2010, %v2015, %v2014
  %vm2017 = vcmp.lt.s32.totalorder %v1773, 0
  %v2018 = vsub.s32 0, %v1773
  %v2019 = vsel %vm2017, %v2018, %v1773
  %v2020 = vshrl.u32 %v2019, 5
  %v2021 = vand.u32 %v2019, 31
  %v2022 = vsub.s32 0, %v2021
  %v2023 = vsel %vm2017, %v2022, %v2021
  %vm2024 = vcmp.lt.s32.totalorder %v1774, 0
  %v2025 = vsub.s32 0, %v1774
  %v2026 = vsel %vm2024, %v2025, %v1774
  %v2027 = vshrl.u32 %v2026, 5
  %v2028 = vand.u32 %v2026, 31
  %v2029 = vsub.s32 0, %v2028
  %v2030 = vsel %vm2024, %v2029, %v2028
  %vm2031 = vcmp.lt.s32.totalorder %v1775, 0
  %v2032 = vsub.s32 0, %v1775
  %v2033 = vsel %vm2031, %v2032, %v1775
  %v2034 = vshrl.u32 %v2033, 5
  %v2035 = vand.u32 %v2033, 31
  %v2036 = vsub.s32 0, %v2035
  %v2037 = vsel %vm2031, %v2036, %v2035
  %vm2038 = vcmp.lt.s32.totalorder %v1776, 0
  %v2039 = vsub.s32 0, %v1776
  %v2040 = vsel %vm2038, %v2039, %v1776
  %v2041 = vshrl.u32 %v2040, 5
  %v2042 = vand.u32 %v2040, 31
  %v2043 = vsub.s32 0, %v2042
  %v2044 = vsel %vm2038, %v2043, %v2042
  %vm2045 = vcmp.lt.s32.totalorder %v1777, 0
  %v2046 = vsub.s32 0, %v1777
  %v2047 = vsel %vm2045, %v2046, %v1777
  %v2048 = vshrl.u32 %v2047, 5
  %v2049 = vand.u32 %v2047, 31
  %v2050 = vsub.s32 0, %v2049
  %v2051 = vsel %vm2045, %v2050, %v2049
  %vm2052 = vcmp.lt.s32.totalorder %v1778, 0
  %v2053 = vsub.s32 0, %v1778
  %v2054 = vsel %vm2052, %v2053, %v1778
  %v2055 = vshrl.u32 %v2054, 5
  %v2056 = vand.u32 %v2054, 31
  %v2057 = vsub.s32 0, %v2056
  %v2058 = vsel %vm2052, %v2057, %v2056
  %vm2059 = vcmp.lt.s32.totalorder %v1779, 0
  %v2060 = vsub.s32 0, %v1779
  %v2061 = vsel %vm2059, %v2060, %v1779
  %v2062 = vshrl.u32 %v2061, 5
  %v2063 = vand.u32 %v2061, 31
  %v2064 = vsub.s32 0, %v2063
  %v2065 = vsel %vm2059, %v2064, %v2063
  %vm2066 = vcmp.lt.s32.totalorder %v1780, 0
  %v2067 = vsub.s32 0, %v1780
  %v2068 = vsel %vm2066, %v2067, %v1780
  %v2069 = vshrl.u32 %v2068, 5
  %v2070 = vand.u32 %v2068, 31
  %v2071 = vsub.s32 0, %v2070
  %v2072 = vsel %vm2066, %v2071, %v2070
  %vm2073 = vcmp.lt.s32.totalorder %v1781, 0
  %v2074 = vsub.s32 0, %v1781
  %v2075 = vsel %vm2073, %v2074, %v1781
  %v2076 = vshrl.u32 %v2075, 5
  %v2077 = vand.u32 %v2075, 31
  %v2078 = vsub.s32 0, %v2077
  %v2079 = vsel %vm2073, %v2078, %v2077
  %vm2080 = vcmp.lt.s32.totalorder %v1782, 0
  %v2081 = vsub.s32 0, %v1782
  %v2082 = vsel %vm2080, %v2081, %v1782
  %v2083 = vshrl.u32 %v2082, 5
  %v2084 = vand.u32 %v2082, 31
  %v2085 = vsub.s32 0, %v2084
  %v2086 = vsel %vm2080, %v2085, %v2084
  %vm2087 = vcmp.lt.s32.totalorder %v1783, 0
  %v2088 = vsub.s32 0, %v1783
  %v2089 = vsel %vm2087, %v2088, %v1783
  %v2090 = vshrl.u32 %v2089, 5
  %v2091 = vand.u32 %v2089, 31
  %v2092 = vsub.s32 0, %v2091
  %v2093 = vsel %vm2087, %v2092, %v2091
  %vm2094 = vcmp.lt.s32.totalorder %v1784, 0
  %v2095 = vsub.s32 0, %v1784
  %v2096 = vsel %vm2094, %v2095, %v1784
  %v2097 = vshrl.u32 %v2096, 5
  %v2098 = vand.u32 %v2096, 31
  %v2099 = vsub.s32 0, %v2098
  %v2100 = vsel %vm2094, %v2099, %v2098
  %vm2101 = vcmp.lt.s32.totalorder %v1785, 0
  %v2102 = vsub.s32 0, %v1785
  %v2103 = vsel %vm2101, %v2102, %v1785
  %v2104 = vshrl.u32 %v2103, 5
  %v2105 = vand.u32 %v2103, 31
  %v2106 = vsub.s32 0, %v2105
  %v2107 = vsel %vm2101, %v2106, %v2105
  %vm2108 = vcmp.lt.s32.totalorder %v1786, 0
  %v2109 = vsub.s32 0, %v1786
  %v2110 = vsel %vm2108, %v2109, %v1786
  %v2111 = vshrl.u32 %v2110, 5
  %v2112 = vand.u32 %v2110, 31
  %v2113 = vsub.s32 0, %v2112
  %v2114 = vsel %vm2108, %v2113, %v2112
  %vm2115 = vcmp.lt.s32.totalorder %v1787, 0
  %v2116 = vsub.s32 0, %v1787
  %v2117 = vsel %vm2115, %v2116, %v1787
  %v2118 = vshrl.u32 %v2117, 5
  %v2119 = vand.u32 %v2117, 31
  %v2120 = vsub.s32 0, %v2119
  %v2121 = vsel %vm2115, %v2120, %v2119
  %vm2122 = vcmp.lt.s32.totalorder %v1788, 0
  %v2123 = vsub.s32 0, %v1788
  %v2124 = vsel %vm2122, %v2123, %v1788
  %v2125 = vshrl.u32 %v2124, 5
  %v2126 = vand.u32 %v2124, 31
  %v2127 = vsub.s32 0, %v2126
  %v2128 = vsel %vm2122, %v2127, %v2126
  %vm2129 = vcmp.lt.s32.totalorder %v1789, 0
  %v2130 = vsub.s32 0, %v1789
  %v2131 = vsel %vm2129, %v2130, %v1789
  %v2132 = vshrl.u32 %v2131, 5
  %v2133 = vand.u32 %v2131, 31
  %v2134 = vsub.s32 0, %v2133
  %v2135 = vsel %vm2129, %v2134, %v2133
  %vm2136 = vcmp.lt.s32.totalorder %v1790, 0
  %v2137 = vsub.s32 0, %v1790
  %v2138 = vsel %vm2136, %v2137, %v1790
  %v2139 = vshrl.u32 %v2138, 5
  %v2140 = vand.u32 %v2138, 31
  %v2141 = vsub.s32 0, %v2140
  %v2142 = vsel %vm2136, %v2141, %v2140
  %vm2143 = vcmp.lt.s32.totalorder %v1791, 0
  %v2144 = vsub.s32 0, %v1791
  %v2145 = vsel %vm2143, %v2144, %v1791
  %v2146 = vshrl.u32 %v2145, 5
  %v2147 = vand.u32 %v2145, 31
  %v2148 = vsub.s32 0, %v2147
  %v2149 = vsel %vm2143, %v2148, %v2147
  %vm2150 = vcmp.lt.s32.totalorder %v1792, 0
  %v2151 = vsub.s32 0, %v1792
  %v2152 = vsel %vm2150, %v2151, %v1792
  %v2153 = vshrl.u32 %v2152, 5
  %v2154 = vand.u32 %v2152, 31
  %v2155 = vsub.s32 0, %v2154
  %v2156 = vsel %vm2150, %v2155, %v2154
  %vm2157 = vcmp.lt.s32.totalorder %v1793, 0
  %v2158 = vsub.s32 0, %v1793
  %v2159 = vsel %vm2157, %v2158, %v1793
  %v2160 = vshrl.u32 %v2159, 5
  %v2161 = vand.u32 %v2159, 31
  %v2162 = vsub.s32 0, %v2161
  %v2163 = vsel %vm2157, %v2162, %v2161
  %vm2164 = vcmp.lt.s32.totalorder %v1794, 0
  %v2165 = vsub.s32 0, %v1794
  %v2166 = vsel %vm2164, %v2165, %v1794
  %v2167 = vshrl.u32 %v2166, 5
  %v2168 = vand.u32 %v2166, 31
  %v2169 = vsub.s32 0, %v2168
  %v2170 = vsel %vm2164, %v2169, %v2168
  %vm2171 = vcmp.lt.s32.totalorder %v1795, 0
  %v2172 = vsub.s32 0, %v1795
  %v2173 = vsel %vm2171, %v2172, %v1795
  %v2174 = vshrl.u32 %v2173, 5
  %v2175 = vand.u32 %v2173, 31
  %v2176 = vsub.s32 0, %v2175
  %v2177 = vsel %vm2171, %v2176, %v2175
  %vm2178 = vcmp.lt.s32.totalorder %v1796, 0
  %v2179 = vsub.s32 0, %v1796
  %v2180 = vsel %vm2178, %v2179, %v1796
  %v2181 = vshrl.u32 %v2180, 5
  %v2182 = vand.u32 %v2180, 31
  %v2183 = vsub.s32 0, %v2182
  %v2184 = vsel %vm2178, %v2183, %v2182
  %vm2185 = vcmp.lt.s32.totalorder %v1797, 0
  %v2186 = vsub.s32 0, %v1797
  %v2187 = vsel %vm2185, %v2186, %v1797
  %v2188 = vshrl.u32 %v2187, 5
  %v2189 = vand.u32 %v2187, 31
  %v2190 = vsub.s32 0, %v2189
  %v2191 = vsel %vm2185, %v2190, %v2189
  %vm2192 = vcmp.lt.s32.totalorder %v1798, 0
  %v2193 = vsub.s32 0, %v1798
  %v2194 = vsel %vm2192, %v2193, %v1798
  %v2195 = vshrl.u32 %v2194, 5
  %v2196 = vand.u32 %v2194, 31
  %v2197 = vsub.s32 0, %v2196
  %v2198 = vsel %vm2192, %v2197, %v2196
  %vm2199 = vcmp.lt.s32.totalorder %v1799, 0
  %v2200 = vsub.s32 0, %v1799
  %v2201 = vsel %vm2199, %v2200, %v1799
  %v2202 = vshrl.u32 %v2201, 5
  %v2203 = vand.u32 %v2201, 31
  %v2204 = vsub.s32 0, %v2203
  %v2205 = vsel %vm2199, %v2204, %v2203
  %vm2206 = vcmp.lt.s32.totalorder %v1800, 0
  %v2207 = vsub.s32 0, %v1800
  %v2208 = vsel %vm2206, %v2207, %v1800
  %v2209 = vshrl.u32 %v2208, 5
  %v2210 = vand.u32 %v2208, 31
  %v2211 = vsub.s32 0, %v2210
  %v2212 = vsel %vm2206, %v2211, %v2210
  %vm2213 = vcmp.lt.s32.totalorder %v1801, 0
  %v2214 = vsub.s32 0, %v1801
  %v2215 = vsel %vm2213, %v2214, %v1801
  %v2216 = vshrl.u32 %v2215, 5
  %v2217 = vand.u32 %v2215, 31
  %v2218 = vsub.s32 0, %v2217
  %v2219 = vsel %vm2213, %v2218, %v2217
  %vm2220 = vcmp.lt.s32.totalorder %v1802, 0
  %v2221 = vsub.s32 0, %v1802
  %v2222 = vsel %vm2220, %v2221, %v1802
  %v2223 = vshrl.u32 %v2222, 5
  %v2224 = vand.u32 %v2222, 31
  %v2225 = vsub.s32 0, %v2224
  %v2226 = vsel %vm2220, %v2225, %v2224
  %vm2227 = vcmp.lt.s32.totalorder %v1803, 0
  %v2228 = vsub.s32 0, %v1803
  %v2229 = vsel %vm2227, %v2228, %v1803
  %v2230 = vshrl.u32 %v2229, 5
  %v2231 = vand.u32 %v2229, 31
  %v2232 = vsub.s32 0, %v2231
  %v2233 = vsel %vm2227, %v2232, %v2231
  %vm2234 = vcmp.lt.s32.totalorder %v1804, 0
  %v2235 = vsub.s32 0, %v1804
  %v2236 = vsel %vm2234, %v2235, %v1804
  %v2237 = vshrl.u32 %v2236, 5
  %v2238 = vand.u32 %v2236, 31
  %v2239 = vsub.s32 0, %v2238
  %v2240 = vsel %vm2234, %v2239, %v2238
  %vm2241 = vcmp.lt.s32.totalorder %v1805, 0
  %v2242 = vsub.s32 0, %v1805
  %v2243 = vsel %vm2241, %v2242, %v1805
  %v2244 = vshrl.u32 %v2243, 5
  %v2245 = vand.u32 %v2243, 31
  %v2246 = vsub.s32 0, %v2245
  %v2247 = vsel %vm2241, %v2246, %v2245
  %vm2248 = vcmp.lt.s32.totalorder %v1806, 0
  %v2249 = vsub.s32 0, %v1806
  %v2250 = vsel %vm2248, %v2249, %v1806
  %v2251 = vshrl.u32 %v2250, 5
  %v2252 = vand.u32 %v2250, 31
  %v2253 = vsub.s32 0, %v2252
  %v2254 = vsel %vm2248, %v2253, %v2252
  %vm2255 = vcmp.ne.s32.totalorder %v1813, 0
  %vm2256 = vcmp.ne.s32.totalorder %v1820, 0
  %vm2257 = vcmp.ne.s32.totalorder %v1827, 0
  %vm2258 = vcmp.ne.s32.totalorder %v1834, 0
  %vm2259 = vcmp.ne.s32.totalorder %v1841, 0
  %vm2260 = vcmp.ne.s32.totalorder %v1848, 0
  %vm2261 = vcmp.ne.s32.totalorder %v1855, 0
  %vm2262 = vcmp.ne.s32.totalorder %v1862, 0
  %vm2263 = vcmp.ne.s32.totalorder %v1869, 0
  %vm2264 = vcmp.ne.s32.totalorder %v1876, 0
  %vm2265 = vcmp.ne.s32.totalorder %v1883, 0
  %vm2266 = vcmp.ne.s32.totalorder %v1890, 0
  %vm2267 = vcmp.ne.s32.totalorder %v1897, 0
  %vm2268 = vcmp.ne.s32.totalorder %v1904, 0
  %vm2269 = vcmp.ne.s32.totalorder %v1911, 0
  %vm2270 = vcmp.ne.s32.totalorder %v1918, 0
  %vm2271 = vcmp.ne.s32.totalorder %v1925, 0
  %vm2272 = vcmp.ne.s32.totalorder %v1932, 0
  %vm2273 = vcmp.ne.s32.totalorder %v1939, 0
  %vm2274 = vcmp.ne.s32.totalorder %v1946, 0
  %vm2275 = vcmp.ne.s32.totalorder %v1953, 0
  %vm2276 = vcmp.ne.s32.totalorder %v1960, 0
  %vm2277 = vcmp.ne.s32.totalorder %v1967, 0
  %vm2278 = vcmp.ne.s32.totalorder %v1974, 0
  %vm2279 = vcmp.ne.s32.totalorder %v1981, 0
  %vm2280 = vcmp.ne.s32.totalorder %v1988, 0
  %vm2281 = vcmp.ne.s32.totalorder %v1995, 0
  %vm2282 = vcmp.ne.s32.totalorder %v2002, 0
  %vm2283 = vcmp.ne.s32.totalorder %v2009, 0
  %vm2284 = vcmp.ne.s32.totalorder %v2016, 0
  %vm2285 = vcmp.ne.s32.totalorder %v2023, 0
  %vm2286 = vcmp.ne.s32.totalorder %v2030, 0
  %vm2287 = vcmp.ne.s32.totalorder %v2037, 0
  %vm2288 = vcmp.ne.s32.totalorder %v2044, 0
  %vm2289 = vcmp.ne.s32.totalorder %v2051, 0
  %vm2290 = vcmp.ne.s32.totalorder %v2058, 0
  %vm2291 = vcmp.ne.s32.totalorder %v2065, 0
  %vm2292 = vcmp.ne.s32.totalorder %v2072, 0
  %vm2293 = vcmp.ne.s32.totalorder %v2079, 0
  %vm2294 = vcmp.ne.s32.totalorder %v2086, 0
  %vm2295 = vcmp.ne.s32.totalorder %v2093, 0
  %vm2296 = vcmp.ne.s32.totalorder %v2100, 0
  %vm2297 = vcmp.ne.s32.totalorder %v2107, 0
  %vm2298 = vcmp.ne.s32.totalorder %v2114, 0
  %vm2299 = vcmp.ne.s32.totalorder %v2121, 0
  %vm2300 = vcmp.ne.s32.totalorder %v2128, 0
  %vm2301 = vcmp.ne.s32.totalorder %v2135, 0
  %vm2302 = vcmp.ne.s32.totalorder %v2142, 0
  %vm2303 = vcmp.ne.s32.totalorder %v2149, 0
  %vm2304 = vcmp.ne.s32.totalorder %v2156, 0
  %vm2305 = vcmp.ne.s32.totalorder %v2163, 0
  %vm2306 = vcmp.ne.s32.totalorder %v2170, 0
  %vm2307 = vcmp.ne.s32.totalorder %v2177, 0
  %vm2308 = vcmp.ne.s32.totalorder %v2184, 0
  %vm2309 = vcmp.ne.s32.totalorder %v2191, 0
  %vm2310 = vcmp.ne.s32.totalorder %v2198, 0
  %vm2311 = vcmp.ne.s32.totalorder %v2205, 0
  %vm2312 = vcmp.ne.s32.totalorder %v2212, 0
  %vm2313 = vcmp.ne.s32.totalorder %v2219, 0
  %vm2314 = vcmp.ne.s32.totalorder %v2226, 0
  %vm2315 = vcmp.ne.s32.totalorder %v2233, 0
  %vm2316 = vcmp.ne.s32.totalorder %v2240, 0
  %vm2317 = vcmp.ne.s32.totalorder %v2247, 0
  %vm2318 = vcmp.ne.s32.totalorder %v2254, 0
  %vm2319 = vcmp.lt.s32.totalorder %v1813, 0
  %vm2320 = vcmp.lt.s32.totalorder %v1820, 0
  %vm2321 = vcmp.lt.s32.totalorder %v1827, 0
  %vm2322 = vcmp.lt.s32.totalorder %v1834, 0
  %vm2323 = vcmp.lt.s32.totalorder %v1841, 0
  %vm2324 = vcmp.lt.s32.totalorder %v1848, 0
  %vm2325 = vcmp.lt.s32.totalorder %v1855, 0
  %vm2326 = vcmp.lt.s32.totalorder %v1862, 0
  %vm2327 = vcmp.lt.s32.totalorder %v1869, 0
  %vm2328 = vcmp.lt.s32.totalorder %v1876, 0
  %vm2329 = vcmp.lt.s32.totalorder %v1883, 0
  %vm2330 = vcmp.lt.s32.totalorder %v1890, 0
  %vm2331 = vcmp.lt.s32.totalorder %v1897, 0
  %vm2332 = vcmp.lt.s32.totalorder %v1904, 0
  %vm2333 = vcmp.lt.s32.totalorder %v1911, 0
  %vm2334 = vcmp.lt.s32.totalorder %v1918, 0
  %vm2335 = vcmp.lt.s32.totalorder %v1925, 0
  %vm2336 = vcmp.lt.s32.totalorder %v1932, 0
  %vm2337 = vcmp.lt.s32.totalorder %v1939, 0
  %vm2338 = vcmp.lt.s32.totalorder %v1946, 0
  %vm2339 = vcmp.lt.s32.totalorder %v1953, 0
  %vm2340 = vcmp.lt.s32.totalorder %v1960, 0
  %vm2341 = vcmp.lt.s32.totalorder %v1967, 0
  %vm2342 = vcmp.lt.s32.totalorder %v1974, 0
  %vm2343 = vcmp.lt.s32.totalorder %v1981, 0
  %vm2344 = vcmp.lt.s32.totalorder %v1988, 0
  %vm2345 = vcmp.lt.s32.totalorder %v1995, 0
  %vm2346 = vcmp.lt.s32.totalorder %v2002, 0
  %vm2347 = vcmp.lt.s32.totalorder %v2009, 0
  %vm2348 = vcmp.lt.s32.totalorder %v2016, 0
  %vm2349 = vcmp.lt.s32.totalorder %v2023, 0
  %vm2350 = vcmp.lt.s32.totalorder %v2030, 0
  %vm2351 = vcmp.lt.s32.totalorder %v2037, 0
  %vm2352 = vcmp.lt.s32.totalorder %v2044, 0
  %vm2353 = vcmp.lt.s32.totalorder %v2051, 0
  %vm2354 = vcmp.lt.s32.totalorder %v2058, 0
  %vm2355 = vcmp.lt.s32.totalorder %v2065, 0
  %vm2356 = vcmp.lt.s32.totalorder %v2072, 0
  %vm2357 = vcmp.lt.s32.totalorder %v2079, 0
  %vm2358 = vcmp.lt.s32.totalorder %v2086, 0
  %vm2359 = vcmp.lt.s32.totalorder %v2093, 0
  %vm2360 = vcmp.lt.s32.totalorder %v2100, 0
  %vm2361 = vcmp.lt.s32.totalorder %v2107, 0
  %vm2362 = vcmp.lt.s32.totalorder %v2114, 0
  %vm2363 = vcmp.lt.s32.totalorder %v2121, 0
  %vm2364 = vcmp.lt.s32.totalorder %v2128, 0
  %vm2365 = vcmp.lt.s32.totalorder %v2135, 0
  %vm2366 = vcmp.lt.s32.totalorder %v2142, 0
  %vm2367 = vcmp.lt.s32.totalorder %v2149, 0
  %vm2368 = vcmp.lt.s32.totalorder %v2156, 0
  %vm2369 = vcmp.lt.s32.totalorder %v2163, 0
  %vm2370 = vcmp.lt.s32.totalorder %v2170, 0
  %vm2371 = vcmp.lt.s32.totalorder %v2177, 0
  %vm2372 = vcmp.lt.s32.totalorder %v2184, 0
  %vm2373 = vcmp.lt.s32.totalorder %v2191, 0
  %vm2374 = vcmp.lt.s32.totalorder %v2198, 0
  %vm2375 = vcmp.lt.s32.totalorder %v2205, 0
  %vm2376 = vcmp.lt.s32.totalorder %v2212, 0
  %vm2377 = vcmp.lt.s32.totalorder %v2219, 0
  %vm2378 = vcmp.lt.s32.totalorder %v2226, 0
  %vm2379 = vcmp.lt.s32.totalorder %v2233, 0
  %vm2380 = vcmp.lt.s32.totalorder %v2240, 0
  %vm2381 = vcmp.lt.s32.totalorder %v2247, 0
  %vm2382 = vcmp.lt.s32.totalorder %v2254, 0
  %vm2383 = vmand %vm2319, %vm2255
  %vm2384 = vmand %vm2320, %vm2256
  %vm2385 = vmand %vm2321, %vm2257
  %vm2386 = vmand %vm2322, %vm2258
  %vm2387 = vmand %vm2323, %vm2259
  %vm2388 = vmand %vm2324, %vm2260
  %vm2389 = vmand %vm2325, %vm2261
  %vm2390 = vmand %vm2326, %vm2262
  %vm2391 = vmand %vm2327, %vm2263
  %vm2392 = vmand %vm2328, %vm2264
  %vm2393 = vmand %vm2329, %vm2265
  %vm2394 = vmand %vm2330, %vm2266
  %vm2395 = vmand %vm2331, %vm2267
  %vm2396 = vmand %vm2332, %vm2268
  %vm2397 = vmand %vm2333, %vm2269
  %vm2398 = vmand %vm2334, %vm2270
  %vm2399 = vmand %vm2335, %vm2271
  %vm2400 = vmand %vm2336, %vm2272
  %vm2401 = vmand %vm2337, %vm2273
  %vm2402 = vmand %vm2338, %vm2274
  %vm2403 = vmand %vm2339, %vm2275
  %vm2404 = vmand %vm2340, %vm2276
  %vm2405 = vmand %vm2341, %vm2277
  %vm2406 = vmand %vm2342, %vm2278
  %vm2407 = vmand %vm2343, %vm2279
  %vm2408 = vmand %vm2344, %vm2280
  %vm2409 = vmand %vm2345, %vm2281
  %vm2410 = vmand %vm2346, %vm2282
  %vm2411 = vmand %vm2347, %vm2283
  %vm2412 = vmand %vm2348, %vm2284
  %vm2413 = vmand %vm2349, %vm2285
  %vm2414 = vmand %vm2350, %vm2286
  %vm2415 = vmand %vm2351, %vm2287
  %vm2416 = vmand %vm2352, %vm2288
  %vm2417 = vmand %vm2353, %vm2289
  %vm2418 = vmand %vm2354, %vm2290
  %vm2419 = vmand %vm2355, %vm2291
  %vm2420 = vmand %vm2356, %vm2292
  %vm2421 = vmand %vm2357, %vm2293
  %vm2422 = vmand %vm2358, %vm2294
  %vm2423 = vmand %vm2359, %vm2295
  %vm2424 = vmand %vm2360, %vm2296
  %vm2425 = vmand %vm2361, %vm2297
  %vm2426 = vmand %vm2362, %vm2298
  %vm2427 = vmand %vm2363, %vm2299
  %vm2428 = vmand %vm2364, %vm2300
  %vm2429 = vmand %vm2365, %vm2301
  %vm2430 = vmand %vm2366, %vm2302
  %vm2431 = vmand %vm2367, %vm2303
  %vm2432 = vmand %vm2368, %vm2304
  %vm2433 = vmand %vm2369, %vm2305
  %vm2434 = vmand %vm2370, %vm2306
  %vm2435 = vmand %vm2371, %vm2307
  %vm2436 = vmand %vm2372, %vm2308
  %vm2437 = vmand %vm2373, %vm2309
  %vm2438 = vmand %vm2374, %vm2310
  %vm2439 = vmand %vm2375, %vm2311
  %vm2440 = vmand %vm2376, %vm2312
  %vm2441 = vmand %vm2377, %vm2313
  %vm2442 = vmand %vm2378, %vm2314
  %vm2443 = vmand %vm2379, %vm2315
  %vm2444 = vmand %vm2380, %vm2316
  %vm2445 = vmand %vm2381, %vm2317
  %vm2446 = vmand %vm2382, %vm2318
  %v2447 = vadd.s32 %v1813, 32
  %v2448 = vadd.s32 %v1820, 32
  %v2449 = vadd.s32 %v1827, 32
  %v2450 = vadd.s32 %v1834, 32
  %v2451 = vadd.s32 %v1841, 32
  %v2452 = vadd.s32 %v1848, 32
  %v2453 = vadd.s32 %v1855, 32
  %v2454 = vadd.s32 %v1862, 32
  %v2455 = vadd.s32 %v1869, 32
  %v2456 = vadd.s32 %v1876, 32
  %v2457 = vadd.s32 %v1883, 32
  %v2458 = vadd.s32 %v1890, 32
  %v2459 = vadd.s32 %v1897, 32
  %v2460 = vadd.s32 %v1904, 32
  %v2461 = vadd.s32 %v1911, 32
  %v2462 = vadd.s32 %v1918, 32
  %v2463 = vadd.s32 %v1925, 32
  %v2464 = vadd.s32 %v1932, 32
  %v2465 = vadd.s32 %v1939, 32
  %v2466 = vadd.s32 %v1946, 32
  %v2467 = vadd.s32 %v1953, 32
  %v2468 = vadd.s32 %v1960, 32
  %v2469 = vadd.s32 %v1967, 32
  %v2470 = vadd.s32 %v1974, 32
  %v2471 = vadd.s32 %v1981, 32
  %v2472 = vadd.s32 %v1988, 32
  %v2473 = vadd.s32 %v1995, 32
  %v2474 = vadd.s32 %v2002, 32
  %v2475 = vadd.s32 %v2009, 32
  %v2476 = vadd.s32 %v2016, 32
  %v2477 = vadd.s32 %v2023, 32
  %v2478 = vadd.s32 %v2030, 32
  %v2479 = vadd.s32 %v2037, 32
  %v2480 = vadd.s32 %v2044, 32
  %v2481 = vadd.s32 %v2051, 32
  %v2482 = vadd.s32 %v2058, 32
  %v2483 = vadd.s32 %v2065, 32
  %v2484 = vadd.s32 %v2072, 32
  %v2485 = vadd.s32 %v2079, 32
  %v2486 = vadd.s32 %v2086, 32
  %v2487 = vadd.s32 %v2093, 32
  %v2488 = vadd.s32 %v2100, 32
  %v2489 = vadd.s32 %v2107, 32
  %v2490 = vadd.s32 %v2114, 32
  %v2491 = vadd.s32 %v2121, 32
  %v2492 = vadd.s32 %v2128, 32
  %v2493 = vadd.s32 %v2135, 32
  %v2494 = vadd.s32 %v2142, 32
  %v2495 = vadd.s32 %v2149, 32
  %v2496 = vadd.s32 %v2156, 32
  %v2497 = vadd.s32 %v2163, 32
  %v2498 = vadd.s32 %v2170, 32
  %v2499 = vadd.s32 %v2177, 32
  %v2500 = vadd.s32 %v2184, 32
  %v2501 = vadd.s32 %v2191, 32
  %v2502 = vadd.s32 %v2198, 32
  %v2503 = vadd.s32 %v2205, 32
  %v2504 = vadd.s32 %v2212, 32
  %v2505 = vadd.s32 %v2219, 32
  %v2506 = vadd.s32 %v2226, 32
  %v2507 = vadd.s32 %v2233, 32
  %v2508 = vadd.s32 %v2240, 32
  %v2509 = vadd.s32 %v2247, 32
  %v2510 = vadd.s32 %v2254, 32
  %v2511 = vsel %vm2383, %v2447, %v1813
  %v2512 = vsel %vm2384, %v2448, %v1820
  %v2513 = vsel %vm2385, %v2449, %v1827
  %v2514 = vsel %vm2386, %v2450, %v1834
  %v2515 = vsel %vm2387, %v2451, %v1841
  %v2516 = vsel %vm2388, %v2452, %v1848
  %v2517 = vsel %vm2389, %v2453, %v1855
  %v2518 = vsel %vm2390, %v2454, %v1862
  %v2519 = vsel %vm2391, %v2455, %v1869
  %v2520 = vsel %vm2392, %v2456, %v1876
  %v2521 = vsel %vm2393, %v2457, %v1883
  %v2522 = vsel %vm2394, %v2458, %v1890
  %v2523 = vsel %vm2395, %v2459, %v1897
  %v2524 = vsel %vm2396, %v2460, %v1904
  %v2525 = vsel %vm2397, %v2461, %v1911
  %v2526 = vsel %vm2398, %v2462, %v1918
  %v2527 = vsel %vm2399, %v2463, %v1925
  %v2528 = vsel %vm2400, %v2464, %v1932
  %v2529 = vsel %vm2401, %v2465, %v1939
  %v2530 = vsel %vm2402, %v2466, %v1946
  %v2531 = vsel %vm2403, %v2467, %v1953
  %v2532 = vsel %vm2404, %v2468, %v1960
  %v2533 = vsel %vm2405, %v2469, %v1967
  %v2534 = vsel %vm2406, %v2470, %v1974
  %v2535 = vsel %vm2407, %v2471, %v1981
  %v2536 = vsel %vm2408, %v2472, %v1988
  %v2537 = vsel %vm2409, %v2473, %v1995
  %v2538 = vsel %vm2410, %v2474, %v2002
  %v2539 = vsel %vm2411, %v2475, %v2009
  %v2540 = vsel %vm2412, %v2476, %v2016
  %v2541 = vsel %vm2413, %v2477, %v2023
  %v2542 = vsel %vm2414, %v2478, %v2030
  %v2543 = vsel %vm2415, %v2479, %v2037
  %v2544 = vsel %vm2416, %v2480, %v2044
  %v2545 = vsel %vm2417, %v2481, %v2051
  %v2546 = vsel %vm2418, %v2482, %v2058
  %v2547 = vsel %vm2419, %v2483, %v2065
  %v2548 = vsel %vm2420, %v2484, %v2072
  %v2549 = vsel %vm2421, %v2485, %v2079
  %v2550 = vsel %vm2422, %v2486, %v2086
  %v2551 = vsel %vm2423, %v2487, %v2093
  %v2552 = vsel %vm2424, %v2488, %v2100
  %v2553 = vsel %vm2425, %v2489, %v2107
  %v2554 = vsel %vm2426, %v2490, %v2114
  %v2555 = vsel %vm2427, %v2491, %v2121
  %v2556 = vsel %vm2428, %v2492, %v2128
  %v2557 = vsel %vm2429, %v2493, %v2135
  %v2558 = vsel %vm2430, %v2494, %v2142
  %v2559 = vsel %vm2431, %v2495, %v2149
  %v2560 = vsel %vm2432, %v2496, %v2156
  %v2561 = vsel %vm2433, %v2497, %v2163
  %v2562 = vsel %vm2434, %v2498, %v2170
  %v2563 = vsel %vm2435, %v2499, %v2177
  %v2564 = vsel %vm2436, %v2500, %v2184
  %v2565 = vsel %vm2437, %v2501, %v2191
  %v2566 = vsel %vm2438, %v2502, %v2198
  %v2567 = vsel %vm2439, %v2503, %v2205
  %v2568 = vsel %vm2440, %v2504, %v2212
  %v2569 = vsel %vm2441, %v2505, %v2219
  %v2570 = vsel %vm2442, %v2506, %v2226
  %v2571 = vsel %vm2443, %v2507, %v2233
  %v2572 = vsel %vm2444, %v2508, %v2240
  %v2573 = vsel %vm2445, %v2509, %v2247
  %v2574 = vsel %vm2446, %v2510, %v2254
  %v2575 = vlaneseq
  %v2576 = vand.u32 %v2575, 127
  %vm2577 = vcmp.eq.s32.totalorder %v2511, %v2576
  %vm2578 = vcmp.eq.s32.totalorder %v2512, %v2576
  %vm2579 = vcmp.eq.s32.totalorder %v2513, %v2576
  %vm2580 = vcmp.eq.s32.totalorder %v2514, %v2576
  %vm2581 = vcmp.eq.s32.totalorder %v2515, %v2576
  %vm2582 = vcmp.eq.s32.totalorder %v2516, %v2576
  %vm2583 = vcmp.eq.s32.totalorder %v2517, %v2576
  %vm2584 = vcmp.eq.s32.totalorder %v2518, %v2576
  %vm2585 = vcmp.eq.s32.totalorder %v2519, %v2576
  %vm2586 = vcmp.eq.s32.totalorder %v2520, %v2576
  %vm2587 = vcmp.eq.s32.totalorder %v2521, %v2576
  %vm2588 = vcmp.eq.s32.totalorder %v2522, %v2576
  %vm2589 = vcmp.eq.s32.totalorder %v2523, %v2576
  %vm2590 = vcmp.eq.s32.totalorder %v2524, %v2576
  %vm2591 = vcmp.eq.s32.totalorder %v2525, %v2576
  %vm2592 = vcmp.eq.s32.totalorder %v2526, %v2576
  %vm2593 = vcmp.eq.s32.totalorder %v2527, %v2576
  %vm2594 = vcmp.eq.s32.totalorder %v2528, %v2576
  %vm2595 = vcmp.eq.s32.totalorder %v2529, %v2576
  %vm2596 = vcmp.eq.s32.totalorder %v2530, %v2576
  %vm2597 = vcmp.eq.s32.totalorder %v2531, %v2576
  %vm2598 = vcmp.eq.s32.totalorder %v2532, %v2576
  %vm2599 = vcmp.eq.s32.totalorder %v2533, %v2576
  %vm2600 = vcmp.eq.s32.totalorder %v2534, %v2576
  %vm2601 = vcmp.eq.s32.totalorder %v2535, %v2576
  %vm2602 = vcmp.eq.s32.totalorder %v2536, %v2576
  %vm2603 = vcmp.eq.s32.totalorder %v2537, %v2576
  %vm2604 = vcmp.eq.s32.totalorder %v2538, %v2576
  %vm2605 = vcmp.eq.s32.totalorder %v2539, %v2576
  %vm2606 = vcmp.eq.s32.totalorder %v2540, %v2576
  %vm2607 = vcmp.eq.s32.totalorder %v2541, %v2576
  %vm2608 = vcmp.eq.s32.totalorder %v2542, %v2576
  %vm2609 = vcmp.eq.s32.totalorder %v2543, %v2576
  %vm2610 = vcmp.eq.s32.totalorder %v2544, %v2576
  %vm2611 = vcmp.eq.s32.totalorder %v2545, %v2576
  %vm2612 = vcmp.eq.s32.totalorder %v2546, %v2576
  %vm2613 = vcmp.eq.s32.totalorder %v2547, %v2576
  %vm2614 = vcmp.eq.s32.totalorder %v2548, %v2576
  %vm2615 = vcmp.eq.s32.totalorder %v2549, %v2576
  %vm2616 = vcmp.eq.s32.totalorder %v2550, %v2576
  %vm2617 = vcmp.eq.s32.totalorder %v2551, %v2576
  %vm2618 = vcmp.eq.s32.totalorder %v2552, %v2576
  %vm2619 = vcmp.eq.s32.totalorder %v2553, %v2576
  %vm2620 = vcmp.eq.s32.totalorder %v2554, %v2576
  %vm2621 = vcmp.eq.s32.totalorder %v2555, %v2576
  %vm2622 = vcmp.eq.s32.totalorder %v2556, %v2576
  %vm2623 = vcmp.eq.s32.totalorder %v2557, %v2576
  %vm2624 = vcmp.eq.s32.totalorder %v2558, %v2576
  %vm2625 = vcmp.eq.s32.totalorder %v2559, %v2576
  %vm2626 = vcmp.eq.s32.totalorder %v2560, %v2576
  %vm2627 = vcmp.eq.s32.totalorder %v2561, %v2576
  %vm2628 = vcmp.eq.s32.totalorder %v2562, %v2576
  %vm2629 = vcmp.eq.s32.totalorder %v2563, %v2576
  %vm2630 = vcmp.eq.s32.totalorder %v2564, %v2576
  %vm2631 = vcmp.eq.s32.totalorder %v2565, %v2576
  %vm2632 = vcmp.eq.s32.totalorder %v2566, %v2576
  %vm2633 = vcmp.eq.s32.totalorder %v2567, %v2576
  %vm2634 = vcmp.eq.s32.totalorder %v2568, %v2576
  %vm2635 = vcmp.eq.s32.totalorder %v2569, %v2576
  %vm2636 = vcmp.eq.s32.totalorder %v2570, %v2576
  %vm2637 = vcmp.eq.s32.totalorder %v2571, %v2576
  %vm2638 = vcmp.eq.s32.totalorder %v2572, %v2576
  %vm2639 = vcmp.eq.s32.totalorder %v2573, %v2576
  %vm2640 = vcmp.eq.s32.totalorder %v2574, %v2576
  %v2641 = vsel %vm2577, 1, 0
  %v2642 = vsel %vm2578, 1, 0
  %v2643 = vsel %vm2579, 1, 0
  %v2644 = vsel %vm2580, 1, 0
  %v2645 = vsel %vm2581, 1, 0
  %v2646 = vsel %vm2582, 1, 0
  %v2647 = vsel %vm2583, 1, 0
  %v2648 = vsel %vm2584, 1, 0
  %v2649 = vsel %vm2585, 1, 0
  %v2650 = vsel %vm2586, 1, 0
  %v2651 = vsel %vm2587, 1, 0
  %v2652 = vsel %vm2588, 1, 0
  %v2653 = vsel %vm2589, 1, 0
  %v2654 = vsel %vm2590, 1, 0
  %v2655 = vsel %vm2591, 1, 0
  %v2656 = vsel %vm2592, 1, 0
  %v2657 = vsel %vm2593, 1, 0
  %v2658 = vsel %vm2594, 1, 0
  %v2659 = vsel %vm2595, 1, 0
  %v2660 = vsel %vm2596, 1, 0
  %v2661 = vsel %vm2597, 1, 0
  %v2662 = vsel %vm2598, 1, 0
  %v2663 = vsel %vm2599, 1, 0
  %v2664 = vsel %vm2600, 1, 0
  %v2665 = vsel %vm2601, 1, 0
  %v2666 = vsel %vm2602, 1, 0
  %v2667 = vsel %vm2603, 1, 0
  %v2668 = vsel %vm2604, 1, 0
  %v2669 = vsel %vm2605, 1, 0
  %v2670 = vsel %vm2606, 1, 0
  %v2671 = vsel %vm2607, 1, 0
  %v2672 = vsel %vm2608, 1, 0
  %v2673 = vsel %vm2609, 1, 0
  %v2674 = vsel %vm2610, 1, 0
  %v2675 = vsel %vm2611, 1, 0
  %v2676 = vsel %vm2612, 1, 0
  %v2677 = vsel %vm2613, 1, 0
  %v2678 = vsel %vm2614, 1, 0
  %v2679 = vsel %vm2615, 1, 0
  %v2680 = vsel %vm2616, 1, 0
  %v2681 = vsel %vm2617, 1, 0
  %v2682 = vsel %vm2618, 1, 0
  %v2683 = vsel %vm2619, 1, 0
  %v2684 = vsel %vm2620, 1, 0
  %v2685 = vsel %vm2621, 1, 0
  %v2686 = vsel %vm2622, 1, 0
  %v2687 = vsel %vm2623, 1, 0
  %v2688 = vsel %vm2624, 1, 0
  %v2689 = vsel %vm2625, 1, 0
  %v2690 = vsel %vm2626, 1, 0
  %v2691 = vsel %vm2627, 1, 0
  %v2692 = vsel %vm2628, 1, 0
  %v2693 = vsel %vm2629, 1, 0
  %v2694 = vsel %vm2630, 1, 0
  %v2695 = vsel %vm2631, 1, 0
  %v2696 = vsel %vm2632, 1, 0
  %v2697 = vsel %vm2633, 1, 0
  %v2698 = vsel %vm2634, 1, 0
  %v2699 = vsel %vm2635, 1, 0
  %v2700 = vsel %vm2636, 1, 0
  %v2701 = vsel %vm2637, 1, 0
  %v2702 = vsel %vm2638, 1, 0
  %v2703 = vsel %vm2639, 1, 0
  %v2704 = vsel %vm2640, 1, 0
  %v2705 = vcvt.s32.f32 %v2641
  %v2706 = vcvt.s32.f32 %v2642
  %v2707 = vcvt.s32.f32 %v2643
  %v2708 = vcvt.s32.f32 %v2644
  %v2709 = vcvt.s32.f32 %v2645
  %v2710 = vcvt.s32.f32 %v2646
  %v2711 = vcvt.s32.f32 %v2647
  %v2712 = vcvt.s32.f32 %v2648
  %v2713 = vcvt.s32.f32 %v2649
  %v2714 = vcvt.s32.f32 %v2650
  %v2715 = vcvt.s32.f32 %v2651
  %v2716 = vcvt.s32.f32 %v2652
  %v2717 = vcvt.s32.f32 %v2653
  %v2718 = vcvt.s32.f32 %v2654
  %v2719 = vcvt.s32.f32 %v2655
  %v2720 = vcvt.s32.f32 %v2656
  %v2721 = vcvt.s32.f32 %v2657
  %v2722 = vcvt.s32.f32 %v2658
  %v2723 = vcvt.s32.f32 %v2659
  %v2724 = vcvt.s32.f32 %v2660
  %v2725 = vcvt.s32.f32 %v2661
  %v2726 = vcvt.s32.f32 %v2662
  %v2727 = vcvt.s32.f32 %v2663
  %v2728 = vcvt.s32.f32 %v2664
  %v2729 = vcvt.s32.f32 %v2665
  %v2730 = vcvt.s32.f32 %v2666
  %v2731 = vcvt.s32.f32 %v2667
  %v2732 = vcvt.s32.f32 %v2668
  %v2733 = vcvt.s32.f32 %v2669
  %v2734 = vcvt.s32.f32 %v2670
  %v2735 = vcvt.s32.f32 %v2671
  %v2736 = vcvt.s32.f32 %v2672
  %v2737 = vcvt.s32.f32 %v2673
  %v2738 = vcvt.s32.f32 %v2674
  %v2739 = vcvt.s32.f32 %v2675
  %v2740 = vcvt.s32.f32 %v2676
  %v2741 = vcvt.s32.f32 %v2677
  %v2742 = vcvt.s32.f32 %v2678
  %v2743 = vcvt.s32.f32 %v2679
  %v2744 = vcvt.s32.f32 %v2680
  %v2745 = vcvt.s32.f32 %v2681
  %v2746 = vcvt.s32.f32 %v2682
  %v2747 = vcvt.s32.f32 %v2683
  %v2748 = vcvt.s32.f32 %v2684
  %v2749 = vcvt.s32.f32 %v2685
  %v2750 = vcvt.s32.f32 %v2686
  %v2751 = vcvt.s32.f32 %v2687
  %v2752 = vcvt.s32.f32 %v2688
  %v2753 = vcvt.s32.f32 %v2689
  %v2754 = vcvt.s32.f32 %v2690
  %v2755 = vcvt.s32.f32 %v2691
  %v2756 = vcvt.s32.f32 %v2692
  %v2757 = vcvt.s32.f32 %v2693
  %v2758 = vcvt.s32.f32 %v2694
  %v2759 = vcvt.s32.f32 %v2695
  %v2760 = vcvt.s32.f32 %v2696
  %v2761 = vcvt.s32.f32 %v2697
  %v2762 = vcvt.s32.f32 %v2698
  %v2763 = vcvt.s32.f32 %v2699
  %v2764 = vcvt.s32.f32 %v2700
  %v2765 = vcvt.s32.f32 %v2701
  %v2766 = vcvt.s32.f32 %v2702
  %v2767 = vcvt.s32.f32 %v2703
  %v2768 = vcvt.s32.f32 %v2704
  %2769 = vmatprep.subr.mxu0 0.0
  %v2770 = vand.u32 %v2705, 4294901760
  %2771 = vmatpush1.msra.mxu0 %v2770
  %2772 = vmatprep.subr.mxu0 0.0
  %v2773 = vand.u32 %v2706, 4294901760
  %2774 = vmatpush1.msra.mxu0 %v2773
  %2775 = vmatprep.subr.mxu0 0.0
  %v2776 = vand.u32 %v2707, 4294901760
  %2777 = vmatpush1.msra.mxu0 %v2776
  %2778 = vmatprep.subr.mxu0 0.0
  %v2779 = vand.u32 %v2708, 4294901760
  %2780 = vmatpush1.msra.mxu0 %v2779
  %2781 = vmatprep.subr.mxu0 0.0
  %v2782 = vand.u32 %v2709, 4294901760
  %2783 = vmatpush1.msra.mxu0 %v2782
  %2784 = vmatprep.subr.mxu0 0.0
  %v2785 = vand.u32 %v2710, 4294901760
  %2786 = vmatpush1.msra.mxu0 %v2785
  %2787 = vmatprep.subr.mxu0 0.0
  %v2788 = vand.u32 %v2711, 4294901760
  %2789 = vmatpush1.msra.mxu0 %v2788
  %2790 = vmatprep.subr.mxu0 0.0
  %v2791 = vand.u32 %v2712, 4294901760
  %2792 = vmatpush1.msra.mxu0 %v2791
  %2793 = vmatprep.subr.mxu0 0.0
  %v2794 = vand.u32 %v2713, 4294901760
  %2795 = vmatpush1.msra.mxu0 %v2794
  %2796 = vmatprep.subr.mxu0 0.0
  %v2797 = vand.u32 %v2714, 4294901760
  %2798 = vmatpush1.msra.mxu0 %v2797
  %2799 = vmatprep.subr.mxu0 0.0
  %v2800 = vand.u32 %v2715, 4294901760
  %2801 = vmatpush1.msra.mxu0 %v2800
  %2802 = vmatprep.subr.mxu0 0.0
  %v2803 = vand.u32 %v2716, 4294901760
  %2804 = vmatpush1.msra.mxu0 %v2803
  %2805 = vmatprep.subr.mxu0 0.0
  %v2806 = vand.u32 %v2717, 4294901760
  %2807 = vmatpush1.msra.mxu0 %v2806
  %2808 = vmatprep.subr.mxu0 0.0
  %v2809 = vand.u32 %v2718, 4294901760
  %2810 = vmatpush1.msra.mxu0 %v2809
  %2811 = vmatprep.subr.mxu0 0.0
  %v2812 = vand.u32 %v2719, 4294901760
  %2813 = vmatpush1.msra.mxu0 %v2812
  %2814 = vmatprep.subr.mxu0 0.0
  %v2815 = vand.u32 %v2720, 4294901760
  %2816 = vmatpush1.msra.mxu0 %v2815
  %2817 = vmatprep.subr.mxu0 0.0
  %v2818 = vand.u32 %v2721, 4294901760
  %2819 = vmatpush1.msra.mxu0 %v2818
  %2820 = vmatprep.subr.mxu0 0.0
  %v2821 = vand.u32 %v2722, 4294901760
  %2822 = vmatpush1.msra.mxu0 %v2821
  %2823 = vmatprep.subr.mxu0 0.0
  %v2824 = vand.u32 %v2723, 4294901760
  %2825 = vmatpush1.msra.mxu0 %v2824
  %2826 = vmatprep.subr.mxu0 0.0
  %v2827 = vand.u32 %v2724, 4294901760
  %2828 = vmatpush1.msra.mxu0 %v2827
  %2829 = vmatprep.subr.mxu0 0.0
  %v2830 = vand.u32 %v2725, 4294901760
  %2831 = vmatpush1.msra.mxu0 %v2830
  %2832 = vmatprep.subr.mxu0 0.0
  %v2833 = vand.u32 %v2726, 4294901760
  %2834 = vmatpush1.msra.mxu0 %v2833
  %2835 = vmatprep.subr.mxu0 0.0
  %v2836 = vand.u32 %v2727, 4294901760
  %2837 = vmatpush1.msra.mxu0 %v2836
  %2838 = vmatprep.subr.mxu0 0.0
  %v2839 = vand.u32 %v2728, 4294901760
  %2840 = vmatpush1.msra.mxu0 %v2839
  %2841 = vmatprep.subr.mxu0 0.0
  %v2842 = vand.u32 %v2729, 4294901760
  %2843 = vmatpush1.msra.mxu0 %v2842
  %2844 = vmatprep.subr.mxu0 0.0
  %v2845 = vand.u32 %v2730, 4294901760
  %2846 = vmatpush1.msra.mxu0 %v2845
  %2847 = vmatprep.subr.mxu0 0.0
  %v2848 = vand.u32 %v2731, 4294901760
  %2849 = vmatpush1.msra.mxu0 %v2848
  %2850 = vmatprep.subr.mxu0 0.0
  %v2851 = vand.u32 %v2732, 4294901760
  %2852 = vmatpush1.msra.mxu0 %v2851
  %2853 = vmatprep.subr.mxu0 0.0
  %v2854 = vand.u32 %v2733, 4294901760
  %2855 = vmatpush1.msra.mxu0 %v2854
  %2856 = vmatprep.subr.mxu0 0.0
  %v2857 = vand.u32 %v2734, 4294901760
  %2858 = vmatpush1.msra.mxu0 %v2857
  %2859 = vmatprep.subr.mxu0 0.0
  %v2860 = vand.u32 %v2735, 4294901760
  %2861 = vmatpush1.msra.mxu0 %v2860
  %2862 = vmatprep.subr.mxu0 0.0
  %v2863 = vand.u32 %v2736, 4294901760
  %2864 = vmatpush1.msra.mxu0 %v2863
  %v2865 = vand.u32 %v1671, 4294901760
  %v2866 = vsub.f32 %v1671, %v2865
  %v2867 = vand.u32 %v2866, 4294901760
  %v2868 = vsub.f32 %v2866, %v2867
  %v2869 = vand.u32 %v2868, 4294901760
  %2870 = vmatprep.mubr.f32.mxu0 %v2869
  %v2871 = vand.u32 %v1662, 4294901760
  %v2872 = vsub.f32 %v1662, %v2871
  %v2873 = vand.u32 %v2872, 4294901760
  %v2874 = vsub.f32 %v2872, %v2873
  %v2875 = vand.u32 %v2874, 4294901760
  %2876 = vmatmul.mubr.f32.gmra.mrb[0].mxu0 %v2875
  %v2877 = vpop.f32.mrb[0].mxu0
  %v2878 = vadd.f32 0.0, %v2877
  %v2879 = vpop.f32.mrb[0].mxu0
  %2880 = vdwg.mxu0
  %2881 = vmatprep.subr.mxu0 0.0
  %v2882 = vand.u32 %v2705, 4294901760
  %v2883 = vsub.f32 %v2705, %v2882
  %v2884 = vand.u32 %v2883, 4294901760
  %v2885 = vsub.f32 %v2883, %v2884
  %v2886 = vand.u32 %v2885, 4294901760
  %2887 = vmatpush1.msra.mxu0 %v2886
  %2888 = vmatprep.subr.mxu0 0.0
  %v2889 = vand.u32 %v2706, 4294901760
  %v2890 = vsub.f32 %v2706, %v2889
  %v2891 = vand.u32 %v2890, 4294901760
  %v2892 = vsub.f32 %v2890, %v2891
  %v2893 = vand.u32 %v2892, 4294901760
  %2894 = vmatpush1.msra.mxu0 %v2893
  %2895 = vmatprep.subr.mxu0 0.0
  %v2896 = vand.u32 %v2707, 4294901760
  %v2897 = vsub.f32 %v2707, %v2896
  %v2898 = vand.u32 %v2897, 4294901760
  %v2899 = vsub.f32 %v2897, %v2898
  %v2900 = vand.u32 %v2899, 4294901760
  %2901 = vmatpush1.msra.mxu0 %v2900
  %2902 = vmatprep.subr.mxu0 0.0
  %v2903 = vand.u32 %v2708, 4294901760
  %v2904 = vsub.f32 %v2708, %v2903
  %v2905 = vand.u32 %v2904, 4294901760
  %v2906 = vsub.f32 %v2904, %v2905
  %v2907 = vand.u32 %v2906, 4294901760
  %2908 = vmatpush1.msra.mxu0 %v2907
  %2909 = vmatprep.subr.mxu0 0.0
  %v2910 = vand.u32 %v2709, 4294901760
  %v2911 = vsub.f32 %v2709, %v2910
  %v2912 = vand.u32 %v2911, 4294901760
  %v2913 = vsub.f32 %v2911, %v2912
  %v2914 = vand.u32 %v2913, 4294901760
  %2915 = vmatpush1.msra.mxu0 %v2914
  %2916 = vmatprep.subr.mxu0 0.0
  %v2917 = vand.u32 %v2710, 4294901760
  %v2918 = vsub.f32 %v2710, %v2917
  %v2919 = vand.u32 %v2918, 4294901760
  %v2920 = vsub.f32 %v2918, %v2919
  %v2921 = vand.u32 %v2920, 4294901760
  %2922 = vmatpush1.msra.mxu0 %v2921
  %2923 = vmatprep.subr.mxu0 0.0
  %v2924 = vand.u32 %v2711, 4294901760
  %v2925 = vsub.f32 %v2711, %v2924
  %v2926 = vand.u32 %v2925, 4294901760
  %v2927 = vsub.f32 %v2925, %v2926
  %v2928 = vand.u32 %v2927, 4294901760
  %2929 = vmatpush1.msra.mxu0 %v2928
  %2930 = vmatprep.subr.mxu0 0.0
  %v2931 = vand.u32 %v2712, 4294901760
  %v2932 = vsub.f32 %v2712, %v2931
  %v2933 = vand.u32 %v2932, 4294901760
  %v2934 = vsub.f32 %v2932, %v2933
  %v2935 = vand.u32 %v2934, 4294901760
  %2936 = vmatpush1.msra.mxu0 %v2935
  %2937 = vmatprep.subr.mxu0 0.0
  %v2938 = vand.u32 %v2713, 4294901760
  %v2939 = vsub.f32 %v2713, %v2938
  %v2940 = vand.u32 %v2939, 4294901760
  %v2941 = vsub.f32 %v2939, %v2940
  %v2942 = vand.u32 %v2941, 4294901760
  %2943 = vmatpush1.msra.mxu0 %v2942
  %2944 = vmatprep.subr.mxu0 0.0
  %v2945 = vand.u32 %v2714, 4294901760
  %v2946 = vsub.f32 %v2714, %v2945
  %v2947 = vand.u32 %v2946, 4294901760
  %v2948 = vsub.f32 %v2946, %v2947
  %v2949 = vand.u32 %v2948, 4294901760
  %2950 = vmatpush1.msra.mxu0 %v2949
  %2951 = vmatprep.subr.mxu0 0.0
  %v2952 = vand.u32 %v2715, 4294901760
  %v2953 = vsub.f32 %v2715, %v2952
  %v2954 = vand.u32 %v2953, 4294901760
  %v2955 = vsub.f32 %v2953, %v2954
  %v2956 = vand.u32 %v2955, 4294901760
  %2957 = vmatpush1.msra.mxu0 %v2956
  %2958 = vmatprep.subr.mxu0 0.0
  %v2959 = vand.u32 %v2716, 4294901760
  %v2960 = vsub.f32 %v2716, %v2959
  %v2961 = vand.u32 %v2960, 4294901760
  %v2962 = vsub.f32 %v2960, %v2961
  %v2963 = vand.u32 %v2962, 4294901760
  %2964 = vmatpush1.msra.mxu0 %v2963
  %2965 = vmatprep.subr.mxu0 0.0
  %v2966 = vand.u32 %v2717, 4294901760
  %v2967 = vsub.f32 %v2717, %v2966
  %v2968 = vand.u32 %v2967, 4294901760
  %v2969 = vsub.f32 %v2967, %v2968
  %v2970 = vand.u32 %v2969, 4294901760
  %2971 = vmatpush1.msra.mxu0 %v2970
  %2972 = vmatprep.subr.mxu0 0.0
  %v2973 = vand.u32 %v2718, 4294901760
  %v2974 = vsub.f32 %v2718, %v2973
  %v2975 = vand.u32 %v2974, 4294901760
  %v2976 = vsub.f32 %v2974, %v2975
  %v2977 = vand.u32 %v2976, 4294901760
  %2978 = vmatpush1.msra.mxu0 %v2977
  %2979 = vmatprep.subr.mxu0 0.0
  %v2980 = vand.u32 %v2719, 4294901760
  %v2981 = vsub.f32 %v2719, %v2980
  %v2982 = vand.u32 %v2981, 4294901760
  %v2983 = vsub.f32 %v2981, %v2982
  %v2984 = vand.u32 %v2983, 4294901760
  %2985 = vmatpush1.msra.mxu0 %v2984
  %2986 = vmatprep.subr.mxu0 0.0
  %v2987 = vand.u32 %v2720, 4294901760
  %v2988 = vsub.f32 %v2720, %v2987
  %v2989 = vand.u32 %v2988, 4294901760
  %v2990 = vsub.f32 %v2988, %v2989
  %v2991 = vand.u32 %v2990, 4294901760
  %2992 = vmatpush1.msra.mxu0 %v2991
  %2993 = vmatprep.subr.mxu0 0.0
  %v2994 = vand.u32 %v2721, 4294901760
  %v2995 = vsub.f32 %v2721, %v2994
  %v2996 = vand.u32 %v2995, 4294901760
  %v2997 = vsub.f32 %v2995, %v2996
  %v2998 = vand.u32 %v2997, 4294901760
  %2999 = vmatpush1.msra.mxu0 %v2998
  %3000 = vmatprep.subr.mxu0 0.0
  %v3001 = vand.u32 %v2722, 4294901760
  %v3002 = vsub.f32 %v2722, %v3001
  %v3003 = vand.u32 %v3002, 4294901760
  %v3004 = vsub.f32 %v3002, %v3003
  %v3005 = vand.u32 %v3004, 4294901760
  %3006 = vmatpush1.msra.mxu0 %v3005
  %3007 = vmatprep.subr.mxu0 0.0
  %v3008 = vand.u32 %v2723, 4294901760
  %v3009 = vsub.f32 %v2723, %v3008
  %v3010 = vand.u32 %v3009, 4294901760
  %v3011 = vsub.f32 %v3009, %v3010
  %v3012 = vand.u32 %v3011, 4294901760
  %3013 = vmatpush1.msra.mxu0 %v3012
  %3014 = vmatprep.subr.mxu0 0.0
  %v3015 = vand.u32 %v2724, 4294901760
  %v3016 = vsub.f32 %v2724, %v3015
  %v3017 = vand.u32 %v3016, 4294901760
  %v3018 = vsub.f32 %v3016, %v3017
  %v3019 = vand.u32 %v3018, 4294901760
  %3020 = vmatpush1.msra.mxu0 %v3019
  %3021 = vmatprep.subr.mxu0 0.0
  %v3022 = vand.u32 %v2725, 4294901760
  %v3023 = vsub.f32 %v2725, %v3022
  %v3024 = vand.u32 %v3023, 4294901760
  %v3025 = vsub.f32 %v3023, %v3024
  %v3026 = vand.u32 %v3025, 4294901760
  %3027 = vmatpush1.msra.mxu0 %v3026
  %3028 = vmatprep.subr.mxu0 0.0
  %v3029 = vand.u32 %v2726, 4294901760
  %v3030 = vsub.f32 %v2726, %v3029
  %v3031 = vand.u32 %v3030, 4294901760
  %v3032 = vsub.f32 %v3030, %v3031
  %v3033 = vand.u32 %v3032, 4294901760
  %3034 = vmatpush1.msra.mxu0 %v3033
  %3035 = vmatprep.subr.mxu0 0.0
  %v3036 = vand.u32 %v2727, 4294901760
  %v3037 = vsub.f32 %v2727, %v3036
  %v3038 = vand.u32 %v3037, 4294901760
  %v3039 = vsub.f32 %v3037, %v3038
  %v3040 = vand.u32 %v3039, 4294901760
  %3041 = vmatpush1.msra.mxu0 %v3040
  %3042 = vmatprep.subr.mxu0 0.0
  %v3043 = vand.u32 %v2728, 4294901760
  %v3044 = vsub.f32 %v2728, %v3043
  %v3045 = vand.u32 %v3044, 4294901760
  %v3046 = vsub.f32 %v3044, %v3045
  %v3047 = vand.u32 %v3046, 4294901760
  %3048 = vmatpush1.msra.mxu0 %v3047
  %3049 = vmatprep.subr.mxu0 0.0
  %v3050 = vand.u32 %v2729, 4294901760
  %v3051 = vsub.f32 %v2729, %v3050
  %v3052 = vand.u32 %v3051, 4294901760
  %v3053 = vsub.f32 %v3051, %v3052
  %v3054 = vand.u32 %v3053, 4294901760
  %3055 = vmatpush1.msra.mxu0 %v3054
  %3056 = vmatprep.subr.mxu0 0.0
  %v3057 = vand.u32 %v2730, 4294901760
  %v3058 = vsub.f32 %v2730, %v3057
  %v3059 = vand.u32 %v3058, 4294901760
  %v3060 = vsub.f32 %v3058, %v3059
  %v3061 = vand.u32 %v3060, 4294901760
  %3062 = vmatpush1.msra.mxu0 %v3061
  %3063 = vmatprep.subr.mxu0 0.0
  %v3064 = vand.u32 %v2731, 4294901760
  %v3065 = vsub.f32 %v2731, %v3064
  %v3066 = vand.u32 %v3065, 4294901760
  %v3067 = vsub.f32 %v3065, %v3066
  %v3068 = vand.u32 %v3067, 4294901760
  %3069 = vmatpush1.msra.mxu0 %v3068
  %3070 = vmatprep.subr.mxu0 0.0
  %v3071 = vand.u32 %v2732, 4294901760
  %v3072 = vsub.f32 %v2732, %v3071
  %v3073 = vand.u32 %v3072, 4294901760
  %v3074 = vsub.f32 %v3072, %v3073
  %v3075 = vand.u32 %v3074, 4294901760
  %3076 = vmatpush1.msra.mxu0 %v3075
  %3077 = vmatprep.subr.mxu0 0.0
  %v3078 = vand.u32 %v2733, 4294901760
  %v3079 = vsub.f32 %v2733, %v3078
  %v3080 = vand.u32 %v3079, 4294901760
  %v3081 = vsub.f32 %v3079, %v3080
  %v3082 = vand.u32 %v3081, 4294901760
  %3083 = vmatpush1.msra.mxu0 %v3082
  %3084 = vmatprep.subr.mxu0 0.0
  %v3085 = vand.u32 %v2734, 4294901760
  %v3086 = vsub.f32 %v2734, %v3085
  %v3087 = vand.u32 %v3086, 4294901760
  %v3088 = vsub.f32 %v3086, %v3087
  %v3089 = vand.u32 %v3088, 4294901760
  %3090 = vmatpush1.msra.mxu0 %v3089
  %3091 = vmatprep.subr.mxu0 0.0
  %v3092 = vand.u32 %v2735, 4294901760
  %v3093 = vsub.f32 %v2735, %v3092
  %v3094 = vand.u32 %v3093, 4294901760
  %v3095 = vsub.f32 %v3093, %v3094
  %v3096 = vand.u32 %v3095, 4294901760
  %3097 = vmatpush1.msra.mxu0 %v3096
  %3098 = vmatprep.subr.mxu0 0.0
  %v3099 = vand.u32 %v2736, 4294901760
  %v3100 = vsub.f32 %v2736, %v3099
  %v3101 = vand.u32 %v3100, 4294901760
  %v3102 = vsub.f32 %v3100, %v3101
  %v3103 = vand.u32 %v3102, 4294901760
  %3104 = vmatpush1.msra.mxu0 %v3103
  %v3105 = vand.u32 %v1671, 4294901760
  %3106 = vmatprep.mubr.f32.mxu0 %v3105
  %v3107 = vand.u32 %v1662, 4294901760
  %3108 = vmatmul.mubr.f32.gmra.mrb[0].mxu0 %v3107
  %v3109 = vpop.f32.mrb[0].mxu0
  %v3110 = vadd.f32 %v2878, %v3109
  %v3111 = vpop.f32.mrb[0].mxu0
  %3112 = vdwg.mxu0
  %3113 = vmatprep.subr.mxu0 0.0
  %v3114 = vand.u32 %v2705, 4294901760
  %v3115 = vsub.f32 %v2705, %v3114
  %3116 = vmatpush1.msra.mxu0 %v3115
  %3117 = vmatprep.subr.mxu0 0.0
  %v3118 = vand.u32 %v2706, 4294901760
  %v3119 = vsub.f32 %v2706, %v3118
  %3120 = vmatpush1.msra.mxu0 %v3119
  %3121 = vmatprep.subr.mxu0 0.0
  %v3122 = vand.u32 %v2707, 4294901760
  %v3123 = vsub.f32 %v2707, %v3122
  %3124 = vmatpush1.msra.mxu0 %v3123
  %3125 = vmatprep.subr.mxu0 0.0
  %v3126 = vand.u32 %v2708, 4294901760
  %v3127 = vsub.f32 %v2708, %v3126
  %3128 = vmatpush1.msra.mxu0 %v3127
  %3129 = vmatprep.subr.mxu0 0.0
  %v3130 = vand.u32 %v2709, 4294901760
  %v3131 = vsub.f32 %v2709, %v3130
  %3132 = vmatpush1.msra.mxu0 %v3131
  %3133 = vmatprep.subr.mxu0 0.0
  %v3134 = vand.u32 %v2710, 4294901760
  %v3135 = vsub.f32 %v2710, %v3134
  %3136 = vmatpush1.msra.mxu0 %v3135
  %3137 = vmatprep.subr.mxu0 0.0
  %v3138 = vand.u32 %v2711, 4294901760
  %v3139 = vsub.f32 %v2711, %v3138
  %3140 = vmatpush1.msra.mxu0 %v3139
  %3141 = vmatprep.subr.mxu0 0.0
  %v3142 = vand.u32 %v2712, 4294901760
  %v3143 = vsub.f32 %v2712, %v3142
  %3144 = vmatpush1.msra.mxu0 %v3143
  %3145 = vmatprep.subr.mxu0 0.0
  %v3146 = vand.u32 %v2713, 4294901760
  %v3147 = vsub.f32 %v2713, %v3146
  %3148 = vmatpush1.msra.mxu0 %v3147
  %3149 = vmatprep.subr.mxu0 0.0
  %v3150 = vand.u32 %v2714, 4294901760
  %v3151 = vsub.f32 %v2714, %v3150
  %3152 = vmatpush1.msra.mxu0 %v3151
  %3153 = vmatprep.subr.mxu0 0.0
  %v3154 = vand.u32 %v2715, 4294901760
  %v3155 = vsub.f32 %v2715, %v3154
  %3156 = vmatpush1.msra.mxu0 %v3155
  %3157 = vmatprep.subr.mxu0 0.0
  %v3158 = vand.u32 %v2716, 4294901760
  %v3159 = vsub.f32 %v2716, %v3158
  %3160 = vmatpush1.msra.mxu0 %v3159
  %3161 = vmatprep.subr.mxu0 0.0
  %v3162 = vand.u32 %v2717, 4294901760
  %v3163 = vsub.f32 %v2717, %v3162
  %3164 = vmatpush1.msra.mxu0 %v3163
  %3165 = vmatprep.subr.mxu0 0.0
  %v3166 = vand.u32 %v2718, 4294901760
  %v3167 = vsub.f32 %v2718, %v3166
  %3168 = vmatpush1.msra.mxu0 %v3167
  %3169 = vmatprep.subr.mxu0 0.0
  %v3170 = vand.u32 %v2719, 4294901760
  %v3171 = vsub.f32 %v2719, %v3170
  %3172 = vmatpush1.msra.mxu0 %v3171
  %3173 = vmatprep.subr.mxu0 0.0
  %v3174 = vand.u32 %v2720, 4294901760
  %v3175 = vsub.f32 %v2720, %v3174
  %3176 = vmatpush1.msra.mxu0 %v3175
  %3177 = vmatprep.subr.mxu0 0.0
  %v3178 = vand.u32 %v2721, 4294901760
  %v3179 = vsub.f32 %v2721, %v3178
  %3180 = vmatpush1.msra.mxu0 %v3179
  %3181 = vmatprep.subr.mxu0 0.0
  %v3182 = vand.u32 %v2722, 4294901760
  %v3183 = vsub.f32 %v2722, %v3182
  %3184 = vmatpush1.msra.mxu0 %v3183
  %3185 = vmatprep.subr.mxu0 0.0
  %v3186 = vand.u32 %v2723, 4294901760
  %v3187 = vsub.f32 %v2723, %v3186
  %3188 = vmatpush1.msra.mxu0 %v3187
  %3189 = vmatprep.subr.mxu0 0.0
  %v3190 = vand.u32 %v2724, 4294901760
  %v3191 = vsub.f32 %v2724, %v3190
  %3192 = vmatpush1.msra.mxu0 %v3191
  %3193 = vmatprep.subr.mxu0 0.0
  %v3194 = vand.u32 %v2725, 4294901760
  %v3195 = vsub.f32 %v2725, %v3194
  %3196 = vmatpush1.msra.mxu0 %v3195
  %3197 = vmatprep.subr.mxu0 0.0
  %v3198 = vand.u32 %v2726, 4294901760
  %v3199 = vsub.f32 %v2726, %v3198
  %3200 = vmatpush1.msra.mxu0 %v3199
  %3201 = vmatprep.subr.mxu0 0.0
  %v3202 = vand.u32 %v2727, 4294901760
  %v3203 = vsub.f32 %v2727, %v3202
  %3204 = vmatpush1.msra.mxu0 %v3203
  %3205 = vmatprep.subr.mxu0 0.0
  %v3206 = vand.u32 %v2728, 4294901760
  %v3207 = vsub.f32 %v2728, %v3206
  %3208 = vmatpush1.msra.mxu0 %v3207
  %3209 = vmatprep.subr.mxu0 0.0
  %v3210 = vand.u32 %v2729, 4294901760
  %v3211 = vsub.f32 %v2729, %v3210
  %3212 = vmatpush1.msra.mxu0 %v3211
  %3213 = vmatprep.subr.mxu0 0.0
  %v3214 = vand.u32 %v2730, 4294901760
  %v3215 = vsub.f32 %v2730, %v3214
  %3216 = vmatpush1.msra.mxu0 %v3215
  %3217 = vmatprep.subr.mxu0 0.0
  %v3218 = vand.u32 %v2731, 4294901760
  %v3219 = vsub.f32 %v2731, %v3218
  %3220 = vmatpush1.msra.mxu0 %v3219
  %3221 = vmatprep.subr.mxu0 0.0
  %v3222 = vand.u32 %v2732, 4294901760
  %v3223 = vsub.f32 %v2732, %v3222
  %3224 = vmatpush1.msra.mxu0 %v3223
  %3225 = vmatprep.subr.mxu0 0.0
  %v3226 = vand.u32 %v2733, 4294901760
  %v3227 = vsub.f32 %v2733, %v3226
  %3228 = vmatpush1.msra.mxu0 %v3227
  %3229 = vmatprep.subr.mxu0 0.0
  %v3230 = vand.u32 %v2734, 4294901760
  %v3231 = vsub.f32 %v2734, %v3230
  %3232 = vmatpush1.msra.mxu0 %v3231
  %3233 = vmatprep.subr.mxu0 0.0
  %v3234 = vand.u32 %v2735, 4294901760
  %v3235 = vsub.f32 %v2735, %v3234
  %3236 = vmatpush1.msra.mxu0 %v3235
  %3237 = vmatprep.subr.mxu0 0.0
  %v3238 = vand.u32 %v2736, 4294901760
  %v3239 = vsub.f32 %v2736, %v3238
  %3240 = vmatpush1.msra.mxu0 %v3239
  %v3241 = vand.u32 %v1671, 4294901760
  %v3242 = vsub.f32 %v1671, %v3241
  %3243 = vmatprep.mubr.f32.mxu0 %v3242
  %v3244 = vand.u32 %v1662, 4294901760
  %v3245 = vsub.f32 %v1662, %v3244
  %3246 = vmatmul.mubr.f32.gmra.mrb[0].mxu0 %v3245
  %v3247 = vpop.f32.mrb[0].mxu0
  %v3248 = vadd.f32 %v3110, %v3247
  %v3249 = vpop.f32.mrb[0].mxu0
  %3250 = vdwg.mxu0
  %3251 = vmatprep.subr.mxu0 0.0
  %v3252 = vand.u32 %v2705, 4294901760
  %3253 = vmatpush1.msra.mxu0 %v3252
  %3254 = vmatprep.subr.mxu0 0.0
  %v3255 = vand.u32 %v2706, 4294901760
  %3256 = vmatpush1.msra.mxu0 %v3255
  %3257 = vmatprep.subr.mxu0 0.0
  %v3258 = vand.u32 %v2707, 4294901760
  %3259 = vmatpush1.msra.mxu0 %v3258
  %3260 = vmatprep.subr.mxu0 0.0
  %v3261 = vand.u32 %v2708, 4294901760
  %3262 = vmatpush1.msra.mxu0 %v3261
  %3263 = vmatprep.subr.mxu0 0.0
  %v3264 = vand.u32 %v2709, 4294901760
  %3265 = vmatpush1.msra.mxu0 %v3264
  %3266 = vmatprep.subr.mxu0 0.0
  %v3267 = vand.u32 %v2710, 4294901760
  %3268 = vmatpush1.msra.mxu0 %v3267
  %3269 = vmatprep.subr.mxu0 0.0
  %v3270 = vand.u32 %v2711, 4294901760
  %3271 = vmatpush1.msra.mxu0 %v3270
  %3272 = vmatprep.subr.mxu0 0.0
  %v3273 = vand.u32 %v2712, 4294901760
  %3274 = vmatpush1.msra.mxu0 %v3273
  %3275 = vmatprep.subr.mxu0 0.0
  %v3276 = vand.u32 %v2713, 4294901760
  %3277 = vmatpush1.msra.mxu0 %v3276
  %3278 = vmatprep.subr.mxu0 0.0
  %v3279 = vand.u32 %v2714, 4294901760
  %3280 = vmatpush1.msra.mxu0 %v3279
  %3281 = vmatprep.subr.mxu0 0.0
  %v3282 = vand.u32 %v2715, 4294901760
  %3283 = vmatpush1.msra.mxu0 %v3282
  %3284 = vmatprep.subr.mxu0 0.0
  %v3285 = vand.u32 %v2716, 4294901760
  %3286 = vmatpush1.msra.mxu0 %v3285
  %3287 = vmatprep.subr.mxu0 0.0
  %v3288 = vand.u32 %v2717, 4294901760
  %3289 = vmatpush1.msra.mxu0 %v3288
  %3290 = vmatprep.subr.mxu0 0.0
  %v3291 = vand.u32 %v2718, 4294901760
  %3292 = vmatpush1.msra.mxu0 %v3291
  %3293 = vmatprep.subr.mxu0 0.0
  %v3294 = vand.u32 %v2719, 4294901760
  %3295 = vmatpush1.msra.mxu0 %v3294
  %3296 = vmatprep.subr.mxu0 0.0
  %v3297 = vand.u32 %v2720, 4294901760
  %3298 = vmatpush1.msra.mxu0 %v3297
  %3299 = vmatprep.subr.mxu0 0.0
  %v3300 = vand.u32 %v2721, 4294901760
  %3301 = vmatpush1.msra.mxu0 %v3300
  %3302 = vmatprep.subr.mxu0 0.0
  %v3303 = vand.u32 %v2722, 4294901760
  %3304 = vmatpush1.msra.mxu0 %v3303
  %3305 = vmatprep.subr.mxu0 0.0
  %v3306 = vand.u32 %v2723, 4294901760
  %3307 = vmatpush1.msra.mxu0 %v3306
  %3308 = vmatprep.subr.mxu0 0.0
  %v3309 = vand.u32 %v2724, 4294901760
  %3310 = vmatpush1.msra.mxu0 %v3309
  %3311 = vmatprep.subr.mxu0 0.0
  %v3312 = vand.u32 %v2725, 4294901760
  %3313 = vmatpush1.msra.mxu0 %v3312
  %3314 = vmatprep.subr.mxu0 0.0
  %v3315 = vand.u32 %v2726, 4294901760
  %3316 = vmatpush1.msra.mxu0 %v3315
  %3317 = vmatprep.subr.mxu0 0.0
  %v3318 = vand.u32 %v2727, 4294901760
  %3319 = vmatpush1.msra.mxu0 %v3318
  %3320 = vmatprep.subr.mxu0 0.0
  %v3321 = vand.u32 %v2728, 4294901760
  %3322 = vmatpush1.msra.mxu0 %v3321
  %3323 = vmatprep.subr.mxu0 0.0
  %v3324 = vand.u32 %v2729, 4294901760
  %3325 = vmatpush1.msra.mxu0 %v3324
  %3326 = vmatprep.subr.mxu0 0.0
  %v3327 = vand.u32 %v2730, 4294901760
  %3328 = vmatpush1.msra.mxu0 %v3327
  %3329 = vmatprep.subr.mxu0 0.0
  %v3330 = vand.u32 %v2731, 4294901760
  %3331 = vmatpush1.msra.mxu0 %v3330
  %3332 = vmatprep.subr.mxu0 0.0
  %v3333 = vand.u32 %v2732, 4294901760
  %3334 = vmatpush1.msra.mxu0 %v3333
  %3335 = vmatprep.subr.mxu0 0.0
  %v3336 = vand.u32 %v2733, 4294901760
  %3337 = vmatpush1.msra.mxu0 %v3336
  %3338 = vmatprep.subr.mxu0 0.0
  %v3339 = vand.u32 %v2734, 4294901760
  %3340 = vmatpush1.msra.mxu0 %v3339
  %3341 = vmatprep.subr.mxu0 0.0
  %v3342 = vand.u32 %v2735, 4294901760
  %3343 = vmatpush1.msra.mxu0 %v3342
  %3344 = vmatprep.subr.mxu0 0.0
  %v3345 = vand.u32 %v2736, 4294901760
  %3346 = vmatpush1.msra.mxu0 %v3345
  %v3347 = vand.u32 %v1671, 4294901760
  %v3348 = vsub.f32 %v1671, %v3347
  %v3349 = vand.u32 %v3348, 4294901760
  %3350 = vmatprep.mubr.f32.mxu0 %v3349
  %v3351 = vand.u32 %v1662, 4294901760
  %v3352 = vsub.f32 %v1662, %v3351
  %v3353 = vand.u32 %v3352, 4294901760
  %3354 = vmatmul.mubr.f32.gmra.mrb[0].mxu0 %v3353
  %v3355 = vpop.f32.mrb[0].mxu0
  %v3356 = vadd.f32 %v3248, %v3355
  %v3357 = vpop.f32.mrb[0].mxu0
  %3358 = vdwg.mxu0
  %3359 = vmatprep.subr.mxu0 0.0
  %v3360 = vand.u32 %v2705, 4294901760
  %v3361 = vsub.f32 %v2705, %v3360
  %v3362 = vand.u32 %v3361, 4294901760
  %3363 = vmatpush1.msra.mxu0 %v3362
  %3364 = vmatprep.subr.mxu0 0.0
  %v3365 = vand.u32 %v2706, 4294901760
  %v3366 = vsub.f32 %v2706, %v3365
  %v3367 = vand.u32 %v3366, 4294901760
  %3368 = vmatpush1.msra.mxu0 %v3367
  %3369 = vmatprep.subr.mxu0 0.0
  %v3370 = vand.u32 %v2707, 4294901760
  %v3371 = vsub.f32 %v2707, %v3370
  %v3372 = vand.u32 %v3371, 4294901760
  %3373 = vmatpush1.msra.mxu0 %v3372
  %3374 = vmatprep.subr.mxu0 0.0
  %v3375 = vand.u32 %v2708, 4294901760
  %v3376 = vsub.f32 %v2708, %v3375
  %v3377 = vand.u32 %v3376, 4294901760
  %3378 = vmatpush1.msra.mxu0 %v3377
  %3379 = vmatprep.subr.mxu0 0.0
  %v3380 = vand.u32 %v2709, 4294901760
  %v3381 = vsub.f32 %v2709, %v3380
  %v3382 = vand.u32 %v3381, 4294901760
  %3383 = vmatpush1.msra.mxu0 %v3382
  %3384 = vmatprep.subr.mxu0 0.0
  %v3385 = vand.u32 %v2710, 4294901760
  %v3386 = vsub.f32 %v2710, %v3385
  %v3387 = vand.u32 %v3386, 4294901760
  %3388 = vmatpush1.msra.mxu0 %v3387
  %3389 = vmatprep.subr.mxu0 0.0
  %v3390 = vand.u32 %v2711, 4294901760
  %v3391 = vsub.f32 %v2711, %v3390
  %v3392 = vand.u32 %v3391, 4294901760
  %3393 = vmatpush1.msra.mxu0 %v3392
  %3394 = vmatprep.subr.mxu0 0.0
  %v3395 = vand.u32 %v2712, 4294901760
  %v3396 = vsub.f32 %v2712, %v3395
  %v3397 = vand.u32 %v3396, 4294901760
  %3398 = vmatpush1.msra.mxu0 %v3397
  %3399 = vmatprep.subr.mxu0 0.0
  %v3400 = vand.u32 %v2713, 4294901760
  %v3401 = vsub.f32 %v2713, %v3400
  %v3402 = vand.u32 %v3401, 4294901760
  %3403 = vmatpush1.msra.mxu0 %v3402
  %3404 = vmatprep.subr.mxu0 0.0
  %v3405 = vand.u32 %v2714, 4294901760
  %v3406 = vsub.f32 %v2714, %v3405
  %v3407 = vand.u32 %v3406, 4294901760
  %3408 = vmatpush1.msra.mxu0 %v3407
  %3409 = vmatprep.subr.mxu0 0.0
  %v3410 = vand.u32 %v2715, 4294901760
  %v3411 = vsub.f32 %v2715, %v3410
  %v3412 = vand.u32 %v3411, 4294901760
  %3413 = vmatpush1.msra.mxu0 %v3412
  %3414 = vmatprep.subr.mxu0 0.0
  %v3415 = vand.u32 %v2716, 4294901760
  %v3416 = vsub.f32 %v2716, %v3415
  %v3417 = vand.u32 %v3416, 4294901760
  %3418 = vmatpush1.msra.mxu0 %v3417
  %3419 = vmatprep.subr.mxu0 0.0
  %v3420 = vand.u32 %v2717, 4294901760
  %v3421 = vsub.f32 %v2717, %v3420
  %v3422 = vand.u32 %v3421, 4294901760
  %3423 = vmatpush1.msra.mxu0 %v3422
  %3424 = vmatprep.subr.mxu0 0.0
  %v3425 = vand.u32 %v2718, 4294901760
  %v3426 = vsub.f32 %v2718, %v3425
  %v3427 = vand.u32 %v3426, 4294901760
  %3428 = vmatpush1.msra.mxu0 %v3427
  %3429 = vmatprep.subr.mxu0 0.0
  %v3430 = vand.u32 %v2719, 4294901760
  %v3431 = vsub.f32 %v2719, %v3430
  %v3432 = vand.u32 %v3431, 4294901760
  %3433 = vmatpush1.msra.mxu0 %v3432
  %3434 = vmatprep.subr.mxu0 0.0
  %v3435 = vand.u32 %v2720, 4294901760
  %v3436 = vsub.f32 %v2720, %v3435
  %v3437 = vand.u32 %v3436, 4294901760
  %3438 = vmatpush1.msra.mxu0 %v3437
  %3439 = vmatprep.subr.mxu0 0.0
  %v3440 = vand.u32 %v2721, 4294901760
  %v3441 = vsub.f32 %v2721, %v3440
  %v3442 = vand.u32 %v3441, 4294901760
  %3443 = vmatpush1.msra.mxu0 %v3442
  %3444 = vmatprep.subr.mxu0 0.0
  %v3445 = vand.u32 %v2722, 4294901760
  %v3446 = vsub.f32 %v2722, %v3445
  %v3447 = vand.u32 %v3446, 4294901760
  %3448 = vmatpush1.msra.mxu0 %v3447
  %3449 = vmatprep.subr.mxu0 0.0
  %v3450 = vand.u32 %v2723, 4294901760
  %v3451 = vsub.f32 %v2723, %v3450
  %v3452 = vand.u32 %v3451, 4294901760
  %3453 = vmatpush1.msra.mxu0 %v3452
  %3454 = vmatprep.subr.mxu0 0.0
  %v3455 = vand.u32 %v2724, 4294901760
  %v3456 = vsub.f32 %v2724, %v3455
  %v3457 = vand.u32 %v3456, 4294901760
  %3458 = vmatpush1.msra.mxu0 %v3457
  %3459 = vmatprep.subr.mxu0 0.0
  %v3460 = vand.u32 %v2725, 4294901760
  %v3461 = vsub.f32 %v2725, %v3460
  %v3462 = vand.u32 %v3461, 4294901760
  %3463 = vmatpush1.msra.mxu0 %v3462
  %3464 = vmatprep.subr.mxu0 0.0
  %v3465 = vand.u32 %v2726, 4294901760
  %v3466 = vsub.f32 %v2726, %v3465
  %v3467 = vand.u32 %v3466, 4294901760
  %3468 = vmatpush1.msra.mxu0 %v3467
  %3469 = vmatprep.subr.mxu0 0.0
  %v3470 = vand.u32 %v2727, 4294901760
  %v3471 = vsub.f32 %v2727, %v3470
  %v3472 = vand.u32 %v3471, 4294901760
  %3473 = vmatpush1.msra.mxu0 %v3472
  %3474 = vmatprep.subr.mxu0 0.0
  %v3475 = vand.u32 %v2728, 4294901760
  %v3476 = vsub.f32 %v2728, %v3475
  %v3477 = vand.u32 %v3476, 4294901760
  %3478 = vmatpush1.msra.mxu0 %v3477
  %3479 = vmatprep.subr.mxu0 0.0
  %v3480 = vand.u32 %v2729, 4294901760
  %v3481 = vsub.f32 %v2729, %v3480
  %v3482 = vand.u32 %v3481, 4294901760
  %3483 = vmatpush1.msra.mxu0 %v3482
  %3484 = vmatprep.subr.mxu0 0.0
  %v3485 = vand.u32 %v2730, 4294901760
  %v3486 = vsub.f32 %v2730, %v3485
  %v3487 = vand.u32 %v3486, 4294901760
  %3488 = vmatpush1.msra.mxu0 %v3487
  %3489 = vmatprep.subr.mxu0 0.0
  %v3490 = vand.u32 %v2731, 4294901760
  %v3491 = vsub.f32 %v2731, %v3490
  %v3492 = vand.u32 %v3491, 4294901760
  %3493 = vmatpush1.msra.mxu0 %v3492
  %3494 = vmatprep.subr.mxu0 0.0
  %v3495 = vand.u32 %v2732, 4294901760
  %v3496 = vsub.f32 %v2732, %v3495
  %v3497 = vand.u32 %v3496, 4294901760
  %3498 = vmatpush1.msra.mxu0 %v3497
  %3499 = vmatprep.subr.mxu0 0.0
  %v3500 = vand.u32 %v2733, 4294901760
  %v3501 = vsub.f32 %v2733, %v3500
  %v3502 = vand.u32 %v3501, 4294901760
  %3503 = vmatpush1.msra.mxu0 %v3502
  %3504 = vmatprep.subr.mxu0 0.0
  %v3505 = vand.u32 %v2734, 4294901760
  %v3506 = vsub.f32 %v2734, %v3505
  %v3507 = vand.u32 %v3506, 4294901760
  %3508 = vmatpush1.msra.mxu0 %v3507
  %3509 = vmatprep.subr.mxu0 0.0
  %v3510 = vand.u32 %v2735, 4294901760
  %v3511 = vsub.f32 %v2735, %v3510
  %v3512 = vand.u32 %v3511, 4294901760
  %3513 = vmatpush1.msra.mxu0 %v3512
  %3514 = vmatprep.subr.mxu0 0.0
  %v3515 = vand.u32 %v2736, 4294901760
  %v3516 = vsub.f32 %v2736, %v3515
  %v3517 = vand.u32 %v3516, 4294901760
  %3518 = vmatpush1.msra.mxu0 %v3517
  %v3519 = vand.u32 %v1671, 4294901760
  %3520 = vmatprep.mubr.f32.mxu0 %v3519
  %v3521 = vand.u32 %v1662, 4294901760
  %3522 = vmatmul.mubr.f32.gmra.mrb[0].mxu0 %v3521
  %v3523 = vpop.f32.mrb[0].mxu0
  %v3524 = vadd.f32 %v3356, %v3523
  %v3525 = vpop.f32.mrb[0].mxu0
  %3526 = vdwg.mxu0
  %3527 = vmatprep.subr.mxu0 0.0
  %v3528 = vand.u32 %v2705, 4294901760
  %3529 = vmatpush1.msra.mxu0 %v3528
  %3530 = vmatprep.subr.mxu0 0.0
  %v3531 = vand.u32 %v2706, 4294901760
  %3532 = vmatpush1.msra.mxu0 %v3531
  %3533 = vmatprep.subr.mxu0 0.0
  %v3534 = vand.u32 %v2707, 4294901760
  %3535 = vmatpush1.msra.mxu0 %v3534
  %3536 = vmatprep.subr.mxu0 0.0
  %v3537 = vand.u32 %v2708, 4294901760
  %3538 = vmatpush1.msra.mxu0 %v3537
  %3539 = vmatprep.subr.mxu0 0.0
  %v3540 = vand.u32 %v2709, 4294901760
  %3541 = vmatpush1.msra.mxu0 %v3540
  %3542 = vmatprep.subr.mxu0 0.0
  %v3543 = vand.u32 %v2710, 4294901760
  %3544 = vmatpush1.msra.mxu0 %v3543
  %3545 = vmatprep.subr.mxu0 0.0
  %v3546 = vand.u32 %v2711, 4294901760
  %3547 = vmatpush1.msra.mxu0 %v3546
  %3548 = vmatprep.subr.mxu0 0.0
  %v3549 = vand.u32 %v2712, 4294901760
  %3550 = vmatpush1.msra.mxu0 %v3549
  %3551 = vmatprep.subr.mxu0 0.0
  %v3552 = vand.u32 %v2713, 4294901760
  %3553 = vmatpush1.msra.mxu0 %v3552
  %3554 = vmatprep.subr.mxu0 0.0
  %v3555 = vand.u32 %v2714, 4294901760
  %3556 = vmatpush1.msra.mxu0 %v3555
  %3557 = vmatprep.subr.mxu0 0.0
  %v3558 = vand.u32 %v2715, 4294901760
  %3559 = vmatpush1.msra.mxu0 %v3558
  %3560 = vmatprep.subr.mxu0 0.0
  %v3561 = vand.u32 %v2716, 4294901760
  %3562 = vmatpush1.msra.mxu0 %v3561
  %3563 = vmatprep.subr.mxu0 0.0
  %v3564 = vand.u32 %v2717, 4294901760
  %3565 = vmatpush1.msra.mxu0 %v3564
  %3566 = vmatprep.subr.mxu0 0.0
  %v3567 = vand.u32 %v2718, 4294901760
  %3568 = vmatpush1.msra.mxu0 %v3567
  %3569 = vmatprep.subr.mxu0 0.0
  %v3570 = vand.u32 %v2719, 4294901760
  %3571 = vmatpush1.msra.mxu0 %v3570
  %3572 = vmatprep.subr.mxu0 0.0
  %v3573 = vand.u32 %v2720, 4294901760
  %3574 = vmatpush1.msra.mxu0 %v3573
  %3575 = vmatprep.subr.mxu0 0.0
  %v3576 = vand.u32 %v2721, 4294901760
  %3577 = vmatpush1.msra.mxu0 %v3576
  %3578 = vmatprep.subr.mxu0 0.0
  %v3579 = vand.u32 %v2722, 4294901760
  %3580 = vmatpush1.msra.mxu0 %v3579
  %3581 = vmatprep.subr.mxu0 0.0
  %v3582 = vand.u32 %v2723, 4294901760
  %3583 = vmatpush1.msra.mxu0 %v3582
  %3584 = vmatprep.subr.mxu0 0.0
  %v3585 = vand.u32 %v2724, 4294901760
  %3586 = vmatpush1.msra.mxu0 %v3585
  %3587 = vmatprep.subr.mxu0 0.0
  %v3588 = vand.u32 %v2725, 4294901760
  %3589 = vmatpush1.msra.mxu0 %v3588
  %3590 = vmatprep.subr.mxu0 0.0
  %v3591 = vand.u32 %v2726, 4294901760
  %3592 = vmatpush1.msra.mxu0 %v3591
  %3593 = vmatprep.subr.mxu0 0.0
  %v3594 = vand.u32 %v2727, 4294901760
  %3595 = vmatpush1.msra.mxu0 %v3594
  %3596 = vmatprep.subr.mxu0 0.0
  %v3597 = vand.u32 %v2728, 4294901760
  %3598 = vmatpush1.msra.mxu0 %v3597
  %3599 = vmatprep.subr.mxu0 0.0
  %v3600 = vand.u32 %v2729, 4294901760
  %3601 = vmatpush1.msra.mxu0 %v3600
  %3602 = vmatprep.subr.mxu0 0.0
  %v3603 = vand.u32 %v2730, 4294901760
  %3604 = vmatpush1.msra.mxu0 %v3603
  %3605 = vmatprep.subr.mxu0 0.0
  %v3606 = vand.u32 %v2731, 4294901760
  %3607 = vmatpush1.msra.mxu0 %v3606
  %3608 = vmatprep.subr.mxu0 0.0
  %v3609 = vand.u32 %v2732, 4294901760
  %3610 = vmatpush1.msra.mxu0 %v3609
  %3611 = vmatprep.subr.mxu0 0.0
  %v3612 = vand.u32 %v2733, 4294901760
  %3613 = vmatpush1.msra.mxu0 %v3612
  %3614 = vmatprep.subr.mxu0 0.0
  %v3615 = vand.u32 %v2734, 4294901760
  %3616 = vmatpush1.msra.mxu0 %v3615
  %3617 = vmatprep.subr.mxu0 0.0
  %v3618 = vand.u32 %v2735, 4294901760
  %3619 = vmatpush1.msra.mxu0 %v3618
  %3620 = vmatprep.subr.mxu0 0.0
  %v3621 = vand.u32 %v2736, 4294901760
  %3622 = vmatpush1.msra.mxu0 %v3621
  %v3623 = vand.u32 %v1671, 4294901760
  %3624 = vmatprep.mubr.f32.mxu0 %v3623
  %v3625 = vand.u32 %v1662, 4294901760
  %3626 = vmatmul.mubr.f32.gmra.mrb[0].mxu0 %v3625
  %v3627 = vpop.f32.mrb[0].mxu0
  %v3628 = vadd.f32 %v3524, %v3627
  %v3629 = vpop.f32.mrb[0].mxu0
  %3630 = vdwg.mxu0
  %3631 = vmatprep.subr.mxu0 0.0
  %v3632 = vand.u32 %v2737, 4294901760
  %3633 = vmatpush1.msra.mxu0 %v3632
  %3634 = vmatprep.subr.mxu0 0.0
  %v3635 = vand.u32 %v2738, 4294901760
  %3636 = vmatpush1.msra.mxu0 %v3635
  %3637 = vmatprep.subr.mxu0 0.0
  %v3638 = vand.u32 %v2739, 4294901760
  %3639 = vmatpush1.msra.mxu0 %v3638
  %3640 = vmatprep.subr.mxu0 0.0
  %v3641 = vand.u32 %v2740, 4294901760
  %3642 = vmatpush1.msra.mxu0 %v3641
  %3643 = vmatprep.subr.mxu0 0.0
  %v3644 = vand.u32 %v2741, 4294901760
  %3645 = vmatpush1.msra.mxu0 %v3644
  %3646 = vmatprep.subr.mxu0 0.0
  %v3647 = vand.u32 %v2742, 4294901760
  %3648 = vmatpush1.msra.mxu0 %v3647
  %3649 = vmatprep.subr.mxu0 0.0
  %v3650 = vand.u32 %v2743, 4294901760
  %3651 = vmatpush1.msra.mxu0 %v3650
  %3652 = vmatprep.subr.mxu0 0.0
  %v3653 = vand.u32 %v2744, 4294901760
  %3654 = vmatpush1.msra.mxu0 %v3653
  %3655 = vmatprep.subr.mxu0 0.0
  %v3656 = vand.u32 %v2745, 4294901760
  %3657 = vmatpush1.msra.mxu0 %v3656
  %3658 = vmatprep.subr.mxu0 0.0
  %v3659 = vand.u32 %v2746, 4294901760
  %3660 = vmatpush1.msra.mxu0 %v3659
  %3661 = vmatprep.subr.mxu0 0.0
  %v3662 = vand.u32 %v2747, 4294901760
  %3663 = vmatpush1.msra.mxu0 %v3662
  %3664 = vmatprep.subr.mxu0 0.0
  %v3665 = vand.u32 %v2748, 4294901760
  %3666 = vmatpush1.msra.mxu0 %v3665
  %3667 = vmatprep.subr.mxu0 0.0
  %v3668 = vand.u32 %v2749, 4294901760
  %3669 = vmatpush1.msra.mxu0 %v3668
  %3670 = vmatprep.subr.mxu0 0.0
  %v3671 = vand.u32 %v2750, 4294901760
  %3672 = vmatpush1.msra.mxu0 %v3671
  %3673 = vmatprep.subr.mxu0 0.0
  %v3674 = vand.u32 %v2751, 4294901760
  %3675 = vmatpush1.msra.mxu0 %v3674
  %3676 = vmatprep.subr.mxu0 0.0
  %v3677 = vand.u32 %v2752, 4294901760
  %3678 = vmatpush1.msra.mxu0 %v3677
  %3679 = vmatprep.subr.mxu0 0.0
  %v3680 = vand.u32 %v2753, 4294901760
  %3681 = vmatpush1.msra.mxu0 %v3680
  %3682 = vmatprep.subr.mxu0 0.0
  %v3683 = vand.u32 %v2754, 4294901760
  %3684 = vmatpush1.msra.mxu0 %v3683
  %3685 = vmatprep.subr.mxu0 0.0
  %v3686 = vand.u32 %v2755, 4294901760
  %3687 = vmatpush1.msra.mxu0 %v3686
  %3688 = vmatprep.subr.mxu0 0.0
  %v3689 = vand.u32 %v2756, 4294901760
  %3690 = vmatpush1.msra.mxu0 %v3689
  %3691 = vmatprep.subr.mxu0 0.0
  %v3692 = vand.u32 %v2757, 4294901760
  %3693 = vmatpush1.msra.mxu0 %v3692
  %3694 = vmatprep.subr.mxu0 0.0
  %v3695 = vand.u32 %v2758, 4294901760
  %3696 = vmatpush1.msra.mxu0 %v3695
  %3697 = vmatprep.subr.mxu0 0.0
  %v3698 = vand.u32 %v2759, 4294901760
  %3699 = vmatpush1.msra.mxu0 %v3698
  %3700 = vmatprep.subr.mxu0 0.0
  %v3701 = vand.u32 %v2760, 4294901760
  %3702 = vmatpush1.msra.mxu0 %v3701
  %3703 = vmatprep.subr.mxu0 0.0
  %v3704 = vand.u32 %v2761, 4294901760
  %3705 = vmatpush1.msra.mxu0 %v3704
  %3706 = vmatprep.subr.mxu0 0.0
  %v3707 = vand.u32 %v2762, 4294901760
  %3708 = vmatpush1.msra.mxu0 %v3707
  %3709 = vmatprep.subr.mxu0 0.0
  %v3710 = vand.u32 %v2763, 4294901760
  %3711 = vmatpush1.msra.mxu0 %v3710
  %3712 = vmatprep.subr.mxu0 0.0
  %v3713 = vand.u32 %v2764, 4294901760
  %3714 = vmatpush1.msra.mxu0 %v3713
  %3715 = vmatprep.subr.mxu0 0.0
  %v3716 = vand.u32 %v2765, 4294901760
  %3717 = vmatpush1.msra.mxu0 %v3716
  %3718 = vmatprep.subr.mxu0 0.0
  %v3719 = vand.u32 %v2766, 4294901760
  %3720 = vmatpush1.msra.mxu0 %v3719
  %3721 = vmatprep.subr.mxu0 0.0
  %v3722 = vand.u32 %v2767, 4294901760
  %3723 = vmatpush1.msra.mxu0 %v3722
  %3724 = vmatprep.subr.mxu0 0.0
  %v3725 = vand.u32 %v2768, 4294901760
  %3726 = vmatpush1.msra.mxu0 %v3725
  %v3727 = vand.u32 %v1689, 4294901760
  %v3728 = vsub.f32 %v1689, %v3727
  %v3729 = vand.u32 %v3728, 4294901760
  %v3730 = vsub.f32 %v3728, %v3729
  %v3731 = vand.u32 %v3730, 4294901760
  %3732 = vmatprep.mubr.f32.mxu0 %v3731
  %v3733 = vand.u32 %v1680, 4294901760
  %v3734 = vsub.f32 %v1680, %v3733
  %v3735 = vand.u32 %v3734, 4294901760
  %v3736 = vsub.f32 %v3734, %v3735
  %v3737 = vand.u32 %v3736, 4294901760
  %3738 = vmatmul.mubr.f32.gmra.mrb[0].mxu0 %v3737
  %v3739 = vpop.f32.mrb[0].mxu0
  %v3740 = vadd.f32 %v3628, %v3739
  %v3741 = vpop.f32.mrb[0].mxu0
  %3742 = vdwg.mxu0
  %3743 = vmatprep.subr.mxu0 0.0
  %v3744 = vand.u32 %v2737, 4294901760
  %v3745 = vsub.f32 %v2737, %v3744
  %v3746 = vand.u32 %v3745, 4294901760
  %v3747 = vsub.f32 %v3745, %v3746
  %v3748 = vand.u32 %v3747, 4294901760
  %3749 = vmatpush1.msra.mxu0 %v3748
  %3750 = vmatprep.subr.mxu0 0.0
  %v3751 = vand.u32 %v2738, 4294901760
  %v3752 = vsub.f32 %v2738, %v3751
  %v3753 = vand.u32 %v3752, 4294901760
  %v3754 = vsub.f32 %v3752, %v3753
  %v3755 = vand.u32 %v3754, 4294901760
  %3756 = vmatpush1.msra.mxu0 %v3755
  %3757 = vmatprep.subr.mxu0 0.0
  %v3758 = vand.u32 %v2739, 4294901760
  %v3759 = vsub.f32 %v2739, %v3758
  %v3760 = vand.u32 %v3759, 4294901760
  %v3761 = vsub.f32 %v3759, %v3760
  %v3762 = vand.u32 %v3761, 4294901760
  %3763 = vmatpush1.msra.mxu0 %v3762
  %3764 = vmatprep.subr.mxu0 0.0
  %v3765 = vand.u32 %v2740, 4294901760
  %v3766 = vsub.f32 %v2740, %v3765
  %v3767 = vand.u32 %v3766, 4294901760
  %v3768 = vsub.f32 %v3766, %v3767
  %v3769 = vand.u32 %v3768, 4294901760
  %3770 = vmatpush1.msra.mxu0 %v3769
  %3771 = vmatprep.subr.mxu0 0.0
  %v3772 = vand.u32 %v2741, 4294901760
  %v3773 = vsub.f32 %v2741, %v3772
  %v3774 = vand.u32 %v3773, 4294901760
  %v3775 = vsub.f32 %v3773, %v3774
  %v3776 = vand.u32 %v3775, 4294901760
  %3777 = vmatpush1.msra.mxu0 %v3776
  %3778 = vmatprep.subr.mxu0 0.0
  %v3779 = vand.u32 %v2742, 4294901760
  %v3780 = vsub.f32 %v2742, %v3779
  %v3781 = vand.u32 %v3780, 4294901760
  %v3782 = vsub.f32 %v3780, %v3781
  %v3783 = vand.u32 %v3782, 4294901760
  %3784 = vmatpush1.msra.mxu0 %v3783
  %3785 = vmatprep.subr.mxu0 0.0
  %v3786 = vand.u32 %v2743, 4294901760
  %v3787 = vsub.f32 %v2743, %v3786
  %v3788 = vand.u32 %v3787, 4294901760
  %v3789 = vsub.f32 %v3787, %v3788
  %v3790 = vand.u32 %v3789, 4294901760
  %3791 = vmatpush1.msra.mxu0 %v3790
  %3792 = vmatprep.subr.mxu0 0.0
  %v3793 = vand.u32 %v2744, 4294901760
  %v3794 = vsub.f32 %v2744, %v3793
  %v3795 = vand.u32 %v3794, 4294901760
  %v3796 = vsub.f32 %v3794, %v3795
  %v3797 = vand.u32 %v3796, 4294901760
  %3798 = vmatpush1.msra.mxu0 %v3797
  %3799 = vmatprep.subr.mxu0 0.0
  %v3800 = vand.u32 %v2745, 4294901760
  %v3801 = vsub.f32 %v2745, %v3800
  %v3802 = vand.u32 %v3801, 4294901760
  %v3803 = vsub.f32 %v3801, %v3802
  %v3804 = vand.u32 %v3803, 4294901760
  %3805 = vmatpush1.msra.mxu0 %v3804
  %3806 = vmatprep.subr.mxu0 0.0
  %v3807 = vand.u32 %v2746, 4294901760
  %v3808 = vsub.f32 %v2746, %v3807
  %v3809 = vand.u32 %v3808, 4294901760
  %v3810 = vsub.f32 %v3808, %v3809
  %v3811 = vand.u32 %v3810, 4294901760
  %3812 = vmatpush1.msra.mxu0 %v3811
  %3813 = vmatprep.subr.mxu0 0.0
  %v3814 = vand.u32 %v2747, 4294901760
  %v3815 = vsub.f32 %v2747, %v3814
  %v3816 = vand.u32 %v3815, 4294901760
  %v3817 = vsub.f32 %v3815, %v3816
  %v3818 = vand.u32 %v3817, 4294901760
  %3819 = vmatpush1.msra.mxu0 %v3818
  %3820 = vmatprep.subr.mxu0 0.0
  %v3821 = vand.u32 %v2748, 4294901760
  %v3822 = vsub.f32 %v2748, %v3821
  %v3823 = vand.u32 %v3822, 4294901760
  %v3824 = vsub.f32 %v3822, %v3823
  %v3825 = vand.u32 %v3824, 4294901760
  %3826 = vmatpush1.msra.mxu0 %v3825
  %3827 = vmatprep.subr.mxu0 0.0
  %v3828 = vand.u32 %v2749, 4294901760
  %v3829 = vsub.f32 %v2749, %v3828
  %v3830 = vand.u32 %v3829, 4294901760
  %v3831 = vsub.f32 %v3829, %v3830
  %v3832 = vand.u32 %v3831, 4294901760
  %3833 = vmatpush1.msra.mxu0 %v3832
  %3834 = vmatprep.subr.mxu0 0.0
  %v3835 = vand.u32 %v2750, 4294901760
  %v3836 = vsub.f32 %v2750, %v3835
  %v3837 = vand.u32 %v3836, 4294901760
  %v3838 = vsub.f32 %v3836, %v3837
  %v3839 = vand.u32 %v3838, 4294901760
  %3840 = vmatpush1.msra.mxu0 %v3839
  %3841 = vmatprep.subr.mxu0 0.0
  %v3842 = vand.u32 %v2751, 4294901760
  %v3843 = vsub.f32 %v2751, %v3842
  %v3844 = vand.u32 %v3843, 4294901760
  %v3845 = vsub.f32 %v3843, %v3844
  %v3846 = vand.u32 %v3845, 4294901760
  %3847 = vmatpush1.msra.mxu0 %v3846
  %3848 = vmatprep.subr.mxu0 0.0
  %v3849 = vand.u32 %v2752, 4294901760
  %v3850 = vsub.f32 %v2752, %v3849
  %v3851 = vand.u32 %v3850, 4294901760
  %v3852 = vsub.f32 %v3850, %v3851
  %v3853 = vand.u32 %v3852, 4294901760
  %3854 = vmatpush1.msra.mxu0 %v3853
  %3855 = vmatprep.subr.mxu0 0.0
  %v3856 = vand.u32 %v2753, 4294901760
  %v3857 = vsub.f32 %v2753, %v3856
  %v3858 = vand.u32 %v3857, 4294901760
  %v3859 = vsub.f32 %v3857, %v3858
  %v3860 = vand.u32 %v3859, 4294901760
  %3861 = vmatpush1.msra.mxu0 %v3860
  %3862 = vmatprep.subr.mxu0 0.0
  %v3863 = vand.u32 %v2754, 4294901760
  %v3864 = vsub.f32 %v2754, %v3863
  %v3865 = vand.u32 %v3864, 4294901760
  %v3866 = vsub.f32 %v3864, %v3865
  %v3867 = vand.u32 %v3866, 4294901760
  %3868 = vmatpush1.msra.mxu0 %v3867
  %3869 = vmatprep.subr.mxu0 0.0
  %v3870 = vand.u32 %v2755, 4294901760
  %v3871 = vsub.f32 %v2755, %v3870
  %v3872 = vand.u32 %v3871, 4294901760
  %v3873 = vsub.f32 %v3871, %v3872
  %v3874 = vand.u32 %v3873, 4294901760
  %3875 = vmatpush1.msra.mxu0 %v3874
  %3876 = vmatprep.subr.mxu0 0.0
  %v3877 = vand.u32 %v2756, 4294901760
  %v3878 = vsub.f32 %v2756, %v3877
  %v3879 = vand.u32 %v3878, 4294901760
  %v3880 = vsub.f32 %v3878, %v3879
  %v3881 = vand.u32 %v3880, 4294901760
  %3882 = vmatpush1.msra.mxu0 %v3881
  %3883 = vmatprep.subr.mxu0 0.0
  %v3884 = vand.u32 %v2757, 4294901760
  %v3885 = vsub.f32 %v2757, %v3884
  %v3886 = vand.u32 %v3885, 4294901760
  %v3887 = vsub.f32 %v3885, %v3886
  %v3888 = vand.u32 %v3887, 4294901760
  %3889 = vmatpush1.msra.mxu0 %v3888
  %3890 = vmatprep.subr.mxu0 0.0
  %v3891 = vand.u32 %v2758, 4294901760
  %v3892 = vsub.f32 %v2758, %v3891
  %v3893 = vand.u32 %v3892, 4294901760
  %v3894 = vsub.f32 %v3892, %v3893
  %v3895 = vand.u32 %v3894, 4294901760
  %3896 = vmatpush1.msra.mxu0 %v3895
  %3897 = vmatprep.subr.mxu0 0.0
  %v3898 = vand.u32 %v2759, 4294901760
  %v3899 = vsub.f32 %v2759, %v3898
  %v3900 = vand.u32 %v3899, 4294901760
  %v3901 = vsub.f32 %v3899, %v3900
  %v3902 = vand.u32 %v3901, 4294901760
  %3903 = vmatpush1.msra.mxu0 %v3902
  %3904 = vmatprep.subr.mxu0 0.0
  %v3905 = vand.u32 %v2760, 4294901760
  %v3906 = vsub.f32 %v2760, %v3905
  %v3907 = vand.u32 %v3906, 4294901760
  %v3908 = vsub.f32 %v3906, %v3907
  %v3909 = vand.u32 %v3908, 4294901760
  %3910 = vmatpush1.msra.mxu0 %v3909
  %3911 = vmatprep.subr.mxu0 0.0
  %v3912 = vand.u32 %v2761, 4294901760
  %v3913 = vsub.f32 %v2761, %v3912
  %v3914 = vand.u32 %v3913, 4294901760
  %v3915 = vsub.f32 %v3913, %v3914
  %v3916 = vand.u32 %v3915, 4294901760
  %3917 = vmatpush1.msra.mxu0 %v3916
  %3918 = vmatprep.subr.mxu0 0.0
  %v3919 = vand.u32 %v2762, 4294901760
  %v3920 = vsub.f32 %v2762, %v3919
  %v3921 = vand.u32 %v3920, 4294901760
  %v3922 = vsub.f32 %v3920, %v3921
  %v3923 = vand.u32 %v3922, 4294901760
  %3924 = vmatpush1.msra.mxu0 %v3923
  %3925 = vmatprep.subr.mxu0 0.0
  %v3926 = vand.u32 %v2763, 4294901760
  %v3927 = vsub.f32 %v2763, %v3926
  %v3928 = vand.u32 %v3927, 4294901760
  %v3929 = vsub.f32 %v3927, %v3928
  %v3930 = vand.u32 %v3929, 4294901760
  %3931 = vmatpush1.msra.mxu0 %v3930
  %3932 = vmatprep.subr.mxu0 0.0
  %v3933 = vand.u32 %v2764, 4294901760
  %v3934 = vsub.f32 %v2764, %v3933
  %v3935 = vand.u32 %v3934, 4294901760
  %v3936 = vsub.f32 %v3934, %v3935
  %v3937 = vand.u32 %v3936, 4294901760
  %3938 = vmatpush1.msra.mxu0 %v3937
  %3939 = vmatprep.subr.mxu0 0.0
  %v3940 = vand.u32 %v2765, 4294901760
  %v3941 = vsub.f32 %v2765, %v3940
  %v3942 = vand.u32 %v3941, 4294901760
  %v3943 = vsub.f32 %v3941, %v3942
  %v3944 = vand.u32 %v3943, 4294901760
  %3945 = vmatpush1.msra.mxu0 %v3944
  %3946 = vmatprep.subr.mxu0 0.0
  %v3947 = vand.u32 %v2766, 4294901760
  %v3948 = vsub.f32 %v2766, %v3947
  %v3949 = vand.u32 %v3948, 4294901760
  %v3950 = vsub.f32 %v3948, %v3949
  %v3951 = vand.u32 %v3950, 4294901760
  %3952 = vmatpush1.msra.mxu0 %v3951
  %3953 = vmatprep.subr.mxu0 0.0
  %v3954 = vand.u32 %v2767, 4294901760
  %v3955 = vsub.f32 %v2767, %v3954
  %v3956 = vand.u32 %v3955, 4294901760
  %v3957 = vsub.f32 %v3955, %v3956
  %v3958 = vand.u32 %v3957, 4294901760
  %3959 = vmatpush1.msra.mxu0 %v3958
  %3960 = vmatprep.subr.mxu0 0.0
  %v3961 = vand.u32 %v2768, 4294901760
  %v3962 = vsub.f32 %v2768, %v3961
  %v3963 = vand.u32 %v3962, 4294901760
  %v3964 = vsub.f32 %v3962, %v3963
  %v3965 = vand.u32 %v3964, 4294901760
  %3966 = vmatpush1.msra.mxu0 %v3965
  %v3967 = vand.u32 %v1689, 4294901760
  %3968 = vmatprep.mubr.f32.mxu0 %v3967
  %v3969 = vand.u32 %v1680, 4294901760
  %3970 = vmatmul.mubr.f32.gmra.mrb[0].mxu0 %v3969
  %v3971 = vpop.f32.mrb[0].mxu0
  %v3972 = vadd.f32 %v3740, %v3971
  %v3973 = vpop.f32.mrb[0].mxu0
  %3974 = vdwg.mxu0
  %3975 = vmatprep.subr.mxu0 0.0
  %v3976 = vand.u32 %v2737, 4294901760
  %v3977 = vsub.f32 %v2737, %v3976
  %3978 = vmatpush1.msra.mxu0 %v3977
  %3979 = vmatprep.subr.mxu0 0.0
  %v3980 = vand.u32 %v2738, 4294901760
  %v3981 = vsub.f32 %v2738, %v3980
  %3982 = vmatpush1.msra.mxu0 %v3981
  %3983 = vmatprep.subr.mxu0 0.0
  %v3984 = vand.u32 %v2739, 4294901760
  %v3985 = vsub.f32 %v2739, %v3984
  %3986 = vmatpush1.msra.mxu0 %v3985
  %3987 = vmatprep.subr.mxu0 0.0
  %v3988 = vand.u32 %v2740, 4294901760
  %v3989 = vsub.f32 %v2740, %v3988
  %3990 = vmatpush1.msra.mxu0 %v3989
  %3991 = vmatprep.subr.mxu0 0.0
  %v3992 = vand.u32 %v2741, 4294901760
  %v3993 = vsub.f32 %v2741, %v3992
  %3994 = vmatpush1.msra.mxu0 %v3993
  %3995 = vmatprep.subr.mxu0 0.0
  %v3996 = vand.u32 %v2742, 4294901760
  %v3997 = vsub.f32 %v2742, %v3996
  %3998 = vmatpush1.msra.mxu0 %v3997
  %3999 = vmatprep.subr.mxu0 0.0
  %v4000 = vand.u32 %v2743, 4294901760
  %v4001 = vsub.f32 %v2743, %v4000
  %4002 = vmatpush1.msra.mxu0 %v4001
  %4003 = vmatprep.subr.mxu0 0.0
  %v4004 = vand.u32 %v2744, 4294901760
  %v4005 = vsub.f32 %v2744, %v4004
  %4006 = vmatpush1.msra.mxu0 %v4005
  %4007 = vmatprep.subr.mxu0 0.0
  %v4008 = vand.u32 %v2745, 4294901760
  %v4009 = vsub.f32 %v2745, %v4008
  %4010 = vmatpush1.msra.mxu0 %v4009
  %4011 = vmatprep.subr.mxu0 0.0
  %v4012 = vand.u32 %v2746, 4294901760
  %v4013 = vsub.f32 %v2746, %v4012
  %4014 = vmatpush1.msra.mxu0 %v4013
  %4015 = vmatprep.subr.mxu0 0.0
  %v4016 = vand.u32 %v2747, 4294901760
  %v4017 = vsub.f32 %v2747, %v4016
  %4018 = vmatpush1.msra.mxu0 %v4017
  %4019 = vmatprep.subr.mxu0 0.0
  %v4020 = vand.u32 %v2748, 4294901760
  %v4021 = vsub.f32 %v2748, %v4020
  %4022 = vmatpush1.msra.mxu0 %v4021
  %4023 = vmatprep.subr.mxu0 0.0
  %v4024 = vand.u32 %v2749, 4294901760
  %v4025 = vsub.f32 %v2749, %v4024
  %4026 = vmatpush1.msra.mxu0 %v4025
  %4027 = vmatprep.subr.mxu0 0.0
  %v4028 = vand.u32 %v2750, 4294901760
  %v4029 = vsub.f32 %v2750, %v4028
  %4030 = vmatpush1.msra.mxu0 %v4029
  %4031 = vmatprep.subr.mxu0 0.0
  %v4032 = vand.u32 %v2751, 4294901760
  %v4033 = vsub.f32 %v2751, %v4032
  %4034 = vmatpush1.msra.mxu0 %v4033
  %4035 = vmatprep.subr.mxu0 0.0
  %v4036 = vand.u32 %v2752, 4294901760
  %v4037 = vsub.f32 %v2752, %v4036
  %4038 = vmatpush1.msra.mxu0 %v4037
  %4039 = vmatprep.subr.mxu0 0.0
  %v4040 = vand.u32 %v2753, 4294901760
  %v4041 = vsub.f32 %v2753, %v4040
  %4042 = vmatpush1.msra.mxu0 %v4041
  %4043 = vmatprep.subr.mxu0 0.0
  %v4044 = vand.u32 %v2754, 4294901760
  %v4045 = vsub.f32 %v2754, %v4044
  %4046 = vmatpush1.msra.mxu0 %v4045
  %4047 = vmatprep.subr.mxu0 0.0
  %v4048 = vand.u32 %v2755, 4294901760
  %v4049 = vsub.f32 %v2755, %v4048
  %4050 = vmatpush1.msra.mxu0 %v4049
  %4051 = vmatprep.subr.mxu0 0.0
  %v4052 = vand.u32 %v2756, 4294901760
  %v4053 = vsub.f32 %v2756, %v4052
  %4054 = vmatpush1.msra.mxu0 %v4053
  %4055 = vmatprep.subr.mxu0 0.0
  %v4056 = vand.u32 %v2757, 4294901760
  %v4057 = vsub.f32 %v2757, %v4056
  %4058 = vmatpush1.msra.mxu0 %v4057
  %4059 = vmatprep.subr.mxu0 0.0
  %v4060 = vand.u32 %v2758, 4294901760
  %v4061 = vsub.f32 %v2758, %v4060
  %4062 = vmatpush1.msra.mxu0 %v4061
  %4063 = vmatprep.subr.mxu0 0.0
  %v4064 = vand.u32 %v2759, 4294901760
  %v4065 = vsub.f32 %v2759, %v4064
  %4066 = vmatpush1.msra.mxu0 %v4065
  %4067 = vmatprep.subr.mxu0 0.0
  %v4068 = vand.u32 %v2760, 4294901760
  %v4069 = vsub.f32 %v2760, %v4068
  %4070 = vmatpush1.msra.mxu0 %v4069
  %4071 = vmatprep.subr.mxu0 0.0
  %v4072 = vand.u32 %v2761, 4294901760
  %v4073 = vsub.f32 %v2761, %v4072
  %4074 = vmatpush1.msra.mxu0 %v4073
  %4075 = vmatprep.subr.mxu0 0.0
  %v4076 = vand.u32 %v2762, 4294901760
  %v4077 = vsub.f32 %v2762, %v4076
  %4078 = vmatpush1.msra.mxu0 %v4077
  %4079 = vmatprep.subr.mxu0 0.0
  %v4080 = vand.u32 %v2763, 4294901760
  %v4081 = vsub.f32 %v2763, %v4080
  %4082 = vmatpush1.msra.mxu0 %v4081
  %4083 = vmatprep.subr.mxu0 0.0
  %v4084 = vand.u32 %v2764, 4294901760
  %v4085 = vsub.f32 %v2764, %v4084
  %4086 = vmatpush1.msra.mxu0 %v4085
  %4087 = vmatprep.subr.mxu0 0.0
  %v4088 = vand.u32 %v2765, 4294901760
  %v4089 = vsub.f32 %v2765, %v4088
  %4090 = vmatpush1.msra.mxu0 %v4089
  %4091 = vmatprep.subr.mxu0 0.0
  %v4092 = vand.u32 %v2766, 4294901760
  %v4093 = vsub.f32 %v2766, %v4092
  %4094 = vmatpush1.msra.mxu0 %v4093
  %4095 = vmatprep.subr.mxu0 0.0
  %v4096 = vand.u32 %v2767, 4294901760
  %v4097 = vsub.f32 %v2767, %v4096
  %4098 = vmatpush1.msra.mxu0 %v4097
  %4099 = vmatprep.subr.mxu0 0.0
  %v4100 = vand.u32 %v2768, 4294901760
  %v4101 = vsub.f32 %v2768, %v4100
  %4102 = vmatpush1.msra.mxu0 %v4101
  %v4103 = vand.u32 %v1689, 4294901760
  %v4104 = vsub.f32 %v1689, %v4103
  %4105 = vmatprep.mubr.f32.mxu0 %v4104
  %v4106 = vand.u32 %v1680, 4294901760
  %v4107 = vsub.f32 %v1680, %v4106
  %4108 = vmatmul.mubr.f32.gmra.mrb[0].mxu0 %v4107
  %v4109 = vpop.f32.mrb[0].mxu0
  %v4110 = vadd.f32 %v3972, %v4109
  %v4111 = vpop.f32.mrb[0].mxu0
  %4112 = vdwg.mxu0
  %4113 = vmatprep.subr.mxu0 0.0
  %v4114 = vand.u32 %v2737, 4294901760
  %4115 = vmatpush1.msra.mxu0 %v4114
  %4116 = vmatprep.subr.mxu0 0.0
  %v4117 = vand.u32 %v2738, 4294901760
  %4118 = vmatpush1.msra.mxu0 %v4117
  %4119 = vmatprep.subr.mxu0 0.0
  %v4120 = vand.u32 %v2739, 4294901760
  %4121 = vmatpush1.msra.mxu0 %v4120
  %4122 = vmatprep.subr.mxu0 0.0
  %v4123 = vand.u32 %v2740, 4294901760
  %4124 = vmatpush1.msra.mxu0 %v4123
  %4125 = vmatprep.subr.mxu0 0.0
  %v4126 = vand.u32 %v2741, 4294901760
  %4127 = vmatpush1.msra.mxu0 %v4126
  %4128 = vmatprep.subr.mxu0 0.0
  %v4129 = vand.u32 %v2742, 4294901760
  %4130 = vmatpush1.msra.mxu0 %v4129
  %4131 = vmatprep.subr.mxu0 0.0
  %v4132 = vand.u32 %v2743, 4294901760
  %4133 = vmatpush1.msra.mxu0 %v4132
  %4134 = vmatprep.subr.mxu0 0.0
  %v4135 = vand.u32 %v2744, 4294901760
  %4136 = vmatpush1.msra.mxu0 %v4135
  %4137 = vmatprep.subr.mxu0 0.0
  %v4138 = vand.u32 %v2745, 4294901760
  %4139 = vmatpush1.msra.mxu0 %v4138
  %4140 = vmatprep.subr.mxu0 0.0
  %v4141 = vand.u32 %v2746, 4294901760
  %4142 = vmatpush1.msra.mxu0 %v4141
  %4143 = vmatprep.subr.mxu0 0.0
  %v4144 = vand.u32 %v2747, 4294901760
  %4145 = vmatpush1.msra.mxu0 %v4144
  %4146 = vmatprep.subr.mxu0 0.0
  %v4147 = vand.u32 %v2748, 4294901760
  %4148 = vmatpush1.msra.mxu0 %v4147
  %4149 = vmatprep.subr.mxu0 0.0
  %v4150 = vand.u32 %v2749, 4294901760
  %4151 = vmatpush1.msra.mxu0 %v4150
  %4152 = vmatprep.subr.mxu0 0.0
  %v4153 = vand.u32 %v2750, 4294901760
  %4154 = vmatpush1.msra.mxu0 %v4153
  %4155 = vmatprep.subr.mxu0 0.0
  %v4156 = vand.u32 %v2751, 4294901760
  %4157 = vmatpush1.msra.mxu0 %v4156
  %4158 = vmatprep.subr.mxu0 0.0
  %v4159 = vand.u32 %v2752, 4294901760
  %4160 = vmatpush1.msra.mxu0 %v4159
  %4161 = vmatprep.subr.mxu0 0.0
  %v4162 = vand.u32 %v2753, 4294901760
  %4163 = vmatpush1.msra.mxu0 %v4162
  %4164 = vmatprep.subr.mxu0 0.0
  %v4165 = vand.u32 %v2754, 4294901760
  %4166 = vmatpush1.msra.mxu0 %v4165
  %4167 = vmatprep.subr.mxu0 0.0
  %v4168 = vand.u32 %v2755, 4294901760
  %4169 = vmatpush1.msra.mxu0 %v4168
  %4170 = vmatprep.subr.mxu0 0.0
  %v4171 = vand.u32 %v2756, 4294901760
  %4172 = vmatpush1.msra.mxu0 %v4171
  %4173 = vmatprep.subr.mxu0 0.0
  %v4174 = vand.u32 %v2757, 4294901760
  %4175 = vmatpush1.msra.mxu0 %v4174
  %4176 = vmatprep.subr.mxu0 0.0
  %v4177 = vand.u32 %v2758, 4294901760
  %4178 = vmatpush1.msra.mxu0 %v4177
  %4179 = vmatprep.subr.mxu0 0.0
  %v4180 = vand.u32 %v2759, 4294901760
  %4181 = vmatpush1.msra.mxu0 %v4180
  %4182 = vmatprep.subr.mxu0 0.0
  %v4183 = vand.u32 %v2760, 4294901760
  %4184 = vmatpush1.msra.mxu0 %v4183
  %4185 = vmatprep.subr.mxu0 0.0
  %v4186 = vand.u32 %v2761, 4294901760
  %4187 = vmatpush1.msra.mxu0 %v4186
  %4188 = vmatprep.subr.mxu0 0.0
  %v4189 = vand.u32 %v2762, 4294901760
  %4190 = vmatpush1.msra.mxu0 %v4189
  %4191 = vmatprep.subr.mxu0 0.0
  %v4192 = vand.u32 %v2763, 4294901760
  %4193 = vmatpush1.msra.mxu0 %v4192
  %4194 = vmatprep.subr.mxu0 0.0
  %v4195 = vand.u32 %v2764, 4294901760
  %4196 = vmatpush1.msra.mxu0 %v4195
  %4197 = vmatprep.subr.mxu0 0.0
  %v4198 = vand.u32 %v2765, 4294901760
  %4199 = vmatpush1.msra.mxu0 %v4198
  %4200 = vmatprep.subr.mxu0 0.0
  %v4201 = vand.u32 %v2766, 4294901760
  %4202 = vmatpush1.msra.mxu0 %v4201
  %4203 = vmatprep.subr.mxu0 0.0
  %v4204 = vand.u32 %v2767, 4294901760
  %4205 = vmatpush1.msra.mxu0 %v4204
  %4206 = vmatprep.subr.mxu0 0.0
  %v4207 = vand.u32 %v2768, 4294901760
  %4208 = vmatpush1.msra.mxu0 %v4207
  %v4209 = vand.u32 %v1689, 4294901760
  %v4210 = vsub.f32 %v1689, %v4209
  %v4211 = vand.u32 %v4210, 4294901760
  %4212 = vmatprep.mubr.f32.mxu0 %v4211
  %v4213 = vand.u32 %v1680, 4294901760
  %v4214 = vsub.f32 %v1680, %v4213
  %v4215 = vand.u32 %v4214, 4294901760
  %4216 = vmatmul.mubr.f32.gmra.mrb[0].mxu0 %v4215
  %v4217 = vpop.f32.mrb[0].mxu0
  %v4218 = vadd.f32 %v4110, %v4217
  %v4219 = vpop.f32.mrb[0].mxu0
  %4220 = vdwg.mxu0
  %4221 = vmatprep.subr.mxu0 0.0
  %v4222 = vand.u32 %v2737, 4294901760
  %v4223 = vsub.f32 %v2737, %v4222
  %v4224 = vand.u32 %v4223, 4294901760
  %4225 = vmatpush1.msra.mxu0 %v4224
  %4226 = vmatprep.subr.mxu0 0.0
  %v4227 = vand.u32 %v2738, 4294901760
  %v4228 = vsub.f32 %v2738, %v4227
  %v4229 = vand.u32 %v4228, 4294901760
  %4230 = vmatpush1.msra.mxu0 %v4229
  %4231 = vmatprep.subr.mxu0 0.0
  %v4232 = vand.u32 %v2739, 4294901760
  %v4233 = vsub.f32 %v2739, %v4232
  %v4234 = vand.u32 %v4233, 4294901760
  %4235 = vmatpush1.msra.mxu0 %v4234
  %4236 = vmatprep.subr.mxu0 0.0
  %v4237 = vand.u32 %v2740, 4294901760
  %v4238 = vsub.f32 %v2740, %v4237
  %v4239 = vand.u32 %v4238, 4294901760
  %4240 = vmatpush1.msra.mxu0 %v4239
  %4241 = vmatprep.subr.mxu0 0.0
  %v4242 = vand.u32 %v2741, 4294901760
  %v4243 = vsub.f32 %v2741, %v4242
  %v4244 = vand.u32 %v4243, 4294901760
  %4245 = vmatpush1.msra.mxu0 %v4244
  %4246 = vmatprep.subr.mxu0 0.0
  %v4247 = vand.u32 %v2742, 4294901760
  %v4248 = vsub.f32 %v2742, %v4247
  %v4249 = vand.u32 %v4248, 4294901760
  %4250 = vmatpush1.msra.mxu0 %v4249
  %4251 = vmatprep.subr.mxu0 0.0
  %v4252 = vand.u32 %v2743, 4294901760
  %v4253 = vsub.f32 %v2743, %v4252
  %v4254 = vand.u32 %v4253, 4294901760
  %4255 = vmatpush1.msra.mxu0 %v4254
  %4256 = vmatprep.subr.mxu0 0.0
  %v4257 = vand.u32 %v2744, 4294901760
  %v4258 = vsub.f32 %v2744, %v4257
  %v4259 = vand.u32 %v4258, 4294901760
  %4260 = vmatpush1.msra.mxu0 %v4259
  %4261 = vmatprep.subr.mxu0 0.0
  %v4262 = vand.u32 %v2745, 4294901760
  %v4263 = vsub.f32 %v2745, %v4262
  %v4264 = vand.u32 %v4263, 4294901760
  %4265 = vmatpush1.msra.mxu0 %v4264
  %4266 = vmatprep.subr.mxu0 0.0
  %v4267 = vand.u32 %v2746, 4294901760
  %v4268 = vsub.f32 %v2746, %v4267
  %v4269 = vand.u32 %v4268, 4294901760
  %4270 = vmatpush1.msra.mxu0 %v4269
  %4271 = vmatprep.subr.mxu0 0.0
  %v4272 = vand.u32 %v2747, 4294901760
  %v4273 = vsub.f32 %v2747, %v4272
  %v4274 = vand.u32 %v4273, 4294901760
  %4275 = vmatpush1.msra.mxu0 %v4274
  %4276 = vmatprep.subr.mxu0 0.0
  %v4277 = vand.u32 %v2748, 4294901760
  %v4278 = vsub.f32 %v2748, %v4277
  %v4279 = vand.u32 %v4278, 4294901760
  %4280 = vmatpush1.msra.mxu0 %v4279
  %4281 = vmatprep.subr.mxu0 0.0
  %v4282 = vand.u32 %v2749, 4294901760
  %v4283 = vsub.f32 %v2749, %v4282
  %v4284 = vand.u32 %v4283, 4294901760
  %4285 = vmatpush1.msra.mxu0 %v4284
  %4286 = vmatprep.subr.mxu0 0.0
  %v4287 = vand.u32 %v2750, 4294901760
  %v4288 = vsub.f32 %v2750, %v4287
  %v4289 = vand.u32 %v4288, 4294901760
  %4290 = vmatpush1.msra.mxu0 %v4289
  %4291 = vmatprep.subr.mxu0 0.0
  %v4292 = vand.u32 %v2751, 4294901760
  %v4293 = vsub.f32 %v2751, %v4292
  %v4294 = vand.u32 %v4293, 4294901760
  %4295 = vmatpush1.msra.mxu0 %v4294
  %4296 = vmatprep.subr.mxu0 0.0
  %v4297 = vand.u32 %v2752, 4294901760
  %v4298 = vsub.f32 %v2752, %v4297
  %v4299 = vand.u32 %v4298, 4294901760
  %4300 = vmatpush1.msra.mxu0 %v4299
  %4301 = vmatprep.subr.mxu0 0.0
  %v4302 = vand.u32 %v2753, 4294901760
  %v4303 = vsub.f32 %v2753, %v4302
  %v4304 = vand.u32 %v4303, 4294901760
  %4305 = vmatpush1.msra.mxu0 %v4304
  %4306 = vmatprep.subr.mxu0 0.0
  %v4307 = vand.u32 %v2754, 4294901760
  %v4308 = vsub.f32 %v2754, %v4307
  %v4309 = vand.u32 %v4308, 4294901760
  %4310 = vmatpush1.msra.mxu0 %v4309
  %4311 = vmatprep.subr.mxu0 0.0
  %v4312 = vand.u32 %v2755, 4294901760
  %v4313 = vsub.f32 %v2755, %v4312
  %v4314 = vand.u32 %v4313, 4294901760
  %4315 = vmatpush1.msra.mxu0 %v4314
  %4316 = vmatprep.subr.mxu0 0.0
  %v4317 = vand.u32 %v2756, 4294901760
  %v4318 = vsub.f32 %v2756, %v4317
  %v4319 = vand.u32 %v4318, 4294901760
  %4320 = vmatpush1.msra.mxu0 %v4319
  %4321 = vmatprep.subr.mxu0 0.0
  %v4322 = vand.u32 %v2757, 4294901760
  %v4323 = vsub.f32 %v2757, %v4322
  %v4324 = vand.u32 %v4323, 4294901760
  %4325 = vmatpush1.msra.mxu0 %v4324
  %4326 = vmatprep.subr.mxu0 0.0
  %v4327 = vand.u32 %v2758, 4294901760
  %v4328 = vsub.f32 %v2758, %v4327
  %v4329 = vand.u32 %v4328, 4294901760
  %4330 = vmatpush1.msra.mxu0 %v4329
  %4331 = vmatprep.subr.mxu0 0.0
  %v4332 = vand.u32 %v2759, 4294901760
  %v4333 = vsub.f32 %v2759, %v4332
  %v4334 = vand.u32 %v4333, 4294901760
  %4335 = vmatpush1.msra.mxu0 %v4334
  %4336 = vmatprep.subr.mxu0 0.0
  %v4337 = vand.u32 %v2760, 4294901760
  %v4338 = vsub.f32 %v2760, %v4337
  %v4339 = vand.u32 %v4338, 4294901760
  %4340 = vmatpush1.msra.mxu0 %v4339
  %4341 = vmatprep.subr.mxu0 0.0
  %v4342 = vand.u32 %v2761, 4294901760
  %v4343 = vsub.f32 %v2761, %v4342
  %v4344 = vand.u32 %v4343, 4294901760
  %4345 = vmatpush1.msra.mxu0 %v4344
  %4346 = vmatprep.subr.mxu0 0.0
  %v4347 = vand.u32 %v2762, 4294901760
  %v4348 = vsub.f32 %v2762, %v4347
  %v4349 = vand.u32 %v4348, 4294901760
  %4350 = vmatpush1.msra.mxu0 %v4349
  %4351 = vmatprep.subr.mxu0 0.0
  %v4352 = vand.u32 %v2763, 4294901760
  %v4353 = vsub.f32 %v2763, %v4352
  %v4354 = vand.u32 %v4353, 4294901760
  %4355 = vmatpush1.msra.mxu0 %v4354
  %4356 = vmatprep.subr.mxu0 0.0
  %v4357 = vand.u32 %v2764, 4294901760
  %v4358 = vsub.f32 %v2764, %v4357
  %v4359 = vand.u32 %v4358, 4294901760
  %4360 = vmatpush1.msra.mxu0 %v4359
  %4361 = vmatprep.subr.mxu0 0.0
  %v4362 = vand.u32 %v2765, 4294901760
  %v4363 = vsub.f32 %v2765, %v4362
  %v4364 = vand.u32 %v4363, 4294901760
  %4365 = vmatpush1.msra.mxu0 %v4364
  %4366 = vmatprep.subr.mxu0 0.0
  %v4367 = vand.u32 %v2766, 4294901760
  %v4368 = vsub.f32 %v2766, %v4367
  %v4369 = vand.u32 %v4368, 4294901760
  %4370 = vmatpush1.msra.mxu0 %v4369
  %4371 = vmatprep.subr.mxu0 0.0
  %v4372 = vand.u32 %v2767, 4294901760
  %v4373 = vsub.f32 %v2767, %v4372
  %v4374 = vand.u32 %v4373, 4294901760
  %4375 = vmatpush1.msra.mxu0 %v4374
  %4376 = vmatprep.subr.mxu0 0.0
  %v4377 = vand.u32 %v2768, 4294901760
  %v4378 = vsub.f32 %v2768, %v4377
  %v4379 = vand.u32 %v4378, 4294901760
  %4380 = vmatpush1.msra.mxu0 %v4379
  %v4381 = vand.u32 %v1689, 4294901760
  %4382 = vmatprep.mubr.f32.mxu0 %v4381
  %v4383 = vand.u32 %v1680, 4294901760
  %4384 = vmatmul.mubr.f32.gmra.mrb[0].mxu0 %v4383
  %v4385 = vpop.f32.mrb[0].mxu0
  %v4386 = vadd.f32 %v4218, %v4385
  %v4387 = vpop.f32.mrb[0].mxu0
  %4388 = vdwg.mxu0
  %4389 = vmatprep.subr.mxu0 0.0
  %v4390 = vand.u32 %v2737, 4294901760
  %4391 = vmatpush1.msra.mxu0 %v4390
  %4392 = vmatprep.subr.mxu0 0.0
  %v4393 = vand.u32 %v2738, 4294901760
  %4394 = vmatpush1.msra.mxu0 %v4393
  %4395 = vmatprep.subr.mxu0 0.0
  %v4396 = vand.u32 %v2739, 4294901760
  %4397 = vmatpush1.msra.mxu0 %v4396
  %4398 = vmatprep.subr.mxu0 0.0
  %v4399 = vand.u32 %v2740, 4294901760
  %4400 = vmatpush1.msra.mxu0 %v4399
  %4401 = vmatprep.subr.mxu0 0.0
  %v4402 = vand.u32 %v2741, 4294901760
  %4403 = vmatpush1.msra.mxu0 %v4402
  %4404 = vmatprep.subr.mxu0 0.0
  %v4405 = vand.u32 %v2742, 4294901760
  %4406 = vmatpush1.msra.mxu0 %v4405
  %4407 = vmatprep.subr.mxu0 0.0
  %v4408 = vand.u32 %v2743, 4294901760
  %4409 = vmatpush1.msra.mxu0 %v4408
  %4410 = vmatprep.subr.mxu0 0.0
  %v4411 = vand.u32 %v2744, 4294901760
  %4412 = vmatpush1.msra.mxu0 %v4411
  %4413 = vmatprep.subr.mxu0 0.0
  %v4414 = vand.u32 %v2745, 4294901760
  %4415 = vmatpush1.msra.mxu0 %v4414
  %4416 = vmatprep.subr.mxu0 0.0
  %v4417 = vand.u32 %v2746, 4294901760
  %4418 = vmatpush1.msra.mxu0 %v4417
  %4419 = vmatprep.subr.mxu0 0.0
  %v4420 = vand.u32 %v2747, 4294901760
  %4421 = vmatpush1.msra.mxu0 %v4420
  %4422 = vmatprep.subr.mxu0 0.0
  %v4423 = vand.u32 %v2748, 4294901760
  %4424 = vmatpush1.msra.mxu0 %v4423
  %4425 = vmatprep.subr.mxu0 0.0
  %v4426 = vand.u32 %v2749, 4294901760
  %4427 = vmatpush1.msra.mxu0 %v4426
  %4428 = vmatprep.subr.mxu0 0.0
  %v4429 = vand.u32 %v2750, 4294901760
  %4430 = vmatpush1.msra.mxu0 %v4429
  %4431 = vmatprep.subr.mxu0 0.0
  %v4432 = vand.u32 %v2751, 4294901760
  %4433 = vmatpush1.msra.mxu0 %v4432
  %4434 = vmatprep.subr.mxu0 0.0
  %v4435 = vand.u32 %v2752, 4294901760
  %4436 = vmatpush1.msra.mxu0 %v4435
  %4437 = vmatprep.subr.mxu0 0.0
  %v4438 = vand.u32 %v2753, 4294901760
  %4439 = vmatpush1.msra.mxu0 %v4438
  %4440 = vmatprep.subr.mxu0 0.0
  %v4441 = vand.u32 %v2754, 4294901760
  %4442 = vmatpush1.msra.mxu0 %v4441
  %4443 = vmatprep.subr.mxu0 0.0
  %v4444 = vand.u32 %v2755, 4294901760
  %4445 = vmatpush1.msra.mxu0 %v4444
  %4446 = vmatprep.subr.mxu0 0.0
  %v4447 = vand.u32 %v2756, 4294901760
  %4448 = vmatpush1.msra.mxu0 %v4447
  %4449 = vmatprep.subr.mxu0 0.0
  %v4450 = vand.u32 %v2757, 4294901760
  %4451 = vmatpush1.msra.mxu0 %v4450
  %4452 = vmatprep.subr.mxu0 0.0
  %v4453 = vand.u32 %v2758, 4294901760
  %4454 = vmatpush1.msra.mxu0 %v4453
  %4455 = vmatprep.subr.mxu0 0.0
  %v4456 = vand.u32 %v2759, 4294901760
  %4457 = vmatpush1.msra.mxu0 %v4456
  %4458 = vmatprep.subr.mxu0 0.0
  %v4459 = vand.u32 %v2760, 4294901760
  %4460 = vmatpush1.msra.mxu0 %v4459
  %4461 = vmatprep.subr.mxu0 0.0
  %v4462 = vand.u32 %v2761, 4294901760
  %4463 = vmatpush1.msra.mxu0 %v4462
  %4464 = vmatprep.subr.mxu0 0.0
  %v4465 = vand.u32 %v2762, 4294901760
  %4466 = vmatpush1.msra.mxu0 %v4465
  %4467 = vmatprep.subr.mxu0 0.0
  %v4468 = vand.u32 %v2763, 4294901760
  %4469 = vmatpush1.msra.mxu0 %v4468
  %4470 = vmatprep.subr.mxu0 0.0
  %v4471 = vand.u32 %v2764, 4294901760
  %4472 = vmatpush1.msra.mxu0 %v4471
  %4473 = vmatprep.subr.mxu0 0.0
  %v4474 = vand.u32 %v2765, 4294901760
  %4475 = vmatpush1.msra.mxu0 %v4474
  %4476 = vmatprep.subr.mxu0 0.0
  %v4477 = vand.u32 %v2766, 4294901760
  %4478 = vmatpush1.msra.mxu0 %v4477
  %4479 = vmatprep.subr.mxu0 0.0
  %v4480 = vand.u32 %v2767, 4294901760
  %4481 = vmatpush1.msra.mxu0 %v4480
  %4482 = vmatprep.subr.mxu0 0.0
  %v4483 = vand.u32 %v2768, 4294901760
  %4484 = vmatpush1.msra.mxu0 %v4483
  %v4485 = vand.u32 %v1689, 4294901760
  %4486 = vmatprep.mubr.f32.mxu0 %v4485
  %v4487 = vand.u32 %v1680, 4294901760
  %4488 = vmatmul.mubr.f32.gmra.mrb[0].mxu0 %v4487
  %v4489 = vpop.f32.mrb[0].mxu0
  %v4490 = vadd.f32 %v4386, %v4489
  %v4491 = vpop.f32.mrb[0].mxu0
  %4492 = vdwg.mxu0
  %4493 = vmatprep.subr.mxu0 0.0
  %v4494 = vand.u32 %v2705, 4294901760
  %4495 = vmatpush1.msra.mxu0 %v4494
  %4496 = vmatprep.subr.mxu0 0.0
  %v4497 = vand.u32 %v2706, 4294901760
  %4498 = vmatpush1.msra.mxu0 %v4497
  %4499 = vmatprep.subr.mxu0 0.0
  %v4500 = vand.u32 %v2707, 4294901760
  %4501 = vmatpush1.msra.mxu0 %v4500
  %4502 = vmatprep.subr.mxu0 0.0
  %v4503 = vand.u32 %v2708, 4294901760
  %4504 = vmatpush1.msra.mxu0 %v4503
  %4505 = vmatprep.subr.mxu0 0.0
  %v4506 = vand.u32 %v2709, 4294901760
  %4507 = vmatpush1.msra.mxu0 %v4506
  %4508 = vmatprep.subr.mxu0 0.0
  %v4509 = vand.u32 %v2710, 4294901760
  %4510 = vmatpush1.msra.mxu0 %v4509
  %4511 = vmatprep.subr.mxu0 0.0
  %v4512 = vand.u32 %v2711, 4294901760
  %4513 = vmatpush1.msra.mxu0 %v4512
  %4514 = vmatprep.subr.mxu0 0.0
  %v4515 = vand.u32 %v2712, 4294901760
  %4516 = vmatpush1.msra.mxu0 %v4515
  %4517 = vmatprep.subr.mxu0 0.0
  %v4518 = vand.u32 %v2713, 4294901760
  %4519 = vmatpush1.msra.mxu0 %v4518
  %4520 = vmatprep.subr.mxu0 0.0
  %v4521 = vand.u32 %v2714, 4294901760
  %4522 = vmatpush1.msra.mxu0 %v4521
  %4523 = vmatprep.subr.mxu0 0.0
  %v4524 = vand.u32 %v2715, 4294901760
  %4525 = vmatpush1.msra.mxu0 %v4524
  %4526 = vmatprep.subr.mxu0 0.0
  %v4527 = vand.u32 %v2716, 4294901760
  %4528 = vmatpush1.msra.mxu0 %v4527
  %4529 = vmatprep.subr.mxu0 0.0
  %v4530 = vand.u32 %v2717, 4294901760
  %4531 = vmatpush1.msra.mxu0 %v4530
  %4532 = vmatprep.subr.mxu0 0.0
  %v4533 = vand.u32 %v2718, 4294901760
  %4534 = vmatpush1.msra.mxu0 %v4533
  %4535 = vmatprep.subr.mxu0 0.0
  %v4536 = vand.u32 %v2719, 4294901760
  %4537 = vmatpush1.msra.mxu0 %v4536
  %4538 = vmatprep.subr.mxu0 0.0
  %v4539 = vand.u32 %v2720, 4294901760
  %4540 = vmatpush1.msra.mxu0 %v4539
  %4541 = vmatprep.subr.mxu0 0.0
  %v4542 = vand.u32 %v2721, 4294901760
  %4543 = vmatpush1.msra.mxu0 %v4542
  %4544 = vmatprep.subr.mxu0 0.0
  %v4545 = vand.u32 %v2722, 4294901760
  %4546 = vmatpush1.msra.mxu0 %v4545
  %4547 = vmatprep.subr.mxu0 0.0
  %v4548 = vand.u32 %v2723, 4294901760
  %4549 = vmatpush1.msra.mxu0 %v4548
  %4550 = vmatprep.subr.mxu0 0.0
  %v4551 = vand.u32 %v2724, 4294901760
  %4552 = vmatpush1.msra.mxu0 %v4551
  %4553 = vmatprep.subr.mxu0 0.0
  %v4554 = vand.u32 %v2725, 4294901760
  %4555 = vmatpush1.msra.mxu0 %v4554
  %4556 = vmatprep.subr.mxu0 0.0
  %v4557 = vand.u32 %v2726, 4294901760
  %4558 = vmatpush1.msra.mxu0 %v4557
  %4559 = vmatprep.subr.mxu0 0.0
  %v4560 = vand.u32 %v2727, 4294901760
  %4561 = vmatpush1.msra.mxu0 %v4560
  %4562 = vmatprep.subr.mxu0 0.0
  %v4563 = vand.u32 %v2728, 4294901760
  %4564 = vmatpush1.msra.mxu0 %v4563
  %4565 = vmatprep.subr.mxu0 0.0
  %v4566 = vand.u32 %v2729, 4294901760
  %4567 = vmatpush1.msra.mxu0 %v4566
  %4568 = vmatprep.subr.mxu0 0.0
  %v4569 = vand.u32 %v2730, 4294901760
  %4570 = vmatpush1.msra.mxu0 %v4569
  %4571 = vmatprep.subr.mxu0 0.0
  %v4572 = vand.u32 %v2731, 4294901760
  %4573 = vmatpush1.msra.mxu0 %v4572
  %4574 = vmatprep.subr.mxu0 0.0
  %v4575 = vand.u32 %v2732, 4294901760
  %4576 = vmatpush1.msra.mxu0 %v4575
  %4577 = vmatprep.subr.mxu0 0.0
  %v4578 = vand.u32 %v2733, 4294901760
  %4579 = vmatpush1.msra.mxu0 %v4578
  %4580 = vmatprep.subr.mxu0 0.0
  %v4581 = vand.u32 %v2734, 4294901760
  %4582 = vmatpush1.msra.mxu0 %v4581
  %4583 = vmatprep.subr.mxu0 0.0
  %v4584 = vand.u32 %v2735, 4294901760
  %4585 = vmatpush1.msra.mxu0 %v4584
  %4586 = vmatprep.subr.mxu0 0.0
  %v4587 = vand.u32 %v2736, 4294901760
  %4588 = vmatpush1.msra.mxu0 %v4587
  %v4589 = vand.u32 %v1723, 4294901760
  %v4590 = vsub.f32 %v1723, %v4589
  %v4591 = vand.u32 %v4590, 4294901760
  %v4592 = vsub.f32 %v4590, %v4591
  %v4593 = vand.u32 %v4592, 4294901760
  %4594 = vmatprep.mubr.f32.mxu0 %v4593
  %v4595 = vand.u32 %v1714, 4294901760
  %v4596 = vsub.f32 %v1714, %v4595
  %v4597 = vand.u32 %v4596, 4294901760
  %v4598 = vsub.f32 %v4596, %v4597
  %v4599 = vand.u32 %v4598, 4294901760
  %4600 = vmatmul.mubr.f32.gmra.mrb[0].mxu0 %v4599
  %v4601 = vpop.f32.mrb[0].mxu0
  %v4602 = vadd.f32 0.0, %v4601
  %v4603 = vpop.f32.mrb[0].mxu0
  %4604 = vdwg.mxu0
  %4605 = vmatprep.subr.mxu0 0.0
  %v4606 = vand.u32 %v2705, 4294901760
  %v4607 = vsub.f32 %v2705, %v4606
  %v4608 = vand.u32 %v4607, 4294901760
  %v4609 = vsub.f32 %v4607, %v4608
  %v4610 = vand.u32 %v4609, 4294901760
  %4611 = vmatpush1.msra.mxu0 %v4610
  %4612 = vmatprep.subr.mxu0 0.0
  %v4613 = vand.u32 %v2706, 4294901760
  %v4614 = vsub.f32 %v2706, %v4613
  %v4615 = vand.u32 %v4614, 4294901760
  %v4616 = vsub.f32 %v4614, %v4615
  %v4617 = vand.u32 %v4616, 4294901760
  %4618 = vmatpush1.msra.mxu0 %v4617
  %4619 = vmatprep.subr.mxu0 0.0
  %v4620 = vand.u32 %v2707, 4294901760
  %v4621 = vsub.f32 %v2707, %v4620
  %v4622 = vand.u32 %v4621, 4294901760
  %v4623 = vsub.f32 %v4621, %v4622
  %v4624 = vand.u32 %v4623, 4294901760
  %4625 = vmatpush1.msra.mxu0 %v4624
  %4626 = vmatprep.subr.mxu0 0.0
  %v4627 = vand.u32 %v2708, 4294901760
  %v4628 = vsub.f32 %v2708, %v4627
  %v4629 = vand.u32 %v4628, 4294901760
  %v4630 = vsub.f32 %v4628, %v4629
  %v4631 = vand.u32 %v4630, 4294901760
  %4632 = vmatpush1.msra.mxu0 %v4631
  %4633 = vmatprep.subr.mxu0 0.0
  %v4634 = vand.u32 %v2709, 4294901760
  %v4635 = vsub.f32 %v2709, %v4634
  %v4636 = vand.u32 %v4635, 4294901760
  %v4637 = vsub.f32 %v4635, %v4636
  %v4638 = vand.u32 %v4637, 4294901760
  %4639 = vmatpush1.msra.mxu0 %v4638
  %4640 = vmatprep.subr.mxu0 0.0
  %v4641 = vand.u32 %v2710, 4294901760
  %v4642 = vsub.f32 %v2710, %v4641
  %v4643 = vand.u32 %v4642, 4294901760
  %v4644 = vsub.f32 %v4642, %v4643
  %v4645 = vand.u32 %v4644, 4294901760
  %4646 = vmatpush1.msra.mxu0 %v4645
  %4647 = vmatprep.subr.mxu0 0.0
  %v4648 = vand.u32 %v2711, 4294901760
  %v4649 = vsub.f32 %v2711, %v4648
  %v4650 = vand.u32 %v4649, 4294901760
  %v4651 = vsub.f32 %v4649, %v4650
  %v4652 = vand.u32 %v4651, 4294901760
  %4653 = vmatpush1.msra.mxu0 %v4652
  %4654 = vmatprep.subr.mxu0 0.0
  %v4655 = vand.u32 %v2712, 4294901760
  %v4656 = vsub.f32 %v2712, %v4655
  %v4657 = vand.u32 %v4656, 4294901760
  %v4658 = vsub.f32 %v4656, %v4657
  %v4659 = vand.u32 %v4658, 4294901760
  %4660 = vmatpush1.msra.mxu0 %v4659
  %4661 = vmatprep.subr.mxu0 0.0
  %v4662 = vand.u32 %v2713, 4294901760
  %v4663 = vsub.f32 %v2713, %v4662
  %v4664 = vand.u32 %v4663, 4294901760
  %v4665 = vsub.f32 %v4663, %v4664
  %v4666 = vand.u32 %v4665, 4294901760
  %4667 = vmatpush1.msra.mxu0 %v4666
  %4668 = vmatprep.subr.mxu0 0.0
  %v4669 = vand.u32 %v2714, 4294901760
  %v4670 = vsub.f32 %v2714, %v4669
  %v4671 = vand.u32 %v4670, 4294901760
  %v4672 = vsub.f32 %v4670, %v4671
  %v4673 = vand.u32 %v4672, 4294901760
  %4674 = vmatpush1.msra.mxu0 %v4673
  %4675 = vmatprep.subr.mxu0 0.0
  %v4676 = vand.u32 %v2715, 4294901760
  %v4677 = vsub.f32 %v2715, %v4676
  %v4678 = vand.u32 %v4677, 4294901760
  %v4679 = vsub.f32 %v4677, %v4678
  %v4680 = vand.u32 %v4679, 4294901760
  %4681 = vmatpush1.msra.mxu0 %v4680
  %4682 = vmatprep.subr.mxu0 0.0
  %v4683 = vand.u32 %v2716, 4294901760
  %v4684 = vsub.f32 %v2716, %v4683
  %v4685 = vand.u32 %v4684, 4294901760
  %v4686 = vsub.f32 %v4684, %v4685
  %v4687 = vand.u32 %v4686, 4294901760
  %4688 = vmatpush1.msra.mxu0 %v4687
  %4689 = vmatprep.subr.mxu0 0.0
  %v4690 = vand.u32 %v2717, 4294901760
  %v4691 = vsub.f32 %v2717, %v4690
  %v4692 = vand.u32 %v4691, 4294901760
  %v4693 = vsub.f32 %v4691, %v4692
  %v4694 = vand.u32 %v4693, 4294901760
  %4695 = vmatpush1.msra.mxu0 %v4694
  %4696 = vmatprep.subr.mxu0 0.0
  %v4697 = vand.u32 %v2718, 4294901760
  %v4698 = vsub.f32 %v2718, %v4697
  %v4699 = vand.u32 %v4698, 4294901760
  %v4700 = vsub.f32 %v4698, %v4699
  %v4701 = vand.u32 %v4700, 4294901760
  %4702 = vmatpush1.msra.mxu0 %v4701
  %4703 = vmatprep.subr.mxu0 0.0
  %v4704 = vand.u32 %v2719, 4294901760
  %v4705 = vsub.f32 %v2719, %v4704
  %v4706 = vand.u32 %v4705, 4294901760
  %v4707 = vsub.f32 %v4705, %v4706
  %v4708 = vand.u32 %v4707, 4294901760
  %4709 = vmatpush1.msra.mxu0 %v4708
  %4710 = vmatprep.subr.mxu0 0.0
  %v4711 = vand.u32 %v2720, 4294901760
  %v4712 = vsub.f32 %v2720, %v4711
  %v4713 = vand.u32 %v4712, 4294901760
  %v4714 = vsub.f32 %v4712, %v4713
  %v4715 = vand.u32 %v4714, 4294901760
  %4716 = vmatpush1.msra.mxu0 %v4715
  %4717 = vmatprep.subr.mxu0 0.0
  %v4718 = vand.u32 %v2721, 4294901760
  %v4719 = vsub.f32 %v2721, %v4718
  %v4720 = vand.u32 %v4719, 4294901760
  %v4721 = vsub.f32 %v4719, %v4720
  %v4722 = vand.u32 %v4721, 4294901760
  %4723 = vmatpush1.msra.mxu0 %v4722
  %4724 = vmatprep.subr.mxu0 0.0
  %v4725 = vand.u32 %v2722, 4294901760
  %v4726 = vsub.f32 %v2722, %v4725
  %v4727 = vand.u32 %v4726, 4294901760
  %v4728 = vsub.f32 %v4726, %v4727
  %v4729 = vand.u32 %v4728, 4294901760
  %4730 = vmatpush1.msra.mxu0 %v4729
  %4731 = vmatprep.subr.mxu0 0.0
  %v4732 = vand.u32 %v2723, 4294901760
  %v4733 = vsub.f32 %v2723, %v4732
  %v4734 = vand.u32 %v4733, 4294901760
  %v4735 = vsub.f32 %v4733, %v4734
  %v4736 = vand.u32 %v4735, 4294901760
  %4737 = vmatpush1.msra.mxu0 %v4736
  %4738 = vmatprep.subr.mxu0 0.0
  %v4739 = vand.u32 %v2724, 4294901760
  %v4740 = vsub.f32 %v2724, %v4739
  %v4741 = vand.u32 %v4740, 4294901760
  %v4742 = vsub.f32 %v4740, %v4741
  %v4743 = vand.u32 %v4742, 4294901760
  %4744 = vmatpush1.msra.mxu0 %v4743
  %4745 = vmatprep.subr.mxu0 0.0
  %v4746 = vand.u32 %v2725, 4294901760
  %v4747 = vsub.f32 %v2725, %v4746
  %v4748 = vand.u32 %v4747, 4294901760
  %v4749 = vsub.f32 %v4747, %v4748
  %v4750 = vand.u32 %v4749, 4294901760
  %4751 = vmatpush1.msra.mxu0 %v4750
  %4752 = vmatprep.subr.mxu0 0.0
  %v4753 = vand.u32 %v2726, 4294901760
  %v4754 = vsub.f32 %v2726, %v4753
  %v4755 = vand.u32 %v4754, 4294901760
  %v4756 = vsub.f32 %v4754, %v4755
  %v4757 = vand.u32 %v4756, 4294901760
  %4758 = vmatpush1.msra.mxu0 %v4757
  %4759 = vmatprep.subr.mxu0 0.0
  %v4760 = vand.u32 %v2727, 4294901760
  %v4761 = vsub.f32 %v2727, %v4760
  %v4762 = vand.u32 %v4761, 4294901760
  %v4763 = vsub.f32 %v4761, %v4762
  %v4764 = vand.u32 %v4763, 4294901760
  %4765 = vmatpush1.msra.mxu0 %v4764
  %4766 = vmatprep.subr.mxu0 0.0
  %v4767 = vand.u32 %v2728, 4294901760
  %v4768 = vsub.f32 %v2728, %v4767
  %v4769 = vand.u32 %v4768, 4294901760
  %v4770 = vsub.f32 %v4768, %v4769
  %v4771 = vand.u32 %v4770, 4294901760
  %4772 = vmatpush1.msra.mxu0 %v4771
  %4773 = vmatprep.subr.mxu0 0.0
  %v4774 = vand.u32 %v2729, 4294901760
  %v4775 = vsub.f32 %v2729, %v4774
  %v4776 = vand.u32 %v4775, 4294901760
  %v4777 = vsub.f32 %v4775, %v4776
  %v4778 = vand.u32 %v4777, 4294901760
  %4779 = vmatpush1.msra.mxu0 %v4778
  %4780 = vmatprep.subr.mxu0 0.0
  %v4781 = vand.u32 %v2730, 4294901760
  %v4782 = vsub.f32 %v2730, %v4781
  %v4783 = vand.u32 %v4782, 4294901760
  %v4784 = vsub.f32 %v4782, %v4783
  %v4785 = vand.u32 %v4784, 4294901760
  %4786 = vmatpush1.msra.mxu0 %v4785
  %4787 = vmatprep.subr.mxu0 0.0
  %v4788 = vand.u32 %v2731, 4294901760
  %v4789 = vsub.f32 %v2731, %v4788
  %v4790 = vand.u32 %v4789, 4294901760
  %v4791 = vsub.f32 %v4789, %v4790
  %v4792 = vand.u32 %v4791, 4294901760
  %4793 = vmatpush1.msra.mxu0 %v4792
  %4794 = vmatprep.subr.mxu0 0.0
  %v4795 = vand.u32 %v2732, 4294901760
  %v4796 = vsub.f32 %v2732, %v4795
  %v4797 = vand.u32 %v4796, 4294901760
  %v4798 = vsub.f32 %v4796, %v4797
  %v4799 = vand.u32 %v4798, 4294901760
  %4800 = vmatpush1.msra.mxu0 %v4799
  %4801 = vmatprep.subr.mxu0 0.0
  %v4802 = vand.u32 %v2733, 4294901760
  %v4803 = vsub.f32 %v2733, %v4802
  %v4804 = vand.u32 %v4803, 4294901760
  %v4805 = vsub.f32 %v4803, %v4804
  %v4806 = vand.u32 %v4805, 4294901760
  %4807 = vmatpush1.msra.mxu0 %v4806
  %4808 = vmatprep.subr.mxu0 0.0
  %v4809 = vand.u32 %v2734, 4294901760
  %v4810 = vsub.f32 %v2734, %v4809
  %v4811 = vand.u32 %v4810, 4294901760
  %v4812 = vsub.f32 %v4810, %v4811
  %v4813 = vand.u32 %v4812, 4294901760
  %4814 = vmatpush1.msra.mxu0 %v4813
  %4815 = vmatprep.subr.mxu0 0.0
  %v4816 = vand.u32 %v2735, 4294901760
  %v4817 = vsub.f32 %v2735, %v4816
  %v4818 = vand.u32 %v4817, 4294901760
  %v4819 = vsub.f32 %v4817, %v4818
  %v4820 = vand.u32 %v4819, 4294901760
  %4821 = vmatpush1.msra.mxu0 %v4820
  %4822 = vmatprep.subr.mxu0 0.0
  %v4823 = vand.u32 %v2736, 4294901760
  %v4824 = vsub.f32 %v2736, %v4823
  %v4825 = vand.u32 %v4824, 4294901760
  %v4826 = vsub.f32 %v4824, %v4825
  %v4827 = vand.u32 %v4826, 4294901760
  %4828 = vmatpush1.msra.mxu0 %v4827
  %v4829 = vand.u32 %v1723, 4294901760
  %4830 = vmatprep.mubr.f32.mxu0 %v4829
  %v4831 = vand.u32 %v1714, 4294901760
  %4832 = vmatmul.mubr.f32.gmra.mrb[0].mxu0 %v4831
  %v4833 = vpop.f32.mrb[0].mxu0
  %v4834 = vadd.f32 %v4602, %v4833
  %v4835 = vpop.f32.mrb[0].mxu0
  %4836 = vdwg.mxu0
  %4837 = vmatprep.subr.mxu0 0.0
  %v4838 = vand.u32 %v2705, 4294901760
  %v4839 = vsub.f32 %v2705, %v4838
  %4840 = vmatpush1.msra.mxu0 %v4839
  %4841 = vmatprep.subr.mxu0 0.0
  %v4842 = vand.u32 %v2706, 4294901760
  %v4843 = vsub.f32 %v2706, %v4842
  %4844 = vmatpush1.msra.mxu0 %v4843
  %4845 = vmatprep.subr.mxu0 0.0
  %v4846 = vand.u32 %v2707, 4294901760
  %v4847 = vsub.f32 %v2707, %v4846
  %4848 = vmatpush1.msra.mxu0 %v4847
  %4849 = vmatprep.subr.mxu0 0.0
  %v4850 = vand.u32 %v2708, 4294901760
  %v4851 = vsub.f32 %v2708, %v4850
  %4852 = vmatpush1.msra.mxu0 %v4851
  %4853 = vmatprep.subr.mxu0 0.0
  %v4854 = vand.u32 %v2709, 4294901760
  %v4855 = vsub.f32 %v2709, %v4854
  %4856 = vmatpush1.msra.mxu0 %v4855
  %4857 = vmatprep.subr.mxu0 0.0
  %v4858 = vand.u32 %v2710, 4294901760
  %v4859 = vsub.f32 %v2710, %v4858
  %4860 = vmatpush1.msra.mxu0 %v4859
  %4861 = vmatprep.subr.mxu0 0.0
  %v4862 = vand.u32 %v2711, 4294901760
  %v4863 = vsub.f32 %v2711, %v4862
  %4864 = vmatpush1.msra.mxu0 %v4863
  %4865 = vmatprep.subr.mxu0 0.0
  %v4866 = vand.u32 %v2712, 4294901760
  %v4867 = vsub.f32 %v2712, %v4866
  %4868 = vmatpush1.msra.mxu0 %v4867
  %4869 = vmatprep.subr.mxu0 0.0
  %v4870 = vand.u32 %v2713, 4294901760
  %v4871 = vsub.f32 %v2713, %v4870
  %4872 = vmatpush1.msra.mxu0 %v4871
  %4873 = vmatprep.subr.mxu0 0.0
  %v4874 = vand.u32 %v2714, 4294901760
  %v4875 = vsub.f32 %v2714, %v4874
  %4876 = vmatpush1.msra.mxu0 %v4875
  %4877 = vmatprep.subr.mxu0 0.0
  %v4878 = vand.u32 %v2715, 4294901760
  %v4879 = vsub.f32 %v2715, %v4878
  %4880 = vmatpush1.msra.mxu0 %v4879
  %4881 = vmatprep.subr.mxu0 0.0
  %v4882 = vand.u32 %v2716, 4294901760
  %v4883 = vsub.f32 %v2716, %v4882
  %4884 = vmatpush1.msra.mxu0 %v4883
  %4885 = vmatprep.subr.mxu0 0.0
  %v4886 = vand.u32 %v2717, 4294901760
  %v4887 = vsub.f32 %v2717, %v4886
  %4888 = vmatpush1.msra.mxu0 %v4887
  %4889 = vmatprep.subr.mxu0 0.0
  %v4890 = vand.u32 %v2718, 4294901760
  %v4891 = vsub.f32 %v2718, %v4890
  %4892 = vmatpush1.msra.mxu0 %v4891
  %4893 = vmatprep.subr.mxu0 0.0
  %v4894 = vand.u32 %v2719, 4294901760
  %v4895 = vsub.f32 %v2719, %v4894
  %4896 = vmatpush1.msra.mxu0 %v4895
  %4897 = vmatprep.subr.mxu0 0.0
  %v4898 = vand.u32 %v2720, 4294901760
  %v4899 = vsub.f32 %v2720, %v4898
  %4900 = vmatpush1.msra.mxu0 %v4899
  %4901 = vmatprep.subr.mxu0 0.0
  %v4902 = vand.u32 %v2721, 4294901760
  %v4903 = vsub.f32 %v2721, %v4902
  %4904 = vmatpush1.msra.mxu0 %v4903
  %4905 = vmatprep.subr.mxu0 0.0
  %v4906 = vand.u32 %v2722, 4294901760
  %v4907 = vsub.f32 %v2722, %v4906
  %4908 = vmatpush1.msra.mxu0 %v4907
  %4909 = vmatprep.subr.mxu0 0.0
  %v4910 = vand.u32 %v2723, 4294901760
  %v4911 = vsub.f32 %v2723, %v4910
  %4912 = vmatpush1.msra.mxu0 %v4911
  %4913 = vmatprep.subr.mxu0 0.0
  %v4914 = vand.u32 %v2724, 4294901760
  %v4915 = vsub.f32 %v2724, %v4914
  %4916 = vmatpush1.msra.mxu0 %v4915
  %4917 = vmatprep.subr.mxu0 0.0
  %v4918 = vand.u32 %v2725, 4294901760
  %v4919 = vsub.f32 %v2725, %v4918
  %4920 = vmatpush1.msra.mxu0 %v4919
  %4921 = vmatprep.subr.mxu0 0.0
  %v4922 = vand.u32 %v2726, 4294901760
  %v4923 = vsub.f32 %v2726, %v4922
  %4924 = vmatpush1.msra.mxu0 %v4923
  %4925 = vmatprep.subr.mxu0 0.0
  %v4926 = vand.u32 %v2727, 4294901760
  %v4927 = vsub.f32 %v2727, %v4926
  %4928 = vmatpush1.msra.mxu0 %v4927
  %4929 = vmatprep.subr.mxu0 0.0
  %v4930 = vand.u32 %v2728, 4294901760
  %v4931 = vsub.f32 %v2728, %v4930
  %4932 = vmatpush1.msra.mxu0 %v4931
  %4933 = vmatprep.subr.mxu0 0.0
  %v4934 = vand.u32 %v2729, 4294901760
  %v4935 = vsub.f32 %v2729, %v4934
  %4936 = vmatpush1.msra.mxu0 %v4935
  %4937 = vmatprep.subr.mxu0 0.0
  %v4938 = vand.u32 %v2730, 4294901760
  %v4939 = vsub.f32 %v2730, %v4938
  %4940 = vmatpush1.msra.mxu0 %v4939
  %4941 = vmatprep.subr.mxu0 0.0
  %v4942 = vand.u32 %v2731, 4294901760
  %v4943 = vsub.f32 %v2731, %v4942
  %4944 = vmatpush1.msra.mxu0 %v4943
  %4945 = vmatprep.subr.mxu0 0.0
  %v4946 = vand.u32 %v2732, 4294901760
  %v4947 = vsub.f32 %v2732, %v4946
  %4948 = vmatpush1.msra.mxu0 %v4947
  %4949 = vmatprep.subr.mxu0 0.0
  %v4950 = vand.u32 %v2733, 4294901760
  %v4951 = vsub.f32 %v2733, %v4950
  %4952 = vmatpush1.msra.mxu0 %v4951
  %4953 = vmatprep.subr.mxu0 0.0
  %v4954 = vand.u32 %v2734, 4294901760
  %v4955 = vsub.f32 %v2734, %v4954
  %4956 = vmatpush1.msra.mxu0 %v4955
  %4957 = vmatprep.subr.mxu0 0.0
  %v4958 = vand.u32 %v2735, 4294901760
  %v4959 = vsub.f32 %v2735, %v4958
  %4960 = vmatpush1.msra.mxu0 %v4959
  %4961 = vmatprep.subr.mxu0 0.0
  %v4962 = vand.u32 %v2736, 4294901760
  %v4963 = vsub.f32 %v2736, %v4962
  %4964 = vmatpush1.msra.mxu0 %v4963
  %v4965 = vand.u32 %v1723, 4294901760
  %v4966 = vsub.f32 %v1723, %v4965
  %4967 = vmatprep.mubr.f32.mxu0 %v4966
  %v4968 = vand.u32 %v1714, 4294901760
  %v4969 = vsub.f32 %v1714, %v4968
  %4970 = vmatmul.mubr.f32.gmra.mrb[0].mxu0 %v4969
  %v4971 = vpop.f32.mrb[0].mxu0
  %v4972 = vadd.f32 %v4834, %v4971
  %v4973 = vpop.f32.mrb[0].mxu0
  %4974 = vdwg.mxu0
  %4975 = vmatprep.subr.mxu0 0.0
  %v4976 = vand.u32 %v2705, 4294901760
  %4977 = vmatpush1.msra.mxu0 %v4976
  %4978 = vmatprep.subr.mxu0 0.0
  %v4979 = vand.u32 %v2706, 4294901760
  %4980 = vmatpush1.msra.mxu0 %v4979
  %4981 = vmatprep.subr.mxu0 0.0
  %v4982 = vand.u32 %v2707, 4294901760
  %4983 = vmatpush1.msra.mxu0 %v4982
  %4984 = vmatprep.subr.mxu0 0.0
  %v4985 = vand.u32 %v2708, 4294901760
  %4986 = vmatpush1.msra.mxu0 %v4985
  %4987 = vmatprep.subr.mxu0 0.0
  %v4988 = vand.u32 %v2709, 4294901760
  %4989 = vmatpush1.msra.mxu0 %v4988
  %4990 = vmatprep.subr.mxu0 0.0
  %v4991 = vand.u32 %v2710, 4294901760
  %4992 = vmatpush1.msra.mxu0 %v4991
  %4993 = vmatprep.subr.mxu0 0.0
  %v4994 = vand.u32 %v2711, 4294901760
  %4995 = vmatpush1.msra.mxu0 %v4994
  %4996 = vmatprep.subr.mxu0 0.0
  %v4997 = vand.u32 %v2712, 4294901760
  %4998 = vmatpush1.msra.mxu0 %v4997
  %4999 = vmatprep.subr.mxu0 0.0
  %v5000 = vand.u32 %v2713, 4294901760
  %5001 = vmatpush1.msra.mxu0 %v5000
  %5002 = vmatprep.subr.mxu0 0.0
  %v5003 = vand.u32 %v2714, 4294901760
  %5004 = vmatpush1.msra.mxu0 %v5003
  %5005 = vmatprep.subr.mxu0 0.0
  %v5006 = vand.u32 %v2715, 4294901760
  %5007 = vmatpush1.msra.mxu0 %v5006
  %5008 = vmatprep.subr.mxu0 0.0
  %v5009 = vand.u32 %v2716, 4294901760
  %5010 = vmatpush1.msra.mxu0 %v5009
  %5011 = vmatprep.subr.mxu0 0.0
  %v5012 = vand.u32 %v2717, 4294901760
  %5013 = vmatpush1.msra.mxu0 %v5012
  %5014 = vmatprep.subr.mxu0 0.0
  %v5015 = vand.u32 %v2718, 4294901760
  %5016 = vmatpush1.msra.mxu0 %v5015
  %5017 = vmatprep.subr.mxu0 0.0
  %v5018 = vand.u32 %v2719, 4294901760
  %5019 = vmatpush1.msra.mxu0 %v5018
  %5020 = vmatprep.subr.mxu0 0.0
  %v5021 = vand.u32 %v2720, 4294901760
  %5022 = vmatpush1.msra.mxu0 %v5021
  %5023 = vmatprep.subr.mxu0 0.0
  %v5024 = vand.u32 %v2721, 4294901760
  %5025 = vmatpush1.msra.mxu0 %v5024
  %5026 = vmatprep.subr.mxu0 0.0
  %v5027 = vand.u32 %v2722, 4294901760
  %5028 = vmatpush1.msra.mxu0 %v5027
  %5029 = vmatprep.subr.mxu0 0.0
  %v5030 = vand.u32 %v2723, 4294901760
  %5031 = vmatpush1.msra.mxu0 %v5030
  %5032 = vmatprep.subr.mxu0 0.0
  %v5033 = vand.u32 %v2724, 4294901760
  %5034 = vmatpush1.msra.mxu0 %v5033
  %5035 = vmatprep.subr.mxu0 0.0
  %v5036 = vand.u32 %v2725, 4294901760
  %5037 = vmatpush1.msra.mxu0 %v5036
  %5038 = vmatprep.subr.mxu0 0.0
  %v5039 = vand.u32 %v2726, 4294901760
  %5040 = vmatpush1.msra.mxu0 %v5039
  %5041 = vmatprep.subr.mxu0 0.0
  %v5042 = vand.u32 %v2727, 4294901760
  %5043 = vmatpush1.msra.mxu0 %v5042
  %5044 = vmatprep.subr.mxu0 0.0
  %v5045 = vand.u32 %v2728, 4294901760
  %5046 = vmatpush1.msra.mxu0 %v5045
  %5047 = vmatprep.subr.mxu0 0.0
  %v5048 = vand.u32 %v2729, 4294901760
  %5049 = vmatpush1.msra.mxu0 %v5048
  %5050 = vmatprep.subr.mxu0 0.0
  %v5051 = vand.u32 %v2730, 4294901760
  %5052 = vmatpush1.msra.mxu0 %v5051
  %5053 = vmatprep.subr.mxu0 0.0
  %v5054 = vand.u32 %v2731, 4294901760
  %5055 = vmatpush1.msra.mxu0 %v5054
  %5056 = vmatprep.subr.mxu0 0.0
  %v5057 = vand.u32 %v2732, 4294901760
  %5058 = vmatpush1.msra.mxu0 %v5057
  %5059 = vmatprep.subr.mxu0 0.0
  %v5060 = vand.u32 %v2733, 4294901760
  %5061 = vmatpush1.msra.mxu0 %v5060
  %5062 = vmatprep.subr.mxu0 0.0
  %v5063 = vand.u32 %v2734, 4294901760
  %5064 = vmatpush1.msra.mxu0 %v5063
  %5065 = vmatprep.subr.mxu0 0.0
  %v5066 = vand.u32 %v2735, 4294901760
  %5067 = vmatpush1.msra.mxu0 %v5066
  %5068 = vmatprep.subr.mxu0 0.0
  %v5069 = vand.u32 %v2736, 4294901760
  %5070 = vmatpush1.msra.mxu0 %v5069
  %v5071 = vand.u32 %v1723, 4294901760
  %v5072 = vsub.f32 %v1723, %v5071
  %v5073 = vand.u32 %v5072, 4294901760
  %5074 = vmatprep.mubr.f32.mxu0 %v5073
  %v5075 = vand.u32 %v1714, 4294901760
  %v5076 = vsub.f32 %v1714, %v5075
  %v5077 = vand.u32 %v5076, 4294901760
  %5078 = vmatmul.mubr.f32.gmra.mrb[0].mxu0 %v5077
  %v5079 = vpop.f32.mrb[0].mxu0
  %v5080 = vadd.f32 %v4972, %v5079
  %v5081 = vpop.f32.mrb[0].mxu0
  %5082 = vdwg.mxu0
  %5083 = vmatprep.subr.mxu0 0.0
  %v5084 = vand.u32 %v2705, 4294901760
  %v5085 = vsub.f32 %v2705, %v5084
  %v5086 = vand.u32 %v5085, 4294901760
  %5087 = vmatpush1.msra.mxu0 %v5086
  %5088 = vmatprep.subr.mxu0 0.0
  %v5089 = vand.u32 %v2706, 4294901760
  %v5090 = vsub.f32 %v2706, %v5089
  %v5091 = vand.u32 %v5090, 4294901760
  %5092 = vmatpush1.msra.mxu0 %v5091
  %5093 = vmatprep.subr.mxu0 0.0
  %v5094 = vand.u32 %v2707, 4294901760
  %v5095 = vsub.f32 %v2707, %v5094
  %v5096 = vand.u32 %v5095, 4294901760
  %5097 = vmatpush1.msra.mxu0 %v5096
  %5098 = vmatprep.subr.mxu0 0.0
  %v5099 = vand.u32 %v2708, 4294901760
  %v5100 = vsub.f32 %v2708, %v5099
  %v5101 = vand.u32 %v5100, 4294901760
  %5102 = vmatpush1.msra.mxu0 %v5101
  %5103 = vmatprep.subr.mxu0 0.0
  %v5104 = vand.u32 %v2709, 4294901760
  %v5105 = vsub.f32 %v2709, %v5104
  %v5106 = vand.u32 %v5105, 4294901760
  %5107 = vmatpush1.msra.mxu0 %v5106
  %5108 = vmatprep.subr.mxu0 0.0
  %v5109 = vand.u32 %v2710, 4294901760
  %v5110 = vsub.f32 %v2710, %v5109
  %v5111 = vand.u32 %v5110, 4294901760
  %5112 = vmatpush1.msra.mxu0 %v5111
  %5113 = vmatprep.subr.mxu0 0.0
  %v5114 = vand.u32 %v2711, 4294901760
  %v5115 = vsub.f32 %v2711, %v5114
  %v5116 = vand.u32 %v5115, 4294901760
  %5117 = vmatpush1.msra.mxu0 %v5116
  %5118 = vmatprep.subr.mxu0 0.0
  %v5119 = vand.u32 %v2712, 4294901760
  %v5120 = vsub.f32 %v2712, %v5119
  %v5121 = vand.u32 %v5120, 4294901760
  %5122 = vmatpush1.msra.mxu0 %v5121
  %5123 = vmatprep.subr.mxu0 0.0
  %v5124 = vand.u32 %v2713, 4294901760
  %v5125 = vsub.f32 %v2713, %v5124
  %v5126 = vand.u32 %v5125, 4294901760
  %5127 = vmatpush1.msra.mxu0 %v5126
  %5128 = vmatprep.subr.mxu0 0.0
  %v5129 = vand.u32 %v2714, 4294901760
  %v5130 = vsub.f32 %v2714, %v5129
  %v5131 = vand.u32 %v5130, 4294901760
  %5132 = vmatpush1.msra.mxu0 %v5131
  %5133 = vmatprep.subr.mxu0 0.0
  %v5134 = vand.u32 %v2715, 4294901760
  %v5135 = vsub.f32 %v2715, %v5134
  %v5136 = vand.u32 %v5135, 4294901760
  %5137 = vmatpush1.msra.mxu0 %v5136
  %5138 = vmatprep.subr.mxu0 0.0
  %v5139 = vand.u32 %v2716, 4294901760
  %v5140 = vsub.f32 %v2716, %v5139
  %v5141 = vand.u32 %v5140, 4294901760
  %5142 = vmatpush1.msra.mxu0 %v5141
  %5143 = vmatprep.subr.mxu0 0.0
  %v5144 = vand.u32 %v2717, 4294901760
  %v5145 = vsub.f32 %v2717, %v5144
  %v5146 = vand.u32 %v5145, 4294901760
  %5147 = vmatpush1.msra.mxu0 %v5146
  %5148 = vmatprep.subr.mxu0 0.0
  %v5149 = vand.u32 %v2718, 4294901760
  %v5150 = vsub.f32 %v2718, %v5149
  %v5151 = vand.u32 %v5150, 4294901760
  %5152 = vmatpush1.msra.mxu0 %v5151
  %5153 = vmatprep.subr.mxu0 0.0
  %v5154 = vand.u32 %v2719, 4294901760
  %v5155 = vsub.f32 %v2719, %v5154
  %v5156 = vand.u32 %v5155, 4294901760
  %5157 = vmatpush1.msra.mxu0 %v5156
  %5158 = vmatprep.subr.mxu0 0.0
  %v5159 = vand.u32 %v2720, 4294901760
  %v5160 = vsub.f32 %v2720, %v5159
  %v5161 = vand.u32 %v5160, 4294901760
  %5162 = vmatpush1.msra.mxu0 %v5161
  %5163 = vmatprep.subr.mxu0 0.0
  %v5164 = vand.u32 %v2721, 4294901760
  %v5165 = vsub.f32 %v2721, %v5164
  %v5166 = vand.u32 %v5165, 4294901760
  %5167 = vmatpush1.msra.mxu0 %v5166
  %5168 = vmatprep.subr.mxu0 0.0
  %v5169 = vand.u32 %v2722, 4294901760
  %v5170 = vsub.f32 %v2722, %v5169
  %v5171 = vand.u32 %v5170, 4294901760
  %5172 = vmatpush1.msra.mxu0 %v5171
  %5173 = vmatprep.subr.mxu0 0.0
  %v5174 = vand.u32 %v2723, 4294901760
  %v5175 = vsub.f32 %v2723, %v5174
  %v5176 = vand.u32 %v5175, 4294901760
  %5177 = vmatpush1.msra.mxu0 %v5176
  %5178 = vmatprep.subr.mxu0 0.0
  %v5179 = vand.u32 %v2724, 4294901760
  %v5180 = vsub.f32 %v2724, %v5179
  %v5181 = vand.u32 %v5180, 4294901760
  %5182 = vmatpush1.msra.mxu0 %v5181
  %5183 = vmatprep.subr.mxu0 0.0
  %v5184 = vand.u32 %v2725, 4294901760
  %v5185 = vsub.f32 %v2725, %v5184
  %v5186 = vand.u32 %v5185, 4294901760
  %5187 = vmatpush1.msra.mxu0 %v5186
  %5188 = vmatprep.subr.mxu0 0.0
  %v5189 = vand.u32 %v2726, 4294901760
  %v5190 = vsub.f32 %v2726, %v5189
  %v5191 = vand.u32 %v5190, 4294901760
  %5192 = vmatpush1.msra.mxu0 %v5191
  %5193 = vmatprep.subr.mxu0 0.0
  %v5194 = vand.u32 %v2727, 4294901760
  %v5195 = vsub.f32 %v2727, %v5194
  %v5196 = vand.u32 %v5195, 4294901760
  %5197 = vmatpush1.msra.mxu0 %v5196
  %5198 = vmatprep.subr.mxu0 0.0
  %v5199 = vand.u32 %v2728, 4294901760
  %v5200 = vsub.f32 %v2728, %v5199
  %v5201 = vand.u32 %v5200, 4294901760
  %5202 = vmatpush1.msra.mxu0 %v5201
  %5203 = vmatprep.subr.mxu0 0.0
  %v5204 = vand.u32 %v2729, 4294901760
  %v5205 = vsub.f32 %v2729, %v5204
  %v5206 = vand.u32 %v5205, 4294901760
  %5207 = vmatpush1.msra.mxu0 %v5206
  %5208 = vmatprep.subr.mxu0 0.0
  %v5209 = vand.u32 %v2730, 4294901760
  %v5210 = vsub.f32 %v2730, %v5209
  %v5211 = vand.u32 %v5210, 4294901760
  %5212 = vmatpush1.msra.mxu0 %v5211
  %5213 = vmatprep.subr.mxu0 0.0
  %v5214 = vand.u32 %v2731, 4294901760
  %v5215 = vsub.f32 %v2731, %v5214
  %v5216 = vand.u32 %v5215, 4294901760
  %5217 = vmatpush1.msra.mxu0 %v5216
  %5218 = vmatprep.subr.mxu0 0.0
  %v5219 = vand.u32 %v2732, 4294901760
  %v5220 = vsub.f32 %v2732, %v5219
  %v5221 = vand.u32 %v5220, 4294901760
  %5222 = vmatpush1.msra.mxu0 %v5221
  %5223 = vmatprep.subr.mxu0 0.0
  %v5224 = vand.u32 %v2733, 4294901760
  %v5225 = vsub.f32 %v2733, %v5224
  %v5226 = vand.u32 %v5225, 4294901760
  %5227 = vmatpush1.msra.mxu0 %v5226
  %5228 = vmatprep.subr.mxu0 0.0
  %v5229 = vand.u32 %v2734, 4294901760
  %v5230 = vsub.f32 %v2734, %v5229
  %v5231 = vand.u32 %v5230, 4294901760
  %5232 = vmatpush1.msra.mxu0 %v5231
  %5233 = vmatprep.subr.mxu0 0.0
  %v5234 = vand.u32 %v2735, 4294901760
  %v5235 = vsub.f32 %v2735, %v5234
  %v5236 = vand.u32 %v5235, 4294901760
  %5237 = vmatpush1.msra.mxu0 %v5236
  %5238 = vmatprep.subr.mxu0 0.0
  %v5239 = vand.u32 %v2736, 4294901760
  %v5240 = vsub.f32 %v2736, %v5239
  %v5241 = vand.u32 %v5240, 4294901760
  %5242 = vmatpush1.msra.mxu0 %v5241
  %v5243 = vand.u32 %v1723, 4294901760
  %5244 = vmatprep.mubr.f32.mxu0 %v5243
  %v5245 = vand.u32 %v1714, 4294901760
  %5246 = vmatmul.mubr.f32.gmra.mrb[0].mxu0 %v5245
  %v5247 = vpop.f32.mrb[0].mxu0
  %v5248 = vadd.f32 %v5080, %v5247
  %v5249 = vpop.f32.mrb[0].mxu0
  %5250 = vdwg.mxu0
  %5251 = vmatprep.subr.mxu0 0.0
  %v5252 = vand.u32 %v2705, 4294901760
  %5253 = vmatpush1.msra.mxu0 %v5252
  %5254 = vmatprep.subr.mxu0 0.0
  %v5255 = vand.u32 %v2706, 4294901760
  %5256 = vmatpush1.msra.mxu0 %v5255
  %5257 = vmatprep.subr.mxu0 0.0
  %v5258 = vand.u32 %v2707, 4294901760
  %5259 = vmatpush1.msra.mxu0 %v5258
  %5260 = vmatprep.subr.mxu0 0.0
  %v5261 = vand.u32 %v2708, 4294901760
  %5262 = vmatpush1.msra.mxu0 %v5261
  %5263 = vmatprep.subr.mxu0 0.0
  %v5264 = vand.u32 %v2709, 4294901760
  %5265 = vmatpush1.msra.mxu0 %v5264
  %5266 = vmatprep.subr.mxu0 0.0
  %v5267 = vand.u32 %v2710, 4294901760
  %5268 = vmatpush1.msra.mxu0 %v5267
  %5269 = vmatprep.subr.mxu0 0.0
  %v5270 = vand.u32 %v2711, 4294901760
  %5271 = vmatpush1.msra.mxu0 %v5270
  %5272 = vmatprep.subr.mxu0 0.0
  %v5273 = vand.u32 %v2712, 4294901760
  %5274 = vmatpush1.msra.mxu0 %v5273
  %5275 = vmatprep.subr.mxu0 0.0
  %v5276 = vand.u32 %v2713, 4294901760
  %5277 = vmatpush1.msra.mxu0 %v5276
  %5278 = vmatprep.subr.mxu0 0.0
  %v5279 = vand.u32 %v2714, 4294901760
  %5280 = vmatpush1.msra.mxu0 %v5279
  %5281 = vmatprep.subr.mxu0 0.0
  %v5282 = vand.u32 %v2715, 4294901760
  %5283 = vmatpush1.msra.mxu0 %v5282
  %5284 = vmatprep.subr.mxu0 0.0
  %v5285 = vand.u32 %v2716, 4294901760
  %5286 = vmatpush1.msra.mxu0 %v5285
  %5287 = vmatprep.subr.mxu0 0.0
  %v5288 = vand.u32 %v2717, 4294901760
  %5289 = vmatpush1.msra.mxu0 %v5288
  %5290 = vmatprep.subr.mxu0 0.0
  %v5291 = vand.u32 %v2718, 4294901760
  %5292 = vmatpush1.msra.mxu0 %v5291
  %5293 = vmatprep.subr.mxu0 0.0
  %v5294 = vand.u32 %v2719, 4294901760
  %5295 = vmatpush1.msra.mxu0 %v5294
  %5296 = vmatprep.subr.mxu0 0.0
  %v5297 = vand.u32 %v2720, 4294901760
  %5298 = vmatpush1.msra.mxu0 %v5297
  %5299 = vmatprep.subr.mxu0 0.0
  %v5300 = vand.u32 %v2721, 4294901760
  %5301 = vmatpush1.msra.mxu0 %v5300
  %5302 = vmatprep.subr.mxu0 0.0
  %v5303 = vand.u32 %v2722, 4294901760
  %5304 = vmatpush1.msra.mxu0 %v5303
  %5305 = vmatprep.subr.mxu0 0.0
  %v5306 = vand.u32 %v2723, 4294901760
  %5307 = vmatpush1.msra.mxu0 %v5306
  %5308 = vmatprep.subr.mxu0 0.0
  %v5309 = vand.u32 %v2724, 4294901760
  %5310 = vmatpush1.msra.mxu0 %v5309
  %5311 = vmatprep.subr.mxu0 0.0
  %v5312 = vand.u32 %v2725, 4294901760
  %5313 = vmatpush1.msra.mxu0 %v5312
  %5314 = vmatprep.subr.mxu0 0.0
  %v5315 = vand.u32 %v2726, 4294901760
  %5316 = vmatpush1.msra.mxu0 %v5315
  %5317 = vmatprep.subr.mxu0 0.0
  %v5318 = vand.u32 %v2727, 4294901760
  %5319 = vmatpush1.msra.mxu0 %v5318
  %5320 = vmatprep.subr.mxu0 0.0
  %v5321 = vand.u32 %v2728, 4294901760
  %5322 = vmatpush1.msra.mxu0 %v5321
  %5323 = vmatprep.subr.mxu0 0.0
  %v5324 = vand.u32 %v2729, 4294901760
  %5325 = vmatpush1.msra.mxu0 %v5324
  %5326 = vmatprep.subr.mxu0 0.0
  %v5327 = vand.u32 %v2730, 4294901760
  %5328 = vmatpush1.msra.mxu0 %v5327
  %5329 = vmatprep.subr.mxu0 0.0
  %v5330 = vand.u32 %v2731, 4294901760
  %5331 = vmatpush1.msra.mxu0 %v5330
  %5332 = vmatprep.subr.mxu0 0.0
  %v5333 = vand.u32 %v2732, 4294901760
  %5334 = vmatpush1.msra.mxu0 %v5333
  %5335 = vmatprep.subr.mxu0 0.0
  %v5336 = vand.u32 %v2733, 4294901760
  %5337 = vmatpush1.msra.mxu0 %v5336
  %5338 = vmatprep.subr.mxu0 0.0
  %v5339 = vand.u32 %v2734, 4294901760
  %5340 = vmatpush1.msra.mxu0 %v5339
  %5341 = vmatprep.subr.mxu0 0.0
  %v5342 = vand.u32 %v2735, 4294901760
  %5343 = vmatpush1.msra.mxu0 %v5342
  %5344 = vmatprep.subr.mxu0 0.0
  %v5345 = vand.u32 %v2736, 4294901760
  %5346 = vmatpush1.msra.mxu0 %v5345
  %v5347 = vand.u32 %v1723, 4294901760
  %5348 = vmatprep.mubr.f32.mxu0 %v5347
  %v5349 = vand.u32 %v1714, 4294901760
  %5350 = vmatmul.mubr.f32.gmra.mrb[0].mxu0 %v5349
  %v5351 = vpop.f32.mrb[0].mxu0
  %v5352 = vadd.f32 %v5248, %v5351
  %v5353 = vpop.f32.mrb[0].mxu0
  %5354 = vdwg.mxu0
  %5355 = vmatprep.subr.mxu0 0.0
  %v5356 = vand.u32 %v2737, 4294901760
  %5357 = vmatpush1.msra.mxu0 %v5356
  %5358 = vmatprep.subr.mxu0 0.0
  %v5359 = vand.u32 %v2738, 4294901760
  %5360 = vmatpush1.msra.mxu0 %v5359
  %5361 = vmatprep.subr.mxu0 0.0
  %v5362 = vand.u32 %v2739, 4294901760
  %5363 = vmatpush1.msra.mxu0 %v5362
  %5364 = vmatprep.subr.mxu0 0.0
  %v5365 = vand.u32 %v2740, 4294901760
  %5366 = vmatpush1.msra.mxu0 %v5365
  %5367 = vmatprep.subr.mxu0 0.0
  %v5368 = vand.u32 %v2741, 4294901760
  %5369 = vmatpush1.msra.mxu0 %v5368
  %5370 = vmatprep.subr.mxu0 0.0
  %v5371 = vand.u32 %v2742, 4294901760
  %5372 = vmatpush1.msra.mxu0 %v5371
  %5373 = vmatprep.subr.mxu0 0.0
  %v5374 = vand.u32 %v2743, 4294901760
  %5375 = vmatpush1.msra.mxu0 %v5374
  %5376 = vmatprep.subr.mxu0 0.0
  %v5377 = vand.u32 %v2744, 4294901760
  %5378 = vmatpush1.msra.mxu0 %v5377
  %5379 = vmatprep.subr.mxu0 0.0
  %v5380 = vand.u32 %v2745, 4294901760
  %5381 = vmatpush1.msra.mxu0 %v5380
  %5382 = vmatprep.subr.mxu0 0.0
  %v5383 = vand.u32 %v2746, 4294901760
  %5384 = vmatpush1.msra.mxu0 %v5383
  %5385 = vmatprep.subr.mxu0 0.0
  %v5386 = vand.u32 %v2747, 4294901760
  %5387 = vmatpush1.msra.mxu0 %v5386
  %5388 = vmatprep.subr.mxu0 0.0
  %v5389 = vand.u32 %v2748, 4294901760
  %5390 = vmatpush1.msra.mxu0 %v5389
  %5391 = vmatprep.subr.mxu0 0.0
  %v5392 = vand.u32 %v2749, 4294901760
  %5393 = vmatpush1.msra.mxu0 %v5392
  %5394 = vmatprep.subr.mxu0 0.0
  %v5395 = vand.u32 %v2750, 4294901760
  %5396 = vmatpush1.msra.mxu0 %v5395
  %5397 = vmatprep.subr.mxu0 0.0
  %v5398 = vand.u32 %v2751, 4294901760
  %5399 = vmatpush1.msra.mxu0 %v5398
  %5400 = vmatprep.subr.mxu0 0.0
  %v5401 = vand.u32 %v2752, 4294901760
  %5402 = vmatpush1.msra.mxu0 %v5401
  %5403 = vmatprep.subr.mxu0 0.0
  %v5404 = vand.u32 %v2753, 4294901760
  %5405 = vmatpush1.msra.mxu0 %v5404
  %5406 = vmatprep.subr.mxu0 0.0
  %v5407 = vand.u32 %v2754, 4294901760
  %5408 = vmatpush1.msra.mxu0 %v5407
  %5409 = vmatprep.subr.mxu0 0.0
  %v5410 = vand.u32 %v2755, 4294901760
  %5411 = vmatpush1.msra.mxu0 %v5410
  %5412 = vmatprep.subr.mxu0 0.0
  %v5413 = vand.u32 %v2756, 4294901760
  %5414 = vmatpush1.msra.mxu0 %v5413
  %5415 = vmatprep.subr.mxu0 0.0
  %v5416 = vand.u32 %v2757, 4294901760
  %5417 = vmatpush1.msra.mxu0 %v5416
  %5418 = vmatprep.subr.mxu0 0.0
  %v5419 = vand.u32 %v2758, 4294901760
  %5420 = vmatpush1.msra.mxu0 %v5419
  %5421 = vmatprep.subr.mxu0 0.0
  %v5422 = vand.u32 %v2759, 4294901760
  %5423 = vmatpush1.msra.mxu0 %v5422
  %5424 = vmatprep.subr.mxu0 0.0
  %v5425 = vand.u32 %v2760, 4294901760
  %5426 = vmatpush1.msra.mxu0 %v5425
  %5427 = vmatprep.subr.mxu0 0.0
  %v5428 = vand.u32 %v2761, 4294901760
  %5429 = vmatpush1.msra.mxu0 %v5428
  %5430 = vmatprep.subr.mxu0 0.0
  %v5431 = vand.u32 %v2762, 4294901760
  %5432 = vmatpush1.msra.mxu0 %v5431
  %5433 = vmatprep.subr.mxu0 0.0
  %v5434 = vand.u32 %v2763, 4294901760
  %5435 = vmatpush1.msra.mxu0 %v5434
  %5436 = vmatprep.subr.mxu0 0.0
  %v5437 = vand.u32 %v2764, 4294901760
  %5438 = vmatpush1.msra.mxu0 %v5437
  %5439 = vmatprep.subr.mxu0 0.0
  %v5440 = vand.u32 %v2765, 4294901760
  %5441 = vmatpush1.msra.mxu0 %v5440
  %5442 = vmatprep.subr.mxu0 0.0
  %v5443 = vand.u32 %v2766, 4294901760
  %5444 = vmatpush1.msra.mxu0 %v5443
  %5445 = vmatprep.subr.mxu0 0.0
  %v5446 = vand.u32 %v2767, 4294901760
  %5447 = vmatpush1.msra.mxu0 %v5446
  %5448 = vmatprep.subr.mxu0 0.0
  %v5449 = vand.u32 %v2768, 4294901760
  %5450 = vmatpush1.msra.mxu0 %v5449
  %v5451 = vand.u32 %v1741, 4294901760
  %v5452 = vsub.f32 %v1741, %v5451
  %v5453 = vand.u32 %v5452, 4294901760
  %v5454 = vsub.f32 %v5452, %v5453
  %v5455 = vand.u32 %v5454, 4294901760
  %5456 = vmatprep.mubr.f32.mxu0 %v5455
  %v5457 = vand.u32 %v1732, 4294901760
  %v5458 = vsub.f32 %v1732, %v5457
  %v5459 = vand.u32 %v5458, 4294901760
  %v5460 = vsub.f32 %v5458, %v5459
  %v5461 = vand.u32 %v5460, 4294901760
  %5462 = vmatmul.mubr.f32.gmra.mrb[0].mxu0 %v5461
  %v5463 = vpop.f32.mrb[0].mxu0
  %v5464 = vadd.f32 %v5352, %v5463
  %v5465 = vpop.f32.mrb[0].mxu0
  %5466 = vdwg.mxu0
  %5467 = vmatprep.subr.mxu0 0.0
  %v5468 = vand.u32 %v2737, 4294901760
  %v5469 = vsub.f32 %v2737, %v5468
  %v5470 = vand.u32 %v5469, 4294901760
  %v5471 = vsub.f32 %v5469, %v5470
  %v5472 = vand.u32 %v5471, 4294901760
  %5473 = vmatpush1.msra.mxu0 %v5472
  %5474 = vmatprep.subr.mxu0 0.0
  %v5475 = vand.u32 %v2738, 4294901760
  %v5476 = vsub.f32 %v2738, %v5475
  %v5477 = vand.u32 %v5476, 4294901760
  %v5478 = vsub.f32 %v5476, %v5477
  %v5479 = vand.u32 %v5478, 4294901760
  %5480 = vmatpush1.msra.mxu0 %v5479
  %5481 = vmatprep.subr.mxu0 0.0
  %v5482 = vand.u32 %v2739, 4294901760
  %v5483 = vsub.f32 %v2739, %v5482
  %v5484 = vand.u32 %v5483, 4294901760
  %v5485 = vsub.f32 %v5483, %v5484
  %v5486 = vand.u32 %v5485, 4294901760
  %5487 = vmatpush1.msra.mxu0 %v5486
  %5488 = vmatprep.subr.mxu0 0.0
  %v5489 = vand.u32 %v2740, 4294901760
  %v5490 = vsub.f32 %v2740, %v5489
  %v5491 = vand.u32 %v5490, 4294901760
  %v5492 = vsub.f32 %v5490, %v5491
  %v5493 = vand.u32 %v5492, 4294901760
  %5494 = vmatpush1.msra.mxu0 %v5493
  %5495 = vmatprep.subr.mxu0 0.0
  %v5496 = vand.u32 %v2741, 4294901760
  %v5497 = vsub.f32 %v2741, %v5496
  %v5498 = vand.u32 %v5497, 4294901760
  %v5499 = vsub.f32 %v5497, %v5498
  %v5500 = vand.u32 %v5499, 4294901760
  %5501 = vmatpush1.msra.mxu0 %v5500
  %5502 = vmatprep.subr.mxu0 0.0
  %v5503 = vand.u32 %v2742, 4294901760
  %v5504 = vsub.f32 %v2742, %v5503
  %v5505 = vand.u32 %v5504, 4294901760
  %v5506 = vsub.f32 %v5504, %v5505
  %v5507 = vand.u32 %v5506, 4294901760
  %5508 = vmatpush1.msra.mxu0 %v5507
  %5509 = vmatprep.subr.mxu0 0.0
  %v5510 = vand.u32 %v2743, 4294901760
  %v5511 = vsub.f32 %v2743, %v5510
  %v5512 = vand.u32 %v5511, 4294901760
  %v5513 = vsub.f32 %v5511, %v5512
  %v5514 = vand.u32 %v5513, 4294901760
  %5515 = vmatpush1.msra.mxu0 %v5514
  %5516 = vmatprep.subr.mxu0 0.0
  %v5517 = vand.u32 %v2744, 4294901760
  %v5518 = vsub.f32 %v2744, %v5517
  %v5519 = vand.u32 %v5518, 4294901760
  %v5520 = vsub.f32 %v5518, %v5519
  %v5521 = vand.u32 %v5520, 4294901760
  %5522 = vmatpush1.msra.mxu0 %v5521
  %5523 = vmatprep.subr.mxu0 0.0
  %v5524 = vand.u32 %v2745, 4294901760
  %v5525 = vsub.f32 %v2745, %v5524
  %v5526 = vand.u32 %v5525, 4294901760
  %v5527 = vsub.f32 %v5525, %v5526
  %v5528 = vand.u32 %v5527, 4294901760
  %5529 = vmatpush1.msra.mxu0 %v5528
  %5530 = vmatprep.subr.mxu0 0.0
  %v5531 = vand.u32 %v2746, 4294901760
  %v5532 = vsub.f32 %v2746, %v5531
  %v5533 = vand.u32 %v5532, 4294901760
  %v5534 = vsub.f32 %v5532, %v5533
  %v5535 = vand.u32 %v5534, 4294901760
  %5536 = vmatpush1.msra.mxu0 %v5535
  %5537 = vmatprep.subr.mxu0 0.0
  %v5538 = vand.u32 %v2747, 4294901760
  %v5539 = vsub.f32 %v2747, %v5538
  %v5540 = vand.u32 %v5539, 4294901760
  %v5541 = vsub.f32 %v5539, %v5540
  %v5542 = vand.u32 %v5541, 4294901760
  %5543 = vmatpush1.msra.mxu0 %v5542
  %5544 = vmatprep.subr.mxu0 0.0
  %v5545 = vand.u32 %v2748, 4294901760
  %v5546 = vsub.f32 %v2748, %v5545
  %v5547 = vand.u32 %v5546, 4294901760
  %v5548 = vsub.f32 %v5546, %v5547
  %v5549 = vand.u32 %v5548, 4294901760
  %5550 = vmatpush1.msra.mxu0 %v5549
  %5551 = vmatprep.subr.mxu0 0.0
  %v5552 = vand.u32 %v2749, 4294901760
  %v5553 = vsub.f32 %v2749, %v5552
  %v5554 = vand.u32 %v5553, 4294901760
  %v5555 = vsub.f32 %v5553, %v5554
  %v5556 = vand.u32 %v5555, 4294901760
  %5557 = vmatpush1.msra.mxu0 %v5556
  %5558 = vmatprep.subr.mxu0 0.0
  %v5559 = vand.u32 %v2750, 4294901760
  %v5560 = vsub.f32 %v2750, %v5559
  %v5561 = vand.u32 %v5560, 4294901760
  %v5562 = vsub.f32 %v5560, %v5561
  %v5563 = vand.u32 %v5562, 4294901760
  %5564 = vmatpush1.msra.mxu0 %v5563
  %5565 = vmatprep.subr.mxu0 0.0
  %v5566 = vand.u32 %v2751, 4294901760
  %v5567 = vsub.f32 %v2751, %v5566
  %v5568 = vand.u32 %v5567, 4294901760
  %v5569 = vsub.f32 %v5567, %v5568
  %v5570 = vand.u32 %v5569, 4294901760
  %5571 = vmatpush1.msra.mxu0 %v5570
  %5572 = vmatprep.subr.mxu0 0.0
  %v5573 = vand.u32 %v2752, 4294901760
  %v5574 = vsub.f32 %v2752, %v5573
  %v5575 = vand.u32 %v5574, 4294901760
  %v5576 = vsub.f32 %v5574, %v5575
  %v5577 = vand.u32 %v5576, 4294901760
  %5578 = vmatpush1.msra.mxu0 %v5577
  %5579 = vmatprep.subr.mxu0 0.0
  %v5580 = vand.u32 %v2753, 4294901760
  %v5581 = vsub.f32 %v2753, %v5580
  %v5582 = vand.u32 %v5581, 4294901760
  %v5583 = vsub.f32 %v5581, %v5582
  %v5584 = vand.u32 %v5583, 4294901760
  %5585 = vmatpush1.msra.mxu0 %v5584
  %5586 = vmatprep.subr.mxu0 0.0
  %v5587 = vand.u32 %v2754, 4294901760
  %v5588 = vsub.f32 %v2754, %v5587
  %v5589 = vand.u32 %v5588, 4294901760
  %v5590 = vsub.f32 %v5588, %v5589
  %v5591 = vand.u32 %v5590, 4294901760
  %5592 = vmatpush1.msra.mxu0 %v5591
  %5593 = vmatprep.subr.mxu0 0.0
  %v5594 = vand.u32 %v2755, 4294901760
  %v5595 = vsub.f32 %v2755, %v5594
  %v5596 = vand.u32 %v5595, 4294901760
  %v5597 = vsub.f32 %v5595, %v5596
  %v5598 = vand.u32 %v5597, 4294901760
  %5599 = vmatpush1.msra.mxu0 %v5598
  %5600 = vmatprep.subr.mxu0 0.0
  %v5601 = vand.u32 %v2756, 4294901760
  %v5602 = vsub.f32 %v2756, %v5601
  %v5603 = vand.u32 %v5602, 4294901760
  %v5604 = vsub.f32 %v5602, %v5603
  %v5605 = vand.u32 %v5604, 4294901760
  %5606 = vmatpush1.msra.mxu0 %v5605
  %5607 = vmatprep.subr.mxu0 0.0
  %v5608 = vand.u32 %v2757, 4294901760
  %v5609 = vsub.f32 %v2757, %v5608
  %v5610 = vand.u32 %v5609, 4294901760
  %v5611 = vsub.f32 %v5609, %v5610
  %v5612 = vand.u32 %v5611, 4294901760
  %5613 = vmatpush1.msra.mxu0 %v5612
  %5614 = vmatprep.subr.mxu0 0.0
  %v5615 = vand.u32 %v2758, 4294901760
  %v5616 = vsub.f32 %v2758, %v5615
  %v5617 = vand.u32 %v5616, 4294901760
  %v5618 = vsub.f32 %v5616, %v5617
  %v5619 = vand.u32 %v5618, 4294901760
  %5620 = vmatpush1.msra.mxu0 %v5619
  %5621 = vmatprep.subr.mxu0 0.0
  %v5622 = vand.u32 %v2759, 4294901760
  %v5623 = vsub.f32 %v2759, %v5622
  %v5624 = vand.u32 %v5623, 4294901760
  %v5625 = vsub.f32 %v5623, %v5624
  %v5626 = vand.u32 %v5625, 4294901760
  %5627 = vmatpush1.msra.mxu0 %v5626
  %5628 = vmatprep.subr.mxu0 0.0
  %v5629 = vand.u32 %v2760, 4294901760
  %v5630 = vsub.f32 %v2760, %v5629
  %v5631 = vand.u32 %v5630, 4294901760
  %v5632 = vsub.f32 %v5630, %v5631
  %v5633 = vand.u32 %v5632, 4294901760
  %5634 = vmatpush1.msra.mxu0 %v5633
  %5635 = vmatprep.subr.mxu0 0.0
  %v5636 = vand.u32 %v2761, 4294901760
  %v5637 = vsub.f32 %v2761, %v5636
  %v5638 = vand.u32 %v5637, 4294901760
  %v5639 = vsub.f32 %v5637, %v5638
  %v5640 = vand.u32 %v5639, 4294901760
  %5641 = vmatpush1.msra.mxu0 %v5640
  %5642 = vmatprep.subr.mxu0 0.0
  %v5643 = vand.u32 %v2762, 4294901760
  %v5644 = vsub.f32 %v2762, %v5643
  %v5645 = vand.u32 %v5644, 4294901760
  %v5646 = vsub.f32 %v5644, %v5645
  %v5647 = vand.u32 %v5646, 4294901760
  %5648 = vmatpush1.msra.mxu0 %v5647
  %5649 = vmatprep.subr.mxu0 0.0
  %v5650 = vand.u32 %v2763, 4294901760
  %v5651 = vsub.f32 %v2763, %v5650
  %v5652 = vand.u32 %v5651, 4294901760
  %v5653 = vsub.f32 %v5651, %v5652
  %v5654 = vand.u32 %v5653, 4294901760
  %5655 = vmatpush1.msra.mxu0 %v5654
  %5656 = vmatprep.subr.mxu0 0.0
  %v5657 = vand.u32 %v2764, 4294901760
  %v5658 = vsub.f32 %v2764, %v5657
  %v5659 = vand.u32 %v5658, 4294901760
  %v5660 = vsub.f32 %v5658, %v5659
  %v5661 = vand.u32 %v5660, 4294901760
  %5662 = vmatpush1.msra.mxu0 %v5661
  %5663 = vmatprep.subr.mxu0 0.0
  %v5664 = vand.u32 %v2765, 4294901760
  %v5665 = vsub.f32 %v2765, %v5664
  %v5666 = vand.u32 %v5665, 4294901760
  %v5667 = vsub.f32 %v5665, %v5666
  %v5668 = vand.u32 %v5667, 4294901760
  %5669 = vmatpush1.msra.mxu0 %v5668
  %5670 = vmatprep.subr.mxu0 0.0
  %v5671 = vand.u32 %v2766, 4294901760
  %v5672 = vsub.f32 %v2766, %v5671
  %v5673 = vand.u32 %v5672, 4294901760
  %v5674 = vsub.f32 %v5672, %v5673
  %v5675 = vand.u32 %v5674, 4294901760
  %5676 = vmatpush1.msra.mxu0 %v5675
  %5677 = vmatprep.subr.mxu0 0.0
  %v5678 = vand.u32 %v2767, 4294901760
  %v5679 = vsub.f32 %v2767, %v5678
  %v5680 = vand.u32 %v5679, 4294901760
  %v5681 = vsub.f32 %v5679, %v5680
  %v5682 = vand.u32 %v5681, 4294901760
  %5683 = vmatpush1.msra.mxu0 %v5682
  %5684 = vmatprep.subr.mxu0 0.0
  %v5685 = vand.u32 %v2768, 4294901760
  %v5686 = vsub.f32 %v2768, %v5685
  %v5687 = vand.u32 %v5686, 4294901760
  %v5688 = vsub.f32 %v5686, %v5687
  %v5689 = vand.u32 %v5688, 4294901760
  %5690 = vmatpush1.msra.mxu0 %v5689
  %v5691 = vand.u32 %v1741, 4294901760
  %5692 = vmatprep.mubr.f32.mxu0 %v5691
  %v5693 = vand.u32 %v1732, 4294901760
  %5694 = vmatmul.mubr.f32.gmra.mrb[0].mxu0 %v5693
  %v5695 = vpop.f32.mrb[0].mxu0
  %v5696 = vadd.f32 %v5464, %v5695
  %v5697 = vpop.f32.mrb[0].mxu0
  %5698 = vdwg.mxu0
  %5699 = vmatprep.subr.mxu0 0.0
  %v5700 = vand.u32 %v2737, 4294901760
  %v5701 = vsub.f32 %v2737, %v5700
  %5702 = vmatpush1.msra.mxu0 %v5701
  %5703 = vmatprep.subr.mxu0 0.0
  %v5704 = vand.u32 %v2738, 4294901760
  %v5705 = vsub.f32 %v2738, %v5704
  %5706 = vmatpush1.msra.mxu0 %v5705
  %5707 = vmatprep.subr.mxu0 0.0
  %v5708 = vand.u32 %v2739, 4294901760
  %v5709 = vsub.f32 %v2739, %v5708
  %5710 = vmatpush1.msra.mxu0 %v5709
  %5711 = vmatprep.subr.mxu0 0.0
  %v5712 = vand.u32 %v2740, 4294901760
  %v5713 = vsub.f32 %v2740, %v5712
  %5714 = vmatpush1.msra.mxu0 %v5713
  %5715 = vmatprep.subr.mxu0 0.0
  %v5716 = vand.u32 %v2741, 4294901760
  %v5717 = vsub.f32 %v2741, %v5716
  %5718 = vmatpush1.msra.mxu0 %v5717
  %5719 = vmatprep.subr.mxu0 0.0
  %v5720 = vand.u32 %v2742, 4294901760
  %v5721 = vsub.f32 %v2742, %v5720
  %5722 = vmatpush1.msra.mxu0 %v5721
  %5723 = vmatprep.subr.mxu0 0.0
  %v5724 = vand.u32 %v2743, 4294901760
  %v5725 = vsub.f32 %v2743, %v5724
  %5726 = vmatpush1.msra.mxu0 %v5725
  %5727 = vmatprep.subr.mxu0 0.0
  %v5728 = vand.u32 %v2744, 4294901760
  %v5729 = vsub.f32 %v2744, %v5728
  %5730 = vmatpush1.msra.mxu0 %v5729
  %5731 = vmatprep.subr.mxu0 0.0
  %v5732 = vand.u32 %v2745, 4294901760
  %v5733 = vsub.f32 %v2745, %v5732
  %5734 = vmatpush1.msra.mxu0 %v5733
  %5735 = vmatprep.subr.mxu0 0.0
  %v5736 = vand.u32 %v2746, 4294901760
  %v5737 = vsub.f32 %v2746, %v5736
  %5738 = vmatpush1.msra.mxu0 %v5737
  %5739 = vmatprep.subr.mxu0 0.0
  %v5740 = vand.u32 %v2747, 4294901760
  %v5741 = vsub.f32 %v2747, %v5740
  %5742 = vmatpush1.msra.mxu0 %v5741
  %5743 = vmatprep.subr.mxu0 0.0
  %v5744 = vand.u32 %v2748, 4294901760
  %v5745 = vsub.f32 %v2748, %v5744
  %5746 = vmatpush1.msra.mxu0 %v5745
  %5747 = vmatprep.subr.mxu0 0.0
  %v5748 = vand.u32 %v2749, 4294901760
  %v5749 = vsub.f32 %v2749, %v5748
  %5750 = vmatpush1.msra.mxu0 %v5749
  %5751 = vmatprep.subr.mxu0 0.0
  %v5752 = vand.u32 %v2750, 4294901760
  %v5753 = vsub.f32 %v2750, %v5752
  %5754 = vmatpush1.msra.mxu0 %v5753
  %5755 = vmatprep.subr.mxu0 0.0
  %v5756 = vand.u32 %v2751, 4294901760
  %v5757 = vsub.f32 %v2751, %v5756
  %5758 = vmatpush1.msra.mxu0 %v5757
  %5759 = vmatprep.subr.mxu0 0.0
  %v5760 = vand.u32 %v2752, 4294901760
  %v5761 = vsub.f32 %v2752, %v5760
  %5762 = vmatpush1.msra.mxu0 %v5761
  %5763 = vmatprep.subr.mxu0 0.0
  %v5764 = vand.u32 %v2753, 4294901760
  %v5765 = vsub.f32 %v2753, %v5764
  %5766 = vmatpush1.msra.mxu0 %v5765
  %5767 = vmatprep.subr.mxu0 0.0
  %v5768 = vand.u32 %v2754, 4294901760
  %v5769 = vsub.f32 %v2754, %v5768
  %5770 = vmatpush1.msra.mxu0 %v5769
  %5771 = vmatprep.subr.mxu0 0.0
  %v5772 = vand.u32 %v2755, 4294901760
  %v5773 = vsub.f32 %v2755, %v5772
  %5774 = vmatpush1.msra.mxu0 %v5773
  %5775 = vmatprep.subr.mxu0 0.0
  %v5776 = vand.u32 %v2756, 4294901760
  %v5777 = vsub.f32 %v2756, %v5776
  %5778 = vmatpush1.msra.mxu0 %v5777
  %5779 = vmatprep.subr.mxu0 0.0
  %v5780 = vand.u32 %v2757, 4294901760
  %v5781 = vsub.f32 %v2757, %v5780
  %5782 = vmatpush1.msra.mxu0 %v5781
  %5783 = vmatprep.subr.mxu0 0.0
  %v5784 = vand.u32 %v2758, 4294901760
  %v5785 = vsub.f32 %v2758, %v5784
  %5786 = vmatpush1.msra.mxu0 %v5785
  %5787 = vmatprep.subr.mxu0 0.0
  %v5788 = vand.u32 %v2759, 4294901760
  %v5789 = vsub.f32 %v2759, %v5788
  %5790 = vmatpush1.msra.mxu0 %v5789
  %5791 = vmatprep.subr.mxu0 0.0
  %v5792 = vand.u32 %v2760, 4294901760
  %v5793 = vsub.f32 %v2760, %v5792
  %5794 = vmatpush1.msra.mxu0 %v5793
  %5795 = vmatprep.subr.mxu0 0.0
  %v5796 = vand.u32 %v2761, 4294901760
  %v5797 = vsub.f32 %v2761, %v5796
  %5798 = vmatpush1.msra.mxu0 %v5797
  %5799 = vmatprep.subr.mxu0 0.0
  %v5800 = vand.u32 %v2762, 4294901760
  %v5801 = vsub.f32 %v2762, %v5800
  %5802 = vmatpush1.msra.mxu0 %v5801
  %5803 = vmatprep.subr.mxu0 0.0
  %v5804 = vand.u32 %v2763, 4294901760
  %v5805 = vsub.f32 %v2763, %v5804
  %5806 = vmatpush1.msra.mxu0 %v5805
  %5807 = vmatprep.subr.mxu0 0.0
  %v5808 = vand.u32 %v2764, 4294901760
  %v5809 = vsub.f32 %v2764, %v5808
  %5810 = vmatpush1.msra.mxu0 %v5809
  %5811 = vmatprep.subr.mxu0 0.0
  %v5812 = vand.u32 %v2765, 4294901760
  %v5813 = vsub.f32 %v2765, %v5812
  %5814 = vmatpush1.msra.mxu0 %v5813
  %5815 = vmatprep.subr.mxu0 0.0
  %v5816 = vand.u32 %v2766, 4294901760
  %v5817 = vsub.f32 %v2766, %v5816
  %5818 = vmatpush1.msra.mxu0 %v5817
  %5819 = vmatprep.subr.mxu0 0.0
  %v5820 = vand.u32 %v2767, 4294901760
  %v5821 = vsub.f32 %v2767, %v5820
  %5822 = vmatpush1.msra.mxu0 %v5821
  %5823 = vmatprep.subr.mxu0 0.0
  %v5824 = vand.u32 %v2768, 4294901760
  %v5825 = vsub.f32 %v2768, %v5824
  %5826 = vmatpush1.msra.mxu0 %v5825
  %v5827 = vand.u32 %v1741, 4294901760
  %v5828 = vsub.f32 %v1741, %v5827
  %5829 = vmatprep.mubr.f32.mxu0 %v5828
  %v5830 = vand.u32 %v1732, 4294901760
  %v5831 = vsub.f32 %v1732, %v5830
  %5832 = vmatmul.mubr.f32.gmra.mrb[0].mxu0 %v5831
  %v5833 = vpop.f32.mrb[0].mxu0
  %v5834 = vadd.f32 %v5696, %v5833
  %v5835 = vpop.f32.mrb[0].mxu0
  %5836 = vdwg.mxu0
  %5837 = vmatprep.subr.mxu0 0.0
  %v5838 = vand.u32 %v2737, 4294901760
  %5839 = vmatpush1.msra.mxu0 %v5838
  %5840 = vmatprep.subr.mxu0 0.0
  %v5841 = vand.u32 %v2738, 4294901760
  %5842 = vmatpush1.msra.mxu0 %v5841
  %5843 = vmatprep.subr.mxu0 0.0
  %v5844 = vand.u32 %v2739, 4294901760
  %5845 = vmatpush1.msra.mxu0 %v5844
  %5846 = vmatprep.subr.mxu0 0.0
  %v5847 = vand.u32 %v2740, 4294901760
  %5848 = vmatpush1.msra.mxu0 %v5847
  %5849 = vmatprep.subr.mxu0 0.0
  %v5850 = vand.u32 %v2741, 4294901760
  %5851 = vmatpush1.msra.mxu0 %v5850
  %5852 = vmatprep.subr.mxu0 0.0
  %v5853 = vand.u32 %v2742, 4294901760
  %5854 = vmatpush1.msra.mxu0 %v5853
  %5855 = vmatprep.subr.mxu0 0.0
  %v5856 = vand.u32 %v2743, 4294901760
  %5857 = vmatpush1.msra.mxu0 %v5856
  %5858 = vmatprep.subr.mxu0 0.0
  %v5859 = vand.u32 %v2744, 4294901760
  %5860 = vmatpush1.msra.mxu0 %v5859
  %5861 = vmatprep.subr.mxu0 0.0
  %v5862 = vand.u32 %v2745, 4294901760
  %5863 = vmatpush1.msra.mxu0 %v5862
  %5864 = vmatprep.subr.mxu0 0.0
  %v5865 = vand.u32 %v2746, 4294901760
  %5866 = vmatpush1.msra.mxu0 %v5865
  %5867 = vmatprep.subr.mxu0 0.0
  %v5868 = vand.u32 %v2747, 4294901760
  %5869 = vmatpush1.msra.mxu0 %v5868
  %5870 = vmatprep.subr.mxu0 0.0
  %v5871 = vand.u32 %v2748, 4294901760
  %5872 = vmatpush1.msra.mxu0 %v5871
  %5873 = vmatprep.subr.mxu0 0.0
  %v5874 = vand.u32 %v2749, 4294901760
  %5875 = vmatpush1.msra.mxu0 %v5874
  %5876 = vmatprep.subr.mxu0 0.0
  %v5877 = vand.u32 %v2750, 4294901760
  %5878 = vmatpush1.msra.mxu0 %v5877
  %5879 = vmatprep.subr.mxu0 0.0
  %v5880 = vand.u32 %v2751, 4294901760
  %5881 = vmatpush1.msra.mxu0 %v5880
  %5882 = vmatprep.subr.mxu0 0.0
  %v5883 = vand.u32 %v2752, 4294901760
  %5884 = vmatpush1.msra.mxu0 %v5883
  %5885 = vmatprep.subr.mxu0 0.0
  %v5886 = vand.u32 %v2753, 4294901760
  %5887 = vmatpush1.msra.mxu0 %v5886
  %5888 = vmatprep.subr.mxu0 0.0
  %v5889 = vand.u32 %v2754, 4294901760
  %5890 = vmatpush1.msra.mxu0 %v5889
  %5891 = vmatprep.subr.mxu0 0.0
  %v5892 = vand.u32 %v2755, 4294901760
  %5893 = vmatpush1.msra.mxu0 %v5892
  %5894 = vmatprep.subr.mxu0 0.0
  %v5895 = vand.u32 %v2756, 4294901760
  %5896 = vmatpush1.msra.mxu0 %v5895
  %5897 = vmatprep.subr.mxu0 0.0
  %v5898 = vand.u32 %v2757, 4294901760
  %5899 = vmatpush1.msra.mxu0 %v5898
  %5900 = vmatprep.subr.mxu0 0.0
  %v5901 = vand.u32 %v2758, 4294901760
  %5902 = vmatpush1.msra.mxu0 %v5901
  %5903 = vmatprep.subr.mxu0 0.0
  %v5904 = vand.u32 %v2759, 4294901760
  %5905 = vmatpush1.msra.mxu0 %v5904
  %5906 = vmatprep.subr.mxu0 0.0
  %v5907 = vand.u32 %v2760, 4294901760
  %5908 = vmatpush1.msra.mxu0 %v5907
  %5909 = vmatprep.subr.mxu0 0.0
  %v5910 = vand.u32 %v2761, 4294901760
  %5911 = vmatpush1.msra.mxu0 %v5910
  %5912 = vmatprep.subr.mxu0 0.0
  %v5913 = vand.u32 %v2762, 4294901760
  %5914 = vmatpush1.msra.mxu0 %v5913
  %5915 = vmatprep.subr.mxu0 0.0
  %v5916 = vand.u32 %v2763, 4294901760
  %5917 = vmatpush1.msra.mxu0 %v5916
  %5918 = vmatprep.subr.mxu0 0.0
  %v5919 = vand.u32 %v2764, 4294901760
  %5920 = vmatpush1.msra.mxu0 %v5919
  %5921 = vmatprep.subr.mxu0 0.0
  %v5922 = vand.u32 %v2765, 4294901760
  %5923 = vmatpush1.msra.mxu0 %v5922
  %5924 = vmatprep.subr.mxu0 0.0
  %v5925 = vand.u32 %v2766, 4294901760
  %5926 = vmatpush1.msra.mxu0 %v5925
  %5927 = vmatprep.subr.mxu0 0.0
  %v5928 = vand.u32 %v2767, 4294901760
  %5929 = vmatpush1.msra.mxu0 %v5928
  %5930 = vmatprep.subr.mxu0 0.0
  %v5931 = vand.u32 %v2768, 4294901760
  %5932 = vmatpush1.msra.mxu0 %v5931
  %v5933 = vand.u32 %v1741, 4294901760
  %v5934 = vsub.f32 %v1741, %v5933
  %v5935 = vand.u32 %v5934, 4294901760
  %5936 = vmatprep.mubr.f32.mxu0 %v5935
  %v5937 = vand.u32 %v1732, 4294901760
  %v5938 = vsub.f32 %v1732, %v5937
  %v5939 = vand.u32 %v5938, 4294901760
  %5940 = vmatmul.mubr.f32.gmra.mrb[0].mxu0 %v5939
  %v5941 = vpop.f32.mrb[0].mxu0
  %v5942 = vadd.f32 %v5834, %v5941
  %v5943 = vpop.f32.mrb[0].mxu0
  %5944 = vdwg.mxu0
  %5945 = vmatprep.subr.mxu0 0.0
  %v5946 = vand.u32 %v2737, 4294901760
  %v5947 = vsub.f32 %v2737, %v5946
  %v5948 = vand.u32 %v5947, 4294901760
  %5949 = vmatpush1.msra.mxu0 %v5948
  %5950 = vmatprep.subr.mxu0 0.0
  %v5951 = vand.u32 %v2738, 4294901760
  %v5952 = vsub.f32 %v2738, %v5951
  %v5953 = vand.u32 %v5952, 4294901760
  %5954 = vmatpush1.msra.mxu0 %v5953
  %5955 = vmatprep.subr.mxu0 0.0
  %v5956 = vand.u32 %v2739, 4294901760
  %v5957 = vsub.f32 %v2739, %v5956
  %v5958 = vand.u32 %v5957, 4294901760
  %5959 = vmatpush1.msra.mxu0 %v5958
  %5960 = vmatprep.subr.mxu0 0.0
  %v5961 = vand.u32 %v2740, 4294901760
  %v5962 = vsub.f32 %v2740, %v5961
  %v5963 = vand.u32 %v5962, 4294901760
  %5964 = vmatpush1.msra.mxu0 %v5963
  %5965 = vmatprep.subr.mxu0 0.0
  %v5966 = vand.u32 %v2741, 4294901760
  %v5967 = vsub.f32 %v2741, %v5966
  %v5968 = vand.u32 %v5967, 4294901760
  %5969 = vmatpush1.msra.mxu0 %v5968
  %5970 = vmatprep.subr.mxu0 0.0
  %v5971 = vand.u32 %v2742, 4294901760
  %v5972 = vsub.f32 %v2742, %v5971
  %v5973 = vand.u32 %v5972, 4294901760
  %5974 = vmatpush1.msra.mxu0 %v5973
  %5975 = vmatprep.subr.mxu0 0.0
  %v5976 = vand.u32 %v2743, 4294901760
  %v5977 = vsub.f32 %v2743, %v5976
  %v5978 = vand.u32 %v5977, 4294901760
  %5979 = vmatpush1.msra.mxu0 %v5978
  %5980 = vmatprep.subr.mxu0 0.0
  %v5981 = vand.u32 %v2744, 4294901760
  %v5982 = vsub.f32 %v2744, %v5981
  %v5983 = vand.u32 %v5982, 4294901760
  %5984 = vmatpush1.msra.mxu0 %v5983
  %5985 = vmatprep.subr.mxu0 0.0
  %v5986 = vand.u32 %v2745, 4294901760
  %v5987 = vsub.f32 %v2745, %v5986
  %v5988 = vand.u32 %v5987, 4294901760
  %5989 = vmatpush1.msra.mxu0 %v5988
  %5990 = vmatprep.subr.mxu0 0.0
  %v5991 = vand.u32 %v2746, 4294901760
  %v5992 = vsub.f32 %v2746, %v5991
  %v5993 = vand.u32 %v5992, 4294901760
  %5994 = vmatpush1.msra.mxu0 %v5993
  %5995 = vmatprep.subr.mxu0 0.0
  %v5996 = vand.u32 %v2747, 4294901760
  %v5997 = vsub.f32 %v2747, %v5996
  %v5998 = vand.u32 %v5997, 4294901760
  %5999 = vmatpush1.msra.mxu0 %v5998
  %6000 = vmatprep.subr.mxu0 0.0
  %v6001 = vand.u32 %v2748, 4294901760
  %v6002 = vsub.f32 %v2748, %v6001
  %v6003 = vand.u32 %v6002, 4294901760
  %6004 = vmatpush1.msra.mxu0 %v6003
  %6005 = vmatprep.subr.mxu0 0.0
  %v6006 = vand.u32 %v2749, 4294901760
  %v6007 = vsub.f32 %v2749, %v6006
  %v6008 = vand.u32 %v6007, 4294901760
  %6009 = vmatpush1.msra.mxu0 %v6008
  %6010 = vmatprep.subr.mxu0 0.0
  %v6011 = vand.u32 %v2750, 4294901760
  %v6012 = vsub.f32 %v2750, %v6011
  %v6013 = vand.u32 %v6012, 4294901760
  %6014 = vmatpush1.msra.mxu0 %v6013
  %6015 = vmatprep.subr.mxu0 0.0
  %v6016 = vand.u32 %v2751, 4294901760
  %v6017 = vsub.f32 %v2751, %v6016
  %v6018 = vand.u32 %v6017, 4294901760
  %6019 = vmatpush1.msra.mxu0 %v6018
  %6020 = vmatprep.subr.mxu0 0.0
  %v6021 = vand.u32 %v2752, 4294901760
  %v6022 = vsub.f32 %v2752, %v6021
  %v6023 = vand.u32 %v6022, 4294901760
  %6024 = vmatpush1.msra.mxu0 %v6023
  %6025 = vmatprep.subr.mxu0 0.0
  %v6026 = vand.u32 %v2753, 4294901760
  %v6027 = vsub.f32 %v2753, %v6026
  %v6028 = vand.u32 %v6027, 4294901760
  %6029 = vmatpush1.msra.mxu0 %v6028
  %6030 = vmatprep.subr.mxu0 0.0
  %v6031 = vand.u32 %v2754, 4294901760
  %v6032 = vsub.f32 %v2754, %v6031
  %v6033 = vand.u32 %v6032, 4294901760
  %6034 = vmatpush1.msra.mxu0 %v6033
  %6035 = vmatprep.subr.mxu0 0.0
  %v6036 = vand.u32 %v2755, 4294901760
  %v6037 = vsub.f32 %v2755, %v6036
  %v6038 = vand.u32 %v6037, 4294901760
  %6039 = vmatpush1.msra.mxu0 %v6038
  %6040 = vmatprep.subr.mxu0 0.0
  %v6041 = vand.u32 %v2756, 4294901760
  %v6042 = vsub.f32 %v2756, %v6041
  %v6043 = vand.u32 %v6042, 4294901760
  %6044 = vmatpush1.msra.mxu0 %v6043
  %6045 = vmatprep.subr.mxu0 0.0
  %v6046 = vand.u32 %v2757, 4294901760
  %v6047 = vsub.f32 %v2757, %v6046
  %v6048 = vand.u32 %v6047, 4294901760
  %6049 = vmatpush1.msra.mxu0 %v6048
  %6050 = vmatprep.subr.mxu0 0.0
  %v6051 = vand.u32 %v2758, 4294901760
  %v6052 = vsub.f32 %v2758, %v6051
  %v6053 = vand.u32 %v6052, 4294901760
  %6054 = vmatpush1.msra.mxu0 %v6053
  %6055 = vmatprep.subr.mxu0 0.0
  %v6056 = vand.u32 %v2759, 4294901760
  %v6057 = vsub.f32 %v2759, %v6056
  %v6058 = vand.u32 %v6057, 4294901760
  %6059 = vmatpush1.msra.mxu0 %v6058
  %6060 = vmatprep.subr.mxu0 0.0
  %v6061 = vand.u32 %v2760, 4294901760
  %v6062 = vsub.f32 %v2760, %v6061
  %v6063 = vand.u32 %v6062, 4294901760
  %6064 = vmatpush1.msra.mxu0 %v6063
  %6065 = vmatprep.subr.mxu0 0.0
  %v6066 = vand.u32 %v2761, 4294901760
  %v6067 = vsub.f32 %v2761, %v6066
  %v6068 = vand.u32 %v6067, 4294901760
  %6069 = vmatpush1.msra.mxu0 %v6068
  %6070 = vmatprep.subr.mxu0 0.0
  %v6071 = vand.u32 %v2762, 4294901760
  %v6072 = vsub.f32 %v2762, %v6071
  %v6073 = vand.u32 %v6072, 4294901760
  %6074 = vmatpush1.msra.mxu0 %v6073
  %6075 = vmatprep.subr.mxu0 0.0
  %v6076 = vand.u32 %v2763, 4294901760
  %v6077 = vsub.f32 %v2763, %v6076
  %v6078 = vand.u32 %v6077, 4294901760
  %6079 = vmatpush1.msra.mxu0 %v6078
  %6080 = vmatprep.subr.mxu0 0.0
  %v6081 = vand.u32 %v2764, 4294901760
  %v6082 = vsub.f32 %v2764, %v6081
  %v6083 = vand.u32 %v6082, 4294901760
  %6084 = vmatpush1.msra.mxu0 %v6083
  %6085 = vmatprep.subr.mxu0 0.0
  %v6086 = vand.u32 %v2765, 4294901760
  %v6087 = vsub.f32 %v2765, %v6086
  %v6088 = vand.u32 %v6087, 4294901760
  %6089 = vmatpush1.msra.mxu0 %v6088
  %6090 = vmatprep.subr.mxu0 0.0
  %v6091 = vand.u32 %v2766, 4294901760
  %v6092 = vsub.f32 %v2766, %v6091
  %v6093 = vand.u32 %v6092, 4294901760
  %6094 = vmatpush1.msra.mxu0 %v6093
  %6095 = vmatprep.subr.mxu0 0.0
  %v6096 = vand.u32 %v2767, 4294901760
  %v6097 = vsub.f32 %v2767, %v6096
  %v6098 = vand.u32 %v6097, 4294901760
  %6099 = vmatpush1.msra.mxu0 %v6098
  %6100 = vmatprep.subr.mxu0 0.0
  %v6101 = vand.u32 %v2768, 4294901760
  %v6102 = vsub.f32 %v2768, %v6101
  %v6103 = vand.u32 %v6102, 4294901760
  %6104 = vmatpush1.msra.mxu0 %v6103
  %v6105 = vand.u32 %v1741, 4294901760
  %6106 = vmatprep.mubr.f32.mxu0 %v6105
  %v6107 = vand.u32 %v1732, 4294901760
  %6108 = vmatmul.mubr.f32.gmra.mrb[0].mxu0 %v6107
  %v6109 = vpop.f32.mrb[0].mxu0
  %v6110 = vadd.f32 %v5942, %v6109
  %v6111 = vpop.f32.mrb[0].mxu0
  %6112 = vdwg.mxu0
  %6113 = vmatprep.subr.mxu0 0.0
  %v6114 = vand.u32 %v2737, 4294901760
  %6115 = vmatpush1.msra.mxu0 %v6114
  %6116 = vmatprep.subr.mxu0 0.0
  %v6117 = vand.u32 %v2738, 4294901760
  %6118 = vmatpush1.msra.mxu0 %v6117
  %6119 = vmatprep.subr.mxu0 0.0
  %v6120 = vand.u32 %v2739, 4294901760
  %6121 = vmatpush1.msra.mxu0 %v6120
  %6122 = vmatprep.subr.mxu0 0.0
  %v6123 = vand.u32 %v2740, 4294901760
  %6124 = vmatpush1.msra.mxu0 %v6123
  %6125 = vmatprep.subr.mxu0 0.0
  %v6126 = vand.u32 %v2741, 4294901760
  %6127 = vmatpush1.msra.mxu0 %v6126
  %6128 = vmatprep.subr.mxu0 0.0
  %v6129 = vand.u32 %v2742, 4294901760
  %6130 = vmatpush1.msra.mxu0 %v6129
  %6131 = vmatprep.subr.mxu0 0.0
  %v6132 = vand.u32 %v2743, 4294901760
  %6133 = vmatpush1.msra.mxu0 %v6132
  %6134 = vmatprep.subr.mxu0 0.0
  %v6135 = vand.u32 %v2744, 4294901760
  %6136 = vmatpush1.msra.mxu0 %v6135
  %6137 = vmatprep.subr.mxu0 0.0
  %v6138 = vand.u32 %v2745, 4294901760
  %6139 = vmatpush1.msra.mxu0 %v6138
  %6140 = vmatprep.subr.mxu0 0.0
  %v6141 = vand.u32 %v2746, 4294901760
  %6142 = vmatpush1.msra.mxu0 %v6141
  %6143 = vmatprep.subr.mxu0 0.0
  %v6144 = vand.u32 %v2747, 4294901760
  %6145 = vmatpush1.msra.mxu0 %v6144
  %6146 = vmatprep.subr.mxu0 0.0
  %v6147 = vand.u32 %v2748, 4294901760
  %6148 = vmatpush1.msra.mxu0 %v6147
  %6149 = vmatprep.subr.mxu0 0.0
  %v6150 = vand.u32 %v2749, 4294901760
  %6151 = vmatpush1.msra.mxu0 %v6150
  %6152 = vmatprep.subr.mxu0 0.0
  %v6153 = vand.u32 %v2750, 4294901760
  %6154 = vmatpush1.msra.mxu0 %v6153
  %6155 = vmatprep.subr.mxu0 0.0
  %v6156 = vand.u32 %v2751, 4294901760
  %6157 = vmatpush1.msra.mxu0 %v6156
  %6158 = vmatprep.subr.mxu0 0.0
  %v6159 = vand.u32 %v2752, 4294901760
  %6160 = vmatpush1.msra.mxu0 %v6159
  %6161 = vmatprep.subr.mxu0 0.0
  %v6162 = vand.u32 %v2753, 4294901760
  %6163 = vmatpush1.msra.mxu0 %v6162
  %6164 = vmatprep.subr.mxu0 0.0
  %v6165 = vand.u32 %v2754, 4294901760
  %6166 = vmatpush1.msra.mxu0 %v6165
  %6167 = vmatprep.subr.mxu0 0.0
  %v6168 = vand.u32 %v2755, 4294901760
  %6169 = vmatpush1.msra.mxu0 %v6168
  %6170 = vmatprep.subr.mxu0 0.0
  %v6171 = vand.u32 %v2756, 4294901760
  %6172 = vmatpush1.msra.mxu0 %v6171
  %6173 = vmatprep.subr.mxu0 0.0
  %v6174 = vand.u32 %v2757, 4294901760
  %6175 = vmatpush1.msra.mxu0 %v6174
  %6176 = vmatprep.subr.mxu0 0.0
  %v6177 = vand.u32 %v2758, 4294901760
  %6178 = vmatpush1.msra.mxu0 %v6177
  %6179 = vmatprep.subr.mxu0 0.0
  %v6180 = vand.u32 %v2759, 4294901760
  %6181 = vmatpush1.msra.mxu0 %v6180
  %6182 = vmatprep.subr.mxu0 0.0
  %v6183 = vand.u32 %v2760, 4294901760
  %6184 = vmatpush1.msra.mxu0 %v6183
  %6185 = vmatprep.subr.mxu0 0.0
  %v6186 = vand.u32 %v2761, 4294901760
  %6187 = vmatpush1.msra.mxu0 %v6186
  %6188 = vmatprep.subr.mxu0 0.0
  %v6189 = vand.u32 %v2762, 4294901760
  %6190 = vmatpush1.msra.mxu0 %v6189
  %6191 = vmatprep.subr.mxu0 0.0
  %v6192 = vand.u32 %v2763, 4294901760
  %6193 = vmatpush1.msra.mxu0 %v6192
  %6194 = vmatprep.subr.mxu0 0.0
  %v6195 = vand.u32 %v2764, 4294901760
  %6196 = vmatpush1.msra.mxu0 %v6195
  %6197 = vmatprep.subr.mxu0 0.0
  %v6198 = vand.u32 %v2765, 4294901760
  %6199 = vmatpush1.msra.mxu0 %v6198
  %6200 = vmatprep.subr.mxu0 0.0
  %v6201 = vand.u32 %v2766, 4294901760
  %6202 = vmatpush1.msra.mxu0 %v6201
  %6203 = vmatprep.subr.mxu0 0.0
  %v6204 = vand.u32 %v2767, 4294901760
  %6205 = vmatpush1.msra.mxu0 %v6204
  %6206 = vmatprep.subr.mxu0 0.0
  %v6207 = vand.u32 %v2768, 4294901760
  %6208 = vmatpush1.msra.mxu0 %v6207
  %v6209 = vand.u32 %v1741, 4294901760
  %6210 = vmatprep.mubr.f32.mxu0 %v6209
  %v6211 = vand.u32 %v1732, 4294901760
  %6212 = vmatmul.mubr.f32.gmra.mrb[0].mxu0 %v6211
  %v6213 = vpop.f32.mrb[0].mxu0
  %v6214 = vadd.f32 %v6110, %v6213
  %v6215 = vpop.f32.mrb[0].mxu0
  %6216 = vdwg.mxu0
  %v6217 = vmul.f32 %v4490, 0.001953125
  %v6218 = vmul.f32 %v6214, 0.001953125
  %v6219 = vmul.f32 %v6217, %v6217
  %v6220 = vsub.f32 %v6218, %v6219
  %v6221 = vld [vmem:[%s2] sm:$0x1]
  %v6222 = vadd.f32 %v6220, 1e-05
  %v6223 = vrsqrt.pop %v6222
  %v6224 = vmul.f32 %v6221, %v6223
  %v6225 = vld [vmem:[%s3] sm:$0x1]
  %v6226 = vmul.f32 %v6217, %v6224
  %v6227 = vsub.f32 %v6225, %v6226
  %v6228 = vadd.s32 %v2576, 128
  %v6229 = vadd.s32 %v2576, 256
  %v6230 = vadd.s32 %v2576, 384
  %vm6231 = vcmp.lt.s32.totalorder %v2576, 0
  %v6232 = vsub.s32 0, %v2576
  %v6233 = vsel %vm6231, %v6232, %v2576
  %v6234 = vshrl.u32 %v6233, 5
  %v6235 = vand.u32 %v6233, 31
  %v6236 = vsub.s32 0, %v6235
  %v6237 = vsel %vm6231, %v6236, %v6235
  %vm6238 = vcmp.lt.s32.totalorder %v6228, 0
  %v6239 = vsub.s32 0, %v6228
  %v6240 = vsel %vm6238, %v6239, %v6228
  %v6241 = vshrl.u32 %v6240, 5
  %v6242 = vand.u32 %v6240, 31
  %v6243 = vsub.s32 0, %v6242
  %v6244 = vsel %vm6238, %v6243, %v6242
  %vm6245 = vcmp.lt.s32.totalorder %v6229, 0
  %v6246 = vsub.s32 0, %v6229
  %v6247 = vsel %vm6245, %v6246, %v6229
  %v6248 = vshrl.u32 %v6247, 5
  %v6249 = vand.u32 %v6247, 31
  %v6250 = vsub.s32 0, %v6249
  %v6251 = vsel %vm6245, %v6250, %v6249
  %vm6252 = vcmp.lt.s32.totalorder %v6230, 0
  %v6253 = vsub.s32 0, %v6230
  %v6254 = vsel %vm6252, %v6253, %v6230
  %v6255 = vshrl.u32 %v6254, 5
  %v6256 = vand.u32 %v6254, 31
  %v6257 = vsub.s32 0, %v6256
  %v6258 = vsel %vm6252, %v6257, %v6256
  %vm6259 = vcmp.ne.s32.totalorder %v6237, 0
  %vm6260 = vcmp.ne.s32.totalorder %v6244, 0
  %vm6261 = vcmp.ne.s32.totalorder %v6251, 0
  %vm6262 = vcmp.ne.s32.totalorder %v6258, 0
  %vm6263 = vcmp.lt.s32.totalorder %v6237, 0
  %vm6264 = vcmp.lt.s32.totalorder %v6244, 0
  %vm6265 = vcmp.lt.s32.totalorder %v6251, 0
  %vm6266 = vcmp.lt.s32.totalorder %v6258, 0
  %vm6267 = vmand %vm6263, %vm6259
  %vm6268 = vmand %vm6264, %vm6260
  %vm6269 = vmand %vm6265, %vm6261
  %vm6270 = vmand %vm6266, %vm6262
  %v6271 = vadd.s32 %v6237, 32
  %v6272 = vadd.s32 %v6244, 32
  %v6273 = vadd.s32 %v6251, 32
  %v6274 = vadd.s32 %v6258, 32
  %v6275 = vsel %vm6267, %v6271, %v6237
  %v6276 = vsel %vm6268, %v6272, %v6244
  %v6277 = vsel %vm6269, %v6273, %v6251
  %v6278 = vsel %vm6270, %v6274, %v6258
  %vm6279 = vcmp.eq.s32.totalorder %v1743, %v6275
  %vm6280 = vcmp.eq.s32.totalorder %v1743, %v6276
  %vm6281 = vcmp.eq.s32.totalorder %v1743, %v6277
  %vm6282 = vcmp.eq.s32.totalorder %v1743, %v6278
  %vm6283 = vcmp.eq.s32.totalorder %v1744, %v6275
  %vm6284 = vcmp.eq.s32.totalorder %v1744, %v6276
  %vm6285 = vcmp.eq.s32.totalorder %v1744, %v6277
  %vm6286 = vcmp.eq.s32.totalorder %v1744, %v6278
  %vm6287 = vcmp.eq.s32.totalorder %v1745, %v6275
  %vm6288 = vcmp.eq.s32.totalorder %v1745, %v6276
  %vm6289 = vcmp.eq.s32.totalorder %v1745, %v6277
  %vm6290 = vcmp.eq.s32.totalorder %v1745, %v6278
  %vm6291 = vcmp.eq.s32.totalorder %v1746, %v6275
  %vm6292 = vcmp.eq.s32.totalorder %v1746, %v6276
  %vm6293 = vcmp.eq.s32.totalorder %v1746, %v6277
  %vm6294 = vcmp.eq.s32.totalorder %v1746, %v6278
  %v6295 = vsel %vm6279, 1, 0
  %v6296 = vsel %vm6280, 1, 0
  %v6297 = vsel %vm6281, 1, 0
  %v6298 = vsel %vm6282, 1, 0
  %v6299 = vsel %vm6283, 1, 0
  %v6300 = vsel %vm6284, 1, 0
  %v6301 = vsel %vm6285, 1, 0
  %v6302 = vsel %vm6286, 1, 0
  %v6303 = vsel %vm6287, 1, 0
  %v6304 = vsel %vm6288, 1, 0
  %v6305 = vsel %vm6289, 1, 0
  %v6306 = vsel %vm6290, 1, 0
  %v6307 = vsel %vm6291, 1, 0
  %v6308 = vsel %vm6292, 1, 0
  %v6309 = vsel %vm6293, 1, 0
  %v6310 = vsel %vm6294, 1, 0
  %v6311 = vcvt.s32.f32 %v6295
  %v6312 = vcvt.s32.f32 %v6296
  %v6313 = vcvt.s32.f32 %v6297
  %v6314 = vcvt.s32.f32 %v6298
  %v6315 = vcvt.s32.f32 %v6299
  %v6316 = vcvt.s32.f32 %v6300
  %v6317 = vcvt.s32.f32 %v6301
  %v6318 = vcvt.s32.f32 %v6302
  %v6319 = vcvt.s32.f32 %v6303
  %v6320 = vcvt.s32.f32 %v6304
  %v6321 = vcvt.s32.f32 %v6305
  %v6322 = vcvt.s32.f32 %v6306
  %v6323 = vcvt.s32.f32 %v6307
  %v6324 = vcvt.s32.f32 %v6308
  %v6325 = vcvt.s32.f32 %v6309
  %v6326 = vcvt.s32.f32 %v6310
  %vm6327 = vcmask 261120
  %v6329 = vsel %vm6327, %v6224, 0
  %v6331 = vand.u32 %v6312, 4294901760
  %6332 = vmatprep.subr.mxu0 %v6331
  %v6333 = vand.u32 %v6311, 4294901760
  %6334 = vmatpush1.msra.mxu0 %v6333
  %v6335 = vand.u32 %v6316, 4294901760
  %6336 = vmatprep.subr.mxu0 %v6335
  %v6337 = vand.u32 %v6315, 4294901760
  %6338 = vmatpush1.msra.mxu0 %v6337
  %v6339 = vand.u32 %v6320, 4294901760
  %6340 = vmatprep.subr.mxu0 %v6339
  %v6341 = vand.u32 %v6319, 4294901760
  %6342 = vmatpush1.msra.mxu0 %v6341
  %v6343 = vand.u32 %v6324, 4294901760
  %6344 = vmatprep.subr.mxu0 %v6343
  %v6345 = vand.u32 %v6323, 4294901760
  %6346 = vmatpush1.msra.mxu0 %v6345
  %6347 = vmatprep.subr.mxu0 0.0
  %6348 = vmatpush1.msra.mxu0 0.0
  %6349 = vmatprep.subr.mxu0 0.0
  %6350 = vmatpush1.msra.mxu0 0.0
  %6351 = vmatprep.subr.mxu0 0.0
  %6352 = vmatpush1.msra.mxu0 0.0
  %6353 = vmatprep.subr.mxu0 0.0
  %6354 = vmatpush1.msra.mxu0 0.0
  %6355 = vmatprep.subr.mxu0 0.0
  %6356 = vmatpush1.msra.mxu0 0.0
  %6357 = vmatprep.subr.mxu0 0.0
  %6358 = vmatpush1.msra.mxu0 0.0
  %6359 = vmatprep.subr.mxu0 0.0
  %6360 = vmatpush1.msra.mxu0 0.0
  %6361 = vmatprep.subr.mxu0 0.0
  %6362 = vmatpush1.msra.mxu0 0.0
  %6363 = vmatprep.subr.mxu0 0.0
  %6364 = vmatpush1.msra.mxu0 0.0
  %6365 = vmatprep.subr.mxu0 0.0
  %6366 = vmatpush1.msra.mxu0 0.0
  %6367 = vmatprep.subr.mxu0 0.0
  %6368 = vmatpush1.msra.mxu0 0.0
  %6369 = vmatprep.subr.mxu0 0.0
  %6370 = vmatpush1.msra.mxu0 0.0
  %6371 = vmatprep.subr.mxu0 0.0
  %6372 = vmatpush1.msra.mxu0 0.0
  %6373 = vmatprep.subr.mxu0 0.0
  %6374 = vmatpush1.msra.mxu0 0.0
  %6375 = vmatprep.subr.mxu0 0.0
  %6376 = vmatpush1.msra.mxu0 0.0
  %6377 = vmatprep.subr.mxu0 0.0
  %6378 = vmatpush1.msra.mxu0 0.0
  %6379 = vmatprep.subr.mxu0 0.0
  %6380 = vmatpush1.msra.mxu0 0.0
  %6381 = vmatprep.subr.mxu0 0.0
  %6382 = vmatpush1.msra.mxu0 0.0
  %6383 = vmatprep.subr.mxu0 0.0
  %6384 = vmatpush1.msra.mxu0 0.0
  %6385 = vmatprep.subr.mxu0 0.0
  %6386 = vmatpush1.msra.mxu0 0.0
  %6387 = vmatprep.subr.mxu0 0.0
  %6388 = vmatpush1.msra.mxu0 0.0
  %6389 = vmatprep.subr.mxu0 0.0
  %6390 = vmatpush1.msra.mxu0 0.0
  %6391 = vmatprep.subr.mxu0 0.0
  %6392 = vmatpush1.msra.mxu0 0.0
  %6393 = vmatprep.subr.mxu0 0.0
  %6394 = vmatpush1.msra.mxu0 0.0
  %6395 = vmatprep.subr.mxu0 0.0
  %6396 = vmatpush1.msra.mxu0 0.0
  %6397 = vmatprep.subr.mxu0 0.0
  %6398 = vmatpush1.msra.mxu0 0.0
  %6399 = vmatprep.subr.mxu0 0.0
  %6400 = vmatpush1.msra.mxu0 0.0
  %6401 = vmatprep.subr.mxu0 0.0
  %6402 = vmatpush1.msra.mxu0 0.0
  %6403 = vmatprep.mubr.f32.mxu0 0.0
  %v6404 = vand.u32 %v6329, 4294901760
  %v6405 = vsub.f32 %v6329, %v6404
  %v6406 = vand.u32 %v6405, 4294901760
  %v6407 = vsub.f32 %v6405, %v6406
  %v6408 = vand.u32 %v6407, 4294901760
  %6409 = vmatmul.mubr.f32.gmra.mrb[0].mxu0 %v6408
  %v6410 = vpop.f32.mrb[0].mxu0
  %v6411 = vadd.f32 0.0, %v6410
  %v6412 = vpop.f32.mrb[0].mxu0
  %v6413 = vadd.f32 0.0, %v6412
  %6414 = vdwg.mxu0
  %v6415 = vand.u32 %v6312, 4294901760
  %v6416 = vsub.f32 %v6312, %v6415
  %v6417 = vand.u32 %v6416, 4294901760
  %v6418 = vsub.f32 %v6416, %v6417
  %v6419 = vand.u32 %v6418, 4294901760
  %6420 = vmatprep.subr.mxu0 %v6419
  %v6421 = vand.u32 %v6311, 4294901760
  %v6422 = vsub.f32 %v6311, %v6421
  %v6423 = vand.u32 %v6422, 4294901760
  %v6424 = vsub.f32 %v6422, %v6423
  %v6425 = vand.u32 %v6424, 4294901760
  %6426 = vmatpush1.msra.mxu0 %v6425
  %v6427 = vand.u32 %v6316, 4294901760
  %v6428 = vsub.f32 %v6316, %v6427
  %v6429 = vand.u32 %v6428, 4294901760
  %v6430 = vsub.f32 %v6428, %v6429
  %v6431 = vand.u32 %v6430, 4294901760
  %6432 = vmatprep.subr.mxu0 %v6431
  %v6433 = vand.u32 %v6315, 4294901760
  %v6434 = vsub.f32 %v6315, %v6433
  %v6435 = vand.u32 %v6434, 4294901760
  %v6436 = vsub.f32 %v6434, %v6435
  %v6437 = vand.u32 %v6436, 4294901760
  %6438 = vmatpush1.msra.mxu0 %v6437
  %v6439 = vand.u32 %v6320, 4294901760
  %v6440 = vsub.f32 %v6320, %v6439
  %v6441 = vand.u32 %v6440, 4294901760
  %v6442 = vsub.f32 %v6440, %v6441
  %v6443 = vand.u32 %v6442, 4294901760
  %6444 = vmatprep.subr.mxu0 %v6443
  %v6445 = vand.u32 %v6319, 4294901760
  %v6446 = vsub.f32 %v6319, %v6445
  %v6447 = vand.u32 %v6446, 4294901760
  %v6448 = vsub.f32 %v6446, %v6447
  %v6449 = vand.u32 %v6448, 4294901760
  %6450 = vmatpush1.msra.mxu0 %v6449
  %v6451 = vand.u32 %v6324, 4294901760
  %v6452 = vsub.f32 %v6324, %v6451
  %v6453 = vand.u32 %v6452, 4294901760
  %v6454 = vsub.f32 %v6452, %v6453
  %v6455 = vand.u32 %v6454, 4294901760
  %6456 = vmatprep.subr.mxu0 %v6455
  %v6457 = vand.u32 %v6323, 4294901760
  %v6458 = vsub.f32 %v6323, %v6457
  %v6459 = vand.u32 %v6458, 4294901760
  %v6460 = vsub.f32 %v6458, %v6459
  %v6461 = vand.u32 %v6460, 4294901760
  %6462 = vmatpush1.msra.mxu0 %v6461
  %6463 = vmatprep.subr.mxu0 0.0
  %6464 = vmatpush1.msra.mxu0 0.0
  %6465 = vmatprep.subr.mxu0 0.0
  %6466 = vmatpush1.msra.mxu0 0.0
  %6467 = vmatprep.subr.mxu0 0.0
  %6468 = vmatpush1.msra.mxu0 0.0
  %6469 = vmatprep.subr.mxu0 0.0
  %6470 = vmatpush1.msra.mxu0 0.0
  %6471 = vmatprep.subr.mxu0 0.0
  %6472 = vmatpush1.msra.mxu0 0.0
  %6473 = vmatprep.subr.mxu0 0.0
  %6474 = vmatpush1.msra.mxu0 0.0
  %6475 = vmatprep.subr.mxu0 0.0
  %6476 = vmatpush1.msra.mxu0 0.0
  %6477 = vmatprep.subr.mxu0 0.0
  %6478 = vmatpush1.msra.mxu0 0.0
  %6479 = vmatprep.subr.mxu0 0.0
  %6480 = vmatpush1.msra.mxu0 0.0
  %6481 = vmatprep.subr.mxu0 0.0
  %6482 = vmatpush1.msra.mxu0 0.0
  %6483 = vmatprep.subr.mxu0 0.0
  %6484 = vmatpush1.msra.mxu0 0.0
  %6485 = vmatprep.subr.mxu0 0.0
  %6486 = vmatpush1.msra.mxu0 0.0
  %6487 = vmatprep.subr.mxu0 0.0
  %6488 = vmatpush1.msra.mxu0 0.0
  %6489 = vmatprep.subr.mxu0 0.0
  %6490 = vmatpush1.msra.mxu0 0.0
  %6491 = vmatprep.subr.mxu0 0.0
  %6492 = vmatpush1.msra.mxu0 0.0
  %6493 = vmatprep.subr.mxu0 0.0
  %6494 = vmatpush1.msra.mxu0 0.0
  %6495 = vmatprep.subr.mxu0 0.0
  %6496 = vmatpush1.msra.mxu0 0.0
  %6497 = vmatprep.subr.mxu0 0.0
  %6498 = vmatpush1.msra.mxu0 0.0
  %6499 = vmatprep.subr.mxu0 0.0
  %6500 = vmatpush1.msra.mxu0 0.0
  %6501 = vmatprep.subr.mxu0 0.0
  %6502 = vmatpush1.msra.mxu0 0.0
  %6503 = vmatprep.subr.mxu0 0.0
  %6504 = vmatpush1.msra.mxu0 0.0
  %6505 = vmatprep.subr.mxu0 0.0
  %6506 = vmatpush1.msra.mxu0 0.0
  %6507 = vmatprep.subr.mxu0 0.0
  %6508 = vmatpush1.msra.mxu0 0.0
  %6509 = vmatprep.subr.mxu0 0.0
  %6510 = vmatpush1.msra.mxu0 0.0
  %6511 = vmatprep.subr.mxu0 0.0
  %6512 = vmatpush1.msra.mxu0 0.0
  %6513 = vmatprep.subr.mxu0 0.0
  %6514 = vmatpush1.msra.mxu0 0.0
  %6515 = vmatprep.subr.mxu0 0.0
  %6516 = vmatpush1.msra.mxu0 0.0
  %6517 = vmatprep.subr.mxu0 0.0
  %6518 = vmatpush1.msra.mxu0 0.0
  %6519 = vmatprep.mubr.f32.mxu0 0.0
  %v6520 = vand.u32 %v6329, 4294901760
  %6521 = vmatmul.mubr.f32.gmra.mrb[0].mxu0 %v6520
  %v6522 = vpop.f32.mrb[0].mxu0
  %v6523 = vadd.f32 %v6411, %v6522
  %v6524 = vpop.f32.mrb[0].mxu0
  %v6525 = vadd.f32 %v6413, %v6524
  %6526 = vdwg.mxu0
  %v6527 = vand.u32 %v6312, 4294901760
  %v6528 = vsub.f32 %v6312, %v6527
  %6529 = vmatprep.subr.mxu0 %v6528
  %v6530 = vand.u32 %v6311, 4294901760
  %v6531 = vsub.f32 %v6311, %v6530
  %6532 = vmatpush1.msra.mxu0 %v6531
  %v6533 = vand.u32 %v6316, 4294901760
  %v6534 = vsub.f32 %v6316, %v6533
  %6535 = vmatprep.subr.mxu0 %v6534
  %v6536 = vand.u32 %v6315, 4294901760
  %v6537 = vsub.f32 %v6315, %v6536
  %6538 = vmatpush1.msra.mxu0 %v6537
  %v6539 = vand.u32 %v6320, 4294901760
  %v6540 = vsub.f32 %v6320, %v6539
  %6541 = vmatprep.subr.mxu0 %v6540
  %v6542 = vand.u32 %v6319, 4294901760
  %v6543 = vsub.f32 %v6319, %v6542
  %6544 = vmatpush1.msra.mxu0 %v6543
  %v6545 = vand.u32 %v6324, 4294901760
  %v6546 = vsub.f32 %v6324, %v6545
  %6547 = vmatprep.subr.mxu0 %v6546
  %v6548 = vand.u32 %v6323, 4294901760
  %v6549 = vsub.f32 %v6323, %v6548
  %6550 = vmatpush1.msra.mxu0 %v6549
  %6551 = vmatprep.subr.mxu0 0.0
  %6552 = vmatpush1.msra.mxu0 0.0
  %6553 = vmatprep.subr.mxu0 0.0
  %6554 = vmatpush1.msra.mxu0 0.0
  %6555 = vmatprep.subr.mxu0 0.0
  %6556 = vmatpush1.msra.mxu0 0.0
  %6557 = vmatprep.subr.mxu0 0.0
  %6558 = vmatpush1.msra.mxu0 0.0
  %6559 = vmatprep.subr.mxu0 0.0
  %6560 = vmatpush1.msra.mxu0 0.0
  %6561 = vmatprep.subr.mxu0 0.0
  %6562 = vmatpush1.msra.mxu0 0.0
  %6563 = vmatprep.subr.mxu0 0.0
  %6564 = vmatpush1.msra.mxu0 0.0
  %6565 = vmatprep.subr.mxu0 0.0
  %6566 = vmatpush1.msra.mxu0 0.0
  %6567 = vmatprep.subr.mxu0 0.0
  %6568 = vmatpush1.msra.mxu0 0.0
  %6569 = vmatprep.subr.mxu0 0.0
  %6570 = vmatpush1.msra.mxu0 0.0
  %6571 = vmatprep.subr.mxu0 0.0
  %6572 = vmatpush1.msra.mxu0 0.0
  %6573 = vmatprep.subr.mxu0 0.0
  %6574 = vmatpush1.msra.mxu0 0.0
  %6575 = vmatprep.subr.mxu0 0.0
  %6576 = vmatpush1.msra.mxu0 0.0
  %6577 = vmatprep.subr.mxu0 0.0
  %6578 = vmatpush1.msra.mxu0 0.0
  %6579 = vmatprep.subr.mxu0 0.0
  %6580 = vmatpush1.msra.mxu0 0.0
  %6581 = vmatprep.subr.mxu0 0.0
  %6582 = vmatpush1.msra.mxu0 0.0
  %6583 = vmatprep.subr.mxu0 0.0
  %6584 = vmatpush1.msra.mxu0 0.0
  %6585 = vmatprep.subr.mxu0 0.0
  %6586 = vmatpush1.msra.mxu0 0.0
  %6587 = vmatprep.subr.mxu0 0.0
  %6588 = vmatpush1.msra.mxu0 0.0
  %6589 = vmatprep.subr.mxu0 0.0
  %6590 = vmatpush1.msra.mxu0 0.0
  %6591 = vmatprep.subr.mxu0 0.0
  %6592 = vmatpush1.msra.mxu0 0.0
  %6593 = vmatprep.subr.mxu0 0.0
  %6594 = vmatpush1.msra.mxu0 0.0
  %6595 = vmatprep.subr.mxu0 0.0
  %6596 = vmatpush1.msra.mxu0 0.0
  %6597 = vmatprep.subr.mxu0 0.0
  %6598 = vmatpush1.msra.mxu0 0.0
  %6599 = vmatprep.subr.mxu0 0.0
  %6600 = vmatpush1.msra.mxu0 0.0
  %6601 = vmatprep.subr.mxu0 0.0
  %6602 = vmatpush1.msra.mxu0 0.0
  %6603 = vmatprep.subr.mxu0 0.0
  %6604 = vmatpush1.msra.mxu0 0.0
  %6605 = vmatprep.subr.mxu0 0.0
  %6606 = vmatpush1.msra.mxu0 0.0
  %6607 = vmatprep.mubr.f32.mxu0 0.0
  %v6608 = vand.u32 %v6329, 4294901760
  %v6609 = vsub.f32 %v6329, %v6608
  %6610 = vmatmul.mubr.f32.gmra.mrb[0].mxu0 %v6609
  %v6611 = vpop.f32.mrb[0].mxu0
  %v6612 = vadd.f32 %v6523, %v6611
  %v6613 = vpop.f32.mrb[0].mxu0
  %v6614 = vadd.f32 %v6525, %v6613
  %6615 = vdwg.mxu0
  %v6616 = vand.u32 %v6312, 4294901760
  %6617 = vmatprep.subr.mxu0 %v6616
  %v6618 = vand.u32 %v6311, 4294901760
  %6619 = vmatpush1.msra.mxu0 %v6618
  %v6620 = vand.u32 %v6316, 4294901760
  %6621 = vmatprep.subr.mxu0 %v6620
  %v6622 = vand.u32 %v6315, 4294901760
  %6623 = vmatpush1.msra.mxu0 %v6622
  %v6624 = vand.u32 %v6320, 4294901760
  %6625 = vmatprep.subr.mxu0 %v6624
  %v6626 = vand.u32 %v6319, 4294901760
  %6627 = vmatpush1.msra.mxu0 %v6626
  %v6628 = vand.u32 %v6324, 4294901760
  %6629 = vmatprep.subr.mxu0 %v6628
  %v6630 = vand.u32 %v6323, 4294901760
  %6631 = vmatpush1.msra.mxu0 %v6630
  %6632 = vmatprep.subr.mxu0 0.0
  %6633 = vmatpush1.msra.mxu0 0.0
  %6634 = vmatprep.subr.mxu0 0.0
  %6635 = vmatpush1.msra.mxu0 0.0
  %6636 = vmatprep.subr.mxu0 0.0
  %6637 = vmatpush1.msra.mxu0 0.0
  %6638 = vmatprep.subr.mxu0 0.0
  %6639 = vmatpush1.msra.mxu0 0.0
  %6640 = vmatprep.subr.mxu0 0.0
  %6641 = vmatpush1.msra.mxu0 0.0
  %6642 = vmatprep.subr.mxu0 0.0
  %6643 = vmatpush1.msra.mxu0 0.0
  %6644 = vmatprep.subr.mxu0 0.0
  %6645 = vmatpush1.msra.mxu0 0.0
  %6646 = vmatprep.subr.mxu0 0.0
  %6647 = vmatpush1.msra.mxu0 0.0
  %6648 = vmatprep.subr.mxu0 0.0
  %6649 = vmatpush1.msra.mxu0 0.0
  %6650 = vmatprep.subr.mxu0 0.0
  %6651 = vmatpush1.msra.mxu0 0.0
  %6652 = vmatprep.subr.mxu0 0.0
  %6653 = vmatpush1.msra.mxu0 0.0
  %6654 = vmatprep.subr.mxu0 0.0
  %6655 = vmatpush1.msra.mxu0 0.0
  %6656 = vmatprep.subr.mxu0 0.0
  %6657 = vmatpush1.msra.mxu0 0.0
  %6658 = vmatprep.subr.mxu0 0.0
  %6659 = vmatpush1.msra.mxu0 0.0
  %6660 = vmatprep.subr.mxu0 0.0
  %6661 = vmatpush1.msra.mxu0 0.0
  %6662 = vmatprep.subr.mxu0 0.0
  %6663 = vmatpush1.msra.mxu0 0.0
  %6664 = vmatprep.subr.mxu0 0.0
  %6665 = vmatpush1.msra.mxu0 0.0
  %6666 = vmatprep.subr.mxu0 0.0
  %6667 = vmatpush1.msra.mxu0 0.0
  %6668 = vmatprep.subr.mxu0 0.0
  %6669 = vmatpush1.msra.mxu0 0.0
  %6670 = vmatprep.subr.mxu0 0.0
  %6671 = vmatpush1.msra.mxu0 0.0
  %6672 = vmatprep.subr.mxu0 0.0
  %6673 = vmatpush1.msra.mxu0 0.0
  %6674 = vmatprep.subr.mxu0 0.0
  %6675 = vmatpush1.msra.mxu0 0.0
  %6676 = vmatprep.subr.mxu0 0.0
  %6677 = vmatpush1.msra.mxu0 0.0
  %6678 = vmatprep.subr.mxu0 0.0
  %6679 = vmatpush1.msra.mxu0 0.0
  %6680 = vmatprep.subr.mxu0 0.0
  %6681 = vmatpush1.msra.mxu0 0.0
  %6682 = vmatprep.subr.mxu0 0.0
  %6683 = vmatpush1.msra.mxu0 0.0
  %6684 = vmatprep.subr.mxu0 0.0
  %6685 = vmatpush1.msra.mxu0 0.0
  %6686 = vmatprep.subr.mxu0 0.0
  %6687 = vmatpush1.msra.mxu0 0.0
  %6688 = vmatprep.mubr.f32.mxu0 0.0
  %v6689 = vand.u32 %v6329, 4294901760
  %v6690 = vsub.f32 %v6329, %v6689
  %v6691 = vand.u32 %v6690, 4294901760
  %6692 = vmatmul.mubr.f32.gmra.mrb[0].mxu0 %v6691
  %v6693 = vpop.f32.mrb[0].mxu0
  %v6694 = vadd.f32 %v6612, %v6693
  %v6695 = vpop.f32.mrb[0].mxu0
  %v6696 = vadd.f32 %v6614, %v6695
  %6697 = vdwg.mxu0
  %v6698 = vand.u32 %v6312, 4294901760
  %v6699 = vsub.f32 %v6312, %v6698
  %v6700 = vand.u32 %v6699, 4294901760
  %6701 = vmatprep.subr.mxu0 %v6700
  %v6702 = vand.u32 %v6311, 4294901760
  %v6703 = vsub.f32 %v6311, %v6702
  %v6704 = vand.u32 %v6703, 4294901760
  %6705 = vmatpush1.msra.mxu0 %v6704
  %v6706 = vand.u32 %v6316, 4294901760
  %v6707 = vsub.f32 %v6316, %v6706
  %v6708 = vand.u32 %v6707, 4294901760
  %6709 = vmatprep.subr.mxu0 %v6708
  %v6710 = vand.u32 %v6315, 4294901760
  %v6711 = vsub.f32 %v6315, %v6710
  %v6712 = vand.u32 %v6711, 4294901760
  %6713 = vmatpush1.msra.mxu0 %v6712
  %v6714 = vand.u32 %v6320, 4294901760
  %v6715 = vsub.f32 %v6320, %v6714
  %v6716 = vand.u32 %v6715, 4294901760
  %6717 = vmatprep.subr.mxu0 %v6716
  %v6718 = vand.u32 %v6319, 4294901760
  %v6719 = vsub.f32 %v6319, %v6718
  %v6720 = vand.u32 %v6719, 4294901760
  %6721 = vmatpush1.msra.mxu0 %v6720
  %v6722 = vand.u32 %v6324, 4294901760
  %v6723 = vsub.f32 %v6324, %v6722
  %v6724 = vand.u32 %v6723, 4294901760
  %6725 = vmatprep.subr.mxu0 %v6724
  %v6726 = vand.u32 %v6323, 4294901760
  %v6727 = vsub.f32 %v6323, %v6726
  %v6728 = vand.u32 %v6727, 4294901760
  %6729 = vmatpush1.msra.mxu0 %v6728
  %6730 = vmatprep.subr.mxu0 0.0
  %6731 = vmatpush1.msra.mxu0 0.0
  %6732 = vmatprep.subr.mxu0 0.0
  %6733 = vmatpush1.msra.mxu0 0.0
  %6734 = vmatprep.subr.mxu0 0.0
  %6735 = vmatpush1.msra.mxu0 0.0
  %6736 = vmatprep.subr.mxu0 0.0
  %6737 = vmatpush1.msra.mxu0 0.0
  %6738 = vmatprep.subr.mxu0 0.0
  %6739 = vmatpush1.msra.mxu0 0.0
  %6740 = vmatprep.subr.mxu0 0.0
  %6741 = vmatpush1.msra.mxu0 0.0
  %6742 = vmatprep.subr.mxu0 0.0
  %6743 = vmatpush1.msra.mxu0 0.0
  %6744 = vmatprep.subr.mxu0 0.0
  %6745 = vmatpush1.msra.mxu0 0.0
  %6746 = vmatprep.subr.mxu0 0.0
  %6747 = vmatpush1.msra.mxu0 0.0
  %6748 = vmatprep.subr.mxu0 0.0
  %6749 = vmatpush1.msra.mxu0 0.0
  %6750 = vmatprep.subr.mxu0 0.0
  %6751 = vmatpush1.msra.mxu0 0.0
  %6752 = vmatprep.subr.mxu0 0.0
  %6753 = vmatpush1.msra.mxu0 0.0
  %6754 = vmatprep.subr.mxu0 0.0
  %6755 = vmatpush1.msra.mxu0 0.0
  %6756 = vmatprep.subr.mxu0 0.0
  %6757 = vmatpush1.msra.mxu0 0.0
  %6758 = vmatprep.subr.mxu0 0.0
  %6759 = vmatpush1.msra.mxu0 0.0
  %6760 = vmatprep.subr.mxu0 0.0
  %6761 = vmatpush1.msra.mxu0 0.0
  %6762 = vmatprep.subr.mxu0 0.0
  %6763 = vmatpush1.msra.mxu0 0.0
  %6764 = vmatprep.subr.mxu0 0.0
  %6765 = vmatpush1.msra.mxu0 0.0
  %6766 = vmatprep.subr.mxu0 0.0
  %6767 = vmatpush1.msra.mxu0 0.0
  %6768 = vmatprep.subr.mxu0 0.0
  %6769 = vmatpush1.msra.mxu0 0.0
  %6770 = vmatprep.subr.mxu0 0.0
  %6771 = vmatpush1.msra.mxu0 0.0
  %6772 = vmatprep.subr.mxu0 0.0
  %6773 = vmatpush1.msra.mxu0 0.0
  %6774 = vmatprep.subr.mxu0 0.0
  %6775 = vmatpush1.msra.mxu0 0.0
  %6776 = vmatprep.subr.mxu0 0.0
  %6777 = vmatpush1.msra.mxu0 0.0
  %6778 = vmatprep.subr.mxu0 0.0
  %6779 = vmatpush1.msra.mxu0 0.0
  %6780 = vmatprep.subr.mxu0 0.0
  %6781 = vmatpush1.msra.mxu0 0.0
  %6782 = vmatprep.subr.mxu0 0.0
  %6783 = vmatpush1.msra.mxu0 0.0
  %6784 = vmatprep.subr.mxu0 0.0
  %6785 = vmatpush1.msra.mxu0 0.0
  %6786 = vmatprep.mubr.f32.mxu0 0.0
  %v6787 = vand.u32 %v6329, 4294901760
  %6788 = vmatmul.mubr.f32.gmra.mrb[0].mxu0 %v6787
  %v6789 = vpop.f32.mrb[0].mxu0
  %v6790 = vadd.f32 %v6694, %v6789
  %v6791 = vpop.f32.mrb[0].mxu0
  %v6792 = vadd.f32 %v6696, %v6791
  %6793 = vdwg.mxu0
  %v6794 = vand.u32 %v6312, 4294901760
  %6795 = vmatprep.subr.mxu0 %v6794
  %v6796 = vand.u32 %v6311, 4294901760
  %6797 = vmatpush1.msra.mxu0 %v6796
  %v6798 = vand.u32 %v6316, 4294901760
  %6799 = vmatprep.subr.mxu0 %v6798
  %v6800 = vand.u32 %v6315, 4294901760
  %6801 = vmatpush1.msra.mxu0 %v6800
  %v6802 = vand.u32 %v6320, 4294901760
  %6803 = vmatprep.subr.mxu0 %v6802
  %v6804 = vand.u32 %v6319, 4294901760
  %6805 = vmatpush1.msra.mxu0 %v6804
  %v6806 = vand.u32 %v6324, 4294901760
  %6807 = vmatprep.subr.mxu0 %v6806
  %v6808 = vand.u32 %v6323, 4294901760
  %6809 = vmatpush1.msra.mxu0 %v6808
  %6810 = vmatprep.subr.mxu0 0.0
  %6811 = vmatpush1.msra.mxu0 0.0
  %6812 = vmatprep.subr.mxu0 0.0
  %6813 = vmatpush1.msra.mxu0 0.0
  %6814 = vmatprep.subr.mxu0 0.0
  %6815 = vmatpush1.msra.mxu0 0.0
  %6816 = vmatprep.subr.mxu0 0.0
  %6817 = vmatpush1.msra.mxu0 0.0
  %6818 = vmatprep.subr.mxu0 0.0
  %6819 = vmatpush1.msra.mxu0 0.0
  %6820 = vmatprep.subr.mxu0 0.0
  %6821 = vmatpush1.msra.mxu0 0.0
  %6822 = vmatprep.subr.mxu0 0.0
  %6823 = vmatpush1.msra.mxu0 0.0
  %6824 = vmatprep.subr.mxu0 0.0
  %6825 = vmatpush1.msra.mxu0 0.0
  %6826 = vmatprep.subr.mxu0 0.0
  %6827 = vmatpush1.msra.mxu0 0.0
  %6828 = vmatprep.subr.mxu0 0.0
  %6829 = vmatpush1.msra.mxu0 0.0
  %6830 = vmatprep.subr.mxu0 0.0
  %6831 = vmatpush1.msra.mxu0 0.0
  %6832 = vmatprep.subr.mxu0 0.0
  %6833 = vmatpush1.msra.mxu0 0.0
  %6834 = vmatprep.subr.mxu0 0.0
  %6835 = vmatpush1.msra.mxu0 0.0
  %6836 = vmatprep.subr.mxu0 0.0
  %6837 = vmatpush1.msra.mxu0 0.0
  %6838 = vmatprep.subr.mxu0 0.0
  %6839 = vmatpush1.msra.mxu0 0.0
  %6840 = vmatprep.subr.mxu0 0.0
  %6841 = vmatpush1.msra.mxu0 0.0
  %6842 = vmatprep.subr.mxu0 0.0
  %6843 = vmatpush1.msra.mxu0 0.0
  %6844 = vmatprep.subr.mxu0 0.0
  %6845 = vmatpush1.msra.mxu0 0.0
  %6846 = vmatprep.subr.mxu0 0.0
  %6847 = vmatpush1.msra.mxu0 0.0
  %6848 = vmatprep.subr.mxu0 0.0
  %6849 = vmatpush1.msra.mxu0 0.0
  %6850 = vmatprep.subr.mxu0 0.0
  %6851 = vmatpush1.msra.mxu0 0.0
  %6852 = vmatprep.subr.mxu0 0.0
  %6853 = vmatpush1.msra.mxu0 0.0
  %6854 = vmatprep.subr.mxu0 0.0
  %6855 = vmatpush1.msra.mxu0 0.0
  %6856 = vmatprep.subr.mxu0 0.0
  %6857 = vmatpush1.msra.mxu0 0.0
  %6858 = vmatprep.subr.mxu0 0.0
  %6859 = vmatpush1.msra.mxu0 0.0
  %6860 = vmatprep.subr.mxu0 0.0
  %6861 = vmatpush1.msra.mxu0 0.0
  %6862 = vmatprep.subr.mxu0 0.0
  %6863 = vmatpush1.msra.mxu0 0.0
  %6864 = vmatprep.subr.mxu0 0.0
  %6865 = vmatpush1.msra.mxu0 0.0
  %6866 = vmatprep.mubr.f32.mxu0 0.0
  %v6867 = vand.u32 %v6329, 4294901760
  %6868 = vmatmul.mubr.f32.gmra.mrb[0].mxu0 %v6867
  %v6869 = vpop.f32.mrb[0].mxu0
  %v6870 = vadd.f32 %v6790, %v6869
  %v6871 = vpop.f32.mrb[0].mxu0
  %v6872 = vadd.f32 %v6792, %v6871
  %6873 = vdwg.mxu0
  %v6874 = vand.u32 %v6314, 4294901760
  %6875 = vmatprep.subr.mxu0 %v6874
  %v6876 = vand.u32 %v6313, 4294901760
  %6877 = vmatpush1.msra.mxu0 %v6876
  %v6878 = vand.u32 %v6318, 4294901760
  %6879 = vmatprep.subr.mxu0 %v6878
  %v6880 = vand.u32 %v6317, 4294901760
  %6881 = vmatpush1.msra.mxu0 %v6880
  %v6882 = vand.u32 %v6322, 4294901760
  %6883 = vmatprep.subr.mxu0 %v6882
  %v6884 = vand.u32 %v6321, 4294901760
  %6885 = vmatpush1.msra.mxu0 %v6884
  %v6886 = vand.u32 %v6326, 4294901760
  %6887 = vmatprep.subr.mxu0 %v6886
  %v6888 = vand.u32 %v6325, 4294901760
  %6889 = vmatpush1.msra.mxu0 %v6888
  %6890 = vmatprep.subr.mxu0 0.0
  %6891 = vmatpush1.msra.mxu0 0.0
  %6892 = vmatprep.subr.mxu0 0.0
  %6893 = vmatpush1.msra.mxu0 0.0
  %6894 = vmatprep.subr.mxu0 0.0
  %6895 = vmatpush1.msra.mxu0 0.0
  %6896 = vmatprep.subr.mxu0 0.0
  %6897 = vmatpush1.msra.mxu0 0.0
  %6898 = vmatprep.subr.mxu0 0.0
  %6899 = vmatpush1.msra.mxu0 0.0
  %6900 = vmatprep.subr.mxu0 0.0
  %6901 = vmatpush1.msra.mxu0 0.0
  %6902 = vmatprep.subr.mxu0 0.0
  %6903 = vmatpush1.msra.mxu0 0.0
  %6904 = vmatprep.subr.mxu0 0.0
  %6905 = vmatpush1.msra.mxu0 0.0
  %6906 = vmatprep.subr.mxu0 0.0
  %6907 = vmatpush1.msra.mxu0 0.0
  %6908 = vmatprep.subr.mxu0 0.0
  %6909 = vmatpush1.msra.mxu0 0.0
  %6910 = vmatprep.subr.mxu0 0.0
  %6911 = vmatpush1.msra.mxu0 0.0
  %6912 = vmatprep.subr.mxu0 0.0
  %6913 = vmatpush1.msra.mxu0 0.0
  %6914 = vmatprep.subr.mxu0 0.0
  %6915 = vmatpush1.msra.mxu0 0.0
  %6916 = vmatprep.subr.mxu0 0.0
  %6917 = vmatpush1.msra.mxu0 0.0
  %6918 = vmatprep.subr.mxu0 0.0
  %6919 = vmatpush1.msra.mxu0 0.0
  %6920 = vmatprep.subr.mxu0 0.0
  %6921 = vmatpush1.msra.mxu0 0.0
  %6922 = vmatprep.subr.mxu0 0.0
  %6923 = vmatpush1.msra.mxu0 0.0
  %6924 = vmatprep.subr.mxu0 0.0
  %6925 = vmatpush1.msra.mxu0 0.0
  %6926 = vmatprep.subr.mxu0 0.0
  %6927 = vmatpush1.msra.mxu0 0.0
  %6928 = vmatprep.subr.mxu0 0.0
  %6929 = vmatpush1.msra.mxu0 0.0
  %6930 = vmatprep.subr.mxu0 0.0
  %6931 = vmatpush1.msra.mxu0 0.0
  %6932 = vmatprep.subr.mxu0 0.0
  %6933 = vmatpush1.msra.mxu0 0.0
  %6934 = vmatprep.subr.mxu0 0.0
  %6935 = vmatpush1.msra.mxu0 0.0
  %6936 = vmatprep.subr.mxu0 0.0
  %6937 = vmatpush1.msra.mxu0 0.0
  %6938 = vmatprep.subr.mxu0 0.0
  %6939 = vmatpush1.msra.mxu0 0.0
  %6940 = vmatprep.subr.mxu0 0.0
  %6941 = vmatpush1.msra.mxu0 0.0
  %6942 = vmatprep.subr.mxu0 0.0
  %6943 = vmatpush1.msra.mxu0 0.0
  %6944 = vmatprep.subr.mxu0 0.0
  %6945 = vmatpush1.msra.mxu0 0.0
  %6946 = vmatprep.mubr.f32.mxu0 0.0
  %v6947 = vand.u32 %v6329, 4294901760
  %v6948 = vsub.f32 %v6329, %v6947
  %v6949 = vand.u32 %v6948, 4294901760
  %v6950 = vsub.f32 %v6948, %v6949
  %v6951 = vand.u32 %v6950, 4294901760
  %6952 = vmatmul.mubr.f32.gmra.mrb[0].mxu0 %v6951
  %v6953 = vpop.f32.mrb[0].mxu0
  %v6954 = vadd.f32 0.0, %v6953
  %v6955 = vpop.f32.mrb[0].mxu0
  %v6956 = vadd.f32 0.0, %v6955
  %6957 = vdwg.mxu0
  %v6958 = vand.u32 %v6314, 4294901760
  %v6959 = vsub.f32 %v6314, %v6958
  %v6960 = vand.u32 %v6959, 4294901760
  %v6961 = vsub.f32 %v6959, %v6960
  %v6962 = vand.u32 %v6961, 4294901760
  %6963 = vmatprep.subr.mxu0 %v6962
  %v6964 = vand.u32 %v6313, 4294901760
  %v6965 = vsub.f32 %v6313, %v6964
  %v6966 = vand.u32 %v6965, 4294901760
  %v6967 = vsub.f32 %v6965, %v6966
  %v6968 = vand.u32 %v6967, 4294901760
  %6969 = vmatpush1.msra.mxu0 %v6968
  %v6970 = vand.u32 %v6318, 4294901760
  %v6971 = vsub.f32 %v6318, %v6970
  %v6972 = vand.u32 %v6971, 4294901760
  %v6973 = vsub.f32 %v6971, %v6972
  %v6974 = vand.u32 %v6973, 4294901760
  %6975 = vmatprep.subr.mxu0 %v6974
  %v6976 = vand.u32 %v6317, 4294901760
  %v6977 = vsub.f32 %v6317, %v6976
  %v6978 = vand.u32 %v6977, 4294901760
  %v6979 = vsub.f32 %v6977, %v6978
  %v6980 = vand.u32 %v6979, 4294901760
  %6981 = vmatpush1.msra.mxu0 %v6980
  %v6982 = vand.u32 %v6322, 4294901760
  %v6983 = vsub.f32 %v6322, %v6982
  %v6984 = vand.u32 %v6983, 4294901760
  %v6985 = vsub.f32 %v6983, %v6984
  %v6986 = vand.u32 %v6985, 4294901760
  %6987 = vmatprep.subr.mxu0 %v6986
  %v6988 = vand.u32 %v6321, 4294901760
  %v6989 = vsub.f32 %v6321, %v6988
  %v6990 = vand.u32 %v6989, 4294901760
  %v6991 = vsub.f32 %v6989, %v6990
  %v6992 = vand.u32 %v6991, 4294901760
  %6993 = vmatpush1.msra.mxu0 %v6992
  %v6994 = vand.u32 %v6326, 4294901760
  %v6995 = vsub.f32 %v6326, %v6994
  %v6996 = vand.u32 %v6995, 4294901760
  %v6997 = vsub.f32 %v6995, %v6996
  %v6998 = vand.u32 %v6997, 4294901760
  %6999 = vmatprep.subr.mxu0 %v6998
  %v7000 = vand.u32 %v6325, 4294901760
  %v7001 = vsub.f32 %v6325, %v7000
  %v7002 = vand.u32 %v7001, 4294901760
  %v7003 = vsub.f32 %v7001, %v7002
  %v7004 = vand.u32 %v7003, 4294901760
  %7005 = vmatpush1.msra.mxu0 %v7004
  %7006 = vmatprep.subr.mxu0 0.0
  %7007 = vmatpush1.msra.mxu0 0.0
  %7008 = vmatprep.subr.mxu0 0.0
  %7009 = vmatpush1.msra.mxu0 0.0
  %7010 = vmatprep.subr.mxu0 0.0
  %7011 = vmatpush1.msra.mxu0 0.0
  %7012 = vmatprep.subr.mxu0 0.0
  %7013 = vmatpush1.msra.mxu0 0.0
  %7014 = vmatprep.subr.mxu0 0.0
  %7015 = vmatpush1.msra.mxu0 0.0
  %7016 = vmatprep.subr.mxu0 0.0
  %7017 = vmatpush1.msra.mxu0 0.0
  %7018 = vmatprep.subr.mxu0 0.0
  %7019 = vmatpush1.msra.mxu0 0.0
  %7020 = vmatprep.subr.mxu0 0.0
  %7021 = vmatpush1.msra.mxu0 0.0
  %7022 = vmatprep.subr.mxu0 0.0
  %7023 = vmatpush1.msra.mxu0 0.0
  %7024 = vmatprep.subr.mxu0 0.0
  %7025 = vmatpush1.msra.mxu0 0.0
  %7026 = vmatprep.subr.mxu0 0.0
  %7027 = vmatpush1.msra.mxu0 0.0
  %7028 = vmatprep.subr.mxu0 0.0
  %7029 = vmatpush1.msra.mxu0 0.0
  %7030 = vmatprep.subr.mxu0 0.0
  %7031 = vmatpush1.msra.mxu0 0.0
  %7032 = vmatprep.subr.mxu0 0.0
  %7033 = vmatpush1.msra.mxu0 0.0
  %7034 = vmatprep.subr.mxu0 0.0
  %7035 = vmatpush1.msra.mxu0 0.0
  %7036 = vmatprep.subr.mxu0 0.0
  %7037 = vmatpush1.msra.mxu0 0.0
  %7038 = vmatprep.subr.mxu0 0.0
  %7039 = vmatpush1.msra.mxu0 0.0
  %7040 = vmatprep.subr.mxu0 0.0
  %7041 = vmatpush1.msra.mxu0 0.0
  %7042 = vmatprep.subr.mxu0 0.0
  %7043 = vmatpush1.msra.mxu0 0.0
  %7044 = vmatprep.subr.mxu0 0.0
  %7045 = vmatpush1.msra.mxu0 0.0
  %7046 = vmatprep.subr.mxu0 0.0
  %7047 = vmatpush1.msra.mxu0 0.0
  %7048 = vmatprep.subr.mxu0 0.0
  %7049 = vmatpush1.msra.mxu0 0.0
  %7050 = vmatprep.subr.mxu0 0.0
  %7051 = vmatpush1.msra.mxu0 0.0
  %7052 = vmatprep.subr.mxu0 0.0
  %7053 = vmatpush1.msra.mxu0 0.0
  %7054 = vmatprep.subr.mxu0 0.0
  %7055 = vmatpush1.msra.mxu0 0.0
  %7056 = vmatprep.subr.mxu0 0.0
  %7057 = vmatpush1.msra.mxu0 0.0
  %7058 = vmatprep.subr.mxu0 0.0
  %7059 = vmatpush1.msra.mxu0 0.0
  %7060 = vmatprep.subr.mxu0 0.0
  %7061 = vmatpush1.msra.mxu0 0.0
  %7062 = vmatprep.mubr.f32.mxu0 0.0
  %v7063 = vand.u32 %v6329, 4294901760
  %7064 = vmatmul.mubr.f32.gmra.mrb[0].mxu0 %v7063
  %v7065 = vpop.f32.mrb[0].mxu0
  %v7066 = vadd.f32 %v6954, %v7065
  %v7067 = vpop.f32.mrb[0].mxu0
  %v7068 = vadd.f32 %v6956, %v7067
  %7069 = vdwg.mxu0
  %v7070 = vand.u32 %v6314, 4294901760
  %v7071 = vsub.f32 %v6314, %v7070
  %7072 = vmatprep.subr.mxu0 %v7071
  %v7073 = vand.u32 %v6313, 4294901760
  %v7074 = vsub.f32 %v6313, %v7073
  %7075 = vmatpush1.msra.mxu0 %v7074
  %v7076 = vand.u32 %v6318, 4294901760
  %v7077 = vsub.f32 %v6318, %v7076
  %7078 = vmatprep.subr.mxu0 %v7077
  %v7079 = vand.u32 %v6317, 4294901760
  %v7080 = vsub.f32 %v6317, %v7079
  %7081 = vmatpush1.msra.mxu0 %v7080
  %v7082 = vand.u32 %v6322, 4294901760
  %v7083 = vsub.f32 %v6322, %v7082
  %7084 = vmatprep.subr.mxu0 %v7083
  %v7085 = vand.u32 %v6321, 4294901760
  %v7086 = vsub.f32 %v6321, %v7085
  %7087 = vmatpush1.msra.mxu0 %v7086
  %v7088 = vand.u32 %v6326, 4294901760
  %v7089 = vsub.f32 %v6326, %v7088
  %7090 = vmatprep.subr.mxu0 %v7089
  %v7091 = vand.u32 %v6325, 4294901760
  %v7092 = vsub.f32 %v6325, %v7091
  %7093 = vmatpush1.msra.mxu0 %v7092
  %7094 = vmatprep.subr.mxu0 0.0
  %7095 = vmatpush1.msra.mxu0 0.0
  %7096 = vmatprep.subr.mxu0 0.0
  %7097 = vmatpush1.msra.mxu0 0.0
  %7098 = vmatprep.subr.mxu0 0.0
  %7099 = vmatpush1.msra.mxu0 0.0
  %7100 = vmatprep.subr.mxu0 0.0
  %7101 = vmatpush1.msra.mxu0 0.0
  %7102 = vmatprep.subr.mxu0 0.0
  %7103 = vmatpush1.msra.mxu0 0.0
  %7104 = vmatprep.subr.mxu0 0.0
  %7105 = vmatpush1.msra.mxu0 0.0
  %7106 = vmatprep.subr.mxu0 0.0
  %7107 = vmatpush1.msra.mxu0 0.0
  %7108 = vmatprep.subr.mxu0 0.0
  %7109 = vmatpush1.msra.mxu0 0.0
  %7110 = vmatprep.subr.mxu0 0.0
  %7111 = vmatpush1.msra.mxu0 0.0
  %7112 = vmatprep.subr.mxu0 0.0
  %7113 = vmatpush1.msra.mxu0 0.0
  %7114 = vmatprep.subr.mxu0 0.0
  %7115 = vmatpush1.msra.mxu0 0.0
  %7116 = vmatprep.subr.mxu0 0.0
  %7117 = vmatpush1.msra.mxu0 0.0
  %7118 = vmatprep.subr.mxu0 0.0
  %7119 = vmatpush1.msra.mxu0 0.0
  %7120 = vmatprep.subr.mxu0 0.0
  %7121 = vmatpush1.msra.mxu0 0.0
  %7122 = vmatprep.subr.mxu0 0.0
  %7123 = vmatpush1.msra.mxu0 0.0
  %7124 = vmatprep.subr.mxu0 0.0
  %7125 = vmatpush1.msra.mxu0 0.0
  %7126 = vmatprep.subr.mxu0 0.0
  %7127 = vmatpush1.msra.mxu0 0.0
  %7128 = vmatprep.subr.mxu0 0.0
  %7129 = vmatpush1.msra.mxu0 0.0
  %7130 = vmatprep.subr.mxu0 0.0
  %7131 = vmatpush1.msra.mxu0 0.0
  %7132 = vmatprep.subr.mxu0 0.0
  %7133 = vmatpush1.msra.mxu0 0.0
  %7134 = vmatprep.subr.mxu0 0.0
  %7135 = vmatpush1.msra.mxu0 0.0
  %7136 = vmatprep.subr.mxu0 0.0
  %7137 = vmatpush1.msra.mxu0 0.0
  %7138 = vmatprep.subr.mxu0 0.0
  %7139 = vmatpush1.msra.mxu0 0.0
  %7140 = vmatprep.subr.mxu0 0.0
  %7141 = vmatpush1.msra.mxu0 0.0
  %7142 = vmatprep.subr.mxu0 0.0
  %7143 = vmatpush1.msra.mxu0 0.0
  %7144 = vmatprep.subr.mxu0 0.0
  %7145 = vmatpush1.msra.mxu0 0.0
  %7146 = vmatprep.subr.mxu0 0.0
  %7147 = vmatpush1.msra.mxu0 0.0
  %7148 = vmatprep.subr.mxu0 0.0
  %7149 = vmatpush1.msra.mxu0 0.0
  %7150 = vmatprep.mubr.f32.mxu0 0.0
  %v7151 = vand.u32 %v6329, 4294901760
  %v7152 = vsub.f32 %v6329, %v7151
  %7153 = vmatmul.mubr.f32.gmra.mrb[0].mxu0 %v7152
  %v7154 = vpop.f32.mrb[0].mxu0
  %v7155 = vadd.f32 %v7066, %v7154
  %v7156 = vpop.f32.mrb[0].mxu0
  %v7157 = vadd.f32 %v7068, %v7156
  %7158 = vdwg.mxu0
  %v7159 = vand.u32 %v6314, 4294901760
  %7160 = vmatprep.subr.mxu0 %v7159
  %v7161 = vand.u32 %v6313, 4294901760
  %7162 = vmatpush1.msra.mxu0 %v7161
  %v7163 = vand.u32 %v6318, 4294901760
  %7164 = vmatprep.subr.mxu0 %v7163
  %v7165 = vand.u32 %v6317, 4294901760
  %7166 = vmatpush1.msra.mxu0 %v7165
  %v7167 = vand.u32 %v6322, 4294901760
  %7168 = vmatprep.subr.mxu0 %v7167
  %v7169 = vand.u32 %v6321, 4294901760
  %7170 = vmatpush1.msra.mxu0 %v7169
  %v7171 = vand.u32 %v6326, 4294901760
  %7172 = vmatprep.subr.mxu0 %v7171
  %v7173 = vand.u32 %v6325, 4294901760
  %7174 = vmatpush1.msra.mxu0 %v7173
  %7175 = vmatprep.subr.mxu0 0.0
  %7176 = vmatpush1.msra.mxu0 0.0
  %7177 = vmatprep.subr.mxu0 0.0
  %7178 = vmatpush1.msra.mxu0 0.0
  %7179 = vmatprep.subr.mxu0 0.0
  %7180 = vmatpush1.msra.mxu0 0.0
  %7181 = vmatprep.subr.mxu0 0.0
  %7182 = vmatpush1.msra.mxu0 0.0
  %7183 = vmatprep.subr.mxu0 0.0
  %7184 = vmatpush1.msra.mxu0 0.0
  %7185 = vmatprep.subr.mxu0 0.0
  %7186 = vmatpush1.msra.mxu0 0.0
  %7187 = vmatprep.subr.mxu0 0.0
  %7188 = vmatpush1.msra.mxu0 0.0
  %7189 = vmatprep.subr.mxu0 0.0
  %7190 = vmatpush1.msra.mxu0 0.0
  %7191 = vmatprep.subr.mxu0 0.0
  %7192 = vmatpush1.msra.mxu0 0.0
  %7193 = vmatprep.subr.mxu0 0.0
  %7194 = vmatpush1.msra.mxu0 0.0
  %7195 = vmatprep.subr.mxu0 0.0
  %7196 = vmatpush1.msra.mxu0 0.0
  %7197 = vmatprep.subr.mxu0 0.0
  %7198 = vmatpush1.msra.mxu0 0.0
  %7199 = vmatprep.subr.mxu0 0.0
  %7200 = vmatpush1.msra.mxu0 0.0
  %7201 = vmatprep.subr.mxu0 0.0
  %7202 = vmatpush1.msra.mxu0 0.0
  %7203 = vmatprep.subr.mxu0 0.0
  %7204 = vmatpush1.msra.mxu0 0.0
  %7205 = vmatprep.subr.mxu0 0.0
  %7206 = vmatpush1.msra.mxu0 0.0
  %7207 = vmatprep.subr.mxu0 0.0
  %7208 = vmatpush1.msra.mxu0 0.0
  %7209 = vmatprep.subr.mxu0 0.0
  %7210 = vmatpush1.msra.mxu0 0.0
  %7211 = vmatprep.subr.mxu0 0.0
  %7212 = vmatpush1.msra.mxu0 0.0
  %7213 = vmatprep.subr.mxu0 0.0
  %7214 = vmatpush1.msra.mxu0 0.0
  %7215 = vmatprep.subr.mxu0 0.0
  %7216 = vmatpush1.msra.mxu0 0.0
  %7217 = vmatprep.subr.mxu0 0.0
  %7218 = vmatpush1.msra.mxu0 0.0
  %7219 = vmatprep.subr.mxu0 0.0
  %7220 = vmatpush1.msra.mxu0 0.0
  %7221 = vmatprep.subr.mxu0 0.0
  %7222 = vmatpush1.msra.mxu0 0.0
  %7223 = vmatprep.subr.mxu0 0.0
  %7224 = vmatpush1.msra.mxu0 0.0
  %7225 = vmatprep.subr.mxu0 0.0
  %7226 = vmatpush1.msra.mxu0 0.0
  %7227 = vmatprep.subr.mxu0 0.0
  %7228 = vmatpush1.msra.mxu0 0.0
  %7229 = vmatprep.subr.mxu0 0.0
  %7230 = vmatpush1.msra.mxu0 0.0
  %7231 = vmatprep.mubr.f32.mxu0 0.0
  %v7232 = vand.u32 %v6329, 4294901760
  %v7233 = vsub.f32 %v6329, %v7232
  %v7234 = vand.u32 %v7233, 4294901760
  %7235 = vmatmul.mubr.f32.gmra.mrb[0].mxu0 %v7234
  %v7236 = vpop.f32.mrb[0].mxu0
  %v7237 = vadd.f32 %v7155, %v7236
  %v7238 = vpop.f32.mrb[0].mxu0
  %v7239 = vadd.f32 %v7157, %v7238
  %7240 = vdwg.mxu0
  %v7241 = vand.u32 %v6314, 4294901760
  %v7242 = vsub.f32 %v6314, %v7241
  %v7243 = vand.u32 %v7242, 4294901760
  %7244 = vmatprep.subr.mxu0 %v7243
  %v7245 = vand.u32 %v6313, 4294901760
  %v7246 = vsub.f32 %v6313, %v7245
  %v7247 = vand.u32 %v7246, 4294901760
  %7248 = vmatpush1.msra.mxu0 %v7247
  %v7249 = vand.u32 %v6318, 4294901760
  %v7250 = vsub.f32 %v6318, %v7249
  %v7251 = vand.u32 %v7250, 4294901760
  %7252 = vmatprep.subr.mxu0 %v7251
  %v7253 = vand.u32 %v6317, 4294901760
  %v7254 = vsub.f32 %v6317, %v7253
  %v7255 = vand.u32 %v7254, 4294901760
  %7256 = vmatpush1.msra.mxu0 %v7255
  %v7257 = vand.u32 %v6322, 4294901760
  %v7258 = vsub.f32 %v6322, %v7257
  %v7259 = vand.u32 %v7258, 4294901760
  %7260 = vmatprep.subr.mxu0 %v7259
  %v7261 = vand.u32 %v6321, 4294901760
  %v7262 = vsub.f32 %v6321, %v7261
  %v7263 = vand.u32 %v7262, 4294901760
  %7264 = vmatpush1.msra.mxu0 %v7263
  %v7265 = vand.u32 %v6326, 4294901760
  %v7266 = vsub.f32 %v6326, %v7265
  %v7267 = vand.u32 %v7266, 4294901760
  %7268 = vmatprep.subr.mxu0 %v7267
  %v7269 = vand.u32 %v6325, 4294901760
  %v7270 = vsub.f32 %v6325, %v7269
  %v7271 = vand.u32 %v7270, 4294901760
  %7272 = vmatpush1.msra.mxu0 %v7271
  %7273 = vmatprep.subr.mxu0 0.0
  %7274 = vmatpush1.msra.mxu0 0.0
  %7275 = vmatprep.subr.mxu0 0.0
  %7276 = vmatpush1.msra.mxu0 0.0
  %7277 = vmatprep.subr.mxu0 0.0
  %7278 = vmatpush1.msra.mxu0 0.0
  %7279 = vmatprep.subr.mxu0 0.0
  %7280 = vmatpush1.msra.mxu0 0.0
  %7281 = vmatprep.subr.mxu0 0.0
  %7282 = vmatpush1.msra.mxu0 0.0
  %7283 = vmatprep.subr.mxu0 0.0
  %7284 = vmatpush1.msra.mxu0 0.0
  %7285 = vmatprep.subr.mxu0 0.0
  %7286 = vmatpush1.msra.mxu0 0.0
  %7287 = vmatprep.subr.mxu0 0.0
  %7288 = vmatpush1.msra.mxu0 0.0
  %7289 = vmatprep.subr.mxu0 0.0
  %7290 = vmatpush1.msra.mxu0 0.0
  %7291 = vmatprep.subr.mxu0 0.0
  %7292 = vmatpush1.msra.mxu0 0.0
  %7293 = vmatprep.subr.mxu0 0.0
  %7294 = vmatpush1.msra.mxu0 0.0
  %7295 = vmatprep.subr.mxu0 0.0
  %7296 = vmatpush1.msra.mxu0 0.0
  %7297 = vmatprep.subr.mxu0 0.0
  %7298 = vmatpush1.msra.mxu0 0.0
  %7299 = vmatprep.subr.mxu0 0.0
  %7300 = vmatpush1.msra.mxu0 0.0
  %7301 = vmatprep.subr.mxu0 0.0
  %7302 = vmatpush1.msra.mxu0 0.0
  %7303 = vmatprep.subr.mxu0 0.0
  %7304 = vmatpush1.msra.mxu0 0.0
  %7305 = vmatprep.subr.mxu0 0.0
  %7306 = vmatpush1.msra.mxu0 0.0
  %7307 = vmatprep.subr.mxu0 0.0
  %7308 = vmatpush1.msra.mxu0 0.0
  %7309 = vmatprep.subr.mxu0 0.0
  %7310 = vmatpush1.msra.mxu0 0.0
  %7311 = vmatprep.subr.mxu0 0.0
  %7312 = vmatpush1.msra.mxu0 0.0
  %7313 = vmatprep.subr.mxu0 0.0
  %7314 = vmatpush1.msra.mxu0 0.0
  %7315 = vmatprep.subr.mxu0 0.0
  %7316 = vmatpush1.msra.mxu0 0.0
  %7317 = vmatprep.subr.mxu0 0.0
  %7318 = vmatpush1.msra.mxu0 0.0
  %7319 = vmatprep.subr.mxu0 0.0
  %7320 = vmatpush1.msra.mxu0 0.0
  %7321 = vmatprep.subr.mxu0 0.0
  %7322 = vmatpush1.msra.mxu0 0.0
  %7323 = vmatprep.subr.mxu0 0.0
  %7324 = vmatpush1.msra.mxu0 0.0
  %7325 = vmatprep.subr.mxu0 0.0
  %7326 = vmatpush1.msra.mxu0 0.0
  %7327 = vmatprep.subr.mxu0 0.0
  %7328 = vmatpush1.msra.mxu0 0.0
  %7329 = vmatprep.mubr.f32.mxu0 0.0
  %v7330 = vand.u32 %v6329, 4294901760
  %7331 = vmatmul.mubr.f32.gmra.mrb[0].mxu0 %v7330
  %v7332 = vpop.f32.mrb[0].mxu0
  %v7333 = vadd.f32 %v7237, %v7332
  %v7334 = vpop.f32.mrb[0].mxu0
  %v7335 = vadd.f32 %v7239, %v7334
  %7336 = vdwg.mxu0
  %v7337 = vand.u32 %v6314, 4294901760
  %7338 = vmatprep.subr.mxu0 %v7337
  %v7339 = vand.u32 %v6313, 4294901760
  %7340 = vmatpush1.msra.mxu0 %v7339
  %v7341 = vand.u32 %v6318, 4294901760
  %7342 = vmatprep.subr.mxu0 %v7341
  %v7343 = vand.u32 %v6317, 4294901760
  %7344 = vmatpush1.msra.mxu0 %v7343
  %v7345 = vand.u32 %v6322, 4294901760
  %7346 = vmatprep.subr.mxu0 %v7345
  %v7347 = vand.u32 %v6321, 4294901760
  %7348 = vmatpush1.msra.mxu0 %v7347
  %v7349 = vand.u32 %v6326, 4294901760
  %7350 = vmatprep.subr.mxu0 %v7349
  %v7351 = vand.u32 %v6325, 4294901760
  %7352 = vmatpush1.msra.mxu0 %v7351
  %7353 = vmatprep.subr.mxu0 0.0
  %7354 = vmatpush1.msra.mxu0 0.0
  %7355 = vmatprep.subr.mxu0 0.0
  %7356 = vmatpush1.msra.mxu0 0.0
  %7357 = vmatprep.subr.mxu0 0.0
  %7358 = vmatpush1.msra.mxu0 0.0
  %7359 = vmatprep.subr.mxu0 0.0
  %7360 = vmatpush1.msra.mxu0 0.0
  %7361 = vmatprep.subr.mxu0 0.0
  %7362 = vmatpush1.msra.mxu0 0.0
  %7363 = vmatprep.subr.mxu0 0.0
  %7364 = vmatpush1.msra.mxu0 0.0
  %7365 = vmatprep.subr.mxu0 0.0
  %7366 = vmatpush1.msra.mxu0 0.0
  %7367 = vmatprep.subr.mxu0 0.0
  %7368 = vmatpush1.msra.mxu0 0.0
  %7369 = vmatprep.subr.mxu0 0.0
  %7370 = vmatpush1.msra.mxu0 0.0
  %7371 = vmatprep.subr.mxu0 0.0
  %7372 = vmatpush1.msra.mxu0 0.0
  %7373 = vmatprep.subr.mxu0 0.0
  %7374 = vmatpush1.msra.mxu0 0.0
  %7375 = vmatprep.subr.mxu0 0.0
  %7376 = vmatpush1.msra.mxu0 0.0
  %7377 = vmatprep.subr.mxu0 0.0
  %7378 = vmatpush1.msra.mxu0 0.0
  %7379 = vmatprep.subr.mxu0 0.0
  %7380 = vmatpush1.msra.mxu0 0.0
  %7381 = vmatprep.subr.mxu0 0.0
  %7382 = vmatpush1.msra.mxu0 0.0
  %7383 = vmatprep.subr.mxu0 0.0
  %7384 = vmatpush1.msra.mxu0 0.0
  %7385 = vmatprep.subr.mxu0 0.0
  %7386 = vmatpush1.msra.mxu0 0.0
  %7387 = vmatprep.subr.mxu0 0.0
  %7388 = vmatpush1.msra.mxu0 0.0
  %7389 = vmatprep.subr.mxu0 0.0
  %7390 = vmatpush1.msra.mxu0 0.0
  %7391 = vmatprep.subr.mxu0 0.0
  %7392 = vmatpush1.msra.mxu0 0.0
  %7393 = vmatprep.subr.mxu0 0.0
  %7394 = vmatpush1.msra.mxu0 0.0
  %7395 = vmatprep.subr.mxu0 0.0
  %7396 = vmatpush1.msra.mxu0 0.0
  %7397 = vmatprep.subr.mxu0 0.0
  %7398 = vmatpush1.msra.mxu0 0.0
  %7399 = vmatprep.subr.mxu0 0.0
  %7400 = vmatpush1.msra.mxu0 0.0
  %7401 = vmatprep.subr.mxu0 0.0
  %7402 = vmatpush1.msra.mxu0 0.0
  %7403 = vmatprep.subr.mxu0 0.0
  %7404 = vmatpush1.msra.mxu0 0.0
  %7405 = vmatprep.subr.mxu0 0.0
  %7406 = vmatpush1.msra.mxu0 0.0
  %7407 = vmatprep.subr.mxu0 0.0
  %7408 = vmatpush1.msra.mxu0 0.0
  %7409 = vmatprep.mubr.f32.mxu0 0.0
  %v7410 = vand.u32 %v6329, 4294901760
  %7411 = vmatmul.mubr.f32.gmra.mrb[0].mxu0 %v7410
  %v7412 = vpop.f32.mrb[0].mxu0
  %v7413 = vadd.f32 %v7333, %v7412
  %v7414 = vpop.f32.mrb[0].mxu0
  %v7415 = vadd.f32 %v7335, %v7414
  %7416 = vdwg.mxu0
  %v7418 = vsel %vm6327, %v6227, 0
  %v7420 = vand.u32 %v6312, 4294901760
  %7421 = vmatprep.subr.mxu0 %v7420
  %v7422 = vand.u32 %v6311, 4294901760
  %7423 = vmatpush1.msra.mxu0 %v7422
  %v7424 = vand.u32 %v6316, 4294901760
  %7425 = vmatprep.subr.mxu0 %v7424
  %v7426 = vand.u32 %v6315, 4294901760
  %7427 = vmatpush1.msra.mxu0 %v7426
  %v7428 = vand.u32 %v6320, 4294901760
  %7429 = vmatprep.subr.mxu0 %v7428
  %v7430 = vand.u32 %v6319, 4294901760
  %7431 = vmatpush1.msra.mxu0 %v7430
  %v7432 = vand.u32 %v6324, 4294901760
  %7433 = vmatprep.subr.mxu0 %v7432
  %v7434 = vand.u32 %v6323, 4294901760
  %7435 = vmatpush1.msra.mxu0 %v7434
  %7436 = vmatprep.subr.mxu0 0.0
  %7437 = vmatpush1.msra.mxu0 0.0
  %7438 = vmatprep.subr.mxu0 0.0
  %7439 = vmatpush1.msra.mxu0 0.0
  %7440 = vmatprep.subr.mxu0 0.0
  %7441 = vmatpush1.msra.mxu0 0.0
  %7442 = vmatprep.subr.mxu0 0.0
  %7443 = vmatpush1.msra.mxu0 0.0
  %7444 = vmatprep.subr.mxu0 0.0
  %7445 = vmatpush1.msra.mxu0 0.0
  %7446 = vmatprep.subr.mxu0 0.0
  %7447 = vmatpush1.msra.mxu0 0.0
  %7448 = vmatprep.subr.mxu0 0.0
  %7449 = vmatpush1.msra.mxu0 0.0
  %7450 = vmatprep.subr.mxu0 0.0
  %7451 = vmatpush1.msra.mxu0 0.0
  %7452 = vmatprep.subr.mxu0 0.0
  %7453 = vmatpush1.msra.mxu0 0.0
  %7454 = vmatprep.subr.mxu0 0.0
  %7455 = vmatpush1.msra.mxu0 0.0
  %7456 = vmatprep.subr.mxu0 0.0
  %7457 = vmatpush1.msra.mxu0 0.0
  %7458 = vmatprep.subr.mxu0 0.0
  %7459 = vmatpush1.msra.mxu0 0.0
  %7460 = vmatprep.subr.mxu0 0.0
  %7461 = vmatpush1.msra.mxu0 0.0
  %7462 = vmatprep.subr.mxu0 0.0
  %7463 = vmatpush1.msra.mxu0 0.0
  %7464 = vmatprep.subr.mxu0 0.0
  %7465 = vmatpush1.msra.mxu0 0.0
  %7466 = vmatprep.subr.mxu0 0.0
  %7467 = vmatpush1.msra.mxu0 0.0
  %7468 = vmatprep.subr.mxu0 0.0
  %7469 = vmatpush1.msra.mxu0 0.0
  %7470 = vmatprep.subr.mxu0 0.0
  %7471 = vmatpush1.msra.mxu0 0.0
  %7472 = vmatprep.subr.mxu0 0.0
  %7473 = vmatpush1.msra.mxu0 0.0
  %7474 = vmatprep.subr.mxu0 0.0
  %7475 = vmatpush1.msra.mxu0 0.0
  %7476 = vmatprep.subr.mxu0 0.0
  %7477 = vmatpush1.msra.mxu0 0.0
  %7478 = vmatprep.subr.mxu0 0.0
  %7479 = vmatpush1.msra.mxu0 0.0
  %7480 = vmatprep.subr.mxu0 0.0
  %7481 = vmatpush1.msra.mxu0 0.0
  %7482 = vmatprep.subr.mxu0 0.0
  %7483 = vmatpush1.msra.mxu0 0.0
  %7484 = vmatprep.subr.mxu0 0.0
  %7485 = vmatpush1.msra.mxu0 0.0
  %7486 = vmatprep.subr.mxu0 0.0
  %7487 = vmatpush1.msra.mxu0 0.0
  %7488 = vmatprep.subr.mxu0 0.0
  %7489 = vmatpush1.msra.mxu0 0.0
  %7490 = vmatprep.subr.mxu0 0.0
  %7491 = vmatpush1.msra.mxu0 0.0
  %7492 = vmatprep.mubr.f32.mxu0 0.0
  %v7493 = vand.u32 %v7418, 4294901760
  %v7494 = vsub.f32 %v7418, %v7493
  %v7495 = vand.u32 %v7494, 4294901760
  %v7496 = vsub.f32 %v7494, %v7495
  %v7497 = vand.u32 %v7496, 4294901760
  %7498 = vmatmul.mubr.f32.gmra.mrb[0].mxu0 %v7497
  %v7499 = vpop.f32.mrb[0].mxu0
  %v7500 = vadd.f32 0.0, %v7499
  %v7501 = vpop.f32.mrb[0].mxu0
  %v7502 = vadd.f32 0.0, %v7501
  %7503 = vdwg.mxu0
  %v7504 = vand.u32 %v6312, 4294901760
  %v7505 = vsub.f32 %v6312, %v7504
  %v7506 = vand.u32 %v7505, 4294901760
  %v7507 = vsub.f32 %v7505, %v7506
  %v7508 = vand.u32 %v7507, 4294901760
  %7509 = vmatprep.subr.mxu0 %v7508
  %v7510 = vand.u32 %v6311, 4294901760
  %v7511 = vsub.f32 %v6311, %v7510
  %v7512 = vand.u32 %v7511, 4294901760
  %v7513 = vsub.f32 %v7511, %v7512
  %v7514 = vand.u32 %v7513, 4294901760
  %7515 = vmatpush1.msra.mxu0 %v7514
  %v7516 = vand.u32 %v6316, 4294901760
  %v7517 = vsub.f32 %v6316, %v7516
  %v7518 = vand.u32 %v7517, 4294901760
  %v7519 = vsub.f32 %v7517, %v7518
  %v7520 = vand.u32 %v7519, 4294901760
  %7521 = vmatprep.subr.mxu0 %v7520
  %v7522 = vand.u32 %v6315, 4294901760
  %v7523 = vsub.f32 %v6315, %v7522
  %v7524 = vand.u32 %v7523, 4294901760
  %v7525 = vsub.f32 %v7523, %v7524
  %v7526 = vand.u32 %v7525, 4294901760
  %7527 = vmatpush1.msra.mxu0 %v7526
  %v7528 = vand.u32 %v6320, 4294901760
  %v7529 = vsub.f32 %v6320, %v7528
  %v7530 = vand.u32 %v7529, 4294901760
  %v7531 = vsub.f32 %v7529, %v7530
  %v7532 = vand.u32 %v7531, 4294901760
  %7533 = vmatprep.subr.mxu0 %v7532
  %v7534 = vand.u32 %v6319, 4294901760
  %v7535 = vsub.f32 %v6319, %v7534
  %v7536 = vand.u32 %v7535, 4294901760
  %v7537 = vsub.f32 %v7535, %v7536
  %v7538 = vand.u32 %v7537, 4294901760
  %7539 = vmatpush1.msra.mxu0 %v7538
  %v7540 = vand.u32 %v6324, 4294901760
  %v7541 = vsub.f32 %v6324, %v7540
  %v7542 = vand.u32 %v7541, 4294901760
  %v7543 = vsub.f32 %v7541, %v7542
  %v7544 = vand.u32 %v7543, 4294901760
  %7545 = vmatprep.subr.mxu0 %v7544
  %v7546 = vand.u32 %v6323, 4294901760
  %v7547 = vsub.f32 %v6323, %v7546
  %v7548 = vand.u32 %v7547, 4294901760
  %v7549 = vsub.f32 %v7547, %v7548
  %v7550 = vand.u32 %v7549, 4294901760
  %7551 = vmatpush1.msra.mxu0 %v7550
  %7552 = vmatprep.subr.mxu0 0.0
  %7553 = vmatpush1.msra.mxu0 0.0
  %7554 = vmatprep.subr.mxu0 0.0
  %7555 = vmatpush1.msra.mxu0 0.0
  %7556 = vmatprep.subr.mxu0 0.0
  %7557 = vmatpush1.msra.mxu0 0.0
  %7558 = vmatprep.subr.mxu0 0.0
  %7559 = vmatpush1.msra.mxu0 0.0
  %7560 = vmatprep.subr.mxu0 0.0
  %7561 = vmatpush1.msra.mxu0 0.0
  %7562 = vmatprep.subr.mxu0 0.0
  %7563 = vmatpush1.msra.mxu0 0.0
  %7564 = vmatprep.subr.mxu0 0.0
  %7565 = vmatpush1.msra.mxu0 0.0
  %7566 = vmatprep.subr.mxu0 0.0
  %7567 = vmatpush1.msra.mxu0 0.0
  %7568 = vmatprep.subr.mxu0 0.0
  %7569 = vmatpush1.msra.mxu0 0.0
  %7570 = vmatprep.subr.mxu0 0.0
  %7571 = vmatpush1.msra.mxu0 0.0
  %7572 = vmatprep.subr.mxu0 0.0
  %7573 = vmatpush1.msra.mxu0 0.0
  %7574 = vmatprep.subr.mxu0 0.0
  %7575 = vmatpush1.msra.mxu0 0.0
  %7576 = vmatprep.subr.mxu0 0.0
  %7577 = vmatpush1.msra.mxu0 0.0
  %7578 = vmatprep.subr.mxu0 0.0
  %7579 = vmatpush1.msra.mxu0 0.0
  %7580 = vmatprep.subr.mxu0 0.0
  %7581 = vmatpush1.msra.mxu0 0.0
  %7582 = vmatprep.subr.mxu0 0.0
  %7583 = vmatpush1.msra.mxu0 0.0
  %7584 = vmatprep.subr.mxu0 0.0
  %7585 = vmatpush1.msra.mxu0 0.0
  %7586 = vmatprep.subr.mxu0 0.0
  %7587 = vmatpush1.msra.mxu0 0.0
  %7588 = vmatprep.subr.mxu0 0.0
  %7589 = vmatpush1.msra.mxu0 0.0
  %7590 = vmatprep.subr.mxu0 0.0
  %7591 = vmatpush1.msra.mxu0 0.0
  %7592 = vmatprep.subr.mxu0 0.0
  %7593 = vmatpush1.msra.mxu0 0.0
  %7594 = vmatprep.subr.mxu0 0.0
  %7595 = vmatpush1.msra.mxu0 0.0
  %7596 = vmatprep.subr.mxu0 0.0
  %7597 = vmatpush1.msra.mxu0 0.0
  %7598 = vmatprep.subr.mxu0 0.0
  %7599 = vmatpush1.msra.mxu0 0.0
  %7600 = vmatprep.subr.mxu0 0.0
  %7601 = vmatpush1.msra.mxu0 0.0
  %7602 = vmatprep.subr.mxu0 0.0
  %7603 = vmatpush1.msra.mxu0 0.0
  %7604 = vmatprep.subr.mxu0 0.0
  %7605 = vmatpush1.msra.mxu0 0.0
  %7606 = vmatprep.subr.mxu0 0.0
  %7607 = vmatpush1.msra.mxu0 0.0
  %7608 = vmatprep.mubr.f32.mxu0 0.0
  %v7609 = vand.u32 %v7418, 4294901760
  %7610 = vmatmul.mubr.f32.gmra.mrb[0].mxu0 %v7609
  %v7611 = vpop.f32.mrb[0].mxu0
  %v7612 = vadd.f32 %v7500, %v7611
  %v7613 = vpop.f32.mrb[0].mxu0
  %v7614 = vadd.f32 %v7502, %v7613
  %7615 = vdwg.mxu0
  %v7616 = vand.u32 %v6312, 4294901760
  %v7617 = vsub.f32 %v6312, %v7616
  %7618 = vmatprep.subr.mxu0 %v7617
  %v7619 = vand.u32 %v6311, 4294901760
  %v7620 = vsub.f32 %v6311, %v7619
  %7621 = vmatpush1.msra.mxu0 %v7620
  %v7622 = vand.u32 %v6316, 4294901760
  %v7623 = vsub.f32 %v6316, %v7622
  %7624 = vmatprep.subr.mxu0 %v7623
  %v7625 = vand.u32 %v6315, 4294901760
  %v7626 = vsub.f32 %v6315, %v7625
  %7627 = vmatpush1.msra.mxu0 %v7626
  %v7628 = vand.u32 %v6320, 4294901760
  %v7629 = vsub.f32 %v6320, %v7628
  %7630 = vmatprep.subr.mxu0 %v7629
  %v7631 = vand.u32 %v6319, 4294901760
  %v7632 = vsub.f32 %v6319, %v7631
  %7633 = vmatpush1.msra.mxu0 %v7632
  %v7634 = vand.u32 %v6324, 4294901760
  %v7635 = vsub.f32 %v6324, %v7634
  %7636 = vmatprep.subr.mxu0 %v7635
  %v7637 = vand.u32 %v6323, 4294901760
  %v7638 = vsub.f32 %v6323, %v7637
  %7639 = vmatpush1.msra.mxu0 %v7638
  %7640 = vmatprep.subr.mxu0 0.0
  %7641 = vmatpush1.msra.mxu0 0.0
  %7642 = vmatprep.subr.mxu0 0.0
  %7643 = vmatpush1.msra.mxu0 0.0
  %7644 = vmatprep.subr.mxu0 0.0
  %7645 = vmatpush1.msra.mxu0 0.0
  %7646 = vmatprep.subr.mxu0 0.0
  %7647 = vmatpush1.msra.mxu0 0.0
  %7648 = vmatprep.subr.mxu0 0.0
  %7649 = vmatpush1.msra.mxu0 0.0
  %7650 = vmatprep.subr.mxu0 0.0
  %7651 = vmatpush1.msra.mxu0 0.0
  %7652 = vmatprep.subr.mxu0 0.0
  %7653 = vmatpush1.msra.mxu0 0.0
  %7654 = vmatprep.subr.mxu0 0.0
  %7655 = vmatpush1.msra.mxu0 0.0
  %7656 = vmatprep.subr.mxu0 0.0
  %7657 = vmatpush1.msra.mxu0 0.0
  %7658 = vmatprep.subr.mxu0 0.0
  %7659 = vmatpush1.msra.mxu0 0.0
  %7660 = vmatprep.subr.mxu0 0.0
  %7661 = vmatpush1.msra.mxu0 0.0
  %7662 = vmatprep.subr.mxu0 0.0
  %7663 = vmatpush1.msra.mxu0 0.0
  %7664 = vmatprep.subr.mxu0 0.0
  %7665 = vmatpush1.msra.mxu0 0.0
  %7666 = vmatprep.subr.mxu0 0.0
  %7667 = vmatpush1.msra.mxu0 0.0
  %7668 = vmatprep.subr.mxu0 0.0
  %7669 = vmatpush1.msra.mxu0 0.0
  %7670 = vmatprep.subr.mxu0 0.0
  %7671 = vmatpush1.msra.mxu0 0.0
  %7672 = vmatprep.subr.mxu0 0.0
  %7673 = vmatpush1.msra.mxu0 0.0
  %7674 = vmatprep.subr.mxu0 0.0
  %7675 = vmatpush1.msra.mxu0 0.0
  %7676 = vmatprep.subr.mxu0 0.0
  %7677 = vmatpush1.msra.mxu0 0.0
  %7678 = vmatprep.subr.mxu0 0.0
  %7679 = vmatpush1.msra.mxu0 0.0
  %7680 = vmatprep.subr.mxu0 0.0
  %7681 = vmatpush1.msra.mxu0 0.0
  %7682 = vmatprep.subr.mxu0 0.0
  %7683 = vmatpush1.msra.mxu0 0.0
  %7684 = vmatprep.subr.mxu0 0.0
  %7685 = vmatpush1.msra.mxu0 0.0
  %7686 = vmatprep.subr.mxu0 0.0
  %7687 = vmatpush1.msra.mxu0 0.0
  %7688 = vmatprep.subr.mxu0 0.0
  %7689 = vmatpush1.msra.mxu0 0.0
  %7690 = vmatprep.subr.mxu0 0.0
  %7691 = vmatpush1.msra.mxu0 0.0
  %7692 = vmatprep.subr.mxu0 0.0
  %7693 = vmatpush1.msra.mxu0 0.0
  %7694 = vmatprep.subr.mxu0 0.0
  %7695 = vmatpush1.msra.mxu0 0.0
  %7696 = vmatprep.mubr.f32.mxu0 0.0
  %v7697 = vand.u32 %v7418, 4294901760
  %v7698 = vsub.f32 %v7418, %v7697
  %7699 = vmatmul.mubr.f32.gmra.mrb[0].mxu0 %v7698
  %v7700 = vpop.f32.mrb[0].mxu0
  %v7701 = vadd.f32 %v7612, %v7700
  %v7702 = vpop.f32.mrb[0].mxu0
  %v7703 = vadd.f32 %v7614, %v7702
  %7704 = vdwg.mxu0
  %v7705 = vand.u32 %v6312, 4294901760
  %7706 = vmatprep.subr.mxu0 %v7705
  %v7707 = vand.u32 %v6311, 4294901760
  %7708 = vmatpush1.msra.mxu0 %v7707
  %v7709 = vand.u32 %v6316, 4294901760
  %7710 = vmatprep.subr.mxu0 %v7709
  %v7711 = vand.u32 %v6315, 4294901760
  %7712 = vmatpush1.msra.mxu0 %v7711
  %v7713 = vand.u32 %v6320, 4294901760
  %7714 = vmatprep.subr.mxu0 %v7713
  %v7715 = vand.u32 %v6319, 4294901760
  %7716 = vmatpush1.msra.mxu0 %v7715
  %v7717 = vand.u32 %v6324, 4294901760
  %7718 = vmatprep.subr.mxu0 %v7717
  %v7719 = vand.u32 %v6323, 4294901760
  %7720 = vmatpush1.msra.mxu0 %v7719
  %7721 = vmatprep.subr.mxu0 0.0
  %7722 = vmatpush1.msra.mxu0 0.0
  %7723 = vmatprep.subr.mxu0 0.0
  %7724 = vmatpush1.msra.mxu0 0.0
  %7725 = vmatprep.subr.mxu0 0.0
  %7726 = vmatpush1.msra.mxu0 0.0
  %7727 = vmatprep.subr.mxu0 0.0
  %7728 = vmatpush1.msra.mxu0 0.0
  %7729 = vmatprep.subr.mxu0 0.0
  %7730 = vmatpush1.msra.mxu0 0.0
  %7731 = vmatprep.subr.mxu0 0.0
  %7732 = vmatpush1.msra.mxu0 0.0
  %7733 = vmatprep.subr.mxu0 0.0
  %7734 = vmatpush1.msra.mxu0 0.0
  %7735 = vmatprep.subr.mxu0 0.0
  %7736 = vmatpush1.msra.mxu0 0.0
  %7737 = vmatprep.subr.mxu0 0.0
  %7738 = vmatpush1.msra.mxu0 0.0
  %7739 = vmatprep.subr.mxu0 0.0
  %7740 = vmatpush1.msra.mxu0 0.0
  %7741 = vmatprep.subr.mxu0 0.0
  %7742 = vmatpush1.msra.mxu0 0.0
  %7743 = vmatprep.subr.mxu0 0.0
  %7744 = vmatpush1.msra.mxu0 0.0
  %7745 = vmatprep.subr.mxu0 0.0
  %7746 = vmatpush1.msra.mxu0 0.0
  %7747 = vmatprep.subr.mxu0 0.0
  %7748 = vmatpush1.msra.mxu0 0.0
  %7749 = vmatprep.subr.mxu0 0.0
  %7750 = vmatpush1.msra.mxu0 0.0
  %7751 = vmatprep.subr.mxu0 0.0
  %7752 = vmatpush1.msra.mxu0 0.0
  %7753 = vmatprep.subr.mxu0 0.0
  %7754 = vmatpush1.msra.mxu0 0.0
  %7755 = vmatprep.subr.mxu0 0.0
  %7756 = vmatpush1.msra.mxu0 0.0
  %7757 = vmatprep.subr.mxu0 0.0
  %7758 = vmatpush1.msra.mxu0 0.0
  %7759 = vmatprep.subr.mxu0 0.0
  %7760 = vmatpush1.msra.mxu0 0.0
  %7761 = vmatprep.subr.mxu0 0.0
  %7762 = vmatpush1.msra.mxu0 0.0
  %7763 = vmatprep.subr.mxu0 0.0
  %7764 = vmatpush1.msra.mxu0 0.0
  %7765 = vmatprep.subr.mxu0 0.0
  %7766 = vmatpush1.msra.mxu0 0.0
  %7767 = vmatprep.subr.mxu0 0.0
  %7768 = vmatpush1.msra.mxu0 0.0
  %7769 = vmatprep.subr.mxu0 0.0
  %7770 = vmatpush1.msra.mxu0 0.0
  %7771 = vmatprep.subr.mxu0 0.0
  %7772 = vmatpush1.msra.mxu0 0.0
  %7773 = vmatprep.subr.mxu0 0.0
  %7774 = vmatpush1.msra.mxu0 0.0
  %7775 = vmatprep.subr.mxu0 0.0
  %7776 = vmatpush1.msra.mxu0 0.0
  %7777 = vmatprep.mubr.f32.mxu0 0.0
  %v7778 = vand.u32 %v7418, 4294901760
  %v7779 = vsub.f32 %v7418, %v7778
  %v7780 = vand.u32 %v7779, 4294901760
  %7781 = vmatmul.mubr.f32.gmra.mrb[0].mxu0 %v7780
  %v7782 = vpop.f32.mrb[0].mxu0
  %v7783 = vadd.f32 %v7701, %v7782
  %v7784 = vpop.f32.mrb[0].mxu0
  %v7785 = vadd.f32 %v7703, %v7784
  %7786 = vdwg.mxu0
  %v7787 = vand.u32 %v6312, 4294901760
  %v7788 = vsub.f32 %v6312, %v7787
  %v7789 = vand.u32 %v7788, 4294901760
  %7790 = vmatprep.subr.mxu0 %v7789
  %v7791 = vand.u32 %v6311, 4294901760
  %v7792 = vsub.f32 %v6311, %v7791
  %v7793 = vand.u32 %v7792, 4294901760
  %7794 = vmatpush1.msra.mxu0 %v7793
  %v7795 = vand.u32 %v6316, 4294901760
  %v7796 = vsub.f32 %v6316, %v7795
  %v7797 = vand.u32 %v7796, 4294901760
  %7798 = vmatprep.subr.mxu0 %v7797
  %v7799 = vand.u32 %v6315, 4294901760
  %v7800 = vsub.f32 %v6315, %v7799
  %v7801 = vand.u32 %v7800, 4294901760
  %7802 = vmatpush1.msra.mxu0 %v7801
  %v7803 = vand.u32 %v6320, 4294901760
  %v7804 = vsub.f32 %v6320, %v7803
  %v7805 = vand.u32 %v7804, 4294901760
  %7806 = vmatprep.subr.mxu0 %v7805
  %v7807 = vand.u32 %v6319, 4294901760
  %v7808 = vsub.f32 %v6319, %v7807
  %v7809 = vand.u32 %v7808, 4294901760
  %7810 = vmatpush1.msra.mxu0 %v7809
  %v7811 = vand.u32 %v6324, 4294901760
  %v7812 = vsub.f32 %v6324, %v7811
  %v7813 = vand.u32 %v7812, 4294901760
  %7814 = vmatprep.subr.mxu0 %v7813
  %v7815 = vand.u32 %v6323, 4294901760
  %v7816 = vsub.f32 %v6323, %v7815
  %v7817 = vand.u32 %v7816, 4294901760
  %7818 = vmatpush1.msra.mxu0 %v7817
  %7819 = vmatprep.subr.mxu0 0.0
  %7820 = vmatpush1.msra.mxu0 0.0
  %7821 = vmatprep.subr.mxu0 0.0
  %7822 = vmatpush1.msra.mxu0 0.0
  %7823 = vmatprep.subr.mxu0 0.0
  %7824 = vmatpush1.msra.mxu0 0.0
  %7825 = vmatprep.subr.mxu0 0.0
  %7826 = vmatpush1.msra.mxu0 0.0
  %7827 = vmatprep.subr.mxu0 0.0
  %7828 = vmatpush1.msra.mxu0 0.0
  %7829 = vmatprep.subr.mxu0 0.0
  %7830 = vmatpush1.msra.mxu0 0.0
  %7831 = vmatprep.subr.mxu0 0.0
  %7832 = vmatpush1.msra.mxu0 0.0
  %7833 = vmatprep.subr.mxu0 0.0
  %7834 = vmatpush1.msra.mxu0 0.0
  %7835 = vmatprep.subr.mxu0 0.0
  %7836 = vmatpush1.msra.mxu0 0.0
  %7837 = vmatprep.subr.mxu0 0.0
  %7838 = vmatpush1.msra.mxu0 0.0
  %7839 = vmatprep.subr.mxu0 0.0
  %7840 = vmatpush1.msra.mxu0 0.0
  %7841 = vmatprep.subr.mxu0 0.0
  %7842 = vmatpush1.msra.mxu0 0.0
  %7843 = vmatprep.subr.mxu0 0.0
  %7844 = vmatpush1.msra.mxu0 0.0
  %7845 = vmatprep.subr.mxu0 0.0
  %7846 = vmatpush1.msra.mxu0 0.0
  %7847 = vmatprep.subr.mxu0 0.0
  %7848 = vmatpush1.msra.mxu0 0.0
  %7849 = vmatprep.subr.mxu0 0.0
  %7850 = vmatpush1.msra.mxu0 0.0
  %7851 = vmatprep.subr.mxu0 0.0
  %7852 = vmatpush1.msra.mxu0 0.0
  %7853 = vmatprep.subr.mxu0 0.0
  %7854 = vmatpush1.msra.mxu0 0.0
  %7855 = vmatprep.subr.mxu0 0.0
  %7856 = vmatpush1.msra.mxu0 0.0
  %7857 = vmatprep.subr.mxu0 0.0
  %7858 = vmatpush1.msra.mxu0 0.0
  %7859 = vmatprep.subr.mxu0 0.0
  %7860 = vmatpush1.msra.mxu0 0.0
  %7861 = vmatprep.subr.mxu0 0.0
  %7862 = vmatpush1.msra.mxu0 0.0
  %7863 = vmatprep.subr.mxu0 0.0
  %7864 = vmatpush1.msra.mxu0 0.0
  %7865 = vmatprep.subr.mxu0 0.0
  %7866 = vmatpush1.msra.mxu0 0.0
  %7867 = vmatprep.subr.mxu0 0.0
  %7868 = vmatpush1.msra.mxu0 0.0
  %7869 = vmatprep.subr.mxu0 0.0
  %7870 = vmatpush1.msra.mxu0 0.0
  %7871 = vmatprep.subr.mxu0 0.0
  %7872 = vmatpush1.msra.mxu0 0.0
  %7873 = vmatprep.subr.mxu0 0.0
  %7874 = vmatpush1.msra.mxu0 0.0
  %7875 = vmatprep.mubr.f32.mxu0 0.0
  %v7876 = vand.u32 %v7418, 4294901760
  %7877 = vmatmul.mubr.f32.gmra.mrb[0].mxu0 %v7876
  %v7878 = vpop.f32.mrb[0].mxu0
  %v7879 = vadd.f32 %v7783, %v7878
  %v7880 = vpop.f32.mrb[0].mxu0
  %v7881 = vadd.f32 %v7785, %v7880
  %7882 = vdwg.mxu0
  %v7883 = vand.u32 %v6312, 4294901760
  %7884 = vmatprep.subr.mxu0 %v7883
  %v7885 = vand.u32 %v6311, 4294901760
  %7886 = vmatpush1.msra.mxu0 %v7885
  %v7887 = vand.u32 %v6316, 4294901760
  %7888 = vmatprep.subr.mxu0 %v7887
  %v7889 = vand.u32 %v6315, 4294901760
  %7890 = vmatpush1.msra.mxu0 %v7889
  %v7891 = vand.u32 %v6320, 4294901760
  %7892 = vmatprep.subr.mxu0 %v7891
  %v7893 = vand.u32 %v6319, 4294901760
  %7894 = vmatpush1.msra.mxu0 %v7893
  %v7895 = vand.u32 %v6324, 4294901760
  %7896 = vmatprep.subr.mxu0 %v7895
  %v7897 = vand.u32 %v6323, 4294901760
  %7898 = vmatpush1.msra.mxu0 %v7897
  %7899 = vmatprep.subr.mxu0 0.0
  %7900 = vmatpush1.msra.mxu0 0.0
  %7901 = vmatprep.subr.mxu0 0.0
  %7902 = vmatpush1.msra.mxu0 0.0
  %7903 = vmatprep.subr.mxu0 0.0
  %7904 = vmatpush1.msra.mxu0 0.0
  %7905 = vmatprep.subr.mxu0 0.0
  %7906 = vmatpush1.msra.mxu0 0.0
  %7907 = vmatprep.subr.mxu0 0.0
  %7908 = vmatpush1.msra.mxu0 0.0
  %7909 = vmatprep.subr.mxu0 0.0
  %7910 = vmatpush1.msra.mxu0 0.0
  %7911 = vmatprep.subr.mxu0 0.0
  %7912 = vmatpush1.msra.mxu0 0.0
  %7913 = vmatprep.subr.mxu0 0.0
  %7914 = vmatpush1.msra.mxu0 0.0
  %7915 = vmatprep.subr.mxu0 0.0
  %7916 = vmatpush1.msra.mxu0 0.0
  %7917 = vmatprep.subr.mxu0 0.0
  %7918 = vmatpush1.msra.mxu0 0.0
  %7919 = vmatprep.subr.mxu0 0.0
  %7920 = vmatpush1.msra.mxu0 0.0
  %7921 = vmatprep.subr.mxu0 0.0
  %7922 = vmatpush1.msra.mxu0 0.0
  %7923 = vmatprep.subr.mxu0 0.0
  %7924 = vmatpush1.msra.mxu0 0.0
  %7925 = vmatprep.subr.mxu0 0.0
  %7926 = vmatpush1.msra.mxu0 0.0
  %7927 = vmatprep.subr.mxu0 0.0
  %7928 = vmatpush1.msra.mxu0 0.0
  %7929 = vmatprep.subr.mxu0 0.0
  %7930 = vmatpush1.msra.mxu0 0.0
  %7931 = vmatprep.subr.mxu0 0.0
  %7932 = vmatpush1.msra.mxu0 0.0
  %7933 = vmatprep.subr.mxu0 0.0
  %7934 = vmatpush1.msra.mxu0 0.0
  %7935 = vmatprep.subr.mxu0 0.0
  %7936 = vmatpush1.msra.mxu0 0.0
  %7937 = vmatprep.subr.mxu0 0.0
  %7938 = vmatpush1.msra.mxu0 0.0
  %7939 = vmatprep.subr.mxu0 0.0
  %7940 = vmatpush1.msra.mxu0 0.0
  %7941 = vmatprep.subr.mxu0 0.0
  %7942 = vmatpush1.msra.mxu0 0.0
  %7943 = vmatprep.subr.mxu0 0.0
  %7944 = vmatpush1.msra.mxu0 0.0
  %7945 = vmatprep.subr.mxu0 0.0
  %7946 = vmatpush1.msra.mxu0 0.0
  %7947 = vmatprep.subr.mxu0 0.0
  %7948 = vmatpush1.msra.mxu0 0.0
  %7949 = vmatprep.subr.mxu0 0.0
  %7950 = vmatpush1.msra.mxu0 0.0
  %7951 = vmatprep.subr.mxu0 0.0
  %7952 = vmatpush1.msra.mxu0 0.0
  %7953 = vmatprep.subr.mxu0 0.0
  %7954 = vmatpush1.msra.mxu0 0.0
  %7955 = vmatprep.mubr.f32.mxu0 0.0
  %v7956 = vand.u32 %v7418, 4294901760
  %7957 = vmatmul.mubr.f32.gmra.mrb[0].mxu0 %v7956
  %v7958 = vpop.f32.mrb[0].mxu0
  %v7959 = vadd.f32 %v7879, %v7958
  %v7960 = vpop.f32.mrb[0].mxu0
  %v7961 = vadd.f32 %v7881, %v7960
  %7962 = vdwg.mxu0
  %v7963 = vand.u32 %v6314, 4294901760
  %7964 = vmatprep.subr.mxu0 %v7963
  %v7965 = vand.u32 %v6313, 4294901760
  %7966 = vmatpush1.msra.mxu0 %v7965
  %v7967 = vand.u32 %v6318, 4294901760
  %7968 = vmatprep.subr.mxu0 %v7967
  %v7969 = vand.u32 %v6317, 4294901760
  %7970 = vmatpush1.msra.mxu0 %v7969
  %v7971 = vand.u32 %v6322, 4294901760
  %7972 = vmatprep.subr.mxu0 %v7971
  %v7973 = vand.u32 %v6321, 4294901760
  %7974 = vmatpush1.msra.mxu0 %v7973
  %v7975 = vand.u32 %v6326, 4294901760
  %7976 = vmatprep.subr.mxu0 %v7975
  %v7977 = vand.u32 %v6325, 4294901760
  %7978 = vmatpush1.msra.mxu0 %v7977
  %7979 = vmatprep.subr.mxu0 0.0
  %7980 = vmatpush1.msra.mxu0 0.0
  %7981 = vmatprep.subr.mxu0 0.0
  %7982 = vmatpush1.msra.mxu0 0.0
  %7983 = vmatprep.subr.mxu0 0.0
  %7984 = vmatpush1.msra.mxu0 0.0
  %7985 = vmatprep.subr.mxu0 0.0
  %7986 = vmatpush1.msra.mxu0 0.0
  %7987 = vmatprep.subr.mxu0 0.0
  %7988 = vmatpush1.msra.mxu0 0.0
  %7989 = vmatprep.subr.mxu0 0.0
  %7990 = vmatpush1.msra.mxu0 0.0
  %7991 = vmatprep.subr.mxu0 0.0
  %7992 = vmatpush1.msra.mxu0 0.0
  %7993 = vmatprep.subr.mxu0 0.0
  %7994 = vmatpush1.msra.mxu0 0.0
  %7995 = vmatprep.subr.mxu0 0.0
  %7996 = vmatpush1.msra.mxu0 0.0
  %7997 = vmatprep.subr.mxu0 0.0
  %7998 = vmatpush1.msra.mxu0 0.0
  %7999 = vmatprep.subr.mxu0 0.0
  %8000 = vmatpush1.msra.mxu0 0.0
  %8001 = vmatprep.subr.mxu0 0.0
  %8002 = vmatpush1.msra.mxu0 0.0
  %8003 = vmatprep.subr.mxu0 0.0
  %8004 = vmatpush1.msra.mxu0 0.0
  %8005 = vmatprep.subr.mxu0 0.0
  %8006 = vmatpush1.msra.mxu0 0.0
  %8007 = vmatprep.subr.mxu0 0.0
  %8008 = vmatpush1.msra.mxu0 0.0
  %8009 = vmatprep.subr.mxu0 0.0
  %8010 = vmatpush1.msra.mxu0 0.0
  %8011 = vmatprep.subr.mxu0 0.0
  %8012 = vmatpush1.msra.mxu0 0.0
  %8013 = vmatprep.subr.mxu0 0.0
  %8014 = vmatpush1.msra.mxu0 0.0
  %8015 = vmatprep.subr.mxu0 0.0
  %8016 = vmatpush1.msra.mxu0 0.0
  %8017 = vmatprep.subr.mxu0 0.0
  %8018 = vmatpush1.msra.mxu0 0.0
  %8019 = vmatprep.subr.mxu0 0.0
  %8020 = vmatpush1.msra.mxu0 0.0
  %8021 = vmatprep.subr.mxu0 0.0
  %8022 = vmatpush1.msra.mxu0 0.0
  %8023 = vmatprep.subr.mxu0 0.0
  %8024 = vmatpush1.msra.mxu0 0.0
  %8025 = vmatprep.subr.mxu0 0.0
  %8026 = vmatpush1.msra.mxu0 0.0
  %8027 = vmatprep.subr.mxu0 0.0
  %8028 = vmatpush1.msra.mxu0 0.0
  %8029 = vmatprep.subr.mxu0 0.0
  %8030 = vmatpush1.msra.mxu0 0.0
  %8031 = vmatprep.subr.mxu0 0.0
  %8032 = vmatpush1.msra.mxu0 0.0
  %8033 = vmatprep.subr.mxu0 0.0
  %8034 = vmatpush1.msra.mxu0 0.0
  %8035 = vmatprep.mubr.f32.mxu0 0.0
  %v8036 = vand.u32 %v7418, 4294901760
  %v8037 = vsub.f32 %v7418, %v8036
  %v8038 = vand.u32 %v8037, 4294901760
  %v8039 = vsub.f32 %v8037, %v8038
  %v8040 = vand.u32 %v8039, 4294901760
  %8041 = vmatmul.mubr.f32.gmra.mrb[0].mxu0 %v8040
  %v8042 = vpop.f32.mrb[0].mxu0
  %v8043 = vadd.f32 0.0, %v8042
  %v8044 = vpop.f32.mrb[0].mxu0
  %v8045 = vadd.f32 0.0, %v8044
  %8046 = vdwg.mxu0
  %v8047 = vand.u32 %v6314, 4294901760
  %v8048 = vsub.f32 %v6314, %v8047
  %v8049 = vand.u32 %v8048, 4294901760
  %v8050 = vsub.f32 %v8048, %v8049
  %v8051 = vand.u32 %v8050, 4294901760
  %8052 = vmatprep.subr.mxu0 %v8051
  %v8053 = vand.u32 %v6313, 4294901760
  %v8054 = vsub.f32 %v6313, %v8053
  %v8055 = vand.u32 %v8054, 4294901760
  %v8056 = vsub.f32 %v8054, %v8055
  %v8057 = vand.u32 %v8056, 4294901760
  %8058 = vmatpush1.msra.mxu0 %v8057
  %v8059 = vand.u32 %v6318, 4294901760
  %v8060 = vsub.f32 %v6318, %v8059
  %v8061 = vand.u32 %v8060, 4294901760
  %v8062 = vsub.f32 %v8060, %v8061
  %v8063 = vand.u32 %v8062, 4294901760
  %8064 = vmatprep.subr.mxu0 %v8063
  %v8065 = vand.u32 %v6317, 4294901760
  %v8066 = vsub.f32 %v6317, %v8065
  %v8067 = vand.u32 %v8066, 4294901760
  %v8068 = vsub.f32 %v8066, %v8067
  %v8069 = vand.u32 %v8068, 4294901760
  %8070 = vmatpush1.msra.mxu0 %v8069
  %v8071 = vand.u32 %v6322, 4294901760
  %v8072 = vsub.f32 %v6322, %v8071
  %v8073 = vand.u32 %v8072, 4294901760
  %v8074 = vsub.f32 %v8072, %v8073
  %v8075 = vand.u32 %v8074, 4294901760
  %8076 = vmatprep.subr.mxu0 %v8075
  %v8077 = vand.u32 %v6321, 4294901760
  %v8078 = vsub.f32 %v6321, %v8077
  %v8079 = vand.u32 %v8078, 4294901760
  %v8080 = vsub.f32 %v8078, %v8079
  %v8081 = vand.u32 %v8080, 4294901760
  %8082 = vmatpush1.msra.mxu0 %v8081
  %v8083 = vand.u32 %v6326, 4294901760
  %v8084 = vsub.f32 %v6326, %v8083
  %v8085 = vand.u32 %v8084, 4294901760
  %v8086 = vsub.f32 %v8084, %v8085
  %v8087 = vand.u32 %v8086, 4294901760
  %8088 = vmatprep.subr.mxu0 %v8087
  %v8089 = vand.u32 %v6325, 4294901760
  %v8090 = vsub.f32 %v6325, %v8089
  %v8091 = vand.u32 %v8090, 4294901760
  %v8092 = vsub.f32 %v8090, %v8091
  %v8093 = vand.u32 %v8092, 4294901760
  %8094 = vmatpush1.msra.mxu0 %v8093
  %8095 = vmatprep.subr.mxu0 0.0
  %8096 = vmatpush1.msra.mxu0 0.0
  %8097 = vmatprep.subr.mxu0 0.0
  %8098 = vmatpush1.msra.mxu0 0.0
  %8099 = vmatprep.subr.mxu0 0.0
  %8100 = vmatpush1.msra.mxu0 0.0
  %8101 = vmatprep.subr.mxu0 0.0
  %8102 = vmatpush1.msra.mxu0 0.0
  %8103 = vmatprep.subr.mxu0 0.0
  %8104 = vmatpush1.msra.mxu0 0.0
  %8105 = vmatprep.subr.mxu0 0.0
  %8106 = vmatpush1.msra.mxu0 0.0
  %8107 = vmatprep.subr.mxu0 0.0
  %8108 = vmatpush1.msra.mxu0 0.0
  %8109 = vmatprep.subr.mxu0 0.0
  %8110 = vmatpush1.msra.mxu0 0.0
  %8111 = vmatprep.subr.mxu0 0.0
  %8112 = vmatpush1.msra.mxu0 0.0
  %8113 = vmatprep.subr.mxu0 0.0
  %8114 = vmatpush1.msra.mxu0 0.0
  %8115 = vmatprep.subr.mxu0 0.0
  %8116 = vmatpush1.msra.mxu0 0.0
  %8117 = vmatprep.subr.mxu0 0.0
  %8118 = vmatpush1.msra.mxu0 0.0
  %8119 = vmatprep.subr.mxu0 0.0
  %8120 = vmatpush1.msra.mxu0 0.0
  %8121 = vmatprep.subr.mxu0 0.0
  %8122 = vmatpush1.msra.mxu0 0.0
  %8123 = vmatprep.subr.mxu0 0.0
  %8124 = vmatpush1.msra.mxu0 0.0
  %8125 = vmatprep.subr.mxu0 0.0
  %8126 = vmatpush1.msra.mxu0 0.0
  %8127 = vmatprep.subr.mxu0 0.0
  %8128 = vmatpush1.msra.mxu0 0.0
  %8129 = vmatprep.subr.mxu0 0.0
  %8130 = vmatpush1.msra.mxu0 0.0
  %8131 = vmatprep.subr.mxu0 0.0
  %8132 = vmatpush1.msra.mxu0 0.0
  %8133 = vmatprep.subr.mxu0 0.0
  %8134 = vmatpush1.msra.mxu0 0.0
  %8135 = vmatprep.subr.mxu0 0.0
  %8136 = vmatpush1.msra.mxu0 0.0
  %8137 = vmatprep.subr.mxu0 0.0
  %8138 = vmatpush1.msra.mxu0 0.0
  %8139 = vmatprep.subr.mxu0 0.0
  %8140 = vmatpush1.msra.mxu0 0.0
  %8141 = vmatprep.subr.mxu0 0.0
  %8142 = vmatpush1.msra.mxu0 0.0
  %8143 = vmatprep.subr.mxu0 0.0
  %8144 = vmatpush1.msra.mxu0 0.0
  %8145 = vmatprep.subr.mxu0 0.0
  %8146 = vmatpush1.msra.mxu0 0.0
  %8147 = vmatprep.subr.mxu0 0.0
  %8148 = vmatpush1.msra.mxu0 0.0
  %8149 = vmatprep.subr.mxu0 0.0
  %8150 = vmatpush1.msra.mxu0 0.0
  %8151 = vmatprep.mubr.f32.mxu0 0.0
  %v8152 = vand.u32 %v7418, 4294901760
  %8153 = vmatmul.mubr.f32.gmra.mrb[0].mxu0 %v8152
  %v8154 = vpop.f32.mrb[0].mxu0
  %v8155 = vadd.f32 %v8043, %v8154
  %v8156 = vpop.f32.mrb[0].mxu0
  %v8157 = vadd.f32 %v8045, %v8156
  %8158 = vdwg.mxu0
  %v8159 = vand.u32 %v6314, 4294901760
  %v8160 = vsub.f32 %v6314, %v8159
  %8161 = vmatprep.subr.mxu0 %v8160
  %v8162 = vand.u32 %v6313, 4294901760
  %v8163 = vsub.f32 %v6313, %v8162
  %8164 = vmatpush1.msra.mxu0 %v8163
  %v8165 = vand.u32 %v6318, 4294901760
  %v8166 = vsub.f32 %v6318, %v8165
  %8167 = vmatprep.subr.mxu0 %v8166
  %v8168 = vand.u32 %v6317, 4294901760
  %v8169 = vsub.f32 %v6317, %v8168
  %8170 = vmatpush1.msra.mxu0 %v8169
  %v8171 = vand.u32 %v6322, 4294901760
  %v8172 = vsub.f32 %v6322, %v8171
  %8173 = vmatprep.subr.mxu0 %v8172
  %v8174 = vand.u32 %v6321, 4294901760
  %v8175 = vsub.f32 %v6321, %v8174
  %8176 = vmatpush1.msra.mxu0 %v8175
  %v8177 = vand.u32 %v6326, 4294901760
  %v8178 = vsub.f32 %v6326, %v8177
  %8179 = vmatprep.subr.mxu0 %v8178
  %v8180 = vand.u32 %v6325, 4294901760
  %v8181 = vsub.f32 %v6325, %v8180
  %8182 = vmatpush1.msra.mxu0 %v8181
  %8183 = vmatprep.subr.mxu0 0.0
  %8184 = vmatpush1.msra.mxu0 0.0
  %8185 = vmatprep.subr.mxu0 0.0
  %8186 = vmatpush1.msra.mxu0 0.0
  %8187 = vmatprep.subr.mxu0 0.0
  %8188 = vmatpush1.msra.mxu0 0.0
  %8189 = vmatprep.subr.mxu0 0.0
  %8190 = vmatpush1.msra.mxu0 0.0
  %8191 = vmatprep.subr.mxu0 0.0
  %8192 = vmatpush1.msra.mxu0 0.0
  %8193 = vmatprep.subr.mxu0 0.0
  %8194 = vmatpush1.msra.mxu0 0.0
  %8195 = vmatprep.subr.mxu0 0.0
  %8196 = vmatpush1.msra.mxu0 0.0
  %8197 = vmatprep.subr.mxu0 0.0
  %8198 = vmatpush1.msra.mxu0 0.0
  %8199 = vmatprep.subr.mxu0 0.0
  %8200 = vmatpush1.msra.mxu0 0.0
  %8201 = vmatprep.subr.mxu0 0.0
  %8202 = vmatpush1.msra.mxu0 0.0
  %8203 = vmatprep.subr.mxu0 0.0
  %8204 = vmatpush1.msra.mxu0 0.0
  %8205 = vmatprep.subr.mxu0 0.0
  %8206 = vmatpush1.msra.mxu0 0.0
  %8207 = vmatprep.subr.mxu0 0.0
  %8208 = vmatpush1.msra.mxu0 0.0
  %8209 = vmatprep.subr.mxu0 0.0
  %8210 = vmatpush1.msra.mxu0 0.0
  %8211 = vmatprep.subr.mxu0 0.0
  %8212 = vmatpush1.msra.mxu0 0.0
  %8213 = vmatprep.subr.mxu0 0.0
  %8214 = vmatpush1.msra.mxu0 0.0
  %8215 = vmatprep.subr.mxu0 0.0
  %8216 = vmatpush1.msra.mxu0 0.0
  %8217 = vmatprep.subr.mxu0 0.0
  %8218 = vmatpush1.msra.mxu0 0.0
  %8219 = vmatprep.subr.mxu0 0.0
  %8220 = vmatpush1.msra.mxu0 0.0
  %8221 = vmatprep.subr.mxu0 0.0
  %8222 = vmatpush1.msra.mxu0 0.0
  %8223 = vmatprep.subr.mxu0 0.0
  %8224 = vmatpush1.msra.mxu0 0.0
  %8225 = vmatprep.subr.mxu0 0.0
  %8226 = vmatpush1.msra.mxu0 0.0
  %8227 = vmatprep.subr.mxu0 0.0
  %8228 = vmatpush1.msra.mxu0 0.0
  %8229 = vmatprep.subr.mxu0 0.0
  %8230 = vmatpush1.msra.mxu0 0.0
  %8231 = vmatprep.subr.mxu0 0.0
  %8232 = vmatpush1.msra.mxu0 0.0
  %8233 = vmatprep.subr.mxu0 0.0
  %8234 = vmatpush1.msra.mxu0 0.0
  %8235 = vmatprep.subr.mxu0 0.0
  %8236 = vmatpush1.msra.mxu0 0.0
  %8237 = vmatprep.subr.mxu0 0.0
  %8238 = vmatpush1.msra.mxu0 0.0
  %8239 = vmatprep.mubr.f32.mxu0 0.0
  %v8240 = vand.u32 %v7418, 4294901760
  %v8241 = vsub.f32 %v7418, %v8240
  %8242 = vmatmul.mubr.f32.gmra.mrb[0].mxu0 %v8241
  %v8243 = vpop.f32.mrb[0].mxu0
  %v8244 = vadd.f32 %v8155, %v8243
  %v8245 = vpop.f32.mrb[0].mxu0
  %v8246 = vadd.f32 %v8157, %v8245
  %8247 = vdwg.mxu0
  %v8248 = vand.u32 %v6314, 4294901760
  %8249 = vmatprep.subr.mxu0 %v8248
  %v8250 = vand.u32 %v6313, 4294901760
  %8251 = vmatpush1.msra.mxu0 %v8250
  %v8252 = vand.u32 %v6318, 4294901760
  %8253 = vmatprep.subr.mxu0 %v8252
  %v8254 = vand.u32 %v6317, 4294901760
  %8255 = vmatpush1.msra.mxu0 %v8254
  %v8256 = vand.u32 %v6322, 4294901760
  %8257 = vmatprep.subr.mxu0 %v8256
  %v8258 = vand.u32 %v6321, 4294901760
  %8259 = vmatpush1.msra.mxu0 %v8258
  %v8260 = vand.u32 %v6326, 4294901760
  %8261 = vmatprep.subr.mxu0 %v8260
  %v8262 = vand.u32 %v6325, 4294901760
  %8263 = vmatpush1.msra.mxu0 %v8262
  %8264 = vmatprep.subr.mxu0 0.0
  %8265 = vmatpush1.msra.mxu0 0.0
  %8266 = vmatprep.subr.mxu0 0.0
  %8267 = vmatpush1.msra.mxu0 0.0
  %8268 = vmatprep.subr.mxu0 0.0
  %8269 = vmatpush1.msra.mxu0 0.0
  %8270 = vmatprep.subr.mxu0 0.0
  %8271 = vmatpush1.msra.mxu0 0.0
  %8272 = vmatprep.subr.mxu0 0.0
  %8273 = vmatpush1.msra.mxu0 0.0
  %8274 = vmatprep.subr.mxu0 0.0
  %8275 = vmatpush1.msra.mxu0 0.0
  %8276 = vmatprep.subr.mxu0 0.0
  %8277 = vmatpush1.msra.mxu0 0.0
  %8278 = vmatprep.subr.mxu0 0.0
  %8279 = vmatpush1.msra.mxu0 0.0
  %8280 = vmatprep.subr.mxu0 0.0
  %8281 = vmatpush1.msra.mxu0 0.0
  %8282 = vmatprep.subr.mxu0 0.0
  %8283 = vmatpush1.msra.mxu0 0.0
  %8284 = vmatprep.subr.mxu0 0.0
  %8285 = vmatpush1.msra.mxu0 0.0
  %8286 = vmatprep.subr.mxu0 0.0
  %8287 = vmatpush1.msra.mxu0 0.0
  %8288 = vmatprep.subr.mxu0 0.0
  %8289 = vmatpush1.msra.mxu0 0.0
  %8290 = vmatprep.subr.mxu0 0.0
  %8291 = vmatpush1.msra.mxu0 0.0
  %8292 = vmatprep.subr.mxu0 0.0
  %8293 = vmatpush1.msra.mxu0 0.0
  %8294 = vmatprep.subr.mxu0 0.0
  %8295 = vmatpush1.msra.mxu0 0.0
  %8296 = vmatprep.subr.mxu0 0.0
  %8297 = vmatpush1.msra.mxu0 0.0
  %8298 = vmatprep.subr.mxu0 0.0
  %8299 = vmatpush1.msra.mxu0 0.0
  %8300 = vmatprep.subr.mxu0 0.0
  %8301 = vmatpush1.msra.mxu0 0.0
  %8302 = vmatprep.subr.mxu0 0.0
  %8303 = vmatpush1.msra.mxu0 0.0
  %8304 = vmatprep.subr.mxu0 0.0
  %8305 = vmatpush1.msra.mxu0 0.0
  %8306 = vmatprep.subr.mxu0 0.0
  %8307 = vmatpush1.msra.mxu0 0.0
  %8308 = vmatprep.subr.mxu0 0.0
  %8309 = vmatpush1.msra.mxu0 0.0
  %8310 = vmatprep.subr.mxu0 0.0
  %8311 = vmatpush1.msra.mxu0 0.0
  %8312 = vmatprep.subr.mxu0 0.0
  %8313 = vmatpush1.msra.mxu0 0.0
  %8314 = vmatprep.subr.mxu0 0.0
  %8315 = vmatpush1.msra.mxu0 0.0
  %8316 = vmatprep.subr.mxu0 0.0
  %8317 = vmatpush1.msra.mxu0 0.0
  %8318 = vmatprep.subr.mxu0 0.0
  %8319 = vmatpush1.msra.mxu0 0.0
  %8320 = vmatprep.mubr.f32.mxu0 0.0
  %v8321 = vand.u32 %v7418, 4294901760
  %v8322 = vsub.f32 %v7418, %v8321
  %v8323 = vand.u32 %v8322, 4294901760
  %8324 = vmatmul.mubr.f32.gmra.mrb[0].mxu0 %v8323
  %v8325 = vpop.f32.mrb[0].mxu0
  %v8326 = vadd.f32 %v8244, %v8325
  %v8327 = vpop.f32.mrb[0].mxu0
  %v8328 = vadd.f32 %v8246, %v8327
  %8329 = vdwg.mxu0
  %v8330 = vand.u32 %v6314, 4294901760
  %v8331 = vsub.f32 %v6314, %v8330
  %v8332 = vand.u32 %v8331, 4294901760
  %8333 = vmatprep.subr.mxu0 %v8332
  %v8334 = vand.u32 %v6313, 4294901760
  %v8335 = vsub.f32 %v6313, %v8334
  %v8336 = vand.u32 %v8335, 4294901760
  %8337 = vmatpush1.msra.mxu0 %v8336
  %v8338 = vand.u32 %v6318, 4294901760
  %v8339 = vsub.f32 %v6318, %v8338
  %v8340 = vand.u32 %v8339, 4294901760
  %8341 = vmatprep.subr.mxu0 %v8340
  %v8342 = vand.u32 %v6317, 4294901760
  %v8343 = vsub.f32 %v6317, %v8342
  %v8344 = vand.u32 %v8343, 4294901760
  %8345 = vmatpush1.msra.mxu0 %v8344
  %v8346 = vand.u32 %v6322, 4294901760
  %v8347 = vsub.f32 %v6322, %v8346
  %v8348 = vand.u32 %v8347, 4294901760
  %8349 = vmatprep.subr.mxu0 %v8348
  %v8350 = vand.u32 %v6321, 4294901760
  %v8351 = vsub.f32 %v6321, %v8350
  %v8352 = vand.u32 %v8351, 4294901760
  %8353 = vmatpush1.msra.mxu0 %v8352
  %v8354 = vand.u32 %v6326, 4294901760
  %v8355 = vsub.f32 %v6326, %v8354
  %v8356 = vand.u32 %v8355, 4294901760
  %8357 = vmatprep.subr.mxu0 %v8356
  %v8358 = vand.u32 %v6325, 4294901760
  %v8359 = vsub.f32 %v6325, %v8358
  %v8360 = vand.u32 %v8359, 4294901760
  %8361 = vmatpush1.msra.mxu0 %v8360
  %8362 = vmatprep.subr.mxu0 0.0
  %8363 = vmatpush1.msra.mxu0 0.0
  %8364 = vmatprep.subr.mxu0 0.0
  %8365 = vmatpush1.msra.mxu0 0.0
  %8366 = vmatprep.subr.mxu0 0.0
  %8367 = vmatpush1.msra.mxu0 0.0
  %8368 = vmatprep.subr.mxu0 0.0
  %8369 = vmatpush1.msra.mxu0 0.0
  %8370 = vmatprep.subr.mxu0 0.0
  %8371 = vmatpush1.msra.mxu0 0.0
  %8372 = vmatprep.subr.mxu0 0.0
  %8373 = vmatpush1.msra.mxu0 0.0
  %8374 = vmatprep.subr.mxu0 0.0
  %8375 = vmatpush1.msra.mxu0 0.0
  %8376 = vmatprep.subr.mxu0 0.0
  %8377 = vmatpush1.msra.mxu0 0.0
  %8378 = vmatprep.subr.mxu0 0.0
  %8379 = vmatpush1.msra.mxu0 0.0
  %8380 = vmatprep.subr.mxu0 0.0
  %8381 = vmatpush1.msra.mxu0 0.0
  %8382 = vmatprep.subr.mxu0 0.0
  %8383 = vmatpush1.msra.mxu0 0.0
  %8384 = vmatprep.subr.mxu0 0.0
  %8385 = vmatpush1.msra.mxu0 0.0
  %8386 = vmatprep.subr.mxu0 0.0
  %8387 = vmatpush1.msra.mxu0 0.0
  %8388 = vmatprep.subr.mxu0 0.0
  %8389 = vmatpush1.msra.mxu0 0.0
  %8390 = vmatprep.subr.mxu0 0.0
  %8391 = vmatpush1.msra.mxu0 0.0
  %8392 = vmatprep.subr.mxu0 0.0
  %8393 = vmatpush1.msra.mxu0 0.0
  %8394 = vmatprep.subr.mxu0 0.0
  %8395 = vmatpush1.msra.mxu0 0.0
  %8396 = vmatprep.subr.mxu0 0.0
  %8397 = vmatpush1.msra.mxu0 0.0
  %8398 = vmatprep.subr.mxu0 0.0
  %8399 = vmatpush1.msra.mxu0 0.0
  %8400 = vmatprep.subr.mxu0 0.0
  %8401 = vmatpush1.msra.mxu0 0.0
  %8402 = vmatprep.subr.mxu0 0.0
  %8403 = vmatpush1.msra.mxu0 0.0
  %8404 = vmatprep.subr.mxu0 0.0
  %8405 = vmatpush1.msra.mxu0 0.0
  %8406 = vmatprep.subr.mxu0 0.0
  %8407 = vmatpush1.msra.mxu0 0.0
  %8408 = vmatprep.subr.mxu0 0.0
  %8409 = vmatpush1.msra.mxu0 0.0
  %8410 = vmatprep.subr.mxu0 0.0
  %8411 = vmatpush1.msra.mxu0 0.0
  %8412 = vmatprep.subr.mxu0 0.0
  %8413 = vmatpush1.msra.mxu0 0.0
  %8414 = vmatprep.subr.mxu0 0.0
  %8415 = vmatpush1.msra.mxu0 0.0
  %8416 = vmatprep.subr.mxu0 0.0
  %8417 = vmatpush1.msra.mxu0 0.0
  %8418 = vmatprep.mubr.f32.mxu0 0.0
  %v8419 = vand.u32 %v7418, 4294901760
  %8420 = vmatmul.mubr.f32.gmra.mrb[0].mxu0 %v8419
  %v8421 = vpop.f32.mrb[0].mxu0
  %v8422 = vadd.f32 %v8326, %v8421
  %v8423 = vpop.f32.mrb[0].mxu0
  %v8424 = vadd.f32 %v8328, %v8423
  %8425 = vdwg.mxu0
  %v8426 = vand.u32 %v6314, 4294901760
  %8427 = vmatprep.subr.mxu0 %v8426
  %v8428 = vand.u32 %v6313, 4294901760
  %8429 = vmatpush1.msra.mxu0 %v8428
  %v8430 = vand.u32 %v6318, 4294901760
  %8431 = vmatprep.subr.mxu0 %v8430
  %v8432 = vand.u32 %v6317, 4294901760
  %8433 = vmatpush1.msra.mxu0 %v8432
  %v8434 = vand.u32 %v6322, 4294901760
  %8435 = vmatprep.subr.mxu0 %v8434
  %v8436 = vand.u32 %v6321, 4294901760
  %8437 = vmatpush1.msra.mxu0 %v8436
  %v8438 = vand.u32 %v6326, 4294901760
  %8439 = vmatprep.subr.mxu0 %v8438
  %v8440 = vand.u32 %v6325, 4294901760
  %8441 = vmatpush1.msra.mxu0 %v8440
  %8442 = vmatprep.subr.mxu0 0.0
  %8443 = vmatpush1.msra.mxu0 0.0
  %8444 = vmatprep.subr.mxu0 0.0
  %8445 = vmatpush1.msra.mxu0 0.0
  %8446 = vmatprep.subr.mxu0 0.0
  %8447 = vmatpush1.msra.mxu0 0.0
  %8448 = vmatprep.subr.mxu0 0.0
  %8449 = vmatpush1.msra.mxu0 0.0
  %8450 = vmatprep.subr.mxu0 0.0
  %8451 = vmatpush1.msra.mxu0 0.0
  %8452 = vmatprep.subr.mxu0 0.0
  %8453 = vmatpush1.msra.mxu0 0.0
  %8454 = vmatprep.subr.mxu0 0.0
  %8455 = vmatpush1.msra.mxu0 0.0
  %8456 = vmatprep.subr.mxu0 0.0
  %8457 = vmatpush1.msra.mxu0 0.0
  %8458 = vmatprep.subr.mxu0 0.0
  %8459 = vmatpush1.msra.mxu0 0.0
  %8460 = vmatprep.subr.mxu0 0.0
  %8461 = vmatpush1.msra.mxu0 0.0
  %8462 = vmatprep.subr.mxu0 0.0
  %8463 = vmatpush1.msra.mxu0 0.0
  %8464 = vmatprep.subr.mxu0 0.0
  %8465 = vmatpush1.msra.mxu0 0.0
  %8466 = vmatprep.subr.mxu0 0.0
  %8467 = vmatpush1.msra.mxu0 0.0
  %8468 = vmatprep.subr.mxu0 0.0
  %8469 = vmatpush1.msra.mxu0 0.0
  %8470 = vmatprep.subr.mxu0 0.0
  %8471 = vmatpush1.msra.mxu0 0.0
  %8472 = vmatprep.subr.mxu0 0.0
  %8473 = vmatpush1.msra.mxu0 0.0
  %8474 = vmatprep.subr.mxu0 0.0
  %8475 = vmatpush1.msra.mxu0 0.0
  %8476 = vmatprep.subr.mxu0 0.0
  %8477 = vmatpush1.msra.mxu0 0.0
  %8478 = vmatprep.subr.mxu0 0.0
  %8479 = vmatpush1.msra.mxu0 0.0
  %8480 = vmatprep.subr.mxu0 0.0
  %8481 = vmatpush1.msra.mxu0 0.0
  %8482 = vmatprep.subr.mxu0 0.0
  %8483 = vmatpush1.msra.mxu0 0.0
  %8484 = vmatprep.subr.mxu0 0.0
  %8485 = vmatpush1.msra.mxu0 0.0
  %8486 = vmatprep.subr.mxu0 0.0
  %8487 = vmatpush1.msra.mxu0 0.0
  %8488 = vmatprep.subr.mxu0 0.0
  %8489 = vmatpush1.msra.mxu0 0.0
  %8490 = vmatprep.subr.mxu0 0.0
  %8491 = vmatpush1.msra.mxu0 0.0
  %8492 = vmatprep.subr.mxu0 0.0
  %8493 = vmatpush1.msra.mxu0 0.0
  %8494 = vmatprep.subr.mxu0 0.0
  %8495 = vmatpush1.msra.mxu0 0.0
  %8496 = vmatprep.subr.mxu0 0.0
  %8497 = vmatpush1.msra.mxu0 0.0
  %8498 = vmatprep.mubr.f32.mxu0 0.0
  %v8499 = vand.u32 %v7418, 4294901760
  %8500 = vmatmul.mubr.f32.gmra.mrb[0].mxu0 %v8499
  %v8501 = vpop.f32.mrb[0].mxu0
  %v8502 = vadd.f32 %v8422, %v8501
  %v8503 = vpop.f32.mrb[0].mxu0
  %v8504 = vadd.f32 %v8424, %v8503
  %8505 = vdwg.mxu0
  %v8506 = vlaneseq
  %v8507 = vshrl.u32 %v8506, 7
  %v8508 = vsub.s32 0, %v8507
  %v8509 = vrot.slane %v6870, %v8508
  %v8510 = vlaneseq
  %v8511 = vshrl.u32 %v8510, 7
  %v8512 = vsub.s32 0, %v8511
  %v8513 = vrot.slane %v6872, %v8512
  %v8514 = vlaneseq
  %v8515 = vshrl.u32 %v8514, 7
  %v8516 = vsub.s32 0, %v8515
  %v8517 = vrot.slane %v7413, %v8516
  %v8518 = vlaneseq
  %v8519 = vshrl.u32 %v8518, 7
  %v8520 = vsub.s32 0, %v8519
  %v8521 = vrot.slane %v7415, %v8520
  %v8522 = vmul.f32 %v835, %v8509
  %v8523 = vmul.f32 %v837, %v8513
  %v8524 = vmul.f32 %v1629, %v8517
  %v8525 = vmul.f32 %v1631, %v8521
  %v8526 = vmul.f32 %v842, %v8509
  %v8527 = vmul.f32 %v844, %v8513
  %v8528 = vmul.f32 %v1636, %v8517
  %v8529 = vmul.f32 %v1638, %v8521
  %v8530 = vmul.f32 %v849, %v8509
  %v8531 = vmul.f32 %v851, %v8513
  %v8532 = vmul.f32 %v1643, %v8517
  %v8533 = vmul.f32 %v1645, %v8521
  %v8534 = vmul.f32 %v856, %v8509
  %v8535 = vmul.f32 %v858, %v8513
  %v8536 = vmul.f32 %v1650, %v8517
  %v8537 = vmul.f32 %v1652, %v8521
  %v8538 = vlaneseq
  %v8539 = vshrl.u32 %v8538, 7
  %v8540 = vsub.s32 0, %v8539
  %v8541 = vrot.slane %v7959, %v8540
  %v8542 = vlaneseq
  %v8543 = vshrl.u32 %v8542, 7
  %v8544 = vsub.s32 0, %v8543
  %v8545 = vrot.slane %v7961, %v8544
  %v8546 = vlaneseq
  %v8547 = vshrl.u32 %v8546, 7
  %v8548 = vsub.s32 0, %v8547
  %v8549 = vrot.slane %v8502, %v8548
  %v8550 = vlaneseq
  %v8551 = vshrl.u32 %v8550, 7
  %v8552 = vsub.s32 0, %v8551
  %v8553 = vrot.slane %v8504, %v8552
  %v8554 = vadd.f32 %v8522, %v8541
  %v8555 = vadd.f32 %v8523, %v8545
  %v8556 = vadd.f32 %v8524, %v8549
  %v8557 = vadd.f32 %v8525, %v8553
  %v8558 = vadd.f32 %v8526, %v8541
  %v8559 = vadd.f32 %v8527, %v8545
  %v8560 = vadd.f32 %v8528, %v8549
  %v8561 = vadd.f32 %v8529, %v8553
  %v8562 = vadd.f32 %v8530, %v8541
  %v8563 = vadd.f32 %v8531, %v8545
  %v8564 = vadd.f32 %v8532, %v8549
  %v8565 = vadd.f32 %v8533, %v8553
  %v8566 = vadd.f32 %v8534, %v8541
  %v8567 = vadd.f32 %v8535, %v8545
  %v8568 = vadd.f32 %v8536, %v8549
  %v8569 = vadd.f32 %v8537, %v8553
  %v8570 = vmax.f32 %v8554, 0.0
  %v8571 = vmax.f32 %v8555, 0.0
  %v8572 = vmax.f32 %v8556, 0.0
  %v8573 = vmax.f32 %v8557, 0.0
  %v8574 = vmax.f32 %v8558, 0.0
  %v8575 = vmax.f32 %v8559, 0.0
  %v8576 = vmax.f32 %v8560, 0.0
  %v8577 = vmax.f32 %v8561, 0.0
  %v8578 = vmax.f32 %v8562, 0.0
  %v8579 = vmax.f32 %v8563, 0.0
  %v8580 = vmax.f32 %v8564, 0.0
  %v8581 = vmax.f32 %v8565, 0.0
  %v8582 = vmax.f32 %v8566, 0.0
  %v8583 = vmax.f32 %v8567, 0.0
  %v8584 = vmax.f32 %v8568, 0.0
  %v8585 = vmax.f32 %v8569, 0.0
  %v8586 = vmax.f32 %v8570, %v8572
  %v8587 = vmax.f32 %v8571, %v8573
  %v8588 = vmax.f32 %v8574, %v8576
  %v8589 = vmax.f32 %v8575, %v8577
  %v8590 = vmax.f32 %v8578, %v8580
  %v8591 = vmax.f32 %v8579, %v8581
  %v8592 = vmax.f32 %v8582, %v8584
  %v8593 = vmax.f32 %v8583, %v8585
  %v8594 = vmax.f32 %v8586, %v8590
  %v8595 = vmax.f32 %v8587, %v8591
  %v8596 = vmax.f32 %v8588, %v8592
  %v8597 = vmax.f32 %v8589, %v8593
  %8598 = vst [vmem:[%s4] sm:$0xff] %v8594
  %8599 = vst [vmem:[%s4 + $0x8] sm:$0xff] %v8595
  %8600 = vst [vmem:[%s4 + $0x10] sm:$0xff] %v8596
  %8601 = vst [vmem:[%s4 + $0x18] sm:$0xff] %v8597
  // Predicated region
  $region18: #{first_layer_forward.1} parent=0 // pred_check
    _
  $region19: #{first_layer_forward.1} parent=0 // pred_check_branch
    %8603 = sbr.rel (0) target = $region21
  $region20: #{first_layer_forward.1} parent=0 // pred_region
    _
  $region21: #{first_layer_forward.1} parent=0 // pred_fallthru
    _
  // Predicated region
  $region22: #{first_layer_forward.1} parent=0 // pred_check
    _
  $region23: #{first_layer_forward.1} parent=0 // pred_check_branch
    %8605 = sbr.rel (0) target = $region25
  $region24: #{first_layer_forward.1} parent=0 // pred_region
    _
  $region25: #{first_layer_forward.1} parent=0 // pred_fallthru
    _

</llo_original>
